<compile_context>
chip_gen: v7x
topology: tpu7x:2x2x1
jax: 0.10.0
libtpu: 0.0.40
codegen_flags: <defaults>
</compile_context>

<pallas_src>
import functools
import math

import jax
import jax.numpy as jnp
from jax.experimental import pallas as pl
from jax.experimental.pallas import tpu as pltpu


def gat_fused_kernel(x_ref, adj_ref, w_aug_ref, w_out_aug_ref, out_ref, hcat_ref, *,
                     alpha, n_heads, n_hid, e_out, bb, m):
    H, E, Eo, Bb, M = n_heads, n_hid, e_out, bb, m

    # ---- one stacked MXU matmul: all head projections + folded f1/f2 columns.
    x2d = x_ref[...]                                              # (Bb*M, F)
    h_aug2d = jnp.dot(x2d, w_aug_ref[...],
                      preferred_element_type=jnp.float32)         # (Bb*M, H*E+2H)
    h_aug = h_aug2d.reshape(Bb, M, H * E + 2 * H)                 # leading-dim split only

    adj_f = adj_ref[...].astype(jnp.float32)                      # int8 -> f32 once
    ones1 = jnp.ones((Bb, M, 1), jnp.float32)                     # hoisted out of head loop

    def attention(h, f1, f2, exact_recip):
        # e[b,i,j] = f1[b,i] + f2[b,j]  via a d=2 batched matmul (no in-kernel transpose):
        #   [f1, 1] · [1, f2]
        lhs = jnp.concatenate([f1, ones1], axis=-1)               # (Bb, M, 2)
        rhs = jnp.concatenate([ones1, f2], axis=-1)               # (Bb, M, 2)
        e = jnp.einsum('bid,bjd->bij', lhs, rhs,
                       preferred_element_type=jnp.float32)        # (Bb, M, M)
        e = jnp.where(e > 0, e, alpha * e)                        # LeakyReLU(alpha)
        att = jnp.where(adj_f > 0, e, -9.0e15)                    # edge mask
        att = att - jnp.max(att, axis=-1, keepdims=True)
        p = jnp.exp(att)
        denom = jnp.sum(p, axis=-1, keepdims=True)
        if exact_recip:
            att = p / denom                                       # exact for final output
        else:
            att = p * pl.reciprocal(denom, approx=True)           # EUP vrcp
        hp = jnp.einsum('bij,bjk->bik', att, h,
                        preferred_element_type=jnp.float32)       # neighbor aggregation
        # ELU with the unselected branch clamped -> no inf intermediates.
        return jnp.where(hp > 0, hp, jnp.exp(jnp.minimum(hp, 0.0)) - 1.0)

    # ---- hidden heads (concat=True -> ELU); results land in VMEM scratch by lane slice.
    for hd in range(H):
        h = h_aug[:, :, hd * E:(hd + 1) * E]                      # (Bb, M, E)
        f1 = h_aug[:, :, H * E + hd:H * E + hd + 1]               # (Bb, M, 1)
        f2 = h_aug[:, :, H * E + H + hd:H * E + H + hd + 1]       # (Bb, M, 1)
        hp = attention(h, f1, f2, exact_recip=False)
        hcat_ref[:, hd * E:(hd + 1) * E] = hp.reshape(Bb * M, E)

    # ---- output attention layer (folded f1/f2 columns again); ELU applied once here
    #      (out_att has concat=False, then GAT.forward applies F.elu).
    h2_aug2d = jnp.dot(hcat_ref[...], w_out_aug_ref[...],
                       preferred_element_type=jnp.float32)        # (Bb*M, Eo+2)
    h2_aug = h2_aug2d.reshape(Bb, M, Eo + 2)
    h2 = h2_aug[:, :, :Eo]
    f1o = h2_aug[:, :, Eo:Eo + 1]
    f2o = h2_aug[:, :, Eo + 1:Eo + 2]
    out = attention(h2, f1o, f2o, exact_recip=True)               # (Bb, M, Eo)

    # ---- lane-dense store: (M, Bb*Eo) slab with the batch element in the lane dim.
    for b in range(Bb):
        out_ref[0, :, b * Eo:(b + 1) * Eo] = out[b]


def gat_forward(x, adj, params, *, alpha, block_b=16):
    """Fused GAT forward. x: (B, M, F) f32, adj: (B, M, M) (any dtype, used as adj>0)."""
    B, M, F = x.shape
    w_all, a1_all, a2_all, w_out, a1_out, a2_out = params
    H, E = a1_all.shape
    Eo = w_out.shape[1]

    Bb = min(block_b, B)
    assert B % Bb == 0, "batch must be divisible by block_b"
    G = B // Bb                                                    # keep even for v7x megacore

    # Fold attention-vector reductions into the projection weights (wrapper side):
    #   f1 = (x@W)·a1 = x@(W a1)  ->  extra columns of the stacked weight.
    w_heads = w_all.reshape(F, H, E)
    wf1 = jnp.einsum('fhe,he->fh', w_heads, a1_all)                # (F, H)
    wf2 = jnp.einsum('fhe,he->fh', w_heads, a2_all)                # (F, H)
    w_aug = jnp.concatenate([w_all, wf1, wf2], axis=1)             # (F, H*E + 2H)

    wo_f1 = jnp.dot(w_out, a1_out.reshape(Eo, 1))                  # (H*E, 1)
    wo_f2 = jnp.dot(w_out, a2_out.reshape(Eo, 1))                  # (H*E, 1)
    w_out_aug = jnp.concatenate([w_out, wo_f1, wo_f2], axis=1)     # (H*E, Eo + 2)

    x_flat = x.reshape(B * M, F)                                   # layout prep (XLA side)
    adj_i8 = (adj > 0).astype(jnp.int8)                            # 4x fewer HBM bytes

    kernel = functools.partial(gat_fused_kernel, alpha=alpha, n_heads=H,
                               n_hid=E, e_out=Eo, bb=Bb, m=M)

    out_flat = pl.pallas_call(
        kernel,
        out_shape=jax.ShapeDtypeStruct((G, M, Bb * Eo), jnp.float32),
        grid=(G,),
        in_specs=[
            pl.BlockSpec((Bb * M, F), lambda g: (g, 0)),           # x, Bb graphs per step
            pl.BlockSpec((Bb, M, M), lambda g: (g, 0, 0)),         # adj (int8)
            pl.BlockSpec((F, H * E + 2 * H), lambda g: (0, 0)),    # W_aug (replicated)
            pl.BlockSpec((H * E, Eo + 2), lambda g: (0, 0)),       # W_out_aug (replicated)
        ],
        out_specs=pl.BlockSpec((1, M, Bb * Eo), lambda g: (g, 0, 0)),  # lane-dense slab
        scratch_shapes=[pltpu.VMEM((Bb * M, H * E), jnp.float32)],     # concat'd hidden state
        compiler_params=pltpu.CompilerParams(
            dimension_semantics=("parallel",)),
    )(x_flat, adj_i8, w_aug, w_out_aug)

    # Unpack lane-dense slabs back to (B, M, Eo): pure layout plumbing, outside the kernel.
    out = out_flat.reshape(G, M, Bb, Eo)
    out = jnp.transpose(out, (0, 2, 1, 3)).reshape(B, M, Eo)
    return out


# ----------------- parameter init (deterministic, xavier_uniform gain=1.414) ---

def _xavier_uniform(key, shape, gain):
    fan_in, fan_out = shape
    limit = gain * math.sqrt(6.0 / (fan_in + fan_out))
    return jax.random.uniform(key, shape, jnp.float32, -limit, limit)


def init_gat_params(key, n_feat, n_hid, out_features, n_heads):
    gain = 1.414
    keys = jax.random.split(key, 2 * n_heads + 2)
    ws, a1s, a2s = [], [], []
    for i in range(n_heads):
        w = _xavier_uniform(keys[2 * i], (n_feat, n_hid), gain)
        a = _xavier_uniform(keys[2 * i + 1], (2 * n_hid, 1), gain)
        ws.append(w)
        a1s.append(a[:n_hid, 0])
        a2s.append(a[n_hid:, 0])
    w_all = jnp.concatenate(ws, axis=1)                 # (F, H*E) stacked heads
    a1_all = jnp.stack(a1s, axis=0)                     # (H, E)
    a2_all = jnp.stack(a2s, axis=0)                     # (H, E)
    w_out = _xavier_uniform(keys[-2], (n_hid * n_heads, out_features), gain)
    a_out = _xavier_uniform(keys[-1], (2 * out_features, 1), gain)
    a1_out = a_out[:out_features, 0]                    # (Eo,)
    a2_out = a_out[out_features:, 0]                    # (Eo,)
    return (w_all, a1_all, a2_all, w_out, a1_out, a2_out)


# ------------------------------ pure-JAX reference -----------------------------

def _ref_attention(h, adj, a1, a2, alpha, apply_elu):
    f1 = jnp.sum(h * a1, axis=-1, keepdims=True)
    f2 = jnp.sum(h * a2, axis=-1, keepdims=True)
    e = f1 + jnp.swapaxes(f2, -1, -2)
    e = jnp.where(e > 0, e, alpha * e)
    att = jnp.where(adj > 0, e, -9.0e15)
    att = jax.nn.softmax(att, axis=-1)
    hp = jnp.einsum("bij,bjk->bik", att, h)
    return jax.nn.elu(hp) if apply_elu else hp


def gat_forward_ref(x, adj, params, *, alpha):
    w_all, a1_all, a2_all, w_out, a1_out, a2_out = params
    H, E = a1_all.shape
    h_all = jnp.einsum("bmf,fe->bme", x, w_all)
    outs = []
    for hd in range(H):
        h = h_all[..., hd * E:(hd + 1) * E]
        outs.append(_ref_attention(h, adj, a1_all[hd], a2_all[hd], alpha, True))
    h_cat = jnp.concatenate(outs, axis=-1)
    h2 = jnp.einsum("bme,eo->bmo", h_cat, w_out)
    return _ref_attention(h2, adj, a1_out, a2_out, alpha, True)


if __name__ == "__main__":
    B, M = 32, 8                      # 32 small graphs of 8 nodes (Bb=16 per grid step)
    n_feat, n_hid, out_features, n_heads = 32, 16, 8, 2
    alpha = 0.2

    key = jax.random.PRNGKey(0)
    kx, kadj, kp = jax.random.split(key, 3)

    x = jax.random.normal(kx, (B, M, n_feat), jnp.float32)
    adj = (jax.random.uniform(kadj, (B, M, M)) > 0.5).astype(jnp.float32)
    adj = jnp.maximum(adj, jnp.eye(M, dtype=jnp.float32)[None])   # self loops

    params = init_gat_params(kp, n_feat, n_hid, out_features, n_heads)

    out = gat_forward(x, adj, params, alpha=alpha, block_b=16)
    out = jax.block_until_ready(out)

    ref = gat_forward_ref(x, adj, params, alpha=alpha)
    ref = jax.block_until_ready(ref)

    assert out.shape == (B, M, out_features)
    assert bool(jnp.all(jnp.isfinite(out)))
    # Tolerance covers the approx reciprocal (EUP vrcp) used in the hidden-head softmax.
    assert bool(jnp.allclose(out, ref, rtol=1e-2, atol=1e-2))
    print("KERNEL_OK")
</pallas_src>

<mosaic_0001>
module attributes {stable_mosaic.version = 11 : i64} {
  func.func @gat_fused_kernel(%arg0: i32, %arg1: memref<128x32xf32, #tpu.memory_space<vmem>>, %arg2: memref<16x8x8xi8, #tpu.memory_space<vmem>>, %arg3: memref<32x36xf32, #tpu.memory_space<vmem>>, %arg4: memref<32x10xf32, #tpu.memory_space<vmem>>, %arg5: memref<1x8x128xf32, #tpu.memory_space<vmem>>, %arg6: memref<128x32xf32, #tpu.memory_space<vmem>>) attributes {dimension_semantics = [#tpu.dimension_semantics<parallel>], iteration_bounds = array<i64: 2>, scalar_prefetch = 0 : i64, scratch_operands = 1 : i64, tpu.core_type = #tpu.core_type<tc>, window_params = [{transform_indices = @transform_0, window_bounds = array<i64: 128, 32>}, {transform_indices = @transform_1, window_bounds = array<i64: 16, 8, 8>}, {pipeline_mode = #tpu.pipeline_mode<synchronous>, transform_indices = @transform_2, window_bounds = array<i64: 32, 36>}, {pipeline_mode = #tpu.pipeline_mode<synchronous>, transform_indices = @transform_3, window_bounds = array<i64: 32, 10>}, {transform_indices = @transform_4, window_bounds = array<i64: 1, 8, 128>}]} {
    %c0 = arith.constant 0 : index
    %c0_0 = arith.constant 0 : index
    %0 = vector.load %arg1[%c0, %c0_0] : memref<128x32xf32, #tpu.memory_space<vmem>>, vector<128x32xf32>
    %c0_1 = arith.constant 0 : index
    %c0_2 = arith.constant 0 : index
    %1 = vector.load %arg3[%c0_1, %c0_2] : memref<32x36xf32, #tpu.memory_space<vmem>>, vector<32x36xf32>
    %cst = arith.constant dense<0.000000e+00> : vector<128x36xf32>
    %2 = tpu.matmul %0, %1, %cst {dimension_numbers = #tpu.dot_dimension_numbers<[1], [0], [0], [1], [0, 0, 1, 1], [], []>} : vector<128x32xf32>, vector<32x36xf32>, vector<128x36xf32> -> vector<128x36xf32>
    %3 = vector.shape_cast %2 : vector<128x36xf32> to vector<16x8x36xf32>
    %c0_3 = arith.constant 0 : index
    %c0_4 = arith.constant 0 : index
    %c0_5 = arith.constant 0 : index
    %4 = vector.load %arg2[%c0_3, %c0_4, %c0_5] : memref<16x8x8xi8, #tpu.memory_space<vmem>>, vector<16x8x8xi8>
    %5 = arith.sitofp %4 : vector<16x8x8xi8> to vector<16x8x8xf32>
    %cst_6 = arith.constant 1.000000e+00 : f32
    %6 = vector.broadcast %cst_6 : f32 to vector<16x8x1xf32>
    %7 = vector.extract_strided_slice %3 {offsets = [0, 0, 0], sizes = [16, 8, 16], strides = [1, 1, 1]} : vector<16x8x36xf32> to vector<16x8x16xf32>
    %8 = vector.extract_strided_slice %3 {offsets = [0, 0, 32], sizes = [16, 8, 1], strides = [1, 1, 1]} : vector<16x8x36xf32> to vector<16x8x1xf32>
    %9 = vector.extract_strided_slice %3 {offsets = [0, 0, 34], sizes = [16, 8, 1], strides = [1, 1, 1]} : vector<16x8x36xf32> to vector<16x8x1xf32>
    %10 = tpu.concatenate %8, %6 in 2 : vector<16x8x1xf32>, vector<16x8x1xf32> -> vector<16x8x2xf32>
    %11 = tpu.concatenate %6, %9 in 2 : vector<16x8x1xf32>, vector<16x8x1xf32> -> vector<16x8x2xf32>
    "tpu.trace_start"() <{level = 10 : i32, message = "bid,bjd->bij"}> : () -> ()
    %cst_7 = arith.constant dense<0.000000e+00> : vector<16x8x8xf32>
    %12 = tpu.matmul %10, %11, %cst_7 {dimension_numbers = #tpu.dot_dimension_numbers<[2], [2], [1], [1], [0, 0, 0, 1, 1, 1], [0], [0]>} : vector<16x8x2xf32>, vector<16x8x2xf32>, vector<16x8x8xf32> -> vector<16x8x8xf32>
    %cst_8 = arith.constant 0.000000e+00 : f32
    "tpu.trace_stop"() : () -> ()
    %13 = vector.broadcast %cst_8 : f32 to vector<16x8x8xf32>
    %14 = arith.cmpf ogt, %12, %13 : vector<16x8x8xf32>
    %cst_9 = arith.constant 2.000000e-01 : f32
    %15 = vector.broadcast %cst_9 : f32 to vector<16x8x8xf32>
    %16 = arith.mulf %15, %12 : vector<16x8x8xf32>
    %17 = arith.select %14, %12, %16 : vector<16x8x8xi1>, vector<16x8x8xf32>
    %cst_10 = arith.constant 0.000000e+00 : f32
    %18 = vector.broadcast %cst_10 : f32 to vector<16x8x8xf32>
    %19 = arith.cmpf ogt, %5, %18 : vector<16x8x8xf32>
    %cst_11 = arith.constant -9.000000e+15 : f32
    %20 = vector.broadcast %cst_11 : f32 to vector<16x8x8xf32>
    %21 = arith.select %19, %17, %20 : vector<16x8x8xi1>, vector<16x8x8xf32>
    %cst_12 = arith.constant dense<0xFF800000> : vector<16x8xf32>
    %22 = vector.multi_reduction <maximumf>, %21, %cst_12 [2] : vector<16x8x8xf32> to vector<16x8xf32>
    %23 = vector.shape_cast %22 : vector<16x8xf32> to vector<16x8x1xf32>
    %24 = vector.broadcast %23 : vector<16x8x1xf32> to vector<16x8x8xf32>
    %25 = arith.subf %21, %24 : vector<16x8x8xf32>
    %26 = math.exp %25 : vector<16x8x8xf32>
    %cst_13 = arith.constant dense<0.000000e+00> : vector<16x8xf32>
    %27 = vector.multi_reduction <add>, %26, %cst_13 [2] : vector<16x8x8xf32> to vector<16x8xf32>
    %28 = vector.shape_cast %27 : vector<16x8xf32> to vector<16x8x1xf32>
    %29 = tpu.reciprocal %28 {approx = true} : vector<16x8x1xf32> -> vector<16x8x1xf32>
    %30 = vector.broadcast %29 : vector<16x8x1xf32> to vector<16x8x8xf32>
    %31 = arith.mulf %26, %30 : vector<16x8x8xf32>
    "tpu.trace_start"() <{level = 10 : i32, message = "bij,bjk->bik"}> : () -> ()
    %cst_14 = arith.constant dense<0.000000e+00> : vector<16x8x16xf32>
    %32 = tpu.matmul %31, %7, %cst_14 {dimension_numbers = #tpu.dot_dimension_numbers<[2], [1], [1], [2], [0, 0, 0, 1, 1, 2], [0], [0]>} : vector<16x8x8xf32>, vector<16x8x16xf32>, vector<16x8x16xf32> -> vector<16x8x16xf32>
    %cst_15 = arith.constant 0.000000e+00 : f32
    "tpu.trace_stop"() : () -> ()
    %33 = vector.broadcast %cst_15 : f32 to vector<16x8x16xf32>
    %34 = arith.cmpf ogt, %32, %33 : vector<16x8x16xf32>
    %cst_16 = arith.constant 0.000000e+00 : f32
    %35 = vector.broadcast %cst_16 : f32 to vector<16x8x16xf32>
    %36 = arith.minimumf %32, %35 : vector<16x8x16xf32>
    %37 = math.exp %36 : vector<16x8x16xf32>
    %cst_17 = arith.constant 1.000000e+00 : f32
    %38 = vector.broadcast %cst_17 : f32 to vector<16x8x16xf32>
    %39 = arith.subf %37, %38 : vector<16x8x16xf32>
    %40 = arith.select %34, %32, %39 : vector<16x8x16xi1>, vector<16x8x16xf32>
    %41 = vector.shape_cast %40 : vector<16x8x16xf32> to vector<128x16xf32>
    %c0_18 = arith.constant 0 : index
    %c0_19 = arith.constant 0 : index
    %42 = vector.load %arg6[%c0_18, %c0_19] : memref<128x32xf32, #tpu.memory_space<vmem>>, vector<128x16xf32>
    tpu.vector_store %arg6[%c0_18, %c0_19], %41 {strides = array<i32>} : memref<128x32xf32, #tpu.memory_space<vmem>>, vector<128x16xf32>,
    %43 = vector.extract_strided_slice %3 {offsets = [0, 0, 16], sizes = [16, 8, 16], strides = [1, 1, 1]} : vector<16x8x36xf32> to vector<16x8x16xf32>
    %44 = vector.extract_strided_slice %3 {offsets = [0, 0, 33], sizes = [16, 8, 1], strides = [1, 1, 1]} : vector<16x8x36xf32> to vector<16x8x1xf32>
    %45 = vector.extract_strided_slice %3 {offsets = [0, 0, 35], sizes = [16, 8, 1], strides = [1, 1, 1]} : vector<16x8x36xf32> to vector<16x8x1xf32>
    %46 = tpu.concatenate %44, %6 in 2 : vector<16x8x1xf32>, vector<16x8x1xf32> -> vector<16x8x2xf32>
    %47 = tpu.concatenate %6, %45 in 2 : vector<16x8x1xf32>, vector<16x8x1xf32> -> vector<16x8x2xf32>
    "tpu.trace_start"() <{level = 10 : i32, message = "bid,bjd->bij"}> : () -> ()
    %cst_20 = arith.constant dense<0.000000e+00> : vector<16x8x8xf32>
    %48 = tpu.matmul %46, %47, %cst_20 {dimension_numbers = #tpu.dot_dimension_numbers<[2], [2], [1], [1], [0, 0, 0, 1, 1, 1], [0], [0]>} : vector<16x8x2xf32>, vector<16x8x2xf32>, vector<16x8x8xf32> -> vector<16x8x8xf32>
    %cst_21 = arith.constant 0.000000e+00 : f32
    "tpu.trace_stop"() : () -> ()
    %49 = vector.broadcast %cst_21 : f32 to vector<16x8x8xf32>
    %50 = arith.cmpf ogt, %48, %49 : vector<16x8x8xf32>
    %cst_22 = arith.constant 2.000000e-01 : f32
    %51 = vector.broadcast %cst_22 : f32 to vector<16x8x8xf32>
    %52 = arith.mulf %51, %48 : vector<16x8x8xf32>
    %53 = arith.select %50, %48, %52 : vector<16x8x8xi1>, vector<16x8x8xf32>
    %cst_23 = arith.constant 0.000000e+00 : f32
    %54 = vector.broadcast %cst_23 : f32 to vector<16x8x8xf32>
    %55 = arith.cmpf ogt, %5, %54 : vector<16x8x8xf32>
    %cst_24 = arith.constant -9.000000e+15 : f32
    %56 = vector.broadcast %cst_24 : f32 to vector<16x8x8xf32>
    %57 = arith.select %55, %53, %56 : vector<16x8x8xi1>, vector<16x8x8xf32>
    %cst_25 = arith.constant dense<0xFF800000> : vector<16x8xf32>
    %58 = vector.multi_reduction <maximumf>, %57, %cst_25 [2] : vector<16x8x8xf32> to vector<16x8xf32>
    %59 = vector.shape_cast %58 : vector<16x8xf32> to vector<16x8x1xf32>
    %60 = vector.broadcast %59 : vector<16x8x1xf32> to vector<16x8x8xf32>
    %61 = arith.subf %57, %60 : vector<16x8x8xf32>
    %62 = math.exp %61 : vector<16x8x8xf32>
    %cst_26 = arith.constant dense<0.000000e+00> : vector<16x8xf32>
    %63 = vector.multi_reduction <add>, %62, %cst_26 [2] : vector<16x8x8xf32> to vector<16x8xf32>
    %64 = vector.shape_cast %63 : vector<16x8xf32> to vector<16x8x1xf32>
    %65 = tpu.reciprocal %64 {approx = true} : vector<16x8x1xf32> -> vector<16x8x1xf32>
    %66 = vector.broadcast %65 : vector<16x8x1xf32> to vector<16x8x8xf32>
    %67 = arith.mulf %62, %66 : vector<16x8x8xf32>
    "tpu.trace_start"() <{level = 10 : i32, message = "bij,bjk->bik"}> : () -> ()
    %cst_27 = arith.constant dense<0.000000e+00> : vector<16x8x16xf32>
    %68 = tpu.matmul %67, %43, %cst_27 {dimension_numbers = #tpu.dot_dimension_numbers<[2], [1], [1], [2], [0, 0, 0, 1, 1, 2], [0], [0]>} : vector<16x8x8xf32>, vector<16x8x16xf32>, vector<16x8x16xf32> -> vector<16x8x16xf32>
    %cst_28 = arith.constant 0.000000e+00 : f32
    "tpu.trace_stop"() : () -> ()
    %69 = vector.broadcast %cst_28 : f32 to vector<16x8x16xf32>
    %70 = arith.cmpf ogt, %68, %69 : vector<16x8x16xf32>
    %cst_29 = arith.constant 0.000000e+00 : f32
    %71 = vector.broadcast %cst_29 : f32 to vector<16x8x16xf32>
    %72 = arith.minimumf %68, %71 : vector<16x8x16xf32>
    %73 = math.exp %72 : vector<16x8x16xf32>
    %cst_30 = arith.constant 1.000000e+00 : f32
    %74 = vector.broadcast %cst_30 : f32 to vector<16x8x16xf32>
    %75 = arith.subf %73, %74 : vector<16x8x16xf32>
    %76 = arith.select %70, %68, %75 : vector<16x8x16xi1>, vector<16x8x16xf32>
    %77 = vector.shape_cast %76 : vector<16x8x16xf32> to vector<128x16xf32>
    %c0_31 = arith.constant 0 : index
    %c16 = arith.constant 16 : index
    %78 = vector.load %arg6[%c0_31, %c16] : memref<128x32xf32, #tpu.memory_space<vmem>>, vector<128x16xf32>
    tpu.vector_store %arg6[%c0_31, %c16], %77 {strides = array<i32>} : memref<128x32xf32, #tpu.memory_space<vmem>>, vector<128x16xf32>,
    %c0_32 = arith.constant 0 : index
    %c0_33 = arith.constant 0 : index
    %79 = vector.load %arg6[%c0_32, %c0_33] : memref<128x32xf32, #tpu.memory_space<vmem>>, vector<128x32xf32>
    %c0_34 = arith.constant 0 : index
    %c0_35 = arith.constant 0 : index
    %80 = vector.load %arg4[%c0_34, %c0_35] : memref<32x10xf32, #tpu.memory_space<vmem>>, vector<32x10xf32>
    %cst_36 = arith.constant dense<0.000000e+00> : vector<128x10xf32>
    %81 = tpu.matmul %79, %80, %cst_36 {dimension_numbers = #tpu.dot_dimension_numbers<[1], [0], [0], [1], [0, 0, 1, 1], [], []>} : vector<128x32xf32>, vector<32x10xf32>, vector<128x10xf32> -> vector<128x10xf32>
    %82 = vector.shape_cast %81 : vector<128x10xf32> to vector<16x8x10xf32>
    %83 = vector.extract_strided_slice %82 {offsets = [0, 0, 0], sizes = [16, 8, 8], strides = [1, 1, 1]} : vector<16x8x10xf32> to vector<16x8x8xf32>
    %84 = vector.extract_strided_slice %82 {offsets = [0, 0, 8], sizes = [16, 8, 1], strides = [1, 1, 1]} : vector<16x8x10xf32> to vector<16x8x1xf32>
    %85 = vector.extract_strided_slice %82 {offsets = [0, 0, 9], sizes = [16, 8, 1], strides = [1, 1, 1]} : vector<16x8x10xf32> to vector<16x8x1xf32>
    %86 = tpu.concatenate %84, %6 in 2 : vector<16x8x1xf32>, vector<16x8x1xf32> -> vector<16x8x2xf32>
    %87 = tpu.concatenate %6, %85 in 2 : vector<16x8x1xf32>, vector<16x8x1xf32> -> vector<16x8x2xf32>
    "tpu.trace_start"() <{level = 10 : i32, message = "bid,bjd->bij"}> : () -> ()
    %cst_37 = arith.constant dense<0.000000e+00> : vector<16x8x8xf32>
    %88 = tpu.matmul %86, %87, %cst_37 {dimension_numbers = #tpu.dot_dimension_numbers<[2], [2], [1], [1], [0, 0, 0, 1, 1, 1], [0], [0]>} : vector<16x8x2xf32>, vector<16x8x2xf32>, vector<16x8x8xf32> -> vector<16x8x8xf32>
    %cst_38 = arith.constant 0.000000e+00 : f32
    "tpu.trace_stop"() : () -> ()
    %89 = vector.broadcast %cst_38 : f32 to vector<16x8x8xf32>
    %90 = arith.cmpf ogt, %88, %89 : vector<16x8x8xf32>
    %cst_39 = arith.constant 2.000000e-01 : f32
    %91 = vector.broadcast %cst_39 : f32 to vector<16x8x8xf32>
    %92 = arith.mulf %91, %88 : vector<16x8x8xf32>
    %93 = arith.select %90, %88, %92 : vector<16x8x8xi1>, vector<16x8x8xf32>
    %cst_40 = arith.constant 0.000000e+00 : f32
    %94 = vector.broadcast %cst_40 : f32 to vector<16x8x8xf32>
    %95 = arith.cmpf ogt, %5, %94 : vector<16x8x8xf32>
    %cst_41 = arith.constant -9.000000e+15 : f32
    %96 = vector.broadcast %cst_41 : f32 to vector<16x8x8xf32>
    %97 = arith.select %95, %93, %96 : vector<16x8x8xi1>, vector<16x8x8xf32>
    %cst_42 = arith.constant dense<0xFF800000> : vector<16x8xf32>
    %98 = vector.multi_reduction <maximumf>, %97, %cst_42 [2] : vector<16x8x8xf32> to vector<16x8xf32>
    %99 = vector.shape_cast %98 : vector<16x8xf32> to vector<16x8x1xf32>
    %100 = vector.broadcast %99 : vector<16x8x1xf32> to vector<16x8x8xf32>
    %101 = arith.subf %97, %100 : vector<16x8x8xf32>
    %102 = math.exp %101 : vector<16x8x8xf32>
    %cst_43 = arith.constant dense<0.000000e+00> : vector<16x8xf32>
    %103 = vector.multi_reduction <add>, %102, %cst_43 [2] : vector<16x8x8xf32> to vector<16x8xf32>
    %104 = vector.shape_cast %103 : vector<16x8xf32> to vector<16x8x1xf32>
    %105 = vector.broadcast %104 : vector<16x8x1xf32> to vector<16x8x8xf32>
    %106 = arith.divf %102, %105 : vector<16x8x8xf32>
    "tpu.trace_start"() <{level = 10 : i32, message = "bij,bjk->bik"}> : () -> ()
    %cst_44 = arith.constant dense<0.000000e+00> : vector<16x8x8xf32>
    %107 = tpu.matmul %106, %83, %cst_44 {dimension_numbers = #tpu.dot_dimension_numbers<[2], [1], [1], [2], [0, 0, 0, 1, 1, 2], [0], [0]>} : vector<16x8x8xf32>, vector<16x8x8xf32>, vector<16x8x8xf32> -> vector<16x8x8xf32>
    %cst_45 = arith.constant 0.000000e+00 : f32
    "tpu.trace_stop"() : () -> ()
    %108 = vector.broadcast %cst_45 : f32 to vector<16x8x8xf32>
    %109 = arith.cmpf ogt, %107, %108 : vector<16x8x8xf32>
    %cst_46 = arith.constant 0.000000e+00 : f32
    %110 = vector.broadcast %cst_46 : f32 to vector<16x8x8xf32>
    %111 = arith.minimumf %107, %110 : vector<16x8x8xf32>
    %112 = math.exp %111 : vector<16x8x8xf32>
    %cst_47 = arith.constant 1.000000e+00 : f32
    %113 = vector.broadcast %cst_47 : f32 to vector<16x8x8xf32>
    %114 = arith.subf %112, %113 : vector<16x8x8xf32>
    %115 = arith.select %109, %107, %114 : vector<16x8x8xi1>, vector<16x8x8xf32>
    %116 = vector.extract_strided_slice %115 {offsets = [0, 0, 0], sizes = [1, 8, 8], strides = [1, 1, 1]} : vector<16x8x8xf32> to vector<1x8x8xf32>
    %117 = vector.shape_cast %116 : vector<1x8x8xf32> to vector<8x8xf32>
    %c0_48 = arith.constant 0 : index
    %c0_49 = arith.constant 0 : index
    %c0_50 = arith.constant 0 : index
    %118 = vector.load %arg5[%c0_48, %c0_49, %c0_50] : memref<1x8x128xf32, #tpu.memory_space<vmem>>, vector<1x8x8xf32>
    %119 = vector.shape_cast %118 : vector<1x8x8xf32> to vector<8x8xf32>
    %120 = vector.shape_cast %117 : vector<8x8xf32> to vector<1x8x8xf32>
    tpu.vector_store %arg5[%c0_48, %c0_49, %c0_50], %120 {strides = array<i32>} : memref<1x8x128xf32, #tpu.memory_space<vmem>>, vector<1x8x8xf32>,
    %121 = vector.extract_strided_slice %115 {offsets = [1, 0, 0], sizes = [1, 8, 8], strides = [1, 1, 1]} : vector<16x8x8xf32> to vector<1x8x8xf32>
    %122 = vector.shape_cast %121 : vector<1x8x8xf32> to vector<8x8xf32>
    %c0_51 = arith.constant 0 : index
    %c0_52 = arith.constant 0 : index
    %c8 = arith.constant 8 : index
    %123 = vector.load %arg5[%c0_51, %c0_52, %c8] : memref<1x8x128xf32, #tpu.memory_space<vmem>>, vector<1x8x8xf32>
    %124 = vector.shape_cast %123 : vector<1x8x8xf32> to vector<8x8xf32>
    %125 = vector.shape_cast %122 : vector<8x8xf32> to vector<1x8x8xf32>
    tpu.vector_store %arg5[%c0_51, %c0_52, %c8], %125 {strides = array<i32>} : memref<1x8x128xf32, #tpu.memory_space<vmem>>, vector<1x8x8xf32>,
    %126 = vector.extract_strided_slice %115 {offsets = [2, 0, 0], sizes = [1, 8, 8], strides = [1, 1, 1]} : vector<16x8x8xf32> to vector<1x8x8xf32>
    %127 = vector.shape_cast %126 : vector<1x8x8xf32> to vector<8x8xf32>
    %c0_53 = arith.constant 0 : index
    %c0_54 = arith.constant 0 : index
    %c16_55 = arith.constant 16 : index
    %128 = vector.load %arg5[%c0_53, %c0_54, %c16_55] : memref<1x8x128xf32, #tpu.memory_space<vmem>>, vector<1x8x8xf32>
    %129 = vector.shape_cast %128 : vector<1x8x8xf32> to vector<8x8xf32>
    %130 = vector.shape_cast %127 : vector<8x8xf32> to vector<1x8x8xf32>
    tpu.vector_store %arg5[%c0_53, %c0_54, %c16_55], %130 {strides = array<i32>} : memref<1x8x128xf32, #tpu.memory_space<vmem>>, vector<1x8x8xf32>,
    %131 = vector.extract_strided_slice %115 {offsets = [3, 0, 0], sizes = [1, 8, 8], strides = [1, 1, 1]} : vector<16x8x8xf32> to vector<1x8x8xf32>
    %132 = vector.shape_cast %131 : vector<1x8x8xf32> to vector<8x8xf32>
    %c0_56 = arith.constant 0 : index
    %c0_57 = arith.constant 0 : index
    %c24 = arith.constant 24 : index
    %133 = vector.load %arg5[%c0_56, %c0_57, %c24] : memref<1x8x128xf32, #tpu.memory_space<vmem>>, vector<1x8x8xf32>
    %134 = vector.shape_cast %133 : vector<1x8x8xf32> to vector<8x8xf32>
    %135 = vector.shape_cast %132 : vector<8x8xf32> to vector<1x8x8xf32>
    tpu.vector_store %arg5[%c0_56, %c0_57, %c24], %135 {strides = array<i32>} : memref<1x8x128xf32, #tpu.memory_space<vmem>>, vector<1x8x8xf32>,
    %136 = vector.extract_strided_slice %115 {offsets = [4, 0, 0], sizes = [1, 8, 8], strides = [1, 1, 1]} : vector<16x8x8xf32> to vector<1x8x8xf32>
    %137 = vector.shape_cast %136 : vector<1x8x8xf32> to vector<8x8xf32>
    %c0_58 = arith.constant 0 : index
    %c0_59 = arith.constant 0 : index
    %c32 = arith.constant 32 : index
    %138 = vector.load %arg5[%c0_58, %c0_59, %c32] : memref<1x8x128xf32, #tpu.memory_space<vmem>>, vector<1x8x8xf32>
    %139 = vector.shape_cast %138 : vector<1x8x8xf32> to vector<8x8xf32>
    %140 = vector.shape_cast %137 : vector<8x8xf32> to vector<1x8x8xf32>
    tpu.vector_store %arg5[%c0_58, %c0_59, %c32], %140 {strides = array<i32>} : memref<1x8x128xf32, #tpu.memory_space<vmem>>, vector<1x8x8xf32>,
    %141 = vector.extract_strided_slice %115 {offsets = [5, 0, 0], sizes = [1, 8, 8], strides = [1, 1, 1]} : vector<16x8x8xf32> to vector<1x8x8xf32>
    %142 = vector.shape_cast %141 : vector<1x8x8xf32> to vector<8x8xf32>
    %c0_60 = arith.constant 0 : index
    %c0_61 = arith.constant 0 : index
    %c40 = arith.constant 40 : index
    %143 = vector.load %arg5[%c0_60, %c0_61, %c40] : memref<1x8x128xf32, #tpu.memory_space<vmem>>, vector<1x8x8xf32>
    %144 = vector.shape_cast %143 : vector<1x8x8xf32> to vector<8x8xf32>
    %145 = vector.shape_cast %142 : vector<8x8xf32> to vector<1x8x8xf32>
    tpu.vector_store %arg5[%c0_60, %c0_61, %c40], %145 {strides = array<i32>} : memref<1x8x128xf32, #tpu.memory_space<vmem>>, vector<1x8x8xf32>,
    %146 = vector.extract_strided_slice %115 {offsets = [6, 0, 0], sizes = [1, 8, 8], strides = [1, 1, 1]} : vector<16x8x8xf32> to vector<1x8x8xf32>
    %147 = vector.shape_cast %146 : vector<1x8x8xf32> to vector<8x8xf32>
    %c0_62 = arith.constant 0 : index
    %c0_63 = arith.constant 0 : index
    %c48 = arith.constant 48 : index
    %148 = vector.load %arg5[%c0_62, %c0_63, %c48] : memref<1x8x128xf32, #tpu.memory_space<vmem>>, vector<1x8x8xf32>
    %149 = vector.shape_cast %148 : vector<1x8x8xf32> to vector<8x8xf32>
    %150 = vector.shape_cast %147 : vector<8x8xf32> to vector<1x8x8xf32>
    tpu.vector_store %arg5[%c0_62, %c0_63, %c48], %150 {strides = array<i32>} : memref<1x8x128xf32, #tpu.memory_space<vmem>>, vector<1x8x8xf32>,
    %151 = vector.extract_strided_slice %115 {offsets = [7, 0, 0], sizes = [1, 8, 8], strides = [1, 1, 1]} : vector<16x8x8xf32> to vector<1x8x8xf32>
    %152 = vector.shape_cast %151 : vector<1x8x8xf32> to vector<8x8xf32>
    %c0_64 = arith.constant 0 : index
    %c0_65 = arith.constant 0 : index
    %c56 = arith.constant 56 : index
    %153 = vector.load %arg5[%c0_64, %c0_65, %c56] : memref<1x8x128xf32, #tpu.memory_space<vmem>>, vector<1x8x8xf32>
    %154 = vector.shape_cast %153 : vector<1x8x8xf32> to vector<8x8xf32>
    %155 = vector.shape_cast %152 : vector<8x8xf32> to vector<1x8x8xf32>
    tpu.vector_store %arg5[%c0_64, %c0_65, %c56], %155 {strides = array<i32>} : memref<1x8x128xf32, #tpu.memory_space<vmem>>, vector<1x8x8xf32>,
    %156 = vector.extract_strided_slice %115 {offsets = [8, 0, 0], sizes = [1, 8, 8], strides = [1, 1, 1]} : vector<16x8x8xf32> to vector<1x8x8xf32>
    %157 = vector.shape_cast %156 : vector<1x8x8xf32> to vector<8x8xf32>
    %c0_66 = arith.constant 0 : index
    %c0_67 = arith.constant 0 : index
    %c64 = arith.constant 64 : index
    %158 = vector.load %arg5[%c0_66, %c0_67, %c64] : memref<1x8x128xf32, #tpu.memory_space<vmem>>, vector<1x8x8xf32>
    %159 = vector.shape_cast %158 : vector<1x8x8xf32> to vector<8x8xf32>
    %160 = vector.shape_cast %157 : vector<8x8xf32> to vector<1x8x8xf32>
    tpu.vector_store %arg5[%c0_66, %c0_67, %c64], %160 {strides = array<i32>} : memref<1x8x128xf32, #tpu.memory_space<vmem>>, vector<1x8x8xf32>,
    %161 = vector.extract_strided_slice %115 {offsets = [9, 0, 0], sizes = [1, 8, 8], strides = [1, 1, 1]} : vector<16x8x8xf32> to vector<1x8x8xf32>
    %162 = vector.shape_cast %161 : vector<1x8x8xf32> to vector<8x8xf32>
    %c0_68 = arith.constant 0 : index
    %c0_69 = arith.constant 0 : index
    %c72 = arith.constant 72 : index
    %163 = vector.load %arg5[%c0_68, %c0_69, %c72] : memref<1x8x128xf32, #tpu.memory_space<vmem>>, vector<1x8x8xf32>
    %164 = vector.shape_cast %163 : vector<1x8x8xf32> to vector<8x8xf32>
    %165 = vector.shape_cast %162 : vector<8x8xf32> to vector<1x8x8xf32>
    tpu.vector_store %arg5[%c0_68, %c0_69, %c72], %165 {strides = array<i32>} : memref<1x8x128xf32, #tpu.memory_space<vmem>>, vector<1x8x8xf32>,
    %166 = vector.extract_strided_slice %115 {offsets = [10, 0, 0], sizes = [1, 8, 8], strides = [1, 1, 1]} : vector<16x8x8xf32> to vector<1x8x8xf32>
    %167 = vector.shape_cast %166 : vector<1x8x8xf32> to vector<8x8xf32>
    %c0_70 = arith.constant 0 : index
    %c0_71 = arith.constant 0 : index
    %c80 = arith.constant 80 : index
    %168 = vector.load %arg5[%c0_70, %c0_71, %c80] : memref<1x8x128xf32, #tpu.memory_space<vmem>>, vector<1x8x8xf32>
    %169 = vector.shape_cast %168 : vector<1x8x8xf32> to vector<8x8xf32>
    %170 = vector.shape_cast %167 : vector<8x8xf32> to vector<1x8x8xf32>
    tpu.vector_store %arg5[%c0_70, %c0_71, %c80], %170 {strides = array<i32>} : memref<1x8x128xf32, #tpu.memory_space<vmem>>, vector<1x8x8xf32>,
    %171 = vector.extract_strided_slice %115 {offsets = [11, 0, 0], sizes = [1, 8, 8], strides = [1, 1, 1]} : vector<16x8x8xf32> to vector<1x8x8xf32>
    %172 = vector.shape_cast %171 : vector<1x8x8xf32> to vector<8x8xf32>
    %c0_72 = arith.constant 0 : index
    %c0_73 = arith.constant 0 : index
    %c88 = arith.constant 88 : index
    %173 = vector.load %arg5[%c0_72, %c0_73, %c88] : memref<1x8x128xf32, #tpu.memory_space<vmem>>, vector<1x8x8xf32>
    %174 = vector.shape_cast %173 : vector<1x8x8xf32> to vector<8x8xf32>
    %175 = vector.shape_cast %172 : vector<8x8xf32> to vector<1x8x8xf32>
    tpu.vector_store %arg5[%c0_72, %c0_73, %c88], %175 {strides = array<i32>} : memref<1x8x128xf32, #tpu.memory_space<vmem>>, vector<1x8x8xf32>,
    %176 = vector.extract_strided_slice %115 {offsets = [12, 0, 0], sizes = [1, 8, 8], strides = [1, 1, 1]} : vector<16x8x8xf32> to vector<1x8x8xf32>
    %177 = vector.shape_cast %176 : vector<1x8x8xf32> to vector<8x8xf32>
    %c0_74 = arith.constant 0 : index
    %c0_75 = arith.constant 0 : index
    %c96 = arith.constant 96 : index
    %178 = vector.load %arg5[%c0_74, %c0_75, %c96] : memref<1x8x128xf32, #tpu.memory_space<vmem>>, vector<1x8x8xf32>
    %179 = vector.shape_cast %178 : vector<1x8x8xf32> to vector<8x8xf32>
    %180 = vector.shape_cast %177 : vector<8x8xf32> to vector<1x8x8xf32>
    tpu.vector_store %arg5[%c0_74, %c0_75, %c96], %180 {strides = array<i32>} : memref<1x8x128xf32, #tpu.memory_space<vmem>>, vector<1x8x8xf32>,
    %181 = vector.extract_strided_slice %115 {offsets = [13, 0, 0], sizes = [1, 8, 8], strides = [1, 1, 1]} : vector<16x8x8xf32> to vector<1x8x8xf32>
    %182 = vector.shape_cast %181 : vector<1x8x8xf32> to vector<8x8xf32>
    %c0_76 = arith.constant 0 : index
    %c0_77 = arith.constant 0 : index
    %c104 = arith.constant 104 : index
    %183 = vector.load %arg5[%c0_76, %c0_77, %c104] : memref<1x8x128xf32, #tpu.memory_space<vmem>>, vector<1x8x8xf32>
    %184 = vector.shape_cast %183 : vector<1x8x8xf32> to vector<8x8xf32>
    %185 = vector.shape_cast %182 : vector<8x8xf32> to vector<1x8x8xf32>
    tpu.vector_store %arg5[%c0_76, %c0_77, %c104], %185 {strides = array<i32>} : memref<1x8x128xf32, #tpu.memory_space<vmem>>, vector<1x8x8xf32>,
    %186 = vector.extract_strided_slice %115 {offsets = [14, 0, 0], sizes = [1, 8, 8], strides = [1, 1, 1]} : vector<16x8x8xf32> to vector<1x8x8xf32>
    %187 = vector.shape_cast %186 : vector<1x8x8xf32> to vector<8x8xf32>
    %c0_78 = arith.constant 0 : index
    %c0_79 = arith.constant 0 : index
    %c112 = arith.constant 112 : index
    %188 = vector.load %arg5[%c0_78, %c0_79, %c112] : memref<1x8x128xf32, #tpu.memory_space<vmem>>, vector<1x8x8xf32>
    %189 = vector.shape_cast %188 : vector<1x8x8xf32> to vector<8x8xf32>
    %190 = vector.shape_cast %187 : vector<8x8xf32> to vector<1x8x8xf32>
    tpu.vector_store %arg5[%c0_78, %c0_79, %c112], %190 {strides = array<i32>} : memref<1x8x128xf32, #tpu.memory_space<vmem>>, vector<1x8x8xf32>,
    %191 = vector.extract_strided_slice %115 {offsets = [15, 0, 0], sizes = [1, 8, 8], strides = [1, 1, 1]} : vector<16x8x8xf32> to vector<1x8x8xf32>
    %192 = vector.shape_cast %191 : vector<1x8x8xf32> to vector<8x8xf32>
    %c0_80 = arith.constant 0 : index
    %c0_81 = arith.constant 0 : index
    %c120 = arith.constant 120 : index
    %193 = vector.load %arg5[%c0_80, %c0_81, %c120] : memref<1x8x128xf32, #tpu.memory_space<vmem>>, vector<1x8x8xf32>
    %194 = vector.shape_cast %193 : vector<1x8x8xf32> to vector<8x8xf32>
    %195 = vector.shape_cast %192 : vector<8x8xf32> to vector<1x8x8xf32>
    tpu.vector_store %arg5[%c0_80, %c0_81, %c120], %195 {strides = array<i32>} : memref<1x8x128xf32, #tpu.memory_space<vmem>>, vector<1x8x8xf32>,
    return
  }
  func.func @transform_0(%arg0: i32) -> (i32, i32) {
    %c0_i32 = arith.constant 0 : i32
    %c0_i32_0 = arith.constant 0 : i32
    return %arg0, %c0_i32 : i32, i32
  }
  func.func @transform_1(%arg0: i32) -> (i32, i32, i32) {
    %c0_i32 = arith.constant 0 : i32
    %c0_i32_0 = arith.constant 0 : i32
    %c0_i32_1 = arith.constant 0 : i32
    return %arg0, %c0_i32, %c0_i32_0 : i32, i32, i32
  }
  func.func @transform_2(%arg0: i32) -> (i32, i32) {
    %c0_i32 = arith.constant 0 : i32
    %c0_i32_0 = arith.constant 0 : i32
    %c0_i32_1 = arith.constant 0 : i32
    return %c0_i32, %c0_i32_0 : i32, i32
  }
  func.func @transform_3(%arg0: i32) -> (i32, i32) {
    %c0_i32 = arith.constant 0 : i32
    %c0_i32_0 = arith.constant 0 : i32
    %c0_i32_1 = arith.constant 0 : i32
    return %c0_i32, %c0_i32_0 : i32, i32
  }
  func.func @transform_4(%arg0: i32) -> (i32, i32, i32) {
    %c0_i32 = arith.constant 0 : i32
    %c0_i32_0 = arith.constant 0 : i32
    %c0_i32_1 = arith.constant 0 : i32
    return %arg0, %c0_i32, %c0_i32_0 : i32, i32, i32
  }
}

</mosaic_0001>

<llo_original>
// kernel: tpu_custom_call.1
$region0: #{tpu_custom_call.1}
  #allocation0 [shape = 'u32[]', space=smem, size = 0x4, offset = 0x4, fixed_abs, tag = 'smem constant byte address 0x4 - core index']
  #allocation1 [shape = 'u32[144,128]{1,0:T(1,128)}', space=vmem, size = 0x12000, scoped, tag = 'internal scratch']
  #allocation2 [shape = 'f32[128,32]{1,0:T(8,128)}', space=vmem, size = 0x10000, scoped, tag = 'scratch operand']
  %s0 = inlined_call_operand.vmem [shape: f32[256,32], index: 0, kind: input, shape index: {}]
  %s1 = inlined_call_operand.vmem [shape: s8[32,8,8], index: 1, kind: input, shape index: {}]
  %s2 = inlined_call_operand.vmem [shape: f32[32,36], index: 2, kind: input, shape index: {}]
  %s3 = inlined_call_operand.vmem [shape: f32[32,10], index: 3, kind: input, shape index: {}]
  %s4 = inlined_call_operand.hbm [shape: f32[2,8,128], index: 4, kind: output, shape index: {}]
  %s5 = sld [smem:[#allocation0]]
  $region49: #{tpu_custom_call.1} parent=0
    _
  %s7 = ssub.s32 1, %s5
  %s8 = scalar_select 0, %s7, %s5
  $region1: #{tpu_custom_call.1} parent=0
    #allocation3 [shape = 'u8[8192]{0}', space=vmem, size = 0x2000, scoped, tag = 'output window, operand 0']
    #allocation4 [shape = 's32[2]{0}', space=sflag, size = 0x8, scoped, tag = 'scoped memory for tpu_custom_call.1']
    %9 = vsyncpa [#allocation4], 0
    %s10 = scalar_lea.sflag [#allocation4], 1
    %11 = vsyncpa %s10, 0
    loop: start=0, step=1, limit=4
    $region2: #{tpu_custom_call.1} parent=1 // loop_pre_header
      _
    $region3: #{tpu_custom_call.1} parent=1 // loop_header
      %s13 = sphi 0, %s17
      %p14 = scmp.ge.s32.totalorder %s13, 4
      %s23 = sphi 0, %s25
      %s26 = sphi 0, %s23
      %s27 = sphi 0, %s26
      %s43 = sphi 0, %s27
      %s49 = sphi 0, %s51
      %s52 = sphi 0, %s49
      %s53 = sphi 0, %s52
      %s69 = sphi 0, %s53
      %s73 = sphi 0, %s73
      %s75 = sphi 0, %s73
      %s76 = sphi 0, %s75
      %s90 = sphi 0, %s76
      %s94 = sphi 0, %s94
      %s96 = sphi 0, %s94
      %s97 = sphi 0, %s96
      %s111 = sphi 0, %s97
      %s117 = sphi 0, %s119
      %s120 = sphi 0, %s117
      %s121 = sphi 0, %s120
      %s137 = sphi 0, %s121
    $region4: #{tpu_custom_call.1} parent=1 // loop_header_branch
      %16 = sbr.rel (%p14) target = $region8
    $region5: #{tpu_custom_call.1} parent=1 // loop_body
      %s18 = ssub.s32 %s13, 1
      %s19 = ssub.s32 %s13, 2
      %s20 = sadd.s32 %s13, 1
      %s21 = ssub.s32 %s13, %s20
      %p22 = scmp.eq.s32.totalorder %s21, 0
      %s24 = sadd.s32 %s23, 1
      %s25 = scalar_select %p22, %s23, %s24
      %p28 = pneg %p22
      %p29 = scmp.eq.s32.totalorder %s13, 1
      %p30 = por %p28, %p29
      %p31 = scmp.ne.s32.totalorder %s23, %s26
      %p32 = scmp.eq.s32.totalorder %s13, 0
      %p33 = por %p31, %p32
      %p34 = scmp.ne.s32.totalorder %s23, %s26
      %p35 = scmp.eq.s32.totalorder %s18, 1
      %p36 = por %p34, %p35
      %p37 = scmp.ne.s32.totalorder %s26, %s27
      %p38 = scmp.eq.s32.totalorder %s18, 0
      %p39 = por %p37, %p38
      %p40 = scmp.ne.s32.totalorder %s26, %s27
      %p41 = scmp.eq.s32.totalorder %s19, 1
      %p42 = por %p40, %p41
      %p44 = scmp.ne.s32.totalorder %s27, %s43
      %p45 = scmp.eq.s32.totalorder %s19, 0
      %p46 = por %p44, %p45
      %s47 = ssub.s32 %s13, %s20
      %p48 = scmp.eq.s32.totalorder %s47, 0
      %s50 = sadd.s32 %s49, 1
      %s51 = scalar_select %p48, %s49, %s50
      %p54 = pneg %p48
      %p55 = scmp.eq.s32.totalorder %s13, 1
      %p56 = por %p54, %p55
      %p57 = scmp.ne.s32.totalorder %s49, %s52
      %p58 = scmp.eq.s32.totalorder %s13, 0
      %p59 = por %p57, %p58
      %p60 = scmp.ne.s32.totalorder %s49, %s52
      %p61 = scmp.eq.s32.totalorder %s18, 1
      %p62 = por %p60, %p61
      %p63 = scmp.ne.s32.totalorder %s52, %s53
      %p64 = scmp.eq.s32.totalorder %s18, 0
      %p65 = por %p63, %p64
      %p66 = scmp.ne.s32.totalorder %s52, %s53
      %p67 = scmp.eq.s32.totalorder %s19, 1
      %p68 = por %p66, %p67
      %p70 = scmp.ne.s32.totalorder %s53, %s69
      %p71 = scmp.eq.s32.totalorder %s19, 0
      %p72 = por %p70, %p71
      %s74 = sadd.s32 %s73, 1
      %p77 = scmp.eq.s32.totalorder %s13, 1
      %p78 = scmp.ne.s32.totalorder %s73, %s75
      %p79 = scmp.eq.s32.totalorder %s13, 0
      %p80 = por %p78, %p79
      %p81 = scmp.ne.s32.totalorder %s73, %s75
      %p82 = scmp.eq.s32.totalorder %s18, 1
      %p83 = por %p81, %p82
      %p84 = scmp.ne.s32.totalorder %s75, %s76
      %p85 = scmp.eq.s32.totalorder %s18, 0
      %p86 = por %p84, %p85
      %p87 = scmp.ne.s32.totalorder %s75, %s76
      %p88 = scmp.eq.s32.totalorder %s19, 1
      %p89 = por %p87, %p88
      %p91 = scmp.ne.s32.totalorder %s76, %s90
      %p92 = scmp.eq.s32.totalorder %s19, 0
      %p93 = por %p91, %p92
      %s95 = sadd.s32 %s94, 1
      %p98 = scmp.eq.s32.totalorder %s13, 1
      %p99 = scmp.ne.s32.totalorder %s94, %s96
      %p100 = scmp.eq.s32.totalorder %s13, 0
      %p101 = por %p99, %p100
      %p102 = scmp.ne.s32.totalorder %s94, %s96
      %p103 = scmp.eq.s32.totalorder %s18, 1
      %p104 = por %p102, %p103
      %p105 = scmp.ne.s32.totalorder %s96, %s97
      %p106 = scmp.eq.s32.totalorder %s18, 0
      %p107 = por %p105, %p106
      %p108 = scmp.ne.s32.totalorder %s96, %s97
      %p109 = scmp.eq.s32.totalorder %s19, 1
      %p110 = por %p108, %p109
      %p112 = scmp.ne.s32.totalorder %s97, %s111
      %p113 = scmp.eq.s32.totalorder %s19, 0
      %p114 = por %p112, %p113
      %s115 = ssub.s32 %s13, %s20
      %p116 = scmp.eq.s32.totalorder %s115, 0
      %s118 = sadd.s32 %s117, 1
      %s119 = scalar_select %p116, %s117, %s118
      %p122 = pneg %p116
      %p123 = scmp.eq.s32.totalorder %s13, 1
      %p124 = por %p122, %p123
      %p125 = scmp.ne.s32.totalorder %s117, %s120
      %p126 = scmp.eq.s32.totalorder %s13, 0
      %p127 = por %p125, %p126
      %p128 = scmp.ne.s32.totalorder %s117, %s120
      %p129 = scmp.eq.s32.totalorder %s18, 1
      %p130 = por %p128, %p129
      %p131 = scmp.ne.s32.totalorder %s120, %s121
      %p132 = scmp.eq.s32.totalorder %s18, 0
      %p133 = por %p131, %p132
      %p134 = scmp.ne.s32.totalorder %s120, %s121
      %p135 = scmp.eq.s32.totalorder %s19, 1
      %p136 = por %p134, %p135
      %p138 = scmp.ne.s32.totalorder %s121, %s137
      %p139 = scmp.eq.s32.totalorder %s19, 0
      %p140 = por %p138, %p139
      %p141 = scmp.le.s32.totalorder 1, %s13
      %p142 = scmp.lt.s32.totalorder %s13, 3
      %p143 = pnand %p141, %p142
      %p144 = pneg %p143
      // Predicated region
      $region9: #{tpu_custom_call.1} parent=5 // pred_check
        _
      $region10: #{tpu_custom_call.1} parent=5 // pred_check_branch
        %146 = sbr.rel (%p143) target = $region12
      $region11: #{tpu_custom_call.1} parent=5 // pred_region
        %s147 = ssub.s32 %s13, 1
        // Predicated region
        $region13: #{tpu_custom_call.1} parent=11 // pred_check
          %p148 = pneg %p86
        $region14: #{tpu_custom_call.1} parent=11 // pred_check_branch
          %150 = sbr.rel (%p148) target = $region16
        $region15: #{tpu_custom_call.1} parent=11 // pred_region
          _
        $region16: #{tpu_custom_call.1} parent=11 // pred_fallthru
          _
        // Predicated region
        $region17: #{tpu_custom_call.1} parent=11 // pred_check
          %p151 = pneg %p107
        $region18: #{tpu_custom_call.1} parent=11 // pred_check_branch
          %153 = sbr.rel (%p151) target = $region20
        $region19: #{tpu_custom_call.1} parent=11 // pred_region
          _
        $region20: #{tpu_custom_call.1} parent=11 // pred_fallthru
          _
      $region12: #{tpu_custom_call.1} parent=5 // pred_fallthru
        _
      %p154 = scmp.lt.s32.totalorder %s13, 2
      // Predicated region
      $region21: #{tpu_custom_call.1} parent=5 // pred_check
        %p155 = pneg %p154
      $region22: #{tpu_custom_call.1} parent=5 // pred_check_branch
        %157 = sbr.rel (%p155) target = $region24
      $region23: #{tpu_custom_call.1} parent=5 // pred_region
        // Predicated region
        $region25: #{tpu_custom_call.1} parent=23 // pred_check
          %p158 = pneg %p33
        $region26: #{tpu_custom_call.1} parent=23 // pred_check_branch
          %160 = sbr.rel (%p158) target = $region28
        $region27: #{tpu_custom_call.1} parent=23 // pred_region
          %s161 = smul.u32 16, %s13
          %p162 = scmp.lt.s32.totalorder %s161, 31
          %s163 = scalar_select %p162, %s161, 31
          %s164 = smul.addr %s163, 8
          %s165 = scalar_lea.vmem %s0, %s164
          %s166 = smul.u32 16, %s13
        $region28: #{tpu_custom_call.1} parent=23 // pred_fallthru
          _
        // Predicated region
        $region29: #{tpu_custom_call.1} parent=23 // pred_check
          %p167 = pneg %p59
        $region30: #{tpu_custom_call.1} parent=23 // pred_check_branch
          %169 = sbr.rel (%p167) target = $region32
        $region31: #{tpu_custom_call.1} parent=23 // pred_region
          %s170 = smul.u32 16, %s13
          %p171 = scmp.lt.s32.totalorder %s170, 31
          %s172 = scalar_select %p171, %s170, 31
          %s173 = smul.addr %s172, 2
          %s174 = scalar_lea.vmem %s1, %s173
          %s175 = smul.u32 16, %s13
        $region32: #{tpu_custom_call.1} parent=23 // pred_fallthru
          _
      $region24: #{tpu_custom_call.1} parent=5 // pred_fallthru
        _
      %p176 = scmp.le.s32.totalorder 1, %s13
      %p177 = scmp.lt.s32.totalorder %s13, 3
      %p178 = pnand %p176, %p177
      %p179 = pneg %p178
      // Predicated region
      $region33: #{tpu_custom_call.1} parent=5 // pred_check
        _
      $region34: #{tpu_custom_call.1} parent=5 // pred_check_branch
        %181 = sbr.rel (%p178) target = $region36
      $region35: #{tpu_custom_call.1} parent=5 // pred_region
        %s182 = ssub.s32 %s13, 1
        %s183 = smul.u32 16, %s18
        %p184 = scmp.lt.s32.totalorder %s183, 31
        %s185 = scalar_select %p184, %s183, 31
        %s186 = smul.addr %s185, 8
        %s187 = scalar_lea.vmem %s0, %s186
        %p188 = pneg %p39
        %p189 = pneg %p36
        %s190 = smul.u32 16, %s18
        %p191 = scmp.lt.s32.totalorder %s190, 31
        %s192 = scalar_select %p191, %s190, 31
        %s193 = smul.addr %s192, 2
        %s194 = scalar_lea.vmem %s1, %s193
        %p195 = pneg %p65
        %p196 = pneg %p62
        %p197 = pneg %p86
        %p198 = pneg %p83
        %p199 = pneg %p107
        %p200 = pneg %p104
        %p201 = pneg %p133
        %p202 = pneg %p130
        %s203 = sand.u32 %s120, 1
        %s204 = scalar_lea.sflag [#allocation4], %s203
        %s205 = sand.u32 %s120, 1
        %s206 = smul.addr %s205, 8
        %s207 = scalar_lea.vmem [#allocation3], %s206
        %s208 = smul.u32 16, %s18
        %p209 = scmp.lt.s32.totalorder %s208, 31
        %s210 = scalar_select %p209, %s208, 31
        %s211 = smul.addr %s210, 8
        %s212 = scalar_lea.vmem %s0, %s211
        %s213 = smul.u32 16, %s18
        %s214 = smul.u32 16, %s18
        %p215 = scmp.lt.s32.totalorder %s214, 31
        %s216 = scalar_select %p215, %s214, 31
        %s217 = smul.addr %s216, 2
        %s218 = scalar_lea.vmem %s1, %s217
        %s219 = smul.u32 16, %s18
        %v220 = vld [vmem:[%s212] sm:$0xff]
        %v221 = vld [vmem:[%s212 + $0x8] sm:$0xff]
        %v222 = vld [vmem:[%s212 + $0x10] sm:$0xff]
        %v223 = vld [vmem:[%s212 + $0x18] sm:$0xff]
        %v224 = vld [vmem:[%s212 + $0x20] sm:$0xff]
        %v225 = vld [vmem:[%s212 + $0x28] sm:$0xff]
        %v226 = vld [vmem:[%s212 + $0x30] sm:$0xff]
        %v227 = vld [vmem:[%s212 + $0x38] sm:$0xff]
        %v228 = vld [vmem:[%s212 + $0x40] sm:$0xff]
        %v229 = vld [vmem:[%s212 + $0x48] sm:$0xff]
        %v230 = vld [vmem:[%s212 + $0x50] sm:$0xff]
        %v231 = vld [vmem:[%s212 + $0x58] sm:$0xff]
        %v232 = vld [vmem:[%s212 + $0x60] sm:$0xff]
        %v233 = vld [vmem:[%s212 + $0x68] sm:$0xff]
        %v234 = vld [vmem:[%s212 + $0x70] sm:$0xff]
        %v235 = vld [vmem:[%s212 + $0x78] sm:$0xff]
        %v236 = vld [vmem:[%s2] sm:$0xff]
        %v237 = vld [vmem:[%s2 + $0x8] sm:$0xff]
        %v238 = vld [vmem:[%s2 + $0x10] sm:$0xff]
        %v239 = vld [vmem:[%s2 + $0x18] sm:$0xff]
        %vm240 = vcmask 261120
        %v242 = vsel %vm240, %v220, 0
        %v245 = vsel %vm240, %v221, 0
        %v248 = vsel %vm240, %v222, 0
        %v251 = vsel %vm240, %v223, 0
        %v254 = vsel %vm240, %v224, 0
        %v257 = vsel %vm240, %v225, 0
        %v260 = vsel %vm240, %v226, 0
        %v263 = vsel %vm240, %v227, 0
        %v266 = vsel %vm240, %v228, 0
        %v269 = vsel %vm240, %v229, 0
        %v272 = vsel %vm240, %v230, 0
        %v275 = vsel %vm240, %v231, 0
        %v278 = vsel %vm240, %v232, 0
        %v281 = vsel %vm240, %v233, 0
        %v284 = vsel %vm240, %v234, 0
        %v287 = vsel %vm240, %v235, 0
        %289 = vmatprep.subr.mxu0 0.0
        %290 = vmatpush1.msra.mxu0 %v236
        %291 = vmatprep.subr.mxu0 0.0
        %292 = vmatpush1.msra.mxu0 %v237
        %293 = vmatprep.subr.mxu0 0.0
        %294 = vmatpush1.msra.mxu0 %v238
        %295 = vmatprep.subr.mxu0 0.0
        %296 = vmatpush1.msra.mxu0 %v239
        %297 = vmatprep.subr.mxu0 0.0
        %298 = vmatpush1.msra.mxu0 0.0
        %299 = vmatprep.subr.mxu0 0.0
        %300 = vmatpush1.msra.mxu0 0.0
        %301 = vmatprep.subr.mxu0 0.0
        %302 = vmatpush1.msra.mxu0 0.0
        %303 = vmatprep.subr.mxu0 0.0
        %304 = vmatpush1.msra.mxu0 0.0
        %305 = vmatprep.subr.mxu0 0.0
        %306 = vmatpush1.msra.mxu0 0.0
        %307 = vmatprep.subr.mxu0 0.0
        %308 = vmatpush1.msra.mxu0 0.0
        %309 = vmatprep.subr.mxu0 0.0
        %310 = vmatpush1.msra.mxu0 0.0
        %311 = vmatprep.subr.mxu0 0.0
        %312 = vmatpush1.msra.mxu0 0.0
        %313 = vmatprep.subr.mxu0 0.0
        %314 = vmatpush1.msra.mxu0 0.0
        %315 = vmatprep.subr.mxu0 0.0
        %316 = vmatpush1.msra.mxu0 0.0
        %317 = vmatprep.subr.mxu0 0.0
        %318 = vmatpush1.msra.mxu0 0.0
        %319 = vmatprep.subr.mxu0 0.0
        %320 = vmatpush1.msra.mxu0 0.0
        %321 = vmatprep.subr.mxu0 0.0
        %322 = vmatpush1.msra.mxu0 0.0
        %323 = vmatprep.subr.mxu0 0.0
        %324 = vmatpush1.msra.mxu0 0.0
        %325 = vmatprep.subr.mxu0 0.0
        %326 = vmatpush1.msra.mxu0 0.0
        %327 = vmatprep.subr.mxu0 0.0
        %328 = vmatpush1.msra.mxu0 0.0
        %329 = vmatprep.subr.mxu0 0.0
        %330 = vmatpush1.msra.mxu0 0.0
        %331 = vmatprep.subr.mxu0 0.0
        %332 = vmatpush1.msra.mxu0 0.0
        %333 = vmatprep.subr.mxu0 0.0
        %334 = vmatpush1.msra.mxu0 0.0
        %335 = vmatprep.subr.mxu0 0.0
        %336 = vmatpush1.msra.mxu0 0.0
        %337 = vmatprep.subr.mxu0 0.0
        %338 = vmatpush1.msra.mxu0 0.0
        %339 = vmatprep.subr.mxu0 0.0
        %340 = vmatpush1.msra.mxu0 0.0
        %341 = vmatprep.subr.mxu0 0.0
        %342 = vmatpush1.msra.mxu0 0.0
        %343 = vmatprep.subr.mxu0 0.0
        %344 = vmatpush1.msra.mxu0 0.0
        %345 = vmatprep.subr.mxu0 0.0
        %346 = vmatpush1.msra.mxu0 0.0
        %347 = vmatprep.subr.mxu0 0.0
        %348 = vmatpush1.msra.mxu0 0.0
        %349 = vmatprep.subr.mxu0 0.0
        %350 = vmatpush1.msra.mxu0 0.0
        %351 = vmatprep.subr.mxu0 0.0
        %352 = vmatpush1.msra.mxu0 0.0
        %353 = vmatprep.mubr.f32.mxu0 0.0
        %354 = vmatmul.mubr.f32.gmra.mrb[0].mxu0 %v242
        %v355 = vpop.f32.mrb[0].mxu0
        %v356 = vadd.f32 0.0, %v355
        %v357 = vpop.f32.mrb[0].mxu0
        %358 = vmatprep.mubr.f32.mxu0 0.0
        %359 = vmatmul.mubr.f32.gmra.mrb[0].mxu0 %v245
        %v360 = vpop.f32.mrb[0].mxu0
        %v361 = vadd.f32 0.0, %v360
        %v362 = vpop.f32.mrb[0].mxu0
        %363 = vmatprep.mubr.f32.mxu0 0.0
        %364 = vmatmul.mubr.f32.gmra.mrb[0].mxu0 %v248
        %v365 = vpop.f32.mrb[0].mxu0
        %v366 = vadd.f32 0.0, %v365
        %v367 = vpop.f32.mrb[0].mxu0
        %368 = vmatprep.mubr.f32.mxu0 0.0
        %369 = vmatmul.mubr.f32.gmra.mrb[0].mxu0 %v251
        %v370 = vpop.f32.mrb[0].mxu0
        %v371 = vadd.f32 0.0, %v370
        %v372 = vpop.f32.mrb[0].mxu0
        %373 = vmatprep.mubr.f32.mxu0 0.0
        %374 = vmatmul.mubr.f32.gmra.mrb[0].mxu0 %v254
        %v375 = vpop.f32.mrb[0].mxu0
        %v376 = vadd.f32 0.0, %v375
        %v377 = vpop.f32.mrb[0].mxu0
        %378 = vmatprep.mubr.f32.mxu0 0.0
        %379 = vmatmul.mubr.f32.gmra.mrb[0].mxu0 %v257
        %v380 = vpop.f32.mrb[0].mxu0
        %v381 = vadd.f32 0.0, %v380
        %v382 = vpop.f32.mrb[0].mxu0
        %383 = vmatprep.mubr.f32.mxu0 0.0
        %384 = vmatmul.mubr.f32.gmra.mrb[0].mxu0 %v260
        %v385 = vpop.f32.mrb[0].mxu0
        %v386 = vadd.f32 0.0, %v385
        %v387 = vpop.f32.mrb[0].mxu0
        %388 = vmatprep.mubr.f32.mxu0 0.0
        %389 = vmatmul.mubr.f32.gmra.mrb[0].mxu0 %v263
        %v390 = vpop.f32.mrb[0].mxu0
        %v391 = vadd.f32 0.0, %v390
        %v392 = vpop.f32.mrb[0].mxu0
        %393 = vmatprep.mubr.f32.mxu0 0.0
        %394 = vmatmul.mubr.f32.gmra.mrb[0].mxu0 %v266
        %v395 = vpop.f32.mrb[0].mxu0
        %v396 = vadd.f32 0.0, %v395
        %v397 = vpop.f32.mrb[0].mxu0
        %398 = vmatprep.mubr.f32.mxu0 0.0
        %399 = vmatmul.mubr.f32.gmra.mrb[0].mxu0 %v269
        %v400 = vpop.f32.mrb[0].mxu0
        %v401 = vadd.f32 0.0, %v400
        %v402 = vpop.f32.mrb[0].mxu0
        %403 = vmatprep.mubr.f32.mxu0 0.0
        %404 = vmatmul.mubr.f32.gmra.mrb[0].mxu0 %v272
        %v405 = vpop.f32.mrb[0].mxu0
        %v406 = vadd.f32 0.0, %v405
        %v407 = vpop.f32.mrb[0].mxu0
        %408 = vmatprep.mubr.f32.mxu0 0.0
        %409 = vmatmul.mubr.f32.gmra.mrb[0].mxu0 %v275
        %v410 = vpop.f32.mrb[0].mxu0
        %v411 = vadd.f32 0.0, %v410
        %v412 = vpop.f32.mrb[0].mxu0
        %413 = vmatprep.mubr.f32.mxu0 0.0
        %414 = vmatmul.mubr.f32.gmra.mrb[0].mxu0 %v278
        %v415 = vpop.f32.mrb[0].mxu0
        %v416 = vadd.f32 0.0, %v415
        %v417 = vpop.f32.mrb[0].mxu0
        %418 = vmatprep.mubr.f32.mxu0 0.0
        %419 = vmatmul.mubr.f32.gmra.mrb[0].mxu0 %v281
        %v420 = vpop.f32.mrb[0].mxu0
        %v421 = vadd.f32 0.0, %v420
        %v422 = vpop.f32.mrb[0].mxu0
        %423 = vmatprep.mubr.f32.mxu0 0.0
        %424 = vmatmul.mubr.f32.gmra.mrb[0].mxu0 %v284
        %v425 = vpop.f32.mrb[0].mxu0
        %v426 = vadd.f32 0.0, %v425
        %v427 = vpop.f32.mrb[0].mxu0
        %428 = vmatprep.mubr.f32.mxu0 0.0
        %429 = vmatmul.mubr.f32.gmra.mrb[0].mxu0 %v287
        %v430 = vpop.f32.mrb[0].mxu0
        %v431 = vadd.f32 0.0, %v430
        %v432 = vpop.f32.mrb[0].mxu0
        %433 = vdwg.mxu0
        %v434 = vld [vmem:[%s218] sm:$0x3]
        %v435 = vld [vmem:[%s218 + $0x2] sm:$0x3]
        %v436 = vld [vmem:[%s218 + $0x4] sm:$0x3]
        %v437 = vld [vmem:[%s218 + $0x6] sm:$0x3]
        %v438 = vld [vmem:[%s218 + $0x8] sm:$0x3]
        %v439 = vld [vmem:[%s218 + $0xa] sm:$0x3]
        %v440 = vld [vmem:[%s218 + $0xc] sm:$0x3]
        %v441 = vld [vmem:[%s218 + $0xe] sm:$0x3]
        %v442 = vld [vmem:[%s218 + $0x10] sm:$0x3]
        %v443 = vld [vmem:[%s218 + $0x12] sm:$0x3]
        %v444 = vld [vmem:[%s218 + $0x14] sm:$0x3]
        %v445 = vld [vmem:[%s218 + $0x16] sm:$0x3]
        %v446 = vld [vmem:[%s218 + $0x18] sm:$0x3]
        %v447 = vld [vmem:[%s218 + $0x1a] sm:$0x3]
        %v448 = vld [vmem:[%s218 + $0x1c] sm:$0x3]
        %v449 = vld [vmem:[%s218 + $0x1e] sm:$0x3]
        %v450 = vunpack.c.0.s8 %v434
        %v451 = vunpack.c.0.s8 %v435
        %v452 = vunpack.c.0.s8 %v436
        %v453 = vunpack.c.0.s8 %v437
        %v454 = vunpack.c.0.s8 %v438
        %v455 = vunpack.c.0.s8 %v439
        %v456 = vunpack.c.0.s8 %v440
        %v457 = vunpack.c.0.s8 %v441
        %v458 = vunpack.c.0.s8 %v442
        %v459 = vunpack.c.0.s8 %v443
        %v460 = vunpack.c.0.s8 %v444
        %v461 = vunpack.c.0.s8 %v445
        %v462 = vunpack.c.0.s8 %v446
        %v463 = vunpack.c.0.s8 %v447
        %v464 = vunpack.c.0.s8 %v448
        %v465 = vunpack.c.0.s8 %v449
        %v466 = vcvt.s32.f32 %v450
        %v467 = vcvt.s32.f32 %v451
        %v468 = vcvt.s32.f32 %v452
        %v469 = vcvt.s32.f32 %v453
        %v470 = vcvt.s32.f32 %v454
        %v471 = vcvt.s32.f32 %v455
        %v472 = vcvt.s32.f32 %v456
        %v473 = vcvt.s32.f32 %v457
        %v474 = vcvt.s32.f32 %v458
        %v475 = vcvt.s32.f32 %v459
        %v476 = vcvt.s32.f32 %v460
        %v477 = vcvt.s32.f32 %v461
        %v478 = vcvt.s32.f32 %v462
        %v479 = vcvt.s32.f32 %v463
        %v480 = vcvt.s32.f32 %v464
        %v481 = vcvt.s32.f32 %v465
        %498 = vrot.lane.b32.xlu0 %v356, 96
        %v499 = vpop.permute.xlu0 %498
        %500 = vrot.lane.b32.xlu0 %v361, 96
        %v501 = vpop.permute.xlu0 %500
        %502 = vrot.lane.b32.xlu0 %v366, 96
        %v503 = vpop.permute.xlu0 %502
        %504 = vrot.lane.b32.xlu0 %v371, 96
        %v505 = vpop.permute.xlu0 %504
        %506 = vrot.lane.b32.xlu0 %v376, 96
        %v507 = vpop.permute.xlu0 %506
        %508 = vrot.lane.b32.xlu0 %v381, 96
        %v509 = vpop.permute.xlu0 %508
        %510 = vrot.lane.b32.xlu0 %v386, 96
        %v511 = vpop.permute.xlu0 %510
        %512 = vrot.lane.b32.xlu0 %v391, 96
        %v513 = vpop.permute.xlu0 %512
        %514 = vrot.lane.b32.xlu0 %v396, 96
        %v515 = vpop.permute.xlu0 %514
        %516 = vrot.lane.b32.xlu0 %v401, 96
        %v517 = vpop.permute.xlu0 %516
        %518 = vrot.lane.b32.xlu0 %v406, 96
        %v519 = vpop.permute.xlu0 %518
        %520 = vrot.lane.b32.xlu0 %v411, 96
        %v521 = vpop.permute.xlu0 %520
        %522 = vrot.lane.b32.xlu0 %v416, 96
        %v523 = vpop.permute.xlu0 %522
        %524 = vrot.lane.b32.xlu0 %v421, 96
        %v525 = vpop.permute.xlu0 %524
        %526 = vrot.lane.b32.xlu0 %v426, 96
        %v527 = vpop.permute.xlu0 %526
        %528 = vrot.lane.b32.xlu0 %v431, 96
        %v529 = vpop.permute.xlu0 %528
        %vm546 = vcmask 7168
        %v547 = vsel %vm546, %v499, 1.0
        %v548 = vsel %vm546, %v501, 1.0
        %v549 = vsel %vm546, %v503, 1.0
        %v550 = vsel %vm546, %v505, 1.0
        %v551 = vsel %vm546, %v507, 1.0
        %v552 = vsel %vm546, %v509, 1.0
        %v553 = vsel %vm546, %v511, 1.0
        %v554 = vsel %vm546, %v513, 1.0
        %v555 = vsel %vm546, %v515, 1.0
        %v556 = vsel %vm546, %v517, 1.0
        %v557 = vsel %vm546, %v519, 1.0
        %v558 = vsel %vm546, %v521, 1.0
        %v559 = vsel %vm546, %v523, 1.0
        %v560 = vsel %vm546, %v525, 1.0
        %v561 = vsel %vm546, %v527, 1.0
        %v562 = vsel %vm546, %v529, 1.0
        %563 = vrot.lane.b32.xlu0 %v356, 95
        %v564 = vpop.permute.xlu0 %563
        %565 = vrot.lane.b32.xlu0 %v361, 95
        %v566 = vpop.permute.xlu0 %565
        %567 = vrot.lane.b32.xlu0 %v366, 95
        %v568 = vpop.permute.xlu0 %567
        %569 = vrot.lane.b32.xlu0 %v371, 95
        %v570 = vpop.permute.xlu0 %569
        %571 = vrot.lane.b32.xlu0 %v376, 95
        %v572 = vpop.permute.xlu0 %571
        %573 = vrot.lane.b32.xlu0 %v381, 95
        %v574 = vpop.permute.xlu0 %573
        %575 = vrot.lane.b32.xlu0 %v386, 95
        %v576 = vpop.permute.xlu0 %575
        %577 = vrot.lane.b32.xlu0 %v391, 95
        %v578 = vpop.permute.xlu0 %577
        %579 = vrot.lane.b32.xlu0 %v396, 95
        %v580 = vpop.permute.xlu0 %579
        %581 = vrot.lane.b32.xlu0 %v401, 95
        %v582 = vpop.permute.xlu0 %581
        %583 = vrot.lane.b32.xlu0 %v406, 95
        %v584 = vpop.permute.xlu0 %583
        %585 = vrot.lane.b32.xlu0 %v411, 95
        %v586 = vpop.permute.xlu0 %585
        %587 = vrot.lane.b32.xlu0 %v416, 95
        %v588 = vpop.permute.xlu0 %587
        %589 = vrot.lane.b32.xlu0 %v421, 95
        %v590 = vpop.permute.xlu0 %589
        %591 = vrot.lane.b32.xlu0 %v426, 95
        %v592 = vpop.permute.xlu0 %591
        %593 = vrot.lane.b32.xlu0 %v431, 95
        %v594 = vpop.permute.xlu0 %593
        %v611 = vsel %vm546, 1.0, %v564
        %v612 = vsel %vm546, 1.0, %v566
        %v613 = vsel %vm546, 1.0, %v568
        %v614 = vsel %vm546, 1.0, %v570
        %v615 = vsel %vm546, 1.0, %v572
        %v616 = vsel %vm546, 1.0, %v574
        %v617 = vsel %vm546, 1.0, %v576
        %v618 = vsel %vm546, 1.0, %v578
        %v619 = vsel %vm546, 1.0, %v580
        %v620 = vsel %vm546, 1.0, %v582
        %v621 = vsel %vm546, 1.0, %v584
        %v622 = vsel %vm546, 1.0, %v586
        %v623 = vsel %vm546, 1.0, %v588
        %v624 = vsel %vm546, 1.0, %v590
        %v625 = vsel %vm546, 1.0, %v592
        %v626 = vsel %vm546, 1.0, %v594
        %vm627 = vcmask 15360
        %v629 = vsel %vm627, %v547, 0
        %v632 = vsel %vm627, %v611, 0
        %634 = vmatprep.subr.mxu0 0.0
        %635 = vmatpush1.xpose.msra.mxu0 %v632
        %636 = vmatprep.subr.mxu0 0.0
        %637 = vmatpush1.xpose.msra.mxu0 0.0
        %638 = vmatprep.subr.mxu0 0.0
        %639 = vmatpush1.xpose.msra.mxu0 0.0
        %640 = vmatprep.subr.mxu0 0.0
        %641 = vmatpush1.xpose.msra.mxu0 0.0
        %642 = vmatprep.subr.mxu0 0.0
        %643 = vmatpush1.xpose.msra.mxu0 0.0
        %644 = vmatprep.subr.mxu0 0.0
        %645 = vmatpush1.xpose.msra.mxu0 0.0
        %646 = vmatprep.subr.mxu0 0.0
        %647 = vmatpush1.xpose.msra.mxu0 0.0
        %648 = vmatprep.subr.mxu0 0.0
        %649 = vmatpush1.xpose.msra.mxu0 0.0
        %650 = vmatprep.subr.mxu0 0.0
        %651 = vmatpush1.xpose.msra.mxu0 0.0
        %652 = vmatprep.subr.mxu0 0.0
        %653 = vmatpush1.xpose.msra.mxu0 0.0
        %654 = vmatprep.subr.mxu0 0.0
        %655 = vmatpush1.xpose.msra.mxu0 0.0
        %656 = vmatprep.subr.mxu0 0.0
        %657 = vmatpush1.xpose.msra.mxu0 0.0
        %658 = vmatprep.subr.mxu0 0.0
        %659 = vmatpush1.xpose.msra.mxu0 0.0
        %660 = vmatprep.subr.mxu0 0.0
        %661 = vmatpush1.xpose.msra.mxu0 0.0
        %662 = vmatprep.subr.mxu0 0.0
        %663 = vmatpush1.xpose.msra.mxu0 0.0
        %664 = vmatprep.subr.mxu0 0.0
        %665 = vmatpush1.xpose.msra.mxu0 0.0
        %666 = vmatprep.subr.mxu0 0.0
        %667 = vmatpush1.xpose.msra.mxu0 0.0
        %668 = vmatprep.subr.mxu0 0.0
        %669 = vmatpush1.xpose.msra.mxu0 0.0
        %670 = vmatprep.subr.mxu0 0.0
        %671 = vmatpush1.xpose.msra.mxu0 0.0
        %672 = vmatprep.subr.mxu0 0.0
        %673 = vmatpush1.xpose.msra.mxu0 0.0
        %674 = vmatprep.subr.mxu0 0.0
        %675 = vmatpush1.xpose.msra.mxu0 0.0
        %676 = vmatprep.subr.mxu0 0.0
        %677 = vmatpush1.xpose.msra.mxu0 0.0
        %678 = vmatprep.subr.mxu0 0.0
        %679 = vmatpush1.xpose.msra.mxu0 0.0
        %680 = vmatprep.subr.mxu0 0.0
        %681 = vmatpush1.xpose.msra.mxu0 0.0
        %682 = vmatprep.subr.mxu0 0.0
        %683 = vmatpush1.xpose.msra.mxu0 0.0
        %684 = vmatprep.subr.mxu0 0.0
        %685 = vmatpush1.xpose.msra.mxu0 0.0
        %686 = vmatprep.subr.mxu0 0.0
        %687 = vmatpush1.xpose.msra.mxu0 0.0
        %688 = vmatprep.subr.mxu0 0.0
        %689 = vmatpush1.xpose.msra.mxu0 0.0
        %690 = vmatprep.subr.mxu0 0.0
        %691 = vmatpush1.xpose.msra.mxu0 0.0
        %692 = vmatprep.subr.mxu0 0.0
        %693 = vmatpush1.xpose.msra.mxu0 0.0
        %694 = vmatprep.subr.mxu0 0.0
        %695 = vmatpush1.xpose.msra.mxu0 0.0
        %696 = vmatprep.subr.mxu0 0.0
        %697 = vmatpush1.xpose.msra.mxu0 0.0
        %698 = vmatprep.mubr.f32.mxu0 0.0
        %699 = vmatmul.mubr.f32.gmra.mrb[0].mxu0 %v629
        %v700 = vpop.f32.mrb[0].mxu0
        %v701 = vadd.f32 0.0, %v700
        %v702 = vpop.f32.mrb[0].mxu0
        %703 = vdwg.mxu0
        %v705 = vsel %vm627, %v548, 0
        %v708 = vsel %vm627, %v612, 0
        %710 = vmatprep.subr.mxu0 0.0
        %711 = vmatpush1.xpose.msra.mxu0 %v708
        %712 = vmatprep.subr.mxu0 0.0
        %713 = vmatpush1.xpose.msra.mxu0 0.0
        %714 = vmatprep.subr.mxu0 0.0
        %715 = vmatpush1.xpose.msra.mxu0 0.0
        %716 = vmatprep.subr.mxu0 0.0
        %717 = vmatpush1.xpose.msra.mxu0 0.0
        %718 = vmatprep.subr.mxu0 0.0
        %719 = vmatpush1.xpose.msra.mxu0 0.0
        %720 = vmatprep.subr.mxu0 0.0
        %721 = vmatpush1.xpose.msra.mxu0 0.0
        %722 = vmatprep.subr.mxu0 0.0
        %723 = vmatpush1.xpose.msra.mxu0 0.0
        %724 = vmatprep.subr.mxu0 0.0
        %725 = vmatpush1.xpose.msra.mxu0 0.0
        %726 = vmatprep.subr.mxu0 0.0
        %727 = vmatpush1.xpose.msra.mxu0 0.0
        %728 = vmatprep.subr.mxu0 0.0
        %729 = vmatpush1.xpose.msra.mxu0 0.0
        %730 = vmatprep.subr.mxu0 0.0
        %731 = vmatpush1.xpose.msra.mxu0 0.0
        %732 = vmatprep.subr.mxu0 0.0
        %733 = vmatpush1.xpose.msra.mxu0 0.0
        %734 = vmatprep.subr.mxu0 0.0
        %735 = vmatpush1.xpose.msra.mxu0 0.0
        %736 = vmatprep.subr.mxu0 0.0
        %737 = vmatpush1.xpose.msra.mxu0 0.0
        %738 = vmatprep.subr.mxu0 0.0
        %739 = vmatpush1.xpose.msra.mxu0 0.0
        %740 = vmatprep.subr.mxu0 0.0
        %741 = vmatpush1.xpose.msra.mxu0 0.0
        %742 = vmatprep.subr.mxu0 0.0
        %743 = vmatpush1.xpose.msra.mxu0 0.0
        %744 = vmatprep.subr.mxu0 0.0
        %745 = vmatpush1.xpose.msra.mxu0 0.0
        %746 = vmatprep.subr.mxu0 0.0
        %747 = vmatpush1.xpose.msra.mxu0 0.0
        %748 = vmatprep.subr.mxu0 0.0
        %749 = vmatpush1.xpose.msra.mxu0 0.0
        %750 = vmatprep.subr.mxu0 0.0
        %751 = vmatpush1.xpose.msra.mxu0 0.0
        %752 = vmatprep.subr.mxu0 0.0
        %753 = vmatpush1.xpose.msra.mxu0 0.0
        %754 = vmatprep.subr.mxu0 0.0
        %755 = vmatpush1.xpose.msra.mxu0 0.0
        %756 = vmatprep.subr.mxu0 0.0
        %757 = vmatpush1.xpose.msra.mxu0 0.0
        %758 = vmatprep.subr.mxu0 0.0
        %759 = vmatpush1.xpose.msra.mxu0 0.0
        %760 = vmatprep.subr.mxu0 0.0
        %761 = vmatpush1.xpose.msra.mxu0 0.0
        %762 = vmatprep.subr.mxu0 0.0
        %763 = vmatpush1.xpose.msra.mxu0 0.0
        %764 = vmatprep.subr.mxu0 0.0
        %765 = vmatpush1.xpose.msra.mxu0 0.0
        %766 = vmatprep.subr.mxu0 0.0
        %767 = vmatpush1.xpose.msra.mxu0 0.0
        %768 = vmatprep.subr.mxu0 0.0
        %769 = vmatpush1.xpose.msra.mxu0 0.0
        %770 = vmatprep.subr.mxu0 0.0
        %771 = vmatpush1.xpose.msra.mxu0 0.0
        %772 = vmatprep.subr.mxu0 0.0
        %773 = vmatpush1.xpose.msra.mxu0 0.0
        %774 = vmatprep.mubr.f32.mxu0 0.0
        %775 = vmatmul.mubr.f32.gmra.mrb[0].mxu0 %v705
        %v776 = vpop.f32.mrb[0].mxu0
        %v777 = vadd.f32 0.0, %v776
        %v778 = vpop.f32.mrb[0].mxu0
        %779 = vdwg.mxu0
        %v781 = vsel %vm627, %v549, 0
        %v784 = vsel %vm627, %v613, 0
        %786 = vmatprep.subr.mxu0 0.0
        %787 = vmatpush1.xpose.msra.mxu0 %v784
        %788 = vmatprep.subr.mxu0 0.0
        %789 = vmatpush1.xpose.msra.mxu0 0.0
        %790 = vmatprep.subr.mxu0 0.0
        %791 = vmatpush1.xpose.msra.mxu0 0.0
        %792 = vmatprep.subr.mxu0 0.0
        %793 = vmatpush1.xpose.msra.mxu0 0.0
        %794 = vmatprep.subr.mxu0 0.0
        %795 = vmatpush1.xpose.msra.mxu0 0.0
        %796 = vmatprep.subr.mxu0 0.0
        %797 = vmatpush1.xpose.msra.mxu0 0.0
        %798 = vmatprep.subr.mxu0 0.0
        %799 = vmatpush1.xpose.msra.mxu0 0.0
        %800 = vmatprep.subr.mxu0 0.0
        %801 = vmatpush1.xpose.msra.mxu0 0.0
        %802 = vmatprep.subr.mxu0 0.0
        %803 = vmatpush1.xpose.msra.mxu0 0.0
        %804 = vmatprep.subr.mxu0 0.0
        %805 = vmatpush1.xpose.msra.mxu0 0.0
        %806 = vmatprep.subr.mxu0 0.0
        %807 = vmatpush1.xpose.msra.mxu0 0.0
        %808 = vmatprep.subr.mxu0 0.0
        %809 = vmatpush1.xpose.msra.mxu0 0.0
        %810 = vmatprep.subr.mxu0 0.0
        %811 = vmatpush1.xpose.msra.mxu0 0.0
        %812 = vmatprep.subr.mxu0 0.0
        %813 = vmatpush1.xpose.msra.mxu0 0.0
        %814 = vmatprep.subr.mxu0 0.0
        %815 = vmatpush1.xpose.msra.mxu0 0.0
        %816 = vmatprep.subr.mxu0 0.0
        %817 = vmatpush1.xpose.msra.mxu0 0.0
        %818 = vmatprep.subr.mxu0 0.0
        %819 = vmatpush1.xpose.msra.mxu0 0.0
        %820 = vmatprep.subr.mxu0 0.0
        %821 = vmatpush1.xpose.msra.mxu0 0.0
        %822 = vmatprep.subr.mxu0 0.0
        %823 = vmatpush1.xpose.msra.mxu0 0.0
        %824 = vmatprep.subr.mxu0 0.0
        %825 = vmatpush1.xpose.msra.mxu0 0.0
        %826 = vmatprep.subr.mxu0 0.0
        %827 = vmatpush1.xpose.msra.mxu0 0.0
        %828 = vmatprep.subr.mxu0 0.0
        %829 = vmatpush1.xpose.msra.mxu0 0.0
        %830 = vmatprep.subr.mxu0 0.0
        %831 = vmatpush1.xpose.msra.mxu0 0.0
        %832 = vmatprep.subr.mxu0 0.0
        %833 = vmatpush1.xpose.msra.mxu0 0.0
        %834 = vmatprep.subr.mxu0 0.0
        %835 = vmatpush1.xpose.msra.mxu0 0.0
        %836 = vmatprep.subr.mxu0 0.0
        %837 = vmatpush1.xpose.msra.mxu0 0.0
        %838 = vmatprep.subr.mxu0 0.0
        %839 = vmatpush1.xpose.msra.mxu0 0.0
        %840 = vmatprep.subr.mxu0 0.0
        %841 = vmatpush1.xpose.msra.mxu0 0.0
        %842 = vmatprep.subr.mxu0 0.0
        %843 = vmatpush1.xpose.msra.mxu0 0.0
        %844 = vmatprep.subr.mxu0 0.0
        %845 = vmatpush1.xpose.msra.mxu0 0.0
        %846 = vmatprep.subr.mxu0 0.0
        %847 = vmatpush1.xpose.msra.mxu0 0.0
        %848 = vmatprep.subr.mxu0 0.0
        %849 = vmatpush1.xpose.msra.mxu0 0.0
        %850 = vmatprep.mubr.f32.mxu0 0.0
        %851 = vmatmul.mubr.f32.gmra.mrb[0].mxu0 %v781
        %v852 = vpop.f32.mrb[0].mxu0
        %v853 = vadd.f32 0.0, %v852
        %v854 = vpop.f32.mrb[0].mxu0
        %855 = vdwg.mxu0
        %v857 = vsel %vm627, %v550, 0
        %v860 = vsel %vm627, %v614, 0
        %862 = vmatprep.subr.mxu0 0.0
        %863 = vmatpush1.xpose.msra.mxu0 %v860
        %864 = vmatprep.subr.mxu0 0.0
        %865 = vmatpush1.xpose.msra.mxu0 0.0
        %866 = vmatprep.subr.mxu0 0.0
        %867 = vmatpush1.xpose.msra.mxu0 0.0
        %868 = vmatprep.subr.mxu0 0.0
        %869 = vmatpush1.xpose.msra.mxu0 0.0
        %870 = vmatprep.subr.mxu0 0.0
        %871 = vmatpush1.xpose.msra.mxu0 0.0
        %872 = vmatprep.subr.mxu0 0.0
        %873 = vmatpush1.xpose.msra.mxu0 0.0
        %874 = vmatprep.subr.mxu0 0.0
        %875 = vmatpush1.xpose.msra.mxu0 0.0
        %876 = vmatprep.subr.mxu0 0.0
        %877 = vmatpush1.xpose.msra.mxu0 0.0
        %878 = vmatprep.subr.mxu0 0.0
        %879 = vmatpush1.xpose.msra.mxu0 0.0
        %880 = vmatprep.subr.mxu0 0.0
        %881 = vmatpush1.xpose.msra.mxu0 0.0
        %882 = vmatprep.subr.mxu0 0.0
        %883 = vmatpush1.xpose.msra.mxu0 0.0
        %884 = vmatprep.subr.mxu0 0.0
        %885 = vmatpush1.xpose.msra.mxu0 0.0
        %886 = vmatprep.subr.mxu0 0.0
        %887 = vmatpush1.xpose.msra.mxu0 0.0
        %888 = vmatprep.subr.mxu0 0.0
        %889 = vmatpush1.xpose.msra.mxu0 0.0
        %890 = vmatprep.subr.mxu0 0.0
        %891 = vmatpush1.xpose.msra.mxu0 0.0
        %892 = vmatprep.subr.mxu0 0.0
        %893 = vmatpush1.xpose.msra.mxu0 0.0
        %894 = vmatprep.subr.mxu0 0.0
        %895 = vmatpush1.xpose.msra.mxu0 0.0
        %896 = vmatprep.subr.mxu0 0.0
        %897 = vmatpush1.xpose.msra.mxu0 0.0
        %898 = vmatprep.subr.mxu0 0.0
        %899 = vmatpush1.xpose.msra.mxu0 0.0
        %900 = vmatprep.subr.mxu0 0.0
        %901 = vmatpush1.xpose.msra.mxu0 0.0
        %902 = vmatprep.subr.mxu0 0.0
        %903 = vmatpush1.xpose.msra.mxu0 0.0
        %904 = vmatprep.subr.mxu0 0.0
        %905 = vmatpush1.xpose.msra.mxu0 0.0
        %906 = vmatprep.subr.mxu0 0.0
        %907 = vmatpush1.xpose.msra.mxu0 0.0
        %908 = vmatprep.subr.mxu0 0.0
        %909 = vmatpush1.xpose.msra.mxu0 0.0
        %910 = vmatprep.subr.mxu0 0.0
        %911 = vmatpush1.xpose.msra.mxu0 0.0
        %912 = vmatprep.subr.mxu0 0.0
        %913 = vmatpush1.xpose.msra.mxu0 0.0
        %914 = vmatprep.subr.mxu0 0.0
        %915 = vmatpush1.xpose.msra.mxu0 0.0
        %916 = vmatprep.subr.mxu0 0.0
        %917 = vmatpush1.xpose.msra.mxu0 0.0
        %918 = vmatprep.subr.mxu0 0.0
        %919 = vmatpush1.xpose.msra.mxu0 0.0
        %920 = vmatprep.subr.mxu0 0.0
        %921 = vmatpush1.xpose.msra.mxu0 0.0
        %922 = vmatprep.subr.mxu0 0.0
        %923 = vmatpush1.xpose.msra.mxu0 0.0
        %924 = vmatprep.subr.mxu0 0.0
        %925 = vmatpush1.xpose.msra.mxu0 0.0
        %926 = vmatprep.mubr.f32.mxu0 0.0
        %927 = vmatmul.mubr.f32.gmra.mrb[0].mxu0 %v857
        %v928 = vpop.f32.mrb[0].mxu0
        %v929 = vadd.f32 0.0, %v928
        %v930 = vpop.f32.mrb[0].mxu0
        %931 = vdwg.mxu0
        %v933 = vsel %vm627, %v551, 0
        %v936 = vsel %vm627, %v615, 0
        %938 = vmatprep.subr.mxu0 0.0
        %939 = vmatpush1.xpose.msra.mxu0 %v936
        %940 = vmatprep.subr.mxu0 0.0
        %941 = vmatpush1.xpose.msra.mxu0 0.0
        %942 = vmatprep.subr.mxu0 0.0
        %943 = vmatpush1.xpose.msra.mxu0 0.0
        %944 = vmatprep.subr.mxu0 0.0
        %945 = vmatpush1.xpose.msra.mxu0 0.0
        %946 = vmatprep.subr.mxu0 0.0
        %947 = vmatpush1.xpose.msra.mxu0 0.0
        %948 = vmatprep.subr.mxu0 0.0
        %949 = vmatpush1.xpose.msra.mxu0 0.0
        %950 = vmatprep.subr.mxu0 0.0
        %951 = vmatpush1.xpose.msra.mxu0 0.0
        %952 = vmatprep.subr.mxu0 0.0
        %953 = vmatpush1.xpose.msra.mxu0 0.0
        %954 = vmatprep.subr.mxu0 0.0
        %955 = vmatpush1.xpose.msra.mxu0 0.0
        %956 = vmatprep.subr.mxu0 0.0
        %957 = vmatpush1.xpose.msra.mxu0 0.0
        %958 = vmatprep.subr.mxu0 0.0
        %959 = vmatpush1.xpose.msra.mxu0 0.0
        %960 = vmatprep.subr.mxu0 0.0
        %961 = vmatpush1.xpose.msra.mxu0 0.0
        %962 = vmatprep.subr.mxu0 0.0
        %963 = vmatpush1.xpose.msra.mxu0 0.0
        %964 = vmatprep.subr.mxu0 0.0
        %965 = vmatpush1.xpose.msra.mxu0 0.0
        %966 = vmatprep.subr.mxu0 0.0
        %967 = vmatpush1.xpose.msra.mxu0 0.0
        %968 = vmatprep.subr.mxu0 0.0
        %969 = vmatpush1.xpose.msra.mxu0 0.0
        %970 = vmatprep.subr.mxu0 0.0
        %971 = vmatpush1.xpose.msra.mxu0 0.0
        %972 = vmatprep.subr.mxu0 0.0
        %973 = vmatpush1.xpose.msra.mxu0 0.0
        %974 = vmatprep.subr.mxu0 0.0
        %975 = vmatpush1.xpose.msra.mxu0 0.0
        %976 = vmatprep.subr.mxu0 0.0
        %977 = vmatpush1.xpose.msra.mxu0 0.0
        %978 = vmatprep.subr.mxu0 0.0
        %979 = vmatpush1.xpose.msra.mxu0 0.0
        %980 = vmatprep.subr.mxu0 0.0
        %981 = vmatpush1.xpose.msra.mxu0 0.0
        %982 = vmatprep.subr.mxu0 0.0
        %983 = vmatpush1.xpose.msra.mxu0 0.0
        %984 = vmatprep.subr.mxu0 0.0
        %985 = vmatpush1.xpose.msra.mxu0 0.0
        %986 = vmatprep.subr.mxu0 0.0
        %987 = vmatpush1.xpose.msra.mxu0 0.0
        %988 = vmatprep.subr.mxu0 0.0
        %989 = vmatpush1.xpose.msra.mxu0 0.0
        %990 = vmatprep.subr.mxu0 0.0
        %991 = vmatpush1.xpose.msra.mxu0 0.0
        %992 = vmatprep.subr.mxu0 0.0
        %993 = vmatpush1.xpose.msra.mxu0 0.0
        %994 = vmatprep.subr.mxu0 0.0
        %995 = vmatpush1.xpose.msra.mxu0 0.0
        %996 = vmatprep.subr.mxu0 0.0
        %997 = vmatpush1.xpose.msra.mxu0 0.0
        %998 = vmatprep.subr.mxu0 0.0
        %999 = vmatpush1.xpose.msra.mxu0 0.0
        %1000 = vmatprep.subr.mxu0 0.0
        %1001 = vmatpush1.xpose.msra.mxu0 0.0
        %1002 = vmatprep.mubr.f32.mxu0 0.0
        %1003 = vmatmul.mubr.f32.gmra.mrb[0].mxu0 %v933
        %v1004 = vpop.f32.mrb[0].mxu0
        %v1005 = vadd.f32 0.0, %v1004
        %v1006 = vpop.f32.mrb[0].mxu0
        %1007 = vdwg.mxu0
        %v1009 = vsel %vm627, %v552, 0
        %v1012 = vsel %vm627, %v616, 0
        %1014 = vmatprep.subr.mxu0 0.0
        %1015 = vmatpush1.xpose.msra.mxu0 %v1012
        %1016 = vmatprep.subr.mxu0 0.0
        %1017 = vmatpush1.xpose.msra.mxu0 0.0
        %1018 = vmatprep.subr.mxu0 0.0
        %1019 = vmatpush1.xpose.msra.mxu0 0.0
        %1020 = vmatprep.subr.mxu0 0.0
        %1021 = vmatpush1.xpose.msra.mxu0 0.0
        %1022 = vmatprep.subr.mxu0 0.0
        %1023 = vmatpush1.xpose.msra.mxu0 0.0
        %1024 = vmatprep.subr.mxu0 0.0
        %1025 = vmatpush1.xpose.msra.mxu0 0.0
        %1026 = vmatprep.subr.mxu0 0.0
        %1027 = vmatpush1.xpose.msra.mxu0 0.0
        %1028 = vmatprep.subr.mxu0 0.0
        %1029 = vmatpush1.xpose.msra.mxu0 0.0
        %1030 = vmatprep.subr.mxu0 0.0
        %1031 = vmatpush1.xpose.msra.mxu0 0.0
        %1032 = vmatprep.subr.mxu0 0.0
        %1033 = vmatpush1.xpose.msra.mxu0 0.0
        %1034 = vmatprep.subr.mxu0 0.0
        %1035 = vmatpush1.xpose.msra.mxu0 0.0
        %1036 = vmatprep.subr.mxu0 0.0
        %1037 = vmatpush1.xpose.msra.mxu0 0.0
        %1038 = vmatprep.subr.mxu0 0.0
        %1039 = vmatpush1.xpose.msra.mxu0 0.0
        %1040 = vmatprep.subr.mxu0 0.0
        %1041 = vmatpush1.xpose.msra.mxu0 0.0
        %1042 = vmatprep.subr.mxu0 0.0
        %1043 = vmatpush1.xpose.msra.mxu0 0.0
        %1044 = vmatprep.subr.mxu0 0.0
        %1045 = vmatpush1.xpose.msra.mxu0 0.0
        %1046 = vmatprep.subr.mxu0 0.0
        %1047 = vmatpush1.xpose.msra.mxu0 0.0
        %1048 = vmatprep.subr.mxu0 0.0
        %1049 = vmatpush1.xpose.msra.mxu0 0.0
        %1050 = vmatprep.subr.mxu0 0.0
        %1051 = vmatpush1.xpose.msra.mxu0 0.0
        %1052 = vmatprep.subr.mxu0 0.0
        %1053 = vmatpush1.xpose.msra.mxu0 0.0
        %1054 = vmatprep.subr.mxu0 0.0
        %1055 = vmatpush1.xpose.msra.mxu0 0.0
        %1056 = vmatprep.subr.mxu0 0.0
        %1057 = vmatpush1.xpose.msra.mxu0 0.0
        %1058 = vmatprep.subr.mxu0 0.0
        %1059 = vmatpush1.xpose.msra.mxu0 0.0
        %1060 = vmatprep.subr.mxu0 0.0
        %1061 = vmatpush1.xpose.msra.mxu0 0.0
        %1062 = vmatprep.subr.mxu0 0.0
        %1063 = vmatpush1.xpose.msra.mxu0 0.0
        %1064 = vmatprep.subr.mxu0 0.0
        %1065 = vmatpush1.xpose.msra.mxu0 0.0
        %1066 = vmatprep.subr.mxu0 0.0
        %1067 = vmatpush1.xpose.msra.mxu0 0.0
        %1068 = vmatprep.subr.mxu0 0.0
        %1069 = vmatpush1.xpose.msra.mxu0 0.0
        %1070 = vmatprep.subr.mxu0 0.0
        %1071 = vmatpush1.xpose.msra.mxu0 0.0
        %1072 = vmatprep.subr.mxu0 0.0
        %1073 = vmatpush1.xpose.msra.mxu0 0.0
        %1074 = vmatprep.subr.mxu0 0.0
        %1075 = vmatpush1.xpose.msra.mxu0 0.0
        %1076 = vmatprep.subr.mxu0 0.0
        %1077 = vmatpush1.xpose.msra.mxu0 0.0
        %1078 = vmatprep.mubr.f32.mxu0 0.0
        %1079 = vmatmul.mubr.f32.gmra.mrb[0].mxu0 %v1009
        %v1080 = vpop.f32.mrb[0].mxu0
        %v1081 = vadd.f32 0.0, %v1080
        %v1082 = vpop.f32.mrb[0].mxu0
        %1083 = vdwg.mxu0
        %v1085 = vsel %vm627, %v553, 0
        %v1088 = vsel %vm627, %v617, 0
        %1090 = vmatprep.subr.mxu0 0.0
        %1091 = vmatpush1.xpose.msra.mxu0 %v1088
        %1092 = vmatprep.subr.mxu0 0.0
        %1093 = vmatpush1.xpose.msra.mxu0 0.0
        %1094 = vmatprep.subr.mxu0 0.0
        %1095 = vmatpush1.xpose.msra.mxu0 0.0
        %1096 = vmatprep.subr.mxu0 0.0
        %1097 = vmatpush1.xpose.msra.mxu0 0.0
        %1098 = vmatprep.subr.mxu0 0.0
        %1099 = vmatpush1.xpose.msra.mxu0 0.0
        %1100 = vmatprep.subr.mxu0 0.0
        %1101 = vmatpush1.xpose.msra.mxu0 0.0
        %1102 = vmatprep.subr.mxu0 0.0
        %1103 = vmatpush1.xpose.msra.mxu0 0.0
        %1104 = vmatprep.subr.mxu0 0.0
        %1105 = vmatpush1.xpose.msra.mxu0 0.0
        %1106 = vmatprep.subr.mxu0 0.0
        %1107 = vmatpush1.xpose.msra.mxu0 0.0
        %1108 = vmatprep.subr.mxu0 0.0
        %1109 = vmatpush1.xpose.msra.mxu0 0.0
        %1110 = vmatprep.subr.mxu0 0.0
        %1111 = vmatpush1.xpose.msra.mxu0 0.0
        %1112 = vmatprep.subr.mxu0 0.0
        %1113 = vmatpush1.xpose.msra.mxu0 0.0
        %1114 = vmatprep.subr.mxu0 0.0
        %1115 = vmatpush1.xpose.msra.mxu0 0.0
        %1116 = vmatprep.subr.mxu0 0.0
        %1117 = vmatpush1.xpose.msra.mxu0 0.0
        %1118 = vmatprep.subr.mxu0 0.0
        %1119 = vmatpush1.xpose.msra.mxu0 0.0
        %1120 = vmatprep.subr.mxu0 0.0
        %1121 = vmatpush1.xpose.msra.mxu0 0.0
        %1122 = vmatprep.subr.mxu0 0.0
        %1123 = vmatpush1.xpose.msra.mxu0 0.0
        %1124 = vmatprep.subr.mxu0 0.0
        %1125 = vmatpush1.xpose.msra.mxu0 0.0
        %1126 = vmatprep.subr.mxu0 0.0
        %1127 = vmatpush1.xpose.msra.mxu0 0.0
        %1128 = vmatprep.subr.mxu0 0.0
        %1129 = vmatpush1.xpose.msra.mxu0 0.0
        %1130 = vmatprep.subr.mxu0 0.0
        %1131 = vmatpush1.xpose.msra.mxu0 0.0
        %1132 = vmatprep.subr.mxu0 0.0
        %1133 = vmatpush1.xpose.msra.mxu0 0.0
        %1134 = vmatprep.subr.mxu0 0.0
        %1135 = vmatpush1.xpose.msra.mxu0 0.0
        %1136 = vmatprep.subr.mxu0 0.0
        %1137 = vmatpush1.xpose.msra.mxu0 0.0
        %1138 = vmatprep.subr.mxu0 0.0
        %1139 = vmatpush1.xpose.msra.mxu0 0.0
        %1140 = vmatprep.subr.mxu0 0.0
        %1141 = vmatpush1.xpose.msra.mxu0 0.0
        %1142 = vmatprep.subr.mxu0 0.0
        %1143 = vmatpush1.xpose.msra.mxu0 0.0
        %1144 = vmatprep.subr.mxu0 0.0
        %1145 = vmatpush1.xpose.msra.mxu0 0.0
        %1146 = vmatprep.subr.mxu0 0.0
        %1147 = vmatpush1.xpose.msra.mxu0 0.0
        %1148 = vmatprep.subr.mxu0 0.0
        %1149 = vmatpush1.xpose.msra.mxu0 0.0
        %1150 = vmatprep.subr.mxu0 0.0
        %1151 = vmatpush1.xpose.msra.mxu0 0.0
        %1152 = vmatprep.subr.mxu0 0.0
        %1153 = vmatpush1.xpose.msra.mxu0 0.0
        %1154 = vmatprep.mubr.f32.mxu0 0.0
        %1155 = vmatmul.mubr.f32.gmra.mrb[0].mxu0 %v1085
        %v1156 = vpop.f32.mrb[0].mxu0
        %v1157 = vadd.f32 0.0, %v1156
        %v1158 = vpop.f32.mrb[0].mxu0
        %1159 = vdwg.mxu0
        %v1161 = vsel %vm627, %v554, 0
        %v1164 = vsel %vm627, %v618, 0
        %1166 = vmatprep.subr.mxu0 0.0
        %1167 = vmatpush1.xpose.msra.mxu0 %v1164
        %1168 = vmatprep.subr.mxu0 0.0
        %1169 = vmatpush1.xpose.msra.mxu0 0.0
        %1170 = vmatprep.subr.mxu0 0.0
        %1171 = vmatpush1.xpose.msra.mxu0 0.0
        %1172 = vmatprep.subr.mxu0 0.0
        %1173 = vmatpush1.xpose.msra.mxu0 0.0
        %1174 = vmatprep.subr.mxu0 0.0
        %1175 = vmatpush1.xpose.msra.mxu0 0.0
        %1176 = vmatprep.subr.mxu0 0.0
        %1177 = vmatpush1.xpose.msra.mxu0 0.0
        %1178 = vmatprep.subr.mxu0 0.0
        %1179 = vmatpush1.xpose.msra.mxu0 0.0
        %1180 = vmatprep.subr.mxu0 0.0
        %1181 = vmatpush1.xpose.msra.mxu0 0.0
        %1182 = vmatprep.subr.mxu0 0.0
        %1183 = vmatpush1.xpose.msra.mxu0 0.0
        %1184 = vmatprep.subr.mxu0 0.0
        %1185 = vmatpush1.xpose.msra.mxu0 0.0
        %1186 = vmatprep.subr.mxu0 0.0
        %1187 = vmatpush1.xpose.msra.mxu0 0.0
        %1188 = vmatprep.subr.mxu0 0.0
        %1189 = vmatpush1.xpose.msra.mxu0 0.0
        %1190 = vmatprep.subr.mxu0 0.0
        %1191 = vmatpush1.xpose.msra.mxu0 0.0
        %1192 = vmatprep.subr.mxu0 0.0
        %1193 = vmatpush1.xpose.msra.mxu0 0.0
        %1194 = vmatprep.subr.mxu0 0.0
        %1195 = vmatpush1.xpose.msra.mxu0 0.0
        %1196 = vmatprep.subr.mxu0 0.0
        %1197 = vmatpush1.xpose.msra.mxu0 0.0
        %1198 = vmatprep.subr.mxu0 0.0
        %1199 = vmatpush1.xpose.msra.mxu0 0.0
        %1200 = vmatprep.subr.mxu0 0.0
        %1201 = vmatpush1.xpose.msra.mxu0 0.0
        %1202 = vmatprep.subr.mxu0 0.0
        %1203 = vmatpush1.xpose.msra.mxu0 0.0
        %1204 = vmatprep.subr.mxu0 0.0
        %1205 = vmatpush1.xpose.msra.mxu0 0.0
        %1206 = vmatprep.subr.mxu0 0.0
        %1207 = vmatpush1.xpose.msra.mxu0 0.0
        %1208 = vmatprep.subr.mxu0 0.0
        %1209 = vmatpush1.xpose.msra.mxu0 0.0
        %1210 = vmatprep.subr.mxu0 0.0
        %1211 = vmatpush1.xpose.msra.mxu0 0.0
        %1212 = vmatprep.subr.mxu0 0.0
        %1213 = vmatpush1.xpose.msra.mxu0 0.0
        %1214 = vmatprep.subr.mxu0 0.0
        %1215 = vmatpush1.xpose.msra.mxu0 0.0
        %1216 = vmatprep.subr.mxu0 0.0
        %1217 = vmatpush1.xpose.msra.mxu0 0.0
        %1218 = vmatprep.subr.mxu0 0.0
        %1219 = vmatpush1.xpose.msra.mxu0 0.0
        %1220 = vmatprep.subr.mxu0 0.0
        %1221 = vmatpush1.xpose.msra.mxu0 0.0
        %1222 = vmatprep.subr.mxu0 0.0
        %1223 = vmatpush1.xpose.msra.mxu0 0.0
        %1224 = vmatprep.subr.mxu0 0.0
        %1225 = vmatpush1.xpose.msra.mxu0 0.0
        %1226 = vmatprep.subr.mxu0 0.0
        %1227 = vmatpush1.xpose.msra.mxu0 0.0
        %1228 = vmatprep.subr.mxu0 0.0
        %1229 = vmatpush1.xpose.msra.mxu0 0.0
        %1230 = vmatprep.mubr.f32.mxu0 0.0
        %1231 = vmatmul.mubr.f32.gmra.mrb[0].mxu0 %v1161
        %v1232 = vpop.f32.mrb[0].mxu0
        %v1233 = vadd.f32 0.0, %v1232
        %v1234 = vpop.f32.mrb[0].mxu0
        %1235 = vdwg.mxu0
        %v1237 = vsel %vm627, %v555, 0
        %v1240 = vsel %vm627, %v619, 0
        %1242 = vmatprep.subr.mxu0 0.0
        %1243 = vmatpush1.xpose.msra.mxu0 %v1240
        %1244 = vmatprep.subr.mxu0 0.0
        %1245 = vmatpush1.xpose.msra.mxu0 0.0
        %1246 = vmatprep.subr.mxu0 0.0
        %1247 = vmatpush1.xpose.msra.mxu0 0.0
        %1248 = vmatprep.subr.mxu0 0.0
        %1249 = vmatpush1.xpose.msra.mxu0 0.0
        %1250 = vmatprep.subr.mxu0 0.0
        %1251 = vmatpush1.xpose.msra.mxu0 0.0
        %1252 = vmatprep.subr.mxu0 0.0
        %1253 = vmatpush1.xpose.msra.mxu0 0.0
        %1254 = vmatprep.subr.mxu0 0.0
        %1255 = vmatpush1.xpose.msra.mxu0 0.0
        %1256 = vmatprep.subr.mxu0 0.0
        %1257 = vmatpush1.xpose.msra.mxu0 0.0
        %1258 = vmatprep.subr.mxu0 0.0
        %1259 = vmatpush1.xpose.msra.mxu0 0.0
        %1260 = vmatprep.subr.mxu0 0.0
        %1261 = vmatpush1.xpose.msra.mxu0 0.0
        %1262 = vmatprep.subr.mxu0 0.0
        %1263 = vmatpush1.xpose.msra.mxu0 0.0
        %1264 = vmatprep.subr.mxu0 0.0
        %1265 = vmatpush1.xpose.msra.mxu0 0.0
        %1266 = vmatprep.subr.mxu0 0.0
        %1267 = vmatpush1.xpose.msra.mxu0 0.0
        %1268 = vmatprep.subr.mxu0 0.0
        %1269 = vmatpush1.xpose.msra.mxu0 0.0
        %1270 = vmatprep.subr.mxu0 0.0
        %1271 = vmatpush1.xpose.msra.mxu0 0.0
        %1272 = vmatprep.subr.mxu0 0.0
        %1273 = vmatpush1.xpose.msra.mxu0 0.0
        %1274 = vmatprep.subr.mxu0 0.0
        %1275 = vmatpush1.xpose.msra.mxu0 0.0
        %1276 = vmatprep.subr.mxu0 0.0
        %1277 = vmatpush1.xpose.msra.mxu0 0.0
        %1278 = vmatprep.subr.mxu0 0.0
        %1279 = vmatpush1.xpose.msra.mxu0 0.0
        %1280 = vmatprep.subr.mxu0 0.0
        %1281 = vmatpush1.xpose.msra.mxu0 0.0
        %1282 = vmatprep.subr.mxu0 0.0
        %1283 = vmatpush1.xpose.msra.mxu0 0.0
        %1284 = vmatprep.subr.mxu0 0.0
        %1285 = vmatpush1.xpose.msra.mxu0 0.0
        %1286 = vmatprep.subr.mxu0 0.0
        %1287 = vmatpush1.xpose.msra.mxu0 0.0
        %1288 = vmatprep.subr.mxu0 0.0
        %1289 = vmatpush1.xpose.msra.mxu0 0.0
        %1290 = vmatprep.subr.mxu0 0.0
        %1291 = vmatpush1.xpose.msra.mxu0 0.0
        %1292 = vmatprep.subr.mxu0 0.0
        %1293 = vmatpush1.xpose.msra.mxu0 0.0
        %1294 = vmatprep.subr.mxu0 0.0
        %1295 = vmatpush1.xpose.msra.mxu0 0.0
        %1296 = vmatprep.subr.mxu0 0.0
        %1297 = vmatpush1.xpose.msra.mxu0 0.0
        %1298 = vmatprep.subr.mxu0 0.0
        %1299 = vmatpush1.xpose.msra.mxu0 0.0
        %1300 = vmatprep.subr.mxu0 0.0
        %1301 = vmatpush1.xpose.msra.mxu0 0.0
        %1302 = vmatprep.subr.mxu0 0.0
        %1303 = vmatpush1.xpose.msra.mxu0 0.0
        %1304 = vmatprep.subr.mxu0 0.0
        %1305 = vmatpush1.xpose.msra.mxu0 0.0
        %1306 = vmatprep.mubr.f32.mxu0 0.0
        %1307 = vmatmul.mubr.f32.gmra.mrb[0].mxu0 %v1237
        %v1308 = vpop.f32.mrb[0].mxu0
        %v1309 = vadd.f32 0.0, %v1308
        %v1310 = vpop.f32.mrb[0].mxu0
        %1311 = vdwg.mxu0
        %v1313 = vsel %vm627, %v556, 0
        %v1316 = vsel %vm627, %v620, 0
        %1318 = vmatprep.subr.mxu0 0.0
        %1319 = vmatpush1.xpose.msra.mxu0 %v1316
        %1320 = vmatprep.subr.mxu0 0.0
        %1321 = vmatpush1.xpose.msra.mxu0 0.0
        %1322 = vmatprep.subr.mxu0 0.0
        %1323 = vmatpush1.xpose.msra.mxu0 0.0
        %1324 = vmatprep.subr.mxu0 0.0
        %1325 = vmatpush1.xpose.msra.mxu0 0.0
        %1326 = vmatprep.subr.mxu0 0.0
        %1327 = vmatpush1.xpose.msra.mxu0 0.0
        %1328 = vmatprep.subr.mxu0 0.0
        %1329 = vmatpush1.xpose.msra.mxu0 0.0
        %1330 = vmatprep.subr.mxu0 0.0
        %1331 = vmatpush1.xpose.msra.mxu0 0.0
        %1332 = vmatprep.subr.mxu0 0.0
        %1333 = vmatpush1.xpose.msra.mxu0 0.0
        %1334 = vmatprep.subr.mxu0 0.0
        %1335 = vmatpush1.xpose.msra.mxu0 0.0
        %1336 = vmatprep.subr.mxu0 0.0
        %1337 = vmatpush1.xpose.msra.mxu0 0.0
        %1338 = vmatprep.subr.mxu0 0.0
        %1339 = vmatpush1.xpose.msra.mxu0 0.0
        %1340 = vmatprep.subr.mxu0 0.0
        %1341 = vmatpush1.xpose.msra.mxu0 0.0
        %1342 = vmatprep.subr.mxu0 0.0
        %1343 = vmatpush1.xpose.msra.mxu0 0.0
        %1344 = vmatprep.subr.mxu0 0.0
        %1345 = vmatpush1.xpose.msra.mxu0 0.0
        %1346 = vmatprep.subr.mxu0 0.0
        %1347 = vmatpush1.xpose.msra.mxu0 0.0
        %1348 = vmatprep.subr.mxu0 0.0
        %1349 = vmatpush1.xpose.msra.mxu0 0.0
        %1350 = vmatprep.subr.mxu0 0.0
        %1351 = vmatpush1.xpose.msra.mxu0 0.0
        %1352 = vmatprep.subr.mxu0 0.0
        %1353 = vmatpush1.xpose.msra.mxu0 0.0
        %1354 = vmatprep.subr.mxu0 0.0
        %1355 = vmatpush1.xpose.msra.mxu0 0.0
        %1356 = vmatprep.subr.mxu0 0.0
        %1357 = vmatpush1.xpose.msra.mxu0 0.0
        %1358 = vmatprep.subr.mxu0 0.0
        %1359 = vmatpush1.xpose.msra.mxu0 0.0
        %1360 = vmatprep.subr.mxu0 0.0
        %1361 = vmatpush1.xpose.msra.mxu0 0.0
        %1362 = vmatprep.subr.mxu0 0.0
        %1363 = vmatpush1.xpose.msra.mxu0 0.0
        %1364 = vmatprep.subr.mxu0 0.0
        %1365 = vmatpush1.xpose.msra.mxu0 0.0
        %1366 = vmatprep.subr.mxu0 0.0
        %1367 = vmatpush1.xpose.msra.mxu0 0.0
        %1368 = vmatprep.subr.mxu0 0.0
        %1369 = vmatpush1.xpose.msra.mxu0 0.0
        %1370 = vmatprep.subr.mxu0 0.0
        %1371 = vmatpush1.xpose.msra.mxu0 0.0
        %1372 = vmatprep.subr.mxu0 0.0
        %1373 = vmatpush1.xpose.msra.mxu0 0.0
        %1374 = vmatprep.subr.mxu0 0.0
        %1375 = vmatpush1.xpose.msra.mxu0 0.0
        %1376 = vmatprep.subr.mxu0 0.0
        %1377 = vmatpush1.xpose.msra.mxu0 0.0
        %1378 = vmatprep.subr.mxu0 0.0
        %1379 = vmatpush1.xpose.msra.mxu0 0.0
        %1380 = vmatprep.subr.mxu0 0.0
        %1381 = vmatpush1.xpose.msra.mxu0 0.0
        %1382 = vmatprep.mubr.f32.mxu0 0.0
        %1383 = vmatmul.mubr.f32.gmra.mrb[0].mxu0 %v1313
        %v1384 = vpop.f32.mrb[0].mxu0
        %v1385 = vadd.f32 0.0, %v1384
        %v1386 = vpop.f32.mrb[0].mxu0
        %1387 = vdwg.mxu0
        %v1389 = vsel %vm627, %v557, 0
        %v1392 = vsel %vm627, %v621, 0
        %1394 = vmatprep.subr.mxu0 0.0
        %1395 = vmatpush1.xpose.msra.mxu0 %v1392
        %1396 = vmatprep.subr.mxu0 0.0
        %1397 = vmatpush1.xpose.msra.mxu0 0.0
        %1398 = vmatprep.subr.mxu0 0.0
        %1399 = vmatpush1.xpose.msra.mxu0 0.0
        %1400 = vmatprep.subr.mxu0 0.0
        %1401 = vmatpush1.xpose.msra.mxu0 0.0
        %1402 = vmatprep.subr.mxu0 0.0
        %1403 = vmatpush1.xpose.msra.mxu0 0.0
        %1404 = vmatprep.subr.mxu0 0.0
        %1405 = vmatpush1.xpose.msra.mxu0 0.0
        %1406 = vmatprep.subr.mxu0 0.0
        %1407 = vmatpush1.xpose.msra.mxu0 0.0
        %1408 = vmatprep.subr.mxu0 0.0
        %1409 = vmatpush1.xpose.msra.mxu0 0.0
        %1410 = vmatprep.subr.mxu0 0.0
        %1411 = vmatpush1.xpose.msra.mxu0 0.0
        %1412 = vmatprep.subr.mxu0 0.0
        %1413 = vmatpush1.xpose.msra.mxu0 0.0
        %1414 = vmatprep.subr.mxu0 0.0
        %1415 = vmatpush1.xpose.msra.mxu0 0.0
        %1416 = vmatprep.subr.mxu0 0.0
        %1417 = vmatpush1.xpose.msra.mxu0 0.0
        %1418 = vmatprep.subr.mxu0 0.0
        %1419 = vmatpush1.xpose.msra.mxu0 0.0
        %1420 = vmatprep.subr.mxu0 0.0
        %1421 = vmatpush1.xpose.msra.mxu0 0.0
        %1422 = vmatprep.subr.mxu0 0.0
        %1423 = vmatpush1.xpose.msra.mxu0 0.0
        %1424 = vmatprep.subr.mxu0 0.0
        %1425 = vmatpush1.xpose.msra.mxu0 0.0
        %1426 = vmatprep.subr.mxu0 0.0
        %1427 = vmatpush1.xpose.msra.mxu0 0.0
        %1428 = vmatprep.subr.mxu0 0.0
        %1429 = vmatpush1.xpose.msra.mxu0 0.0
        %1430 = vmatprep.subr.mxu0 0.0
        %1431 = vmatpush1.xpose.msra.mxu0 0.0
        %1432 = vmatprep.subr.mxu0 0.0
        %1433 = vmatpush1.xpose.msra.mxu0 0.0
        %1434 = vmatprep.subr.mxu0 0.0
        %1435 = vmatpush1.xpose.msra.mxu0 0.0
        %1436 = vmatprep.subr.mxu0 0.0
        %1437 = vmatpush1.xpose.msra.mxu0 0.0
        %1438 = vmatprep.subr.mxu0 0.0
        %1439 = vmatpush1.xpose.msra.mxu0 0.0
        %1440 = vmatprep.subr.mxu0 0.0
        %1441 = vmatpush1.xpose.msra.mxu0 0.0
        %1442 = vmatprep.subr.mxu0 0.0
        %1443 = vmatpush1.xpose.msra.mxu0 0.0
        %1444 = vmatprep.subr.mxu0 0.0
        %1445 = vmatpush1.xpose.msra.mxu0 0.0
        %1446 = vmatprep.subr.mxu0 0.0
        %1447 = vmatpush1.xpose.msra.mxu0 0.0
        %1448 = vmatprep.subr.mxu0 0.0
        %1449 = vmatpush1.xpose.msra.mxu0 0.0
        %1450 = vmatprep.subr.mxu0 0.0
        %1451 = vmatpush1.xpose.msra.mxu0 0.0
        %1452 = vmatprep.subr.mxu0 0.0
        %1453 = vmatpush1.xpose.msra.mxu0 0.0
        %1454 = vmatprep.subr.mxu0 0.0
        %1455 = vmatpush1.xpose.msra.mxu0 0.0
        %1456 = vmatprep.subr.mxu0 0.0
        %1457 = vmatpush1.xpose.msra.mxu0 0.0
        %1458 = vmatprep.mubr.f32.mxu0 0.0
        %1459 = vmatmul.mubr.f32.gmra.mrb[0].mxu0 %v1389
        %v1460 = vpop.f32.mrb[0].mxu0
        %v1461 = vadd.f32 0.0, %v1460
        %v1462 = vpop.f32.mrb[0].mxu0
        %1463 = vdwg.mxu0
        %v1465 = vsel %vm627, %v558, 0
        %v1468 = vsel %vm627, %v622, 0
        %1470 = vmatprep.subr.mxu0 0.0
        %1471 = vmatpush1.xpose.msra.mxu0 %v1468
        %1472 = vmatprep.subr.mxu0 0.0
        %1473 = vmatpush1.xpose.msra.mxu0 0.0
        %1474 = vmatprep.subr.mxu0 0.0
        %1475 = vmatpush1.xpose.msra.mxu0 0.0
        %1476 = vmatprep.subr.mxu0 0.0
        %1477 = vmatpush1.xpose.msra.mxu0 0.0
        %1478 = vmatprep.subr.mxu0 0.0
        %1479 = vmatpush1.xpose.msra.mxu0 0.0
        %1480 = vmatprep.subr.mxu0 0.0
        %1481 = vmatpush1.xpose.msra.mxu0 0.0
        %1482 = vmatprep.subr.mxu0 0.0
        %1483 = vmatpush1.xpose.msra.mxu0 0.0
        %1484 = vmatprep.subr.mxu0 0.0
        %1485 = vmatpush1.xpose.msra.mxu0 0.0
        %1486 = vmatprep.subr.mxu0 0.0
        %1487 = vmatpush1.xpose.msra.mxu0 0.0
        %1488 = vmatprep.subr.mxu0 0.0
        %1489 = vmatpush1.xpose.msra.mxu0 0.0
        %1490 = vmatprep.subr.mxu0 0.0
        %1491 = vmatpush1.xpose.msra.mxu0 0.0
        %1492 = vmatprep.subr.mxu0 0.0
        %1493 = vmatpush1.xpose.msra.mxu0 0.0
        %1494 = vmatprep.subr.mxu0 0.0
        %1495 = vmatpush1.xpose.msra.mxu0 0.0
        %1496 = vmatprep.subr.mxu0 0.0
        %1497 = vmatpush1.xpose.msra.mxu0 0.0
        %1498 = vmatprep.subr.mxu0 0.0
        %1499 = vmatpush1.xpose.msra.mxu0 0.0
        %1500 = vmatprep.subr.mxu0 0.0
        %1501 = vmatpush1.xpose.msra.mxu0 0.0
        %1502 = vmatprep.subr.mxu0 0.0
        %1503 = vmatpush1.xpose.msra.mxu0 0.0
        %1504 = vmatprep.subr.mxu0 0.0
        %1505 = vmatpush1.xpose.msra.mxu0 0.0
        %1506 = vmatprep.subr.mxu0 0.0
        %1507 = vmatpush1.xpose.msra.mxu0 0.0
        %1508 = vmatprep.subr.mxu0 0.0
        %1509 = vmatpush1.xpose.msra.mxu0 0.0
        %1510 = vmatprep.subr.mxu0 0.0
        %1511 = vmatpush1.xpose.msra.mxu0 0.0
        %1512 = vmatprep.subr.mxu0 0.0
        %1513 = vmatpush1.xpose.msra.mxu0 0.0
        %1514 = vmatprep.subr.mxu0 0.0
        %1515 = vmatpush1.xpose.msra.mxu0 0.0
        %1516 = vmatprep.subr.mxu0 0.0
        %1517 = vmatpush1.xpose.msra.mxu0 0.0
        %1518 = vmatprep.subr.mxu0 0.0
        %1519 = vmatpush1.xpose.msra.mxu0 0.0
        %1520 = vmatprep.subr.mxu0 0.0
        %1521 = vmatpush1.xpose.msra.mxu0 0.0
        %1522 = vmatprep.subr.mxu0 0.0
        %1523 = vmatpush1.xpose.msra.mxu0 0.0
        %1524 = vmatprep.subr.mxu0 0.0
        %1525 = vmatpush1.xpose.msra.mxu0 0.0
        %1526 = vmatprep.subr.mxu0 0.0
        %1527 = vmatpush1.xpose.msra.mxu0 0.0
        %1528 = vmatprep.subr.mxu0 0.0
        %1529 = vmatpush1.xpose.msra.mxu0 0.0
        %1530 = vmatprep.subr.mxu0 0.0
        %1531 = vmatpush1.xpose.msra.mxu0 0.0
        %1532 = vmatprep.subr.mxu0 0.0
        %1533 = vmatpush1.xpose.msra.mxu0 0.0
        %1534 = vmatprep.mubr.f32.mxu0 0.0
        %1535 = vmatmul.mubr.f32.gmra.mrb[0].mxu0 %v1465
        %v1536 = vpop.f32.mrb[0].mxu0
        %v1537 = vadd.f32 0.0, %v1536
        %v1538 = vpop.f32.mrb[0].mxu0
        %1539 = vdwg.mxu0
        %v1541 = vsel %vm627, %v559, 0
        %v1544 = vsel %vm627, %v623, 0
        %1546 = vmatprep.subr.mxu0 0.0
        %1547 = vmatpush1.xpose.msra.mxu0 %v1544
        %1548 = vmatprep.subr.mxu0 0.0
        %1549 = vmatpush1.xpose.msra.mxu0 0.0
        %1550 = vmatprep.subr.mxu0 0.0
        %1551 = vmatpush1.xpose.msra.mxu0 0.0
        %1552 = vmatprep.subr.mxu0 0.0
        %1553 = vmatpush1.xpose.msra.mxu0 0.0
        %1554 = vmatprep.subr.mxu0 0.0
        %1555 = vmatpush1.xpose.msra.mxu0 0.0
        %1556 = vmatprep.subr.mxu0 0.0
        %1557 = vmatpush1.xpose.msra.mxu0 0.0
        %1558 = vmatprep.subr.mxu0 0.0
        %1559 = vmatpush1.xpose.msra.mxu0 0.0
        %1560 = vmatprep.subr.mxu0 0.0
        %1561 = vmatpush1.xpose.msra.mxu0 0.0
        %1562 = vmatprep.subr.mxu0 0.0
        %1563 = vmatpush1.xpose.msra.mxu0 0.0
        %1564 = vmatprep.subr.mxu0 0.0
        %1565 = vmatpush1.xpose.msra.mxu0 0.0
        %1566 = vmatprep.subr.mxu0 0.0
        %1567 = vmatpush1.xpose.msra.mxu0 0.0
        %1568 = vmatprep.subr.mxu0 0.0
        %1569 = vmatpush1.xpose.msra.mxu0 0.0
        %1570 = vmatprep.subr.mxu0 0.0
        %1571 = vmatpush1.xpose.msra.mxu0 0.0
        %1572 = vmatprep.subr.mxu0 0.0
        %1573 = vmatpush1.xpose.msra.mxu0 0.0
        %1574 = vmatprep.subr.mxu0 0.0
        %1575 = vmatpush1.xpose.msra.mxu0 0.0
        %1576 = vmatprep.subr.mxu0 0.0
        %1577 = vmatpush1.xpose.msra.mxu0 0.0
        %1578 = vmatprep.subr.mxu0 0.0
        %1579 = vmatpush1.xpose.msra.mxu0 0.0
        %1580 = vmatprep.subr.mxu0 0.0
        %1581 = vmatpush1.xpose.msra.mxu0 0.0
        %1582 = vmatprep.subr.mxu0 0.0
        %1583 = vmatpush1.xpose.msra.mxu0 0.0
        %1584 = vmatprep.subr.mxu0 0.0
        %1585 = vmatpush1.xpose.msra.mxu0 0.0
        %1586 = vmatprep.subr.mxu0 0.0
        %1587 = vmatpush1.xpose.msra.mxu0 0.0
        %1588 = vmatprep.subr.mxu0 0.0
        %1589 = vmatpush1.xpose.msra.mxu0 0.0
        %1590 = vmatprep.subr.mxu0 0.0
        %1591 = vmatpush1.xpose.msra.mxu0 0.0
        %1592 = vmatprep.subr.mxu0 0.0
        %1593 = vmatpush1.xpose.msra.mxu0 0.0
        %1594 = vmatprep.subr.mxu0 0.0
        %1595 = vmatpush1.xpose.msra.mxu0 0.0
        %1596 = vmatprep.subr.mxu0 0.0
        %1597 = vmatpush1.xpose.msra.mxu0 0.0
        %1598 = vmatprep.subr.mxu0 0.0
        %1599 = vmatpush1.xpose.msra.mxu0 0.0
        %1600 = vmatprep.subr.mxu0 0.0
        %1601 = vmatpush1.xpose.msra.mxu0 0.0
        %1602 = vmatprep.subr.mxu0 0.0
        %1603 = vmatpush1.xpose.msra.mxu0 0.0
        %1604 = vmatprep.subr.mxu0 0.0
        %1605 = vmatpush1.xpose.msra.mxu0 0.0
        %1606 = vmatprep.subr.mxu0 0.0
        %1607 = vmatpush1.xpose.msra.mxu0 0.0
        %1608 = vmatprep.subr.mxu0 0.0
        %1609 = vmatpush1.xpose.msra.mxu0 0.0
        %1610 = vmatprep.mubr.f32.mxu0 0.0
        %1611 = vmatmul.mubr.f32.gmra.mrb[0].mxu0 %v1541
        %v1612 = vpop.f32.mrb[0].mxu0
        %v1613 = vadd.f32 0.0, %v1612
        %v1614 = vpop.f32.mrb[0].mxu0
        %1615 = vdwg.mxu0
        %v1617 = vsel %vm627, %v560, 0
        %v1620 = vsel %vm627, %v624, 0
        %1622 = vmatprep.subr.mxu0 0.0
        %1623 = vmatpush1.xpose.msra.mxu0 %v1620
        %1624 = vmatprep.subr.mxu0 0.0
        %1625 = vmatpush1.xpose.msra.mxu0 0.0
        %1626 = vmatprep.subr.mxu0 0.0
        %1627 = vmatpush1.xpose.msra.mxu0 0.0
        %1628 = vmatprep.subr.mxu0 0.0
        %1629 = vmatpush1.xpose.msra.mxu0 0.0
        %1630 = vmatprep.subr.mxu0 0.0
        %1631 = vmatpush1.xpose.msra.mxu0 0.0
        %1632 = vmatprep.subr.mxu0 0.0
        %1633 = vmatpush1.xpose.msra.mxu0 0.0
        %1634 = vmatprep.subr.mxu0 0.0
        %1635 = vmatpush1.xpose.msra.mxu0 0.0
        %1636 = vmatprep.subr.mxu0 0.0
        %1637 = vmatpush1.xpose.msra.mxu0 0.0
        %1638 = vmatprep.subr.mxu0 0.0
        %1639 = vmatpush1.xpose.msra.mxu0 0.0
        %1640 = vmatprep.subr.mxu0 0.0
        %1641 = vmatpush1.xpose.msra.mxu0 0.0
        %1642 = vmatprep.subr.mxu0 0.0
        %1643 = vmatpush1.xpose.msra.mxu0 0.0
        %1644 = vmatprep.subr.mxu0 0.0
        %1645 = vmatpush1.xpose.msra.mxu0 0.0
        %1646 = vmatprep.subr.mxu0 0.0
        %1647 = vmatpush1.xpose.msra.mxu0 0.0
        %1648 = vmatprep.subr.mxu0 0.0
        %1649 = vmatpush1.xpose.msra.mxu0 0.0
        %1650 = vmatprep.subr.mxu0 0.0
        %1651 = vmatpush1.xpose.msra.mxu0 0.0
        %1652 = vmatprep.subr.mxu0 0.0
        %1653 = vmatpush1.xpose.msra.mxu0 0.0
        %1654 = vmatprep.subr.mxu0 0.0
        %1655 = vmatpush1.xpose.msra.mxu0 0.0
        %1656 = vmatprep.subr.mxu0 0.0
        %1657 = vmatpush1.xpose.msra.mxu0 0.0
        %1658 = vmatprep.subr.mxu0 0.0
        %1659 = vmatpush1.xpose.msra.mxu0 0.0
        %1660 = vmatprep.subr.mxu0 0.0
        %1661 = vmatpush1.xpose.msra.mxu0 0.0
        %1662 = vmatprep.subr.mxu0 0.0
        %1663 = vmatpush1.xpose.msra.mxu0 0.0
        %1664 = vmatprep.subr.mxu0 0.0
        %1665 = vmatpush1.xpose.msra.mxu0 0.0
        %1666 = vmatprep.subr.mxu0 0.0
        %1667 = vmatpush1.xpose.msra.mxu0 0.0
        %1668 = vmatprep.subr.mxu0 0.0
        %1669 = vmatpush1.xpose.msra.mxu0 0.0
        %1670 = vmatprep.subr.mxu0 0.0
        %1671 = vmatpush1.xpose.msra.mxu0 0.0
        %1672 = vmatprep.subr.mxu0 0.0
        %1673 = vmatpush1.xpose.msra.mxu0 0.0
        %1674 = vmatprep.subr.mxu0 0.0
        %1675 = vmatpush1.xpose.msra.mxu0 0.0
        %1676 = vmatprep.subr.mxu0 0.0
        %1677 = vmatpush1.xpose.msra.mxu0 0.0
        %1678 = vmatprep.subr.mxu0 0.0
        %1679 = vmatpush1.xpose.msra.mxu0 0.0
        %1680 = vmatprep.subr.mxu0 0.0
        %1681 = vmatpush1.xpose.msra.mxu0 0.0
        %1682 = vmatprep.subr.mxu0 0.0
        %1683 = vmatpush1.xpose.msra.mxu0 0.0
        %1684 = vmatprep.subr.mxu0 0.0
        %1685 = vmatpush1.xpose.msra.mxu0 0.0
        %1686 = vmatprep.mubr.f32.mxu0 0.0
        %1687 = vmatmul.mubr.f32.gmra.mrb[0].mxu0 %v1617
        %v1688 = vpop.f32.mrb[0].mxu0
        %v1689 = vadd.f32 0.0, %v1688
        %v1690 = vpop.f32.mrb[0].mxu0
        %1691 = vdwg.mxu0
        %v1693 = vsel %vm627, %v561, 0
        %v1696 = vsel %vm627, %v625, 0
        %1698 = vmatprep.subr.mxu0 0.0
        %1699 = vmatpush1.xpose.msra.mxu0 %v1696
        %1700 = vmatprep.subr.mxu0 0.0
        %1701 = vmatpush1.xpose.msra.mxu0 0.0
        %1702 = vmatprep.subr.mxu0 0.0
        %1703 = vmatpush1.xpose.msra.mxu0 0.0
        %1704 = vmatprep.subr.mxu0 0.0
        %1705 = vmatpush1.xpose.msra.mxu0 0.0
        %1706 = vmatprep.subr.mxu0 0.0
        %1707 = vmatpush1.xpose.msra.mxu0 0.0
        %1708 = vmatprep.subr.mxu0 0.0
        %1709 = vmatpush1.xpose.msra.mxu0 0.0
        %1710 = vmatprep.subr.mxu0 0.0
        %1711 = vmatpush1.xpose.msra.mxu0 0.0
        %1712 = vmatprep.subr.mxu0 0.0
        %1713 = vmatpush1.xpose.msra.mxu0 0.0
        %1714 = vmatprep.subr.mxu0 0.0
        %1715 = vmatpush1.xpose.msra.mxu0 0.0
        %1716 = vmatprep.subr.mxu0 0.0
        %1717 = vmatpush1.xpose.msra.mxu0 0.0
        %1718 = vmatprep.subr.mxu0 0.0
        %1719 = vmatpush1.xpose.msra.mxu0 0.0
        %1720 = vmatprep.subr.mxu0 0.0
        %1721 = vmatpush1.xpose.msra.mxu0 0.0
        %1722 = vmatprep.subr.mxu0 0.0
        %1723 = vmatpush1.xpose.msra.mxu0 0.0
        %1724 = vmatprep.subr.mxu0 0.0
        %1725 = vmatpush1.xpose.msra.mxu0 0.0
        %1726 = vmatprep.subr.mxu0 0.0
        %1727 = vmatpush1.xpose.msra.mxu0 0.0
        %1728 = vmatprep.subr.mxu0 0.0
        %1729 = vmatpush1.xpose.msra.mxu0 0.0
        %1730 = vmatprep.subr.mxu0 0.0
        %1731 = vmatpush1.xpose.msra.mxu0 0.0
        %1732 = vmatprep.subr.mxu0 0.0
        %1733 = vmatpush1.xpose.msra.mxu0 0.0
        %1734 = vmatprep.subr.mxu0 0.0
        %1735 = vmatpush1.xpose.msra.mxu0 0.0
        %1736 = vmatprep.subr.mxu0 0.0
        %1737 = vmatpush1.xpose.msra.mxu0 0.0
        %1738 = vmatprep.subr.mxu0 0.0
        %1739 = vmatpush1.xpose.msra.mxu0 0.0
        %1740 = vmatprep.subr.mxu0 0.0
        %1741 = vmatpush1.xpose.msra.mxu0 0.0
        %1742 = vmatprep.subr.mxu0 0.0
        %1743 = vmatpush1.xpose.msra.mxu0 0.0
        %1744 = vmatprep.subr.mxu0 0.0
        %1745 = vmatpush1.xpose.msra.mxu0 0.0
        %1746 = vmatprep.subr.mxu0 0.0
        %1747 = vmatpush1.xpose.msra.mxu0 0.0
        %1748 = vmatprep.subr.mxu0 0.0
        %1749 = vmatpush1.xpose.msra.mxu0 0.0
        %1750 = vmatprep.subr.mxu0 0.0
        %1751 = vmatpush1.xpose.msra.mxu0 0.0
        %1752 = vmatprep.subr.mxu0 0.0
        %1753 = vmatpush1.xpose.msra.mxu0 0.0
        %1754 = vmatprep.subr.mxu0 0.0
        %1755 = vmatpush1.xpose.msra.mxu0 0.0
        %1756 = vmatprep.subr.mxu0 0.0
        %1757 = vmatpush1.xpose.msra.mxu0 0.0
        %1758 = vmatprep.subr.mxu0 0.0
        %1759 = vmatpush1.xpose.msra.mxu0 0.0
        %1760 = vmatprep.subr.mxu0 0.0
        %1761 = vmatpush1.xpose.msra.mxu0 0.0
        %1762 = vmatprep.mubr.f32.mxu0 0.0
        %1763 = vmatmul.mubr.f32.gmra.mrb[0].mxu0 %v1693
        %v1764 = vpop.f32.mrb[0].mxu0
        %v1765 = vadd.f32 0.0, %v1764
        %v1766 = vpop.f32.mrb[0].mxu0
        %1767 = vdwg.mxu0
        %v1769 = vsel %vm627, %v562, 0
        %v1772 = vsel %vm627, %v626, 0
        %1774 = vmatprep.subr.mxu0 0.0
        %1775 = vmatpush1.xpose.msra.mxu0 %v1772
        %1776 = vmatprep.subr.mxu0 0.0
        %1777 = vmatpush1.xpose.msra.mxu0 0.0
        %1778 = vmatprep.subr.mxu0 0.0
        %1779 = vmatpush1.xpose.msra.mxu0 0.0
        %1780 = vmatprep.subr.mxu0 0.0
        %1781 = vmatpush1.xpose.msra.mxu0 0.0
        %1782 = vmatprep.subr.mxu0 0.0
        %1783 = vmatpush1.xpose.msra.mxu0 0.0
        %1784 = vmatprep.subr.mxu0 0.0
        %1785 = vmatpush1.xpose.msra.mxu0 0.0
        %1786 = vmatprep.subr.mxu0 0.0
        %1787 = vmatpush1.xpose.msra.mxu0 0.0
        %1788 = vmatprep.subr.mxu0 0.0
        %1789 = vmatpush1.xpose.msra.mxu0 0.0
        %1790 = vmatprep.subr.mxu0 0.0
        %1791 = vmatpush1.xpose.msra.mxu0 0.0
        %1792 = vmatprep.subr.mxu0 0.0
        %1793 = vmatpush1.xpose.msra.mxu0 0.0
        %1794 = vmatprep.subr.mxu0 0.0
        %1795 = vmatpush1.xpose.msra.mxu0 0.0
        %1796 = vmatprep.subr.mxu0 0.0
        %1797 = vmatpush1.xpose.msra.mxu0 0.0
        %1798 = vmatprep.subr.mxu0 0.0
        %1799 = vmatpush1.xpose.msra.mxu0 0.0
        %1800 = vmatprep.subr.mxu0 0.0
        %1801 = vmatpush1.xpose.msra.mxu0 0.0
        %1802 = vmatprep.subr.mxu0 0.0
        %1803 = vmatpush1.xpose.msra.mxu0 0.0
        %1804 = vmatprep.subr.mxu0 0.0
        %1805 = vmatpush1.xpose.msra.mxu0 0.0
        %1806 = vmatprep.subr.mxu0 0.0
        %1807 = vmatpush1.xpose.msra.mxu0 0.0
        %1808 = vmatprep.subr.mxu0 0.0
        %1809 = vmatpush1.xpose.msra.mxu0 0.0
        %1810 = vmatprep.subr.mxu0 0.0
        %1811 = vmatpush1.xpose.msra.mxu0 0.0
        %1812 = vmatprep.subr.mxu0 0.0
        %1813 = vmatpush1.xpose.msra.mxu0 0.0
        %1814 = vmatprep.subr.mxu0 0.0
        %1815 = vmatpush1.xpose.msra.mxu0 0.0
        %1816 = vmatprep.subr.mxu0 0.0
        %1817 = vmatpush1.xpose.msra.mxu0 0.0
        %1818 = vmatprep.subr.mxu0 0.0
        %1819 = vmatpush1.xpose.msra.mxu0 0.0
        %1820 = vmatprep.subr.mxu0 0.0
        %1821 = vmatpush1.xpose.msra.mxu0 0.0
        %1822 = vmatprep.subr.mxu0 0.0
        %1823 = vmatpush1.xpose.msra.mxu0 0.0
        %1824 = vmatprep.subr.mxu0 0.0
        %1825 = vmatpush1.xpose.msra.mxu0 0.0
        %1826 = vmatprep.subr.mxu0 0.0
        %1827 = vmatpush1.xpose.msra.mxu0 0.0
        %1828 = vmatprep.subr.mxu0 0.0
        %1829 = vmatpush1.xpose.msra.mxu0 0.0
        %1830 = vmatprep.subr.mxu0 0.0
        %1831 = vmatpush1.xpose.msra.mxu0 0.0
        %1832 = vmatprep.subr.mxu0 0.0
        %1833 = vmatpush1.xpose.msra.mxu0 0.0
        %1834 = vmatprep.subr.mxu0 0.0
        %1835 = vmatpush1.xpose.msra.mxu0 0.0
        %1836 = vmatprep.subr.mxu0 0.0
        %1837 = vmatpush1.xpose.msra.mxu0 0.0
        %1838 = vmatprep.mubr.f32.mxu0 0.0
        %1839 = vmatmul.mubr.f32.gmra.mrb[0].mxu0 %v1769
        %v1840 = vpop.f32.mrb[0].mxu0
        %v1841 = vadd.f32 0.0, %v1840
        %v1842 = vpop.f32.mrb[0].mxu0
        %1843 = vdwg.mxu0
        %vm1844 = vcmp.gt.f32.partialorder %v701, 0.0
        %vm1845 = vcmp.gt.f32.partialorder %v777, 0.0
        %vm1846 = vcmp.gt.f32.partialorder %v853, 0.0
        %vm1847 = vcmp.gt.f32.partialorder %v929, 0.0
        %vm1848 = vcmp.gt.f32.partialorder %v1005, 0.0
        %vm1849 = vcmp.gt.f32.partialorder %v1081, 0.0
        %vm1850 = vcmp.gt.f32.partialorder %v1157, 0.0
        %vm1851 = vcmp.gt.f32.partialorder %v1233, 0.0
        %vm1852 = vcmp.gt.f32.partialorder %v1309, 0.0
        %vm1853 = vcmp.gt.f32.partialorder %v1385, 0.0
        %vm1854 = vcmp.gt.f32.partialorder %v1461, 0.0
        %vm1855 = vcmp.gt.f32.partialorder %v1537, 0.0
        %vm1856 = vcmp.gt.f32.partialorder %v1613, 0.0
        %vm1857 = vcmp.gt.f32.partialorder %v1689, 0.0
        %vm1858 = vcmp.gt.f32.partialorder %v1765, 0.0
        %vm1859 = vcmp.gt.f32.partialorder %v1841, 0.0
        %v1860 = vmul.f32 %v701, 0.2
        %v1861 = vmul.f32 %v777, 0.2
        %v1862 = vmul.f32 %v853, 0.2
        %v1863 = vmul.f32 %v929, 0.2
        %v1864 = vmul.f32 %v1005, 0.2
        %v1865 = vmul.f32 %v1081, 0.2
        %v1866 = vmul.f32 %v1157, 0.2
        %v1867 = vmul.f32 %v1233, 0.2
        %v1868 = vmul.f32 %v1309, 0.2
        %v1869 = vmul.f32 %v1385, 0.2
        %v1870 = vmul.f32 %v1461, 0.2
        %v1871 = vmul.f32 %v1537, 0.2
        %v1872 = vmul.f32 %v1613, 0.2
        %v1873 = vmul.f32 %v1689, 0.2
        %v1874 = vmul.f32 %v1765, 0.2
        %v1875 = vmul.f32 %v1841, 0.2
        %v1876 = vsel %vm1844, %v701, %v1860
        %v1877 = vsel %vm1845, %v777, %v1861
        %v1878 = vsel %vm1846, %v853, %v1862
        %v1879 = vsel %vm1847, %v929, %v1863
        %v1880 = vsel %vm1848, %v1005, %v1864
        %v1881 = vsel %vm1849, %v1081, %v1865
        %v1882 = vsel %vm1850, %v1157, %v1866
        %v1883 = vsel %vm1851, %v1233, %v1867
        %v1884 = vsel %vm1852, %v1309, %v1868
        %v1885 = vsel %vm1853, %v1385, %v1869
        %v1886 = vsel %vm1854, %v1461, %v1870
        %v1887 = vsel %vm1855, %v1537, %v1871
        %v1888 = vsel %vm1856, %v1613, %v1872
        %v1889 = vsel %vm1857, %v1689, %v1873
        %v1890 = vsel %vm1858, %v1765, %v1874
        %v1891 = vsel %vm1859, %v1841, %v1875
        %vm1892 = vcmp.gt.f32.partialorder %v466, 0.0
        %vm1893 = vcmp.gt.f32.partialorder %v467, 0.0
        %vm1894 = vcmp.gt.f32.partialorder %v468, 0.0
        %vm1895 = vcmp.gt.f32.partialorder %v469, 0.0
        %vm1896 = vcmp.gt.f32.partialorder %v470, 0.0
        %vm1897 = vcmp.gt.f32.partialorder %v471, 0.0
        %vm1898 = vcmp.gt.f32.partialorder %v472, 0.0
        %vm1899 = vcmp.gt.f32.partialorder %v473, 0.0
        %vm1900 = vcmp.gt.f32.partialorder %v474, 0.0
        %vm1901 = vcmp.gt.f32.partialorder %v475, 0.0
        %vm1902 = vcmp.gt.f32.partialorder %v476, 0.0
        %vm1903 = vcmp.gt.f32.partialorder %v477, 0.0
        %vm1904 = vcmp.gt.f32.partialorder %v478, 0.0
        %vm1905 = vcmp.gt.f32.partialorder %v479, 0.0
        %vm1906 = vcmp.gt.f32.partialorder %v480, 0.0
        %vm1907 = vcmp.gt.f32.partialorder %v481, 0.0
        %v1908 = vsel %vm1892, %v1876, -9e+15
        %v1909 = vsel %vm1893, %v1877, -9e+15
        %v1910 = vsel %vm1894, %v1878, -9e+15
        %v1911 = vsel %vm1895, %v1879, -9e+15
        %v1912 = vsel %vm1896, %v1880, -9e+15
        %v1913 = vsel %vm1897, %v1881, -9e+15
        %v1914 = vsel %vm1898, %v1882, -9e+15
        %v1915 = vsel %vm1899, %v1883, -9e+15
        %v1916 = vsel %vm1900, %v1884, -9e+15
        %v1917 = vsel %vm1901, %v1885, -9e+15
        %v1918 = vsel %vm1902, %v1886, -9e+15
        %v1919 = vsel %vm1903, %v1887, -9e+15
        %v1920 = vsel %vm1904, %v1888, -9e+15
        %v1921 = vsel %vm1905, %v1889, -9e+15
        %v1922 = vsel %vm1906, %v1890, -9e+15
        %v1923 = vsel %vm1907, %v1891, -9e+15
        %vm1924 = vcmask 64512
        %v1925 = vsel %vm1924, %v1908, -inf
        %1926 = vmax.xlane.f32.xlu0 %v1925
        %v1927 = vpop.xlane.xlu0 %1926
        %v1928 = vsel %vm1924, %v1909, -inf
        %1929 = vmax.xlane.f32.xlu0 %v1928
        %v1930 = vpop.xlane.xlu0 %1929
        %v1931 = vsel %vm1924, %v1910, -inf
        %1932 = vmax.xlane.f32.xlu0 %v1931
        %v1933 = vpop.xlane.xlu0 %1932
        %v1934 = vsel %vm1924, %v1911, -inf
        %1935 = vmax.xlane.f32.xlu0 %v1934
        %v1936 = vpop.xlane.xlu0 %1935
        %v1937 = vsel %vm1924, %v1912, -inf
        %1938 = vmax.xlane.f32.xlu0 %v1937
        %v1939 = vpop.xlane.xlu0 %1938
        %v1940 = vsel %vm1924, %v1913, -inf
        %1941 = vmax.xlane.f32.xlu0 %v1940
        %v1942 = vpop.xlane.xlu0 %1941
        %v1943 = vsel %vm1924, %v1914, -inf
        %1944 = vmax.xlane.f32.xlu0 %v1943
        %v1945 = vpop.xlane.xlu0 %1944
        %v1946 = vsel %vm1924, %v1915, -inf
        %1947 = vmax.xlane.f32.xlu0 %v1946
        %v1948 = vpop.xlane.xlu0 %1947
        %v1949 = vsel %vm1924, %v1916, -inf
        %1950 = vmax.xlane.f32.xlu0 %v1949
        %v1951 = vpop.xlane.xlu0 %1950
        %v1952 = vsel %vm1924, %v1917, -inf
        %1953 = vmax.xlane.f32.xlu0 %v1952
        %v1954 = vpop.xlane.xlu0 %1953
        %v1955 = vsel %vm1924, %v1918, -inf
        %1956 = vmax.xlane.f32.xlu0 %v1955
        %v1957 = vpop.xlane.xlu0 %1956
        %v1958 = vsel %vm1924, %v1919, -inf
        %1959 = vmax.xlane.f32.xlu0 %v1958
        %v1960 = vpop.xlane.xlu0 %1959
        %v1961 = vsel %vm1924, %v1920, -inf
        %1962 = vmax.xlane.f32.xlu0 %v1961
        %v1963 = vpop.xlane.xlu0 %1962
        %v1964 = vsel %vm1924, %v1921, -inf
        %1965 = vmax.xlane.f32.xlu0 %v1964
        %v1966 = vpop.xlane.xlu0 %1965
        %v1967 = vsel %vm1924, %v1922, -inf
        %1968 = vmax.xlane.f32.xlu0 %v1967
        %v1969 = vpop.xlane.xlu0 %1968
        %v1970 = vsel %vm1924, %v1923, -inf
        %1971 = vmax.xlane.f32.xlu0 %v1970
        %v1972 = vpop.xlane.xlu0 %1971
        %v1973 = vsub.f32 %v1908, %v1927
        %v1974 = vsub.f32 %v1909, %v1930
        %v1975 = vsub.f32 %v1910, %v1933
        %v1976 = vsub.f32 %v1911, %v1936
        %v1977 = vsub.f32 %v1912, %v1939
        %v1978 = vsub.f32 %v1913, %v1942
        %v1979 = vsub.f32 %v1914, %v1945
        %v1980 = vsub.f32 %v1915, %v1948
        %v1981 = vsub.f32 %v1916, %v1951
        %v1982 = vsub.f32 %v1917, %v1954
        %v1983 = vsub.f32 %v1918, %v1957
        %v1984 = vsub.f32 %v1919, %v1960
        %v1985 = vsub.f32 %v1920, %v1963
        %v1986 = vsub.f32 %v1921, %v1966
        %v1987 = vsub.f32 %v1922, %v1969
        %v1988 = vsub.f32 %v1923, %v1972
        %v1989 = vmul.f32 %v1973, 1.442695
        %v1990 = vpow.pop %v1989
        %v1991 = vmul.f32 %v1974, 1.442695
        %v1992 = vpow.pop %v1991
        %v1993 = vmul.f32 %v1975, 1.442695
        %v1994 = vpow.pop %v1993
        %v1995 = vmul.f32 %v1976, 1.442695
        %v1996 = vpow.pop %v1995
        %v1997 = vmul.f32 %v1977, 1.442695
        %v1998 = vpow.pop %v1997
        %v1999 = vmul.f32 %v1978, 1.442695
        %v2000 = vpow.pop %v1999
        %v2001 = vmul.f32 %v1979, 1.442695
        %v2002 = vpow.pop %v2001
        %v2003 = vmul.f32 %v1980, 1.442695
        %v2004 = vpow.pop %v2003
        %v2005 = vmul.f32 %v1981, 1.442695
        %v2006 = vpow.pop %v2005
        %v2007 = vmul.f32 %v1982, 1.442695
        %v2008 = vpow.pop %v2007
        %v2009 = vmul.f32 %v1983, 1.442695
        %v2010 = vpow.pop %v2009
        %v2011 = vmul.f32 %v1984, 1.442695
        %v2012 = vpow.pop %v2011
        %v2013 = vmul.f32 %v1985, 1.442695
        %v2014 = vpow.pop %v2013
        %v2015 = vmul.f32 %v1986, 1.442695
        %v2016 = vpow.pop %v2015
        %v2017 = vmul.f32 %v1987, 1.442695
        %v2018 = vpow.pop %v2017
        %v2019 = vmul.f32 %v1988, 1.442695
        %v2020 = vpow.pop %v2019
        %v2021 = vsel %vm1924, %v1990, 0.0
        %2022 = vadd.xlane.f32.xlu0 %v2021
        %v2023 = vpop.xlane.xlu0 %2022
        %v2024 = vsel %vm1924, %v1992, 0.0
        %2025 = vadd.xlane.f32.xlu0 %v2024
        %v2026 = vpop.xlane.xlu0 %2025
        %v2027 = vsel %vm1924, %v1994, 0.0
        %2028 = vadd.xlane.f32.xlu0 %v2027
        %v2029 = vpop.xlane.xlu0 %2028
        %v2030 = vsel %vm1924, %v1996, 0.0
        %2031 = vadd.xlane.f32.xlu0 %v2030
        %v2032 = vpop.xlane.xlu0 %2031
        %v2033 = vsel %vm1924, %v1998, 0.0
        %2034 = vadd.xlane.f32.xlu0 %v2033
        %v2035 = vpop.xlane.xlu0 %2034
        %v2036 = vsel %vm1924, %v2000, 0.0
        %2037 = vadd.xlane.f32.xlu0 %v2036
        %v2038 = vpop.xlane.xlu0 %2037
        %v2039 = vsel %vm1924, %v2002, 0.0
        %2040 = vadd.xlane.f32.xlu0 %v2039
        %v2041 = vpop.xlane.xlu0 %2040
        %v2042 = vsel %vm1924, %v2004, 0.0
        %2043 = vadd.xlane.f32.xlu0 %v2042
        %v2044 = vpop.xlane.xlu0 %2043
        %v2045 = vsel %vm1924, %v2006, 0.0
        %2046 = vadd.xlane.f32.xlu0 %v2045
        %v2047 = vpop.xlane.xlu0 %2046
        %v2048 = vsel %vm1924, %v2008, 0.0
        %2049 = vadd.xlane.f32.xlu0 %v2048
        %v2050 = vpop.xlane.xlu0 %2049
        %v2051 = vsel %vm1924, %v2010, 0.0
        %2052 = vadd.xlane.f32.xlu0 %v2051
        %v2053 = vpop.xlane.xlu0 %2052
        %v2054 = vsel %vm1924, %v2012, 0.0
        %2055 = vadd.xlane.f32.xlu0 %v2054
        %v2056 = vpop.xlane.xlu0 %2055
        %v2057 = vsel %vm1924, %v2014, 0.0
        %2058 = vadd.xlane.f32.xlu0 %v2057
        %v2059 = vpop.xlane.xlu0 %2058
        %v2060 = vsel %vm1924, %v2016, 0.0
        %2061 = vadd.xlane.f32.xlu0 %v2060
        %v2062 = vpop.xlane.xlu0 %2061
        %v2063 = vsel %vm1924, %v2018, 0.0
        %2064 = vadd.xlane.f32.xlu0 %v2063
        %v2065 = vpop.xlane.xlu0 %2064
        %v2066 = vsel %vm1924, %v2020, 0.0
        %2067 = vadd.xlane.f32.xlu0 %v2066
        %v2068 = vpop.xlane.xlu0 %2067
        %v2069 = vrcp.pop %v2023
        %v2070 = vrcp.pop %v2026
        %v2071 = vrcp.pop %v2029
        %v2072 = vrcp.pop %v2032
        %v2073 = vrcp.pop %v2035
        %v2074 = vrcp.pop %v2038
        %v2075 = vrcp.pop %v2041
        %v2076 = vrcp.pop %v2044
        %v2077 = vrcp.pop %v2047
        %v2078 = vrcp.pop %v2050
        %v2079 = vrcp.pop %v2053
        %v2080 = vrcp.pop %v2056
        %v2081 = vrcp.pop %v2059
        %v2082 = vrcp.pop %v2062
        %v2083 = vrcp.pop %v2065
        %v2084 = vrcp.pop %v2068
        %v2085 = vmul.f32 %v1990, %v2069
        %v2086 = vmul.f32 %v1992, %v2070
        %v2087 = vmul.f32 %v1994, %v2071
        %v2088 = vmul.f32 %v1996, %v2072
        %v2089 = vmul.f32 %v1998, %v2073
        %v2090 = vmul.f32 %v2000, %v2074
        %v2091 = vmul.f32 %v2002, %v2075
        %v2092 = vmul.f32 %v2004, %v2076
        %v2093 = vmul.f32 %v2006, %v2077
        %v2094 = vmul.f32 %v2008, %v2078
        %v2095 = vmul.f32 %v2010, %v2079
        %v2096 = vmul.f32 %v2012, %v2080
        %v2097 = vmul.f32 %v2014, %v2081
        %v2098 = vmul.f32 %v2016, %v2082
        %v2099 = vmul.f32 %v2018, %v2083
        %v2100 = vmul.f32 %v2020, %v2084
        %v2102 = vsel %vm1924, %v2085, 0
        %2104 = vmatprep.subr.mxu0 0.0
        %2105 = vmatpush1.msra.mxu0 %v356
        %2106 = vmatprep.subr.mxu0 0.0
        %2107 = vmatpush1.msra.mxu0 0.0
        %2108 = vmatprep.subr.mxu0 0.0
        %2109 = vmatpush1.msra.mxu0 0.0
        %2110 = vmatprep.subr.mxu0 0.0
        %2111 = vmatpush1.msra.mxu0 0.0
        %2112 = vmatprep.subr.mxu0 0.0
        %2113 = vmatpush1.msra.mxu0 0.0
        %2114 = vmatprep.subr.mxu0 0.0
        %2115 = vmatpush1.msra.mxu0 0.0
        %2116 = vmatprep.subr.mxu0 0.0
        %2117 = vmatpush1.msra.mxu0 0.0
        %2118 = vmatprep.subr.mxu0 0.0
        %2119 = vmatpush1.msra.mxu0 0.0
        %2120 = vmatprep.subr.mxu0 0.0
        %2121 = vmatpush1.msra.mxu0 0.0
        %2122 = vmatprep.subr.mxu0 0.0
        %2123 = vmatpush1.msra.mxu0 0.0
        %2124 = vmatprep.subr.mxu0 0.0
        %2125 = vmatpush1.msra.mxu0 0.0
        %2126 = vmatprep.subr.mxu0 0.0
        %2127 = vmatpush1.msra.mxu0 0.0
        %2128 = vmatprep.subr.mxu0 0.0
        %2129 = vmatpush1.msra.mxu0 0.0
        %2130 = vmatprep.subr.mxu0 0.0
        %2131 = vmatpush1.msra.mxu0 0.0
        %2132 = vmatprep.subr.mxu0 0.0
        %2133 = vmatpush1.msra.mxu0 0.0
        %2134 = vmatprep.subr.mxu0 0.0
        %2135 = vmatpush1.msra.mxu0 0.0
        %2136 = vmatprep.subr.mxu0 0.0
        %2137 = vmatpush1.msra.mxu0 0.0
        %2138 = vmatprep.subr.mxu0 0.0
        %2139 = vmatpush1.msra.mxu0 0.0
        %2140 = vmatprep.subr.mxu0 0.0
        %2141 = vmatpush1.msra.mxu0 0.0
        %2142 = vmatprep.subr.mxu0 0.0
        %2143 = vmatpush1.msra.mxu0 0.0
        %2144 = vmatprep.subr.mxu0 0.0
        %2145 = vmatpush1.msra.mxu0 0.0
        %2146 = vmatprep.subr.mxu0 0.0
        %2147 = vmatpush1.msra.mxu0 0.0
        %2148 = vmatprep.subr.mxu0 0.0
        %2149 = vmatpush1.msra.mxu0 0.0
        %2150 = vmatprep.subr.mxu0 0.0
        %2151 = vmatpush1.msra.mxu0 0.0
        %2152 = vmatprep.subr.mxu0 0.0
        %2153 = vmatpush1.msra.mxu0 0.0
        %2154 = vmatprep.subr.mxu0 0.0
        %2155 = vmatpush1.msra.mxu0 0.0
        %2156 = vmatprep.subr.mxu0 0.0
        %2157 = vmatpush1.msra.mxu0 0.0
        %2158 = vmatprep.subr.mxu0 0.0
        %2159 = vmatpush1.msra.mxu0 0.0
        %2160 = vmatprep.subr.mxu0 0.0
        %2161 = vmatpush1.msra.mxu0 0.0
        %2162 = vmatprep.subr.mxu0 0.0
        %2163 = vmatpush1.msra.mxu0 0.0
        %2164 = vmatprep.subr.mxu0 0.0
        %2165 = vmatpush1.msra.mxu0 0.0
        %2166 = vmatprep.subr.mxu0 0.0
        %2167 = vmatpush1.msra.mxu0 0.0
        %2168 = vmatprep.mubr.f32.mxu0 0.0
        %2169 = vmatmul.mubr.f32.gmra.mrb[0].mxu0 %v2102
        %v2170 = vpop.f32.mrb[0].mxu0
        %v2171 = vadd.f32 0.0, %v2170
        %v2172 = vpop.f32.mrb[0].mxu0
        %2173 = vdwg.mxu0
        %v2175 = vsel %vm1924, %v2086, 0
        %2177 = vmatprep.subr.mxu0 0.0
        %2178 = vmatpush1.msra.mxu0 %v361
        %2179 = vmatprep.subr.mxu0 0.0
        %2180 = vmatpush1.msra.mxu0 0.0
        %2181 = vmatprep.subr.mxu0 0.0
        %2182 = vmatpush1.msra.mxu0 0.0
        %2183 = vmatprep.subr.mxu0 0.0
        %2184 = vmatpush1.msra.mxu0 0.0
        %2185 = vmatprep.subr.mxu0 0.0
        %2186 = vmatpush1.msra.mxu0 0.0
        %2187 = vmatprep.subr.mxu0 0.0
        %2188 = vmatpush1.msra.mxu0 0.0
        %2189 = vmatprep.subr.mxu0 0.0
        %2190 = vmatpush1.msra.mxu0 0.0
        %2191 = vmatprep.subr.mxu0 0.0
        %2192 = vmatpush1.msra.mxu0 0.0
        %2193 = vmatprep.subr.mxu0 0.0
        %2194 = vmatpush1.msra.mxu0 0.0
        %2195 = vmatprep.subr.mxu0 0.0
        %2196 = vmatpush1.msra.mxu0 0.0
        %2197 = vmatprep.subr.mxu0 0.0
        %2198 = vmatpush1.msra.mxu0 0.0
        %2199 = vmatprep.subr.mxu0 0.0
        %2200 = vmatpush1.msra.mxu0 0.0
        %2201 = vmatprep.subr.mxu0 0.0
        %2202 = vmatpush1.msra.mxu0 0.0
        %2203 = vmatprep.subr.mxu0 0.0
        %2204 = vmatpush1.msra.mxu0 0.0
        %2205 = vmatprep.subr.mxu0 0.0
        %2206 = vmatpush1.msra.mxu0 0.0
        %2207 = vmatprep.subr.mxu0 0.0
        %2208 = vmatpush1.msra.mxu0 0.0
        %2209 = vmatprep.subr.mxu0 0.0
        %2210 = vmatpush1.msra.mxu0 0.0
        %2211 = vmatprep.subr.mxu0 0.0
        %2212 = vmatpush1.msra.mxu0 0.0
        %2213 = vmatprep.subr.mxu0 0.0
        %2214 = vmatpush1.msra.mxu0 0.0
        %2215 = vmatprep.subr.mxu0 0.0
        %2216 = vmatpush1.msra.mxu0 0.0
        %2217 = vmatprep.subr.mxu0 0.0
        %2218 = vmatpush1.msra.mxu0 0.0
        %2219 = vmatprep.subr.mxu0 0.0
        %2220 = vmatpush1.msra.mxu0 0.0
        %2221 = vmatprep.subr.mxu0 0.0
        %2222 = vmatpush1.msra.mxu0 0.0
        %2223 = vmatprep.subr.mxu0 0.0
        %2224 = vmatpush1.msra.mxu0 0.0
        %2225 = vmatprep.subr.mxu0 0.0
        %2226 = vmatpush1.msra.mxu0 0.0
        %2227 = vmatprep.subr.mxu0 0.0
        %2228 = vmatpush1.msra.mxu0 0.0
        %2229 = vmatprep.subr.mxu0 0.0
        %2230 = vmatpush1.msra.mxu0 0.0
        %2231 = vmatprep.subr.mxu0 0.0
        %2232 = vmatpush1.msra.mxu0 0.0
        %2233 = vmatprep.subr.mxu0 0.0
        %2234 = vmatpush1.msra.mxu0 0.0
        %2235 = vmatprep.subr.mxu0 0.0
        %2236 = vmatpush1.msra.mxu0 0.0
        %2237 = vmatprep.subr.mxu0 0.0
        %2238 = vmatpush1.msra.mxu0 0.0
        %2239 = vmatprep.subr.mxu0 0.0
        %2240 = vmatpush1.msra.mxu0 0.0
        %2241 = vmatprep.mubr.f32.mxu0 0.0
        %2242 = vmatmul.mubr.f32.gmra.mrb[0].mxu0 %v2175
        %v2243 = vpop.f32.mrb[0].mxu0
        %v2244 = vadd.f32 0.0, %v2243
        %v2245 = vpop.f32.mrb[0].mxu0
        %2246 = vdwg.mxu0
        %v2248 = vsel %vm1924, %v2087, 0
        %2250 = vmatprep.subr.mxu0 0.0
        %2251 = vmatpush1.msra.mxu0 %v366
        %2252 = vmatprep.subr.mxu0 0.0
        %2253 = vmatpush1.msra.mxu0 0.0
        %2254 = vmatprep.subr.mxu0 0.0
        %2255 = vmatpush1.msra.mxu0 0.0
        %2256 = vmatprep.subr.mxu0 0.0
        %2257 = vmatpush1.msra.mxu0 0.0
        %2258 = vmatprep.subr.mxu0 0.0
        %2259 = vmatpush1.msra.mxu0 0.0
        %2260 = vmatprep.subr.mxu0 0.0
        %2261 = vmatpush1.msra.mxu0 0.0
        %2262 = vmatprep.subr.mxu0 0.0
        %2263 = vmatpush1.msra.mxu0 0.0
        %2264 = vmatprep.subr.mxu0 0.0
        %2265 = vmatpush1.msra.mxu0 0.0
        %2266 = vmatprep.subr.mxu0 0.0
        %2267 = vmatpush1.msra.mxu0 0.0
        %2268 = vmatprep.subr.mxu0 0.0
        %2269 = vmatpush1.msra.mxu0 0.0
        %2270 = vmatprep.subr.mxu0 0.0
        %2271 = vmatpush1.msra.mxu0 0.0
        %2272 = vmatprep.subr.mxu0 0.0
        %2273 = vmatpush1.msra.mxu0 0.0
        %2274 = vmatprep.subr.mxu0 0.0
        %2275 = vmatpush1.msra.mxu0 0.0
        %2276 = vmatprep.subr.mxu0 0.0
        %2277 = vmatpush1.msra.mxu0 0.0
        %2278 = vmatprep.subr.mxu0 0.0
        %2279 = vmatpush1.msra.mxu0 0.0
        %2280 = vmatprep.subr.mxu0 0.0
        %2281 = vmatpush1.msra.mxu0 0.0
        %2282 = vmatprep.subr.mxu0 0.0
        %2283 = vmatpush1.msra.mxu0 0.0
        %2284 = vmatprep.subr.mxu0 0.0
        %2285 = vmatpush1.msra.mxu0 0.0
        %2286 = vmatprep.subr.mxu0 0.0
        %2287 = vmatpush1.msra.mxu0 0.0
        %2288 = vmatprep.subr.mxu0 0.0
        %2289 = vmatpush1.msra.mxu0 0.0
        %2290 = vmatprep.subr.mxu0 0.0
        %2291 = vmatpush1.msra.mxu0 0.0
        %2292 = vmatprep.subr.mxu0 0.0
        %2293 = vmatpush1.msra.mxu0 0.0
        %2294 = vmatprep.subr.mxu0 0.0
        %2295 = vmatpush1.msra.mxu0 0.0
        %2296 = vmatprep.subr.mxu0 0.0
        %2297 = vmatpush1.msra.mxu0 0.0
        %2298 = vmatprep.subr.mxu0 0.0
        %2299 = vmatpush1.msra.mxu0 0.0
        %2300 = vmatprep.subr.mxu0 0.0
        %2301 = vmatpush1.msra.mxu0 0.0
        %2302 = vmatprep.subr.mxu0 0.0
        %2303 = vmatpush1.msra.mxu0 0.0
        %2304 = vmatprep.subr.mxu0 0.0
        %2305 = vmatpush1.msra.mxu0 0.0
        %2306 = vmatprep.subr.mxu0 0.0
        %2307 = vmatpush1.msra.mxu0 0.0
        %2308 = vmatprep.subr.mxu0 0.0
        %2309 = vmatpush1.msra.mxu0 0.0
        %2310 = vmatprep.subr.mxu0 0.0
        %2311 = vmatpush1.msra.mxu0 0.0
        %2312 = vmatprep.subr.mxu0 0.0
        %2313 = vmatpush1.msra.mxu0 0.0
        %2314 = vmatprep.mubr.f32.mxu0 0.0
        %2315 = vmatmul.mubr.f32.gmra.mrb[0].mxu0 %v2248
        %v2316 = vpop.f32.mrb[0].mxu0
        %v2317 = vadd.f32 0.0, %v2316
        %v2318 = vpop.f32.mrb[0].mxu0
        %2319 = vdwg.mxu0
        %v2321 = vsel %vm1924, %v2088, 0
        %2323 = vmatprep.subr.mxu0 0.0
        %2324 = vmatpush1.msra.mxu0 %v371
        %2325 = vmatprep.subr.mxu0 0.0
        %2326 = vmatpush1.msra.mxu0 0.0
        %2327 = vmatprep.subr.mxu0 0.0
        %2328 = vmatpush1.msra.mxu0 0.0
        %2329 = vmatprep.subr.mxu0 0.0
        %2330 = vmatpush1.msra.mxu0 0.0
        %2331 = vmatprep.subr.mxu0 0.0
        %2332 = vmatpush1.msra.mxu0 0.0
        %2333 = vmatprep.subr.mxu0 0.0
        %2334 = vmatpush1.msra.mxu0 0.0
        %2335 = vmatprep.subr.mxu0 0.0
        %2336 = vmatpush1.msra.mxu0 0.0
        %2337 = vmatprep.subr.mxu0 0.0
        %2338 = vmatpush1.msra.mxu0 0.0
        %2339 = vmatprep.subr.mxu0 0.0
        %2340 = vmatpush1.msra.mxu0 0.0
        %2341 = vmatprep.subr.mxu0 0.0
        %2342 = vmatpush1.msra.mxu0 0.0
        %2343 = vmatprep.subr.mxu0 0.0
        %2344 = vmatpush1.msra.mxu0 0.0
        %2345 = vmatprep.subr.mxu0 0.0
        %2346 = vmatpush1.msra.mxu0 0.0
        %2347 = vmatprep.subr.mxu0 0.0
        %2348 = vmatpush1.msra.mxu0 0.0
        %2349 = vmatprep.subr.mxu0 0.0
        %2350 = vmatpush1.msra.mxu0 0.0
        %2351 = vmatprep.subr.mxu0 0.0
        %2352 = vmatpush1.msra.mxu0 0.0
        %2353 = vmatprep.subr.mxu0 0.0
        %2354 = vmatpush1.msra.mxu0 0.0
        %2355 = vmatprep.subr.mxu0 0.0
        %2356 = vmatpush1.msra.mxu0 0.0
        %2357 = vmatprep.subr.mxu0 0.0
        %2358 = vmatpush1.msra.mxu0 0.0
        %2359 = vmatprep.subr.mxu0 0.0
        %2360 = vmatpush1.msra.mxu0 0.0
        %2361 = vmatprep.subr.mxu0 0.0
        %2362 = vmatpush1.msra.mxu0 0.0
        %2363 = vmatprep.subr.mxu0 0.0
        %2364 = vmatpush1.msra.mxu0 0.0
        %2365 = vmatprep.subr.mxu0 0.0
        %2366 = vmatpush1.msra.mxu0 0.0
        %2367 = vmatprep.subr.mxu0 0.0
        %2368 = vmatpush1.msra.mxu0 0.0
        %2369 = vmatprep.subr.mxu0 0.0
        %2370 = vmatpush1.msra.mxu0 0.0
        %2371 = vmatprep.subr.mxu0 0.0
        %2372 = vmatpush1.msra.mxu0 0.0
        %2373 = vmatprep.subr.mxu0 0.0
        %2374 = vmatpush1.msra.mxu0 0.0
        %2375 = vmatprep.subr.mxu0 0.0
        %2376 = vmatpush1.msra.mxu0 0.0
        %2377 = vmatprep.subr.mxu0 0.0
        %2378 = vmatpush1.msra.mxu0 0.0
        %2379 = vmatprep.subr.mxu0 0.0
        %2380 = vmatpush1.msra.mxu0 0.0
        %2381 = vmatprep.subr.mxu0 0.0
        %2382 = vmatpush1.msra.mxu0 0.0
        %2383 = vmatprep.subr.mxu0 0.0
        %2384 = vmatpush1.msra.mxu0 0.0
        %2385 = vmatprep.subr.mxu0 0.0
        %2386 = vmatpush1.msra.mxu0 0.0
        %2387 = vmatprep.mubr.f32.mxu0 0.0
        %2388 = vmatmul.mubr.f32.gmra.mrb[0].mxu0 %v2321
        %v2389 = vpop.f32.mrb[0].mxu0
        %v2390 = vadd.f32 0.0, %v2389
        %v2391 = vpop.f32.mrb[0].mxu0
        %2392 = vdwg.mxu0
        %v2394 = vsel %vm1924, %v2089, 0
        %2396 = vmatprep.subr.mxu0 0.0
        %2397 = vmatpush1.msra.mxu0 %v376
        %2398 = vmatprep.subr.mxu0 0.0
        %2399 = vmatpush1.msra.mxu0 0.0
        %2400 = vmatprep.subr.mxu0 0.0
        %2401 = vmatpush1.msra.mxu0 0.0
        %2402 = vmatprep.subr.mxu0 0.0
        %2403 = vmatpush1.msra.mxu0 0.0
        %2404 = vmatprep.subr.mxu0 0.0
        %2405 = vmatpush1.msra.mxu0 0.0
        %2406 = vmatprep.subr.mxu0 0.0
        %2407 = vmatpush1.msra.mxu0 0.0
        %2408 = vmatprep.subr.mxu0 0.0
        %2409 = vmatpush1.msra.mxu0 0.0
        %2410 = vmatprep.subr.mxu0 0.0
        %2411 = vmatpush1.msra.mxu0 0.0
        %2412 = vmatprep.subr.mxu0 0.0
        %2413 = vmatpush1.msra.mxu0 0.0
        %2414 = vmatprep.subr.mxu0 0.0
        %2415 = vmatpush1.msra.mxu0 0.0
        %2416 = vmatprep.subr.mxu0 0.0
        %2417 = vmatpush1.msra.mxu0 0.0
        %2418 = vmatprep.subr.mxu0 0.0
        %2419 = vmatpush1.msra.mxu0 0.0
        %2420 = vmatprep.subr.mxu0 0.0
        %2421 = vmatpush1.msra.mxu0 0.0
        %2422 = vmatprep.subr.mxu0 0.0
        %2423 = vmatpush1.msra.mxu0 0.0
        %2424 = vmatprep.subr.mxu0 0.0
        %2425 = vmatpush1.msra.mxu0 0.0
        %2426 = vmatprep.subr.mxu0 0.0
        %2427 = vmatpush1.msra.mxu0 0.0
        %2428 = vmatprep.subr.mxu0 0.0
        %2429 = vmatpush1.msra.mxu0 0.0
        %2430 = vmatprep.subr.mxu0 0.0
        %2431 = vmatpush1.msra.mxu0 0.0
        %2432 = vmatprep.subr.mxu0 0.0
        %2433 = vmatpush1.msra.mxu0 0.0
        %2434 = vmatprep.subr.mxu0 0.0
        %2435 = vmatpush1.msra.mxu0 0.0
        %2436 = vmatprep.subr.mxu0 0.0
        %2437 = vmatpush1.msra.mxu0 0.0
        %2438 = vmatprep.subr.mxu0 0.0
        %2439 = vmatpush1.msra.mxu0 0.0
        %2440 = vmatprep.subr.mxu0 0.0
        %2441 = vmatpush1.msra.mxu0 0.0
        %2442 = vmatprep.subr.mxu0 0.0
        %2443 = vmatpush1.msra.mxu0 0.0
        %2444 = vmatprep.subr.mxu0 0.0
        %2445 = vmatpush1.msra.mxu0 0.0
        %2446 = vmatprep.subr.mxu0 0.0
        %2447 = vmatpush1.msra.mxu0 0.0
        %2448 = vmatprep.subr.mxu0 0.0
        %2449 = vmatpush1.msra.mxu0 0.0
        %2450 = vmatprep.subr.mxu0 0.0
        %2451 = vmatpush1.msra.mxu0 0.0
        %2452 = vmatprep.subr.mxu0 0.0
        %2453 = vmatpush1.msra.mxu0 0.0
        %2454 = vmatprep.subr.mxu0 0.0
        %2455 = vmatpush1.msra.mxu0 0.0
        %2456 = vmatprep.subr.mxu0 0.0
        %2457 = vmatpush1.msra.mxu0 0.0
        %2458 = vmatprep.subr.mxu0 0.0
        %2459 = vmatpush1.msra.mxu0 0.0
        %2460 = vmatprep.mubr.f32.mxu0 0.0
        %2461 = vmatmul.mubr.f32.gmra.mrb[0].mxu0 %v2394
        %v2462 = vpop.f32.mrb[0].mxu0
        %v2463 = vadd.f32 0.0, %v2462
        %v2464 = vpop.f32.mrb[0].mxu0
        %2465 = vdwg.mxu0
        %v2467 = vsel %vm1924, %v2090, 0
        %2469 = vmatprep.subr.mxu0 0.0
        %2470 = vmatpush1.msra.mxu0 %v381
        %2471 = vmatprep.subr.mxu0 0.0
        %2472 = vmatpush1.msra.mxu0 0.0
        %2473 = vmatprep.subr.mxu0 0.0
        %2474 = vmatpush1.msra.mxu0 0.0
        %2475 = vmatprep.subr.mxu0 0.0
        %2476 = vmatpush1.msra.mxu0 0.0
        %2477 = vmatprep.subr.mxu0 0.0
        %2478 = vmatpush1.msra.mxu0 0.0
        %2479 = vmatprep.subr.mxu0 0.0
        %2480 = vmatpush1.msra.mxu0 0.0
        %2481 = vmatprep.subr.mxu0 0.0
        %2482 = vmatpush1.msra.mxu0 0.0
        %2483 = vmatprep.subr.mxu0 0.0
        %2484 = vmatpush1.msra.mxu0 0.0
        %2485 = vmatprep.subr.mxu0 0.0
        %2486 = vmatpush1.msra.mxu0 0.0
        %2487 = vmatprep.subr.mxu0 0.0
        %2488 = vmatpush1.msra.mxu0 0.0
        %2489 = vmatprep.subr.mxu0 0.0
        %2490 = vmatpush1.msra.mxu0 0.0
        %2491 = vmatprep.subr.mxu0 0.0
        %2492 = vmatpush1.msra.mxu0 0.0
        %2493 = vmatprep.subr.mxu0 0.0
        %2494 = vmatpush1.msra.mxu0 0.0
        %2495 = vmatprep.subr.mxu0 0.0
        %2496 = vmatpush1.msra.mxu0 0.0
        %2497 = vmatprep.subr.mxu0 0.0
        %2498 = vmatpush1.msra.mxu0 0.0
        %2499 = vmatprep.subr.mxu0 0.0
        %2500 = vmatpush1.msra.mxu0 0.0
        %2501 = vmatprep.subr.mxu0 0.0
        %2502 = vmatpush1.msra.mxu0 0.0
        %2503 = vmatprep.subr.mxu0 0.0
        %2504 = vmatpush1.msra.mxu0 0.0
        %2505 = vmatprep.subr.mxu0 0.0
        %2506 = vmatpush1.msra.mxu0 0.0
        %2507 = vmatprep.subr.mxu0 0.0
        %2508 = vmatpush1.msra.mxu0 0.0
        %2509 = vmatprep.subr.mxu0 0.0
        %2510 = vmatpush1.msra.mxu0 0.0
        %2511 = vmatprep.subr.mxu0 0.0
        %2512 = vmatpush1.msra.mxu0 0.0
        %2513 = vmatprep.subr.mxu0 0.0
        %2514 = vmatpush1.msra.mxu0 0.0
        %2515 = vmatprep.subr.mxu0 0.0
        %2516 = vmatpush1.msra.mxu0 0.0
        %2517 = vmatprep.subr.mxu0 0.0
        %2518 = vmatpush1.msra.mxu0 0.0
        %2519 = vmatprep.subr.mxu0 0.0
        %2520 = vmatpush1.msra.mxu0 0.0
        %2521 = vmatprep.subr.mxu0 0.0
        %2522 = vmatpush1.msra.mxu0 0.0
        %2523 = vmatprep.subr.mxu0 0.0
        %2524 = vmatpush1.msra.mxu0 0.0
        %2525 = vmatprep.subr.mxu0 0.0
        %2526 = vmatpush1.msra.mxu0 0.0
        %2527 = vmatprep.subr.mxu0 0.0
        %2528 = vmatpush1.msra.mxu0 0.0
        %2529 = vmatprep.subr.mxu0 0.0
        %2530 = vmatpush1.msra.mxu0 0.0
        %2531 = vmatprep.subr.mxu0 0.0
        %2532 = vmatpush1.msra.mxu0 0.0
        %2533 = vmatprep.mubr.f32.mxu0 0.0
        %2534 = vmatmul.mubr.f32.gmra.mrb[0].mxu0 %v2467
        %v2535 = vpop.f32.mrb[0].mxu0
        %v2536 = vadd.f32 0.0, %v2535
        %v2537 = vpop.f32.mrb[0].mxu0
        %2538 = vdwg.mxu0
        %v2540 = vsel %vm1924, %v2091, 0
        %2542 = vmatprep.subr.mxu0 0.0
        %2543 = vmatpush1.msra.mxu0 %v386
        %2544 = vmatprep.subr.mxu0 0.0
        %2545 = vmatpush1.msra.mxu0 0.0
        %2546 = vmatprep.subr.mxu0 0.0
        %2547 = vmatpush1.msra.mxu0 0.0
        %2548 = vmatprep.subr.mxu0 0.0
        %2549 = vmatpush1.msra.mxu0 0.0
        %2550 = vmatprep.subr.mxu0 0.0
        %2551 = vmatpush1.msra.mxu0 0.0
        %2552 = vmatprep.subr.mxu0 0.0
        %2553 = vmatpush1.msra.mxu0 0.0
        %2554 = vmatprep.subr.mxu0 0.0
        %2555 = vmatpush1.msra.mxu0 0.0
        %2556 = vmatprep.subr.mxu0 0.0
        %2557 = vmatpush1.msra.mxu0 0.0
        %2558 = vmatprep.subr.mxu0 0.0
        %2559 = vmatpush1.msra.mxu0 0.0
        %2560 = vmatprep.subr.mxu0 0.0
        %2561 = vmatpush1.msra.mxu0 0.0
        %2562 = vmatprep.subr.mxu0 0.0
        %2563 = vmatpush1.msra.mxu0 0.0
        %2564 = vmatprep.subr.mxu0 0.0
        %2565 = vmatpush1.msra.mxu0 0.0
        %2566 = vmatprep.subr.mxu0 0.0
        %2567 = vmatpush1.msra.mxu0 0.0
        %2568 = vmatprep.subr.mxu0 0.0
        %2569 = vmatpush1.msra.mxu0 0.0
        %2570 = vmatprep.subr.mxu0 0.0
        %2571 = vmatpush1.msra.mxu0 0.0
        %2572 = vmatprep.subr.mxu0 0.0
        %2573 = vmatpush1.msra.mxu0 0.0
        %2574 = vmatprep.subr.mxu0 0.0
        %2575 = vmatpush1.msra.mxu0 0.0
        %2576 = vmatprep.subr.mxu0 0.0
        %2577 = vmatpush1.msra.mxu0 0.0
        %2578 = vmatprep.subr.mxu0 0.0
        %2579 = vmatpush1.msra.mxu0 0.0
        %2580 = vmatprep.subr.mxu0 0.0
        %2581 = vmatpush1.msra.mxu0 0.0
        %2582 = vmatprep.subr.mxu0 0.0
        %2583 = vmatpush1.msra.mxu0 0.0
        %2584 = vmatprep.subr.mxu0 0.0
        %2585 = vmatpush1.msra.mxu0 0.0
        %2586 = vmatprep.subr.mxu0 0.0
        %2587 = vmatpush1.msra.mxu0 0.0
        %2588 = vmatprep.subr.mxu0 0.0
        %2589 = vmatpush1.msra.mxu0 0.0
        %2590 = vmatprep.subr.mxu0 0.0
        %2591 = vmatpush1.msra.mxu0 0.0
        %2592 = vmatprep.subr.mxu0 0.0
        %2593 = vmatpush1.msra.mxu0 0.0
        %2594 = vmatprep.subr.mxu0 0.0
        %2595 = vmatpush1.msra.mxu0 0.0
        %2596 = vmatprep.subr.mxu0 0.0
        %2597 = vmatpush1.msra.mxu0 0.0
        %2598 = vmatprep.subr.mxu0 0.0
        %2599 = vmatpush1.msra.mxu0 0.0
        %2600 = vmatprep.subr.mxu0 0.0
        %2601 = vmatpush1.msra.mxu0 0.0
        %2602 = vmatprep.subr.mxu0 0.0
        %2603 = vmatpush1.msra.mxu0 0.0
        %2604 = vmatprep.subr.mxu0 0.0
        %2605 = vmatpush1.msra.mxu0 0.0
        %2606 = vmatprep.mubr.f32.mxu0 0.0
        %2607 = vmatmul.mubr.f32.gmra.mrb[0].mxu0 %v2540
        %v2608 = vpop.f32.mrb[0].mxu0
        %v2609 = vadd.f32 0.0, %v2608
        %v2610 = vpop.f32.mrb[0].mxu0
        %2611 = vdwg.mxu0
        %v2613 = vsel %vm1924, %v2092, 0
        %2615 = vmatprep.subr.mxu0 0.0
        %2616 = vmatpush1.msra.mxu0 %v391
        %2617 = vmatprep.subr.mxu0 0.0
        %2618 = vmatpush1.msra.mxu0 0.0
        %2619 = vmatprep.subr.mxu0 0.0
        %2620 = vmatpush1.msra.mxu0 0.0
        %2621 = vmatprep.subr.mxu0 0.0
        %2622 = vmatpush1.msra.mxu0 0.0
        %2623 = vmatprep.subr.mxu0 0.0
        %2624 = vmatpush1.msra.mxu0 0.0
        %2625 = vmatprep.subr.mxu0 0.0
        %2626 = vmatpush1.msra.mxu0 0.0
        %2627 = vmatprep.subr.mxu0 0.0
        %2628 = vmatpush1.msra.mxu0 0.0
        %2629 = vmatprep.subr.mxu0 0.0
        %2630 = vmatpush1.msra.mxu0 0.0
        %2631 = vmatprep.subr.mxu0 0.0
        %2632 = vmatpush1.msra.mxu0 0.0
        %2633 = vmatprep.subr.mxu0 0.0
        %2634 = vmatpush1.msra.mxu0 0.0
        %2635 = vmatprep.subr.mxu0 0.0
        %2636 = vmatpush1.msra.mxu0 0.0
        %2637 = vmatprep.subr.mxu0 0.0
        %2638 = vmatpush1.msra.mxu0 0.0
        %2639 = vmatprep.subr.mxu0 0.0
        %2640 = vmatpush1.msra.mxu0 0.0
        %2641 = vmatprep.subr.mxu0 0.0
        %2642 = vmatpush1.msra.mxu0 0.0
        %2643 = vmatprep.subr.mxu0 0.0
        %2644 = vmatpush1.msra.mxu0 0.0
        %2645 = vmatprep.subr.mxu0 0.0
        %2646 = vmatpush1.msra.mxu0 0.0
        %2647 = vmatprep.subr.mxu0 0.0
        %2648 = vmatpush1.msra.mxu0 0.0
        %2649 = vmatprep.subr.mxu0 0.0
        %2650 = vmatpush1.msra.mxu0 0.0
        %2651 = vmatprep.subr.mxu0 0.0
        %2652 = vmatpush1.msra.mxu0 0.0
        %2653 = vmatprep.subr.mxu0 0.0
        %2654 = vmatpush1.msra.mxu0 0.0
        %2655 = vmatprep.subr.mxu0 0.0
        %2656 = vmatpush1.msra.mxu0 0.0
        %2657 = vmatprep.subr.mxu0 0.0
        %2658 = vmatpush1.msra.mxu0 0.0
        %2659 = vmatprep.subr.mxu0 0.0
        %2660 = vmatpush1.msra.mxu0 0.0
        %2661 = vmatprep.subr.mxu0 0.0
        %2662 = vmatpush1.msra.mxu0 0.0
        %2663 = vmatprep.subr.mxu0 0.0
        %2664 = vmatpush1.msra.mxu0 0.0
        %2665 = vmatprep.subr.mxu0 0.0
        %2666 = vmatpush1.msra.mxu0 0.0
        %2667 = vmatprep.subr.mxu0 0.0
        %2668 = vmatpush1.msra.mxu0 0.0
        %2669 = vmatprep.subr.mxu0 0.0
        %2670 = vmatpush1.msra.mxu0 0.0
        %2671 = vmatprep.subr.mxu0 0.0
        %2672 = vmatpush1.msra.mxu0 0.0
        %2673 = vmatprep.subr.mxu0 0.0
        %2674 = vmatpush1.msra.mxu0 0.0
        %2675 = vmatprep.subr.mxu0 0.0
        %2676 = vmatpush1.msra.mxu0 0.0
        %2677 = vmatprep.subr.mxu0 0.0
        %2678 = vmatpush1.msra.mxu0 0.0
        %2679 = vmatprep.mubr.f32.mxu0 0.0
        %2680 = vmatmul.mubr.f32.gmra.mrb[0].mxu0 %v2613
        %v2681 = vpop.f32.mrb[0].mxu0
        %v2682 = vadd.f32 0.0, %v2681
        %v2683 = vpop.f32.mrb[0].mxu0
        %2684 = vdwg.mxu0
        %v2686 = vsel %vm1924, %v2093, 0
        %2688 = vmatprep.subr.mxu0 0.0
        %2689 = vmatpush1.msra.mxu0 %v396
        %2690 = vmatprep.subr.mxu0 0.0
        %2691 = vmatpush1.msra.mxu0 0.0
        %2692 = vmatprep.subr.mxu0 0.0
        %2693 = vmatpush1.msra.mxu0 0.0
        %2694 = vmatprep.subr.mxu0 0.0
        %2695 = vmatpush1.msra.mxu0 0.0
        %2696 = vmatprep.subr.mxu0 0.0
        %2697 = vmatpush1.msra.mxu0 0.0
        %2698 = vmatprep.subr.mxu0 0.0
        %2699 = vmatpush1.msra.mxu0 0.0
        %2700 = vmatprep.subr.mxu0 0.0
        %2701 = vmatpush1.msra.mxu0 0.0
        %2702 = vmatprep.subr.mxu0 0.0
        %2703 = vmatpush1.msra.mxu0 0.0
        %2704 = vmatprep.subr.mxu0 0.0
        %2705 = vmatpush1.msra.mxu0 0.0
        %2706 = vmatprep.subr.mxu0 0.0
        %2707 = vmatpush1.msra.mxu0 0.0
        %2708 = vmatprep.subr.mxu0 0.0
        %2709 = vmatpush1.msra.mxu0 0.0
        %2710 = vmatprep.subr.mxu0 0.0
        %2711 = vmatpush1.msra.mxu0 0.0
        %2712 = vmatprep.subr.mxu0 0.0
        %2713 = vmatpush1.msra.mxu0 0.0
        %2714 = vmatprep.subr.mxu0 0.0
        %2715 = vmatpush1.msra.mxu0 0.0
        %2716 = vmatprep.subr.mxu0 0.0
        %2717 = vmatpush1.msra.mxu0 0.0
        %2718 = vmatprep.subr.mxu0 0.0
        %2719 = vmatpush1.msra.mxu0 0.0
        %2720 = vmatprep.subr.mxu0 0.0
        %2721 = vmatpush1.msra.mxu0 0.0
        %2722 = vmatprep.subr.mxu0 0.0
        %2723 = vmatpush1.msra.mxu0 0.0
        %2724 = vmatprep.subr.mxu0 0.0
        %2725 = vmatpush1.msra.mxu0 0.0
        %2726 = vmatprep.subr.mxu0 0.0
        %2727 = vmatpush1.msra.mxu0 0.0
        %2728 = vmatprep.subr.mxu0 0.0
        %2729 = vmatpush1.msra.mxu0 0.0
        %2730 = vmatprep.subr.mxu0 0.0
        %2731 = vmatpush1.msra.mxu0 0.0
        %2732 = vmatprep.subr.mxu0 0.0
        %2733 = vmatpush1.msra.mxu0 0.0
        %2734 = vmatprep.subr.mxu0 0.0
        %2735 = vmatpush1.msra.mxu0 0.0
        %2736 = vmatprep.subr.mxu0 0.0
        %2737 = vmatpush1.msra.mxu0 0.0
        %2738 = vmatprep.subr.mxu0 0.0
        %2739 = vmatpush1.msra.mxu0 0.0
        %2740 = vmatprep.subr.mxu0 0.0
        %2741 = vmatpush1.msra.mxu0 0.0
        %2742 = vmatprep.subr.mxu0 0.0
        %2743 = vmatpush1.msra.mxu0 0.0
        %2744 = vmatprep.subr.mxu0 0.0
        %2745 = vmatpush1.msra.mxu0 0.0
        %2746 = vmatprep.subr.mxu0 0.0
        %2747 = vmatpush1.msra.mxu0 0.0
        %2748 = vmatprep.subr.mxu0 0.0
        %2749 = vmatpush1.msra.mxu0 0.0
        %2750 = vmatprep.subr.mxu0 0.0
        %2751 = vmatpush1.msra.mxu0 0.0
        %2752 = vmatprep.mubr.f32.mxu0 0.0
        %2753 = vmatmul.mubr.f32.gmra.mrb[0].mxu0 %v2686
        %v2754 = vpop.f32.mrb[0].mxu0
        %v2755 = vadd.f32 0.0, %v2754
        %v2756 = vpop.f32.mrb[0].mxu0
        %2757 = vdwg.mxu0
        %v2759 = vsel %vm1924, %v2094, 0
        %2761 = vmatprep.subr.mxu0 0.0
        %2762 = vmatpush1.msra.mxu0 %v401
        %2763 = vmatprep.subr.mxu0 0.0
        %2764 = vmatpush1.msra.mxu0 0.0
        %2765 = vmatprep.subr.mxu0 0.0
        %2766 = vmatpush1.msra.mxu0 0.0
        %2767 = vmatprep.subr.mxu0 0.0
        %2768 = vmatpush1.msra.mxu0 0.0
        %2769 = vmatprep.subr.mxu0 0.0
        %2770 = vmatpush1.msra.mxu0 0.0
        %2771 = vmatprep.subr.mxu0 0.0
        %2772 = vmatpush1.msra.mxu0 0.0
        %2773 = vmatprep.subr.mxu0 0.0
        %2774 = vmatpush1.msra.mxu0 0.0
        %2775 = vmatprep.subr.mxu0 0.0
        %2776 = vmatpush1.msra.mxu0 0.0
        %2777 = vmatprep.subr.mxu0 0.0
        %2778 = vmatpush1.msra.mxu0 0.0
        %2779 = vmatprep.subr.mxu0 0.0
        %2780 = vmatpush1.msra.mxu0 0.0
        %2781 = vmatprep.subr.mxu0 0.0
        %2782 = vmatpush1.msra.mxu0 0.0
        %2783 = vmatprep.subr.mxu0 0.0
        %2784 = vmatpush1.msra.mxu0 0.0
        %2785 = vmatprep.subr.mxu0 0.0
        %2786 = vmatpush1.msra.mxu0 0.0
        %2787 = vmatprep.subr.mxu0 0.0
        %2788 = vmatpush1.msra.mxu0 0.0
        %2789 = vmatprep.subr.mxu0 0.0
        %2790 = vmatpush1.msra.mxu0 0.0
        %2791 = vmatprep.subr.mxu0 0.0
        %2792 = vmatpush1.msra.mxu0 0.0
        %2793 = vmatprep.subr.mxu0 0.0
        %2794 = vmatpush1.msra.mxu0 0.0
        %2795 = vmatprep.subr.mxu0 0.0
        %2796 = vmatpush1.msra.mxu0 0.0
        %2797 = vmatprep.subr.mxu0 0.0
        %2798 = vmatpush1.msra.mxu0 0.0
        %2799 = vmatprep.subr.mxu0 0.0
        %2800 = vmatpush1.msra.mxu0 0.0
        %2801 = vmatprep.subr.mxu0 0.0
        %2802 = vmatpush1.msra.mxu0 0.0
        %2803 = vmatprep.subr.mxu0 0.0
        %2804 = vmatpush1.msra.mxu0 0.0
        %2805 = vmatprep.subr.mxu0 0.0
        %2806 = vmatpush1.msra.mxu0 0.0
        %2807 = vmatprep.subr.mxu0 0.0
        %2808 = vmatpush1.msra.mxu0 0.0
        %2809 = vmatprep.subr.mxu0 0.0
        %2810 = vmatpush1.msra.mxu0 0.0
        %2811 = vmatprep.subr.mxu0 0.0
        %2812 = vmatpush1.msra.mxu0 0.0
        %2813 = vmatprep.subr.mxu0 0.0
        %2814 = vmatpush1.msra.mxu0 0.0
        %2815 = vmatprep.subr.mxu0 0.0
        %2816 = vmatpush1.msra.mxu0 0.0
        %2817 = vmatprep.subr.mxu0 0.0
        %2818 = vmatpush1.msra.mxu0 0.0
        %2819 = vmatprep.subr.mxu0 0.0
        %2820 = vmatpush1.msra.mxu0 0.0
        %2821 = vmatprep.subr.mxu0 0.0
        %2822 = vmatpush1.msra.mxu0 0.0
        %2823 = vmatprep.subr.mxu0 0.0
        %2824 = vmatpush1.msra.mxu0 0.0
        %2825 = vmatprep.mubr.f32.mxu0 0.0
        %2826 = vmatmul.mubr.f32.gmra.mrb[0].mxu0 %v2759
        %v2827 = vpop.f32.mrb[0].mxu0
        %v2828 = vadd.f32 0.0, %v2827
        %v2829 = vpop.f32.mrb[0].mxu0
        %2830 = vdwg.mxu0
        %v2832 = vsel %vm1924, %v2095, 0
        %2834 = vmatprep.subr.mxu0 0.0
        %2835 = vmatpush1.msra.mxu0 %v406
        %2836 = vmatprep.subr.mxu0 0.0
        %2837 = vmatpush1.msra.mxu0 0.0
        %2838 = vmatprep.subr.mxu0 0.0
        %2839 = vmatpush1.msra.mxu0 0.0
        %2840 = vmatprep.subr.mxu0 0.0
        %2841 = vmatpush1.msra.mxu0 0.0
        %2842 = vmatprep.subr.mxu0 0.0
        %2843 = vmatpush1.msra.mxu0 0.0
        %2844 = vmatprep.subr.mxu0 0.0
        %2845 = vmatpush1.msra.mxu0 0.0
        %2846 = vmatprep.subr.mxu0 0.0
        %2847 = vmatpush1.msra.mxu0 0.0
        %2848 = vmatprep.subr.mxu0 0.0
        %2849 = vmatpush1.msra.mxu0 0.0
        %2850 = vmatprep.subr.mxu0 0.0
        %2851 = vmatpush1.msra.mxu0 0.0
        %2852 = vmatprep.subr.mxu0 0.0
        %2853 = vmatpush1.msra.mxu0 0.0
        %2854 = vmatprep.subr.mxu0 0.0
        %2855 = vmatpush1.msra.mxu0 0.0
        %2856 = vmatprep.subr.mxu0 0.0
        %2857 = vmatpush1.msra.mxu0 0.0
        %2858 = vmatprep.subr.mxu0 0.0
        %2859 = vmatpush1.msra.mxu0 0.0
        %2860 = vmatprep.subr.mxu0 0.0
        %2861 = vmatpush1.msra.mxu0 0.0
        %2862 = vmatprep.subr.mxu0 0.0
        %2863 = vmatpush1.msra.mxu0 0.0
        %2864 = vmatprep.subr.mxu0 0.0
        %2865 = vmatpush1.msra.mxu0 0.0
        %2866 = vmatprep.subr.mxu0 0.0
        %2867 = vmatpush1.msra.mxu0 0.0
        %2868 = vmatprep.subr.mxu0 0.0
        %2869 = vmatpush1.msra.mxu0 0.0
        %2870 = vmatprep.subr.mxu0 0.0
        %2871 = vmatpush1.msra.mxu0 0.0
        %2872 = vmatprep.subr.mxu0 0.0
        %2873 = vmatpush1.msra.mxu0 0.0
        %2874 = vmatprep.subr.mxu0 0.0
        %2875 = vmatpush1.msra.mxu0 0.0
        %2876 = vmatprep.subr.mxu0 0.0
        %2877 = vmatpush1.msra.mxu0 0.0
        %2878 = vmatprep.subr.mxu0 0.0
        %2879 = vmatpush1.msra.mxu0 0.0
        %2880 = vmatprep.subr.mxu0 0.0
        %2881 = vmatpush1.msra.mxu0 0.0
        %2882 = vmatprep.subr.mxu0 0.0
        %2883 = vmatpush1.msra.mxu0 0.0
        %2884 = vmatprep.subr.mxu0 0.0
        %2885 = vmatpush1.msra.mxu0 0.0
        %2886 = vmatprep.subr.mxu0 0.0
        %2887 = vmatpush1.msra.mxu0 0.0
        %2888 = vmatprep.subr.mxu0 0.0
        %2889 = vmatpush1.msra.mxu0 0.0
        %2890 = vmatprep.subr.mxu0 0.0
        %2891 = vmatpush1.msra.mxu0 0.0
        %2892 = vmatprep.subr.mxu0 0.0
        %2893 = vmatpush1.msra.mxu0 0.0
        %2894 = vmatprep.subr.mxu0 0.0
        %2895 = vmatpush1.msra.mxu0 0.0
        %2896 = vmatprep.subr.mxu0 0.0
        %2897 = vmatpush1.msra.mxu0 0.0
        %2898 = vmatprep.mubr.f32.mxu0 0.0
        %2899 = vmatmul.mubr.f32.gmra.mrb[0].mxu0 %v2832
        %v2900 = vpop.f32.mrb[0].mxu0
        %v2901 = vadd.f32 0.0, %v2900
        %v2902 = vpop.f32.mrb[0].mxu0
        %2903 = vdwg.mxu0
        %v2905 = vsel %vm1924, %v2096, 0
        %2907 = vmatprep.subr.mxu0 0.0
        %2908 = vmatpush1.msra.mxu0 %v411
        %2909 = vmatprep.subr.mxu0 0.0
        %2910 = vmatpush1.msra.mxu0 0.0
        %2911 = vmatprep.subr.mxu0 0.0
        %2912 = vmatpush1.msra.mxu0 0.0
        %2913 = vmatprep.subr.mxu0 0.0
        %2914 = vmatpush1.msra.mxu0 0.0
        %2915 = vmatprep.subr.mxu0 0.0
        %2916 = vmatpush1.msra.mxu0 0.0
        %2917 = vmatprep.subr.mxu0 0.0
        %2918 = vmatpush1.msra.mxu0 0.0
        %2919 = vmatprep.subr.mxu0 0.0
        %2920 = vmatpush1.msra.mxu0 0.0
        %2921 = vmatprep.subr.mxu0 0.0
        %2922 = vmatpush1.msra.mxu0 0.0
        %2923 = vmatprep.subr.mxu0 0.0
        %2924 = vmatpush1.msra.mxu0 0.0
        %2925 = vmatprep.subr.mxu0 0.0
        %2926 = vmatpush1.msra.mxu0 0.0
        %2927 = vmatprep.subr.mxu0 0.0
        %2928 = vmatpush1.msra.mxu0 0.0
        %2929 = vmatprep.subr.mxu0 0.0
        %2930 = vmatpush1.msra.mxu0 0.0
        %2931 = vmatprep.subr.mxu0 0.0
        %2932 = vmatpush1.msra.mxu0 0.0
        %2933 = vmatprep.subr.mxu0 0.0
        %2934 = vmatpush1.msra.mxu0 0.0
        %2935 = vmatprep.subr.mxu0 0.0
        %2936 = vmatpush1.msra.mxu0 0.0
        %2937 = vmatprep.subr.mxu0 0.0
        %2938 = vmatpush1.msra.mxu0 0.0
        %2939 = vmatprep.subr.mxu0 0.0
        %2940 = vmatpush1.msra.mxu0 0.0
        %2941 = vmatprep.subr.mxu0 0.0
        %2942 = vmatpush1.msra.mxu0 0.0
        %2943 = vmatprep.subr.mxu0 0.0
        %2944 = vmatpush1.msra.mxu0 0.0
        %2945 = vmatprep.subr.mxu0 0.0
        %2946 = vmatpush1.msra.mxu0 0.0
        %2947 = vmatprep.subr.mxu0 0.0
        %2948 = vmatpush1.msra.mxu0 0.0
        %2949 = vmatprep.subr.mxu0 0.0
        %2950 = vmatpush1.msra.mxu0 0.0
        %2951 = vmatprep.subr.mxu0 0.0
        %2952 = vmatpush1.msra.mxu0 0.0
        %2953 = vmatprep.subr.mxu0 0.0
        %2954 = vmatpush1.msra.mxu0 0.0
        %2955 = vmatprep.subr.mxu0 0.0
        %2956 = vmatpush1.msra.mxu0 0.0
        %2957 = vmatprep.subr.mxu0 0.0
        %2958 = vmatpush1.msra.mxu0 0.0
        %2959 = vmatprep.subr.mxu0 0.0
        %2960 = vmatpush1.msra.mxu0 0.0
        %2961 = vmatprep.subr.mxu0 0.0
        %2962 = vmatpush1.msra.mxu0 0.0
        %2963 = vmatprep.subr.mxu0 0.0
        %2964 = vmatpush1.msra.mxu0 0.0
        %2965 = vmatprep.subr.mxu0 0.0
        %2966 = vmatpush1.msra.mxu0 0.0
        %2967 = vmatprep.subr.mxu0 0.0
        %2968 = vmatpush1.msra.mxu0 0.0
        %2969 = vmatprep.subr.mxu0 0.0
        %2970 = vmatpush1.msra.mxu0 0.0
        %2971 = vmatprep.mubr.f32.mxu0 0.0
        %2972 = vmatmul.mubr.f32.gmra.mrb[0].mxu0 %v2905
        %v2973 = vpop.f32.mrb[0].mxu0
        %v2974 = vadd.f32 0.0, %v2973
        %v2975 = vpop.f32.mrb[0].mxu0
        %2976 = vdwg.mxu0
        %v2978 = vsel %vm1924, %v2097, 0
        %2980 = vmatprep.subr.mxu0 0.0
        %2981 = vmatpush1.msra.mxu0 %v416
        %2982 = vmatprep.subr.mxu0 0.0
        %2983 = vmatpush1.msra.mxu0 0.0
        %2984 = vmatprep.subr.mxu0 0.0
        %2985 = vmatpush1.msra.mxu0 0.0
        %2986 = vmatprep.subr.mxu0 0.0
        %2987 = vmatpush1.msra.mxu0 0.0
        %2988 = vmatprep.subr.mxu0 0.0
        %2989 = vmatpush1.msra.mxu0 0.0
        %2990 = vmatprep.subr.mxu0 0.0
        %2991 = vmatpush1.msra.mxu0 0.0
        %2992 = vmatprep.subr.mxu0 0.0
        %2993 = vmatpush1.msra.mxu0 0.0
        %2994 = vmatprep.subr.mxu0 0.0
        %2995 = vmatpush1.msra.mxu0 0.0
        %2996 = vmatprep.subr.mxu0 0.0
        %2997 = vmatpush1.msra.mxu0 0.0
        %2998 = vmatprep.subr.mxu0 0.0
        %2999 = vmatpush1.msra.mxu0 0.0
        %3000 = vmatprep.subr.mxu0 0.0
        %3001 = vmatpush1.msra.mxu0 0.0
        %3002 = vmatprep.subr.mxu0 0.0
        %3003 = vmatpush1.msra.mxu0 0.0
        %3004 = vmatprep.subr.mxu0 0.0
        %3005 = vmatpush1.msra.mxu0 0.0
        %3006 = vmatprep.subr.mxu0 0.0
        %3007 = vmatpush1.msra.mxu0 0.0
        %3008 = vmatprep.subr.mxu0 0.0
        %3009 = vmatpush1.msra.mxu0 0.0
        %3010 = vmatprep.subr.mxu0 0.0
        %3011 = vmatpush1.msra.mxu0 0.0
        %3012 = vmatprep.subr.mxu0 0.0
        %3013 = vmatpush1.msra.mxu0 0.0
        %3014 = vmatprep.subr.mxu0 0.0
        %3015 = vmatpush1.msra.mxu0 0.0
        %3016 = vmatprep.subr.mxu0 0.0
        %3017 = vmatpush1.msra.mxu0 0.0
        %3018 = vmatprep.subr.mxu0 0.0
        %3019 = vmatpush1.msra.mxu0 0.0
        %3020 = vmatprep.subr.mxu0 0.0
        %3021 = vmatpush1.msra.mxu0 0.0
        %3022 = vmatprep.subr.mxu0 0.0
        %3023 = vmatpush1.msra.mxu0 0.0
        %3024 = vmatprep.subr.mxu0 0.0
        %3025 = vmatpush1.msra.mxu0 0.0
        %3026 = vmatprep.subr.mxu0 0.0
        %3027 = vmatpush1.msra.mxu0 0.0
        %3028 = vmatprep.subr.mxu0 0.0
        %3029 = vmatpush1.msra.mxu0 0.0
        %3030 = vmatprep.subr.mxu0 0.0
        %3031 = vmatpush1.msra.mxu0 0.0
        %3032 = vmatprep.subr.mxu0 0.0
        %3033 = vmatpush1.msra.mxu0 0.0
        %3034 = vmatprep.subr.mxu0 0.0
        %3035 = vmatpush1.msra.mxu0 0.0
        %3036 = vmatprep.subr.mxu0 0.0
        %3037 = vmatpush1.msra.mxu0 0.0
        %3038 = vmatprep.subr.mxu0 0.0
        %3039 = vmatpush1.msra.mxu0 0.0
        %3040 = vmatprep.subr.mxu0 0.0
        %3041 = vmatpush1.msra.mxu0 0.0
        %3042 = vmatprep.subr.mxu0 0.0
        %3043 = vmatpush1.msra.mxu0 0.0
        %3044 = vmatprep.mubr.f32.mxu0 0.0
        %3045 = vmatmul.mubr.f32.gmra.mrb[0].mxu0 %v2978
        %v3046 = vpop.f32.mrb[0].mxu0
        %v3047 = vadd.f32 0.0, %v3046
        %v3048 = vpop.f32.mrb[0].mxu0
        %3049 = vdwg.mxu0
        %v3051 = vsel %vm1924, %v2098, 0
        %3053 = vmatprep.subr.mxu0 0.0
        %3054 = vmatpush1.msra.mxu0 %v421
        %3055 = vmatprep.subr.mxu0 0.0
        %3056 = vmatpush1.msra.mxu0 0.0
        %3057 = vmatprep.subr.mxu0 0.0
        %3058 = vmatpush1.msra.mxu0 0.0
        %3059 = vmatprep.subr.mxu0 0.0
        %3060 = vmatpush1.msra.mxu0 0.0
        %3061 = vmatprep.subr.mxu0 0.0
        %3062 = vmatpush1.msra.mxu0 0.0
        %3063 = vmatprep.subr.mxu0 0.0
        %3064 = vmatpush1.msra.mxu0 0.0
        %3065 = vmatprep.subr.mxu0 0.0
        %3066 = vmatpush1.msra.mxu0 0.0
        %3067 = vmatprep.subr.mxu0 0.0
        %3068 = vmatpush1.msra.mxu0 0.0
        %3069 = vmatprep.subr.mxu0 0.0
        %3070 = vmatpush1.msra.mxu0 0.0
        %3071 = vmatprep.subr.mxu0 0.0
        %3072 = vmatpush1.msra.mxu0 0.0
        %3073 = vmatprep.subr.mxu0 0.0
        %3074 = vmatpush1.msra.mxu0 0.0
        %3075 = vmatprep.subr.mxu0 0.0
        %3076 = vmatpush1.msra.mxu0 0.0
        %3077 = vmatprep.subr.mxu0 0.0
        %3078 = vmatpush1.msra.mxu0 0.0
        %3079 = vmatprep.subr.mxu0 0.0
        %3080 = vmatpush1.msra.mxu0 0.0
        %3081 = vmatprep.subr.mxu0 0.0
        %3082 = vmatpush1.msra.mxu0 0.0
        %3083 = vmatprep.subr.mxu0 0.0
        %3084 = vmatpush1.msra.mxu0 0.0
        %3085 = vmatprep.subr.mxu0 0.0
        %3086 = vmatpush1.msra.mxu0 0.0
        %3087 = vmatprep.subr.mxu0 0.0
        %3088 = vmatpush1.msra.mxu0 0.0
        %3089 = vmatprep.subr.mxu0 0.0
        %3090 = vmatpush1.msra.mxu0 0.0
        %3091 = vmatprep.subr.mxu0 0.0
        %3092 = vmatpush1.msra.mxu0 0.0
        %3093 = vmatprep.subr.mxu0 0.0
        %3094 = vmatpush1.msra.mxu0 0.0
        %3095 = vmatprep.subr.mxu0 0.0
        %3096 = vmatpush1.msra.mxu0 0.0
        %3097 = vmatprep.subr.mxu0 0.0
        %3098 = vmatpush1.msra.mxu0 0.0
        %3099 = vmatprep.subr.mxu0 0.0
        %3100 = vmatpush1.msra.mxu0 0.0
        %3101 = vmatprep.subr.mxu0 0.0
        %3102 = vmatpush1.msra.mxu0 0.0
        %3103 = vmatprep.subr.mxu0 0.0
        %3104 = vmatpush1.msra.mxu0 0.0
        %3105 = vmatprep.subr.mxu0 0.0
        %3106 = vmatpush1.msra.mxu0 0.0
        %3107 = vmatprep.subr.mxu0 0.0
        %3108 = vmatpush1.msra.mxu0 0.0
        %3109 = vmatprep.subr.mxu0 0.0
        %3110 = vmatpush1.msra.mxu0 0.0
        %3111 = vmatprep.subr.mxu0 0.0
        %3112 = vmatpush1.msra.mxu0 0.0
        %3113 = vmatprep.subr.mxu0 0.0
        %3114 = vmatpush1.msra.mxu0 0.0
        %3115 = vmatprep.subr.mxu0 0.0
        %3116 = vmatpush1.msra.mxu0 0.0
        %3117 = vmatprep.mubr.f32.mxu0 0.0
        %3118 = vmatmul.mubr.f32.gmra.mrb[0].mxu0 %v3051
        %v3119 = vpop.f32.mrb[0].mxu0
        %v3120 = vadd.f32 0.0, %v3119
        %v3121 = vpop.f32.mrb[0].mxu0
        %3122 = vdwg.mxu0
        %v3124 = vsel %vm1924, %v2099, 0
        %3126 = vmatprep.subr.mxu0 0.0
        %3127 = vmatpush1.msra.mxu0 %v426
        %3128 = vmatprep.subr.mxu0 0.0
        %3129 = vmatpush1.msra.mxu0 0.0
        %3130 = vmatprep.subr.mxu0 0.0
        %3131 = vmatpush1.msra.mxu0 0.0
        %3132 = vmatprep.subr.mxu0 0.0
        %3133 = vmatpush1.msra.mxu0 0.0
        %3134 = vmatprep.subr.mxu0 0.0
        %3135 = vmatpush1.msra.mxu0 0.0
        %3136 = vmatprep.subr.mxu0 0.0
        %3137 = vmatpush1.msra.mxu0 0.0
        %3138 = vmatprep.subr.mxu0 0.0
        %3139 = vmatpush1.msra.mxu0 0.0
        %3140 = vmatprep.subr.mxu0 0.0
        %3141 = vmatpush1.msra.mxu0 0.0
        %3142 = vmatprep.subr.mxu0 0.0
        %3143 = vmatpush1.msra.mxu0 0.0
        %3144 = vmatprep.subr.mxu0 0.0
        %3145 = vmatpush1.msra.mxu0 0.0
        %3146 = vmatprep.subr.mxu0 0.0
        %3147 = vmatpush1.msra.mxu0 0.0
        %3148 = vmatprep.subr.mxu0 0.0
        %3149 = vmatpush1.msra.mxu0 0.0
        %3150 = vmatprep.subr.mxu0 0.0
        %3151 = vmatpush1.msra.mxu0 0.0
        %3152 = vmatprep.subr.mxu0 0.0
        %3153 = vmatpush1.msra.mxu0 0.0
        %3154 = vmatprep.subr.mxu0 0.0
        %3155 = vmatpush1.msra.mxu0 0.0
        %3156 = vmatprep.subr.mxu0 0.0
        %3157 = vmatpush1.msra.mxu0 0.0
        %3158 = vmatprep.subr.mxu0 0.0
        %3159 = vmatpush1.msra.mxu0 0.0
        %3160 = vmatprep.subr.mxu0 0.0
        %3161 = vmatpush1.msra.mxu0 0.0
        %3162 = vmatprep.subr.mxu0 0.0
        %3163 = vmatpush1.msra.mxu0 0.0
        %3164 = vmatprep.subr.mxu0 0.0
        %3165 = vmatpush1.msra.mxu0 0.0
        %3166 = vmatprep.subr.mxu0 0.0
        %3167 = vmatpush1.msra.mxu0 0.0
        %3168 = vmatprep.subr.mxu0 0.0
        %3169 = vmatpush1.msra.mxu0 0.0
        %3170 = vmatprep.subr.mxu0 0.0
        %3171 = vmatpush1.msra.mxu0 0.0
        %3172 = vmatprep.subr.mxu0 0.0
        %3173 = vmatpush1.msra.mxu0 0.0
        %3174 = vmatprep.subr.mxu0 0.0
        %3175 = vmatpush1.msra.mxu0 0.0
        %3176 = vmatprep.subr.mxu0 0.0
        %3177 = vmatpush1.msra.mxu0 0.0
        %3178 = vmatprep.subr.mxu0 0.0
        %3179 = vmatpush1.msra.mxu0 0.0
        %3180 = vmatprep.subr.mxu0 0.0
        %3181 = vmatpush1.msra.mxu0 0.0
        %3182 = vmatprep.subr.mxu0 0.0
        %3183 = vmatpush1.msra.mxu0 0.0
        %3184 = vmatprep.subr.mxu0 0.0
        %3185 = vmatpush1.msra.mxu0 0.0
        %3186 = vmatprep.subr.mxu0 0.0
        %3187 = vmatpush1.msra.mxu0 0.0
        %3188 = vmatprep.subr.mxu0 0.0
        %3189 = vmatpush1.msra.mxu0 0.0
        %3190 = vmatprep.mubr.f32.mxu0 0.0
        %3191 = vmatmul.mubr.f32.gmra.mrb[0].mxu0 %v3124
        %v3192 = vpop.f32.mrb[0].mxu0
        %v3193 = vadd.f32 0.0, %v3192
        %v3194 = vpop.f32.mrb[0].mxu0
        %3195 = vdwg.mxu0
        %v3197 = vsel %vm1924, %v2100, 0
        %3199 = vmatprep.subr.mxu0 0.0
        %3200 = vmatpush1.msra.mxu0 %v431
        %3201 = vmatprep.subr.mxu0 0.0
        %3202 = vmatpush1.msra.mxu0 0.0
        %3203 = vmatprep.subr.mxu0 0.0
        %3204 = vmatpush1.msra.mxu0 0.0
        %3205 = vmatprep.subr.mxu0 0.0
        %3206 = vmatpush1.msra.mxu0 0.0
        %3207 = vmatprep.subr.mxu0 0.0
        %3208 = vmatpush1.msra.mxu0 0.0
        %3209 = vmatprep.subr.mxu0 0.0
        %3210 = vmatpush1.msra.mxu0 0.0
        %3211 = vmatprep.subr.mxu0 0.0
        %3212 = vmatpush1.msra.mxu0 0.0
        %3213 = vmatprep.subr.mxu0 0.0
        %3214 = vmatpush1.msra.mxu0 0.0
        %3215 = vmatprep.subr.mxu0 0.0
        %3216 = vmatpush1.msra.mxu0 0.0
        %3217 = vmatprep.subr.mxu0 0.0
        %3218 = vmatpush1.msra.mxu0 0.0
        %3219 = vmatprep.subr.mxu0 0.0
        %3220 = vmatpush1.msra.mxu0 0.0
        %3221 = vmatprep.subr.mxu0 0.0
        %3222 = vmatpush1.msra.mxu0 0.0
        %3223 = vmatprep.subr.mxu0 0.0
        %3224 = vmatpush1.msra.mxu0 0.0
        %3225 = vmatprep.subr.mxu0 0.0
        %3226 = vmatpush1.msra.mxu0 0.0
        %3227 = vmatprep.subr.mxu0 0.0
        %3228 = vmatpush1.msra.mxu0 0.0
        %3229 = vmatprep.subr.mxu0 0.0
        %3230 = vmatpush1.msra.mxu0 0.0
        %3231 = vmatprep.subr.mxu0 0.0
        %3232 = vmatpush1.msra.mxu0 0.0
        %3233 = vmatprep.subr.mxu0 0.0
        %3234 = vmatpush1.msra.mxu0 0.0
        %3235 = vmatprep.subr.mxu0 0.0
        %3236 = vmatpush1.msra.mxu0 0.0
        %3237 = vmatprep.subr.mxu0 0.0
        %3238 = vmatpush1.msra.mxu0 0.0
        %3239 = vmatprep.subr.mxu0 0.0
        %3240 = vmatpush1.msra.mxu0 0.0
        %3241 = vmatprep.subr.mxu0 0.0
        %3242 = vmatpush1.msra.mxu0 0.0
        %3243 = vmatprep.subr.mxu0 0.0
        %3244 = vmatpush1.msra.mxu0 0.0
        %3245 = vmatprep.subr.mxu0 0.0
        %3246 = vmatpush1.msra.mxu0 0.0
        %3247 = vmatprep.subr.mxu0 0.0
        %3248 = vmatpush1.msra.mxu0 0.0
        %3249 = vmatprep.subr.mxu0 0.0
        %3250 = vmatpush1.msra.mxu0 0.0
        %3251 = vmatprep.subr.mxu0 0.0
        %3252 = vmatpush1.msra.mxu0 0.0
        %3253 = vmatprep.subr.mxu0 0.0
        %3254 = vmatpush1.msra.mxu0 0.0
        %3255 = vmatprep.subr.mxu0 0.0
        %3256 = vmatpush1.msra.mxu0 0.0
        %3257 = vmatprep.subr.mxu0 0.0
        %3258 = vmatpush1.msra.mxu0 0.0
        %3259 = vmatprep.subr.mxu0 0.0
        %3260 = vmatpush1.msra.mxu0 0.0
        %3261 = vmatprep.subr.mxu0 0.0
        %3262 = vmatpush1.msra.mxu0 0.0
        %3263 = vmatprep.mubr.f32.mxu0 0.0
        %3264 = vmatmul.mubr.f32.gmra.mrb[0].mxu0 %v3197
        %v3265 = vpop.f32.mrb[0].mxu0
        %v3266 = vadd.f32 0.0, %v3265
        %v3267 = vpop.f32.mrb[0].mxu0
        %3268 = vdwg.mxu0
        %vm3269 = vcmp.gt.f32.partialorder %v2171, 0.0
        %vm3270 = vcmp.gt.f32.partialorder %v2244, 0.0
        %vm3271 = vcmp.gt.f32.partialorder %v2317, 0.0
        %vm3272 = vcmp.gt.f32.partialorder %v2390, 0.0
        %vm3273 = vcmp.gt.f32.partialorder %v2463, 0.0
        %vm3274 = vcmp.gt.f32.partialorder %v2536, 0.0
        %vm3275 = vcmp.gt.f32.partialorder %v2609, 0.0
        %vm3276 = vcmp.gt.f32.partialorder %v2682, 0.0
        %vm3277 = vcmp.gt.f32.partialorder %v2755, 0.0
        %vm3278 = vcmp.gt.f32.partialorder %v2828, 0.0
        %vm3279 = vcmp.gt.f32.partialorder %v2901, 0.0
        %vm3280 = vcmp.gt.f32.partialorder %v2974, 0.0
        %vm3281 = vcmp.gt.f32.partialorder %v3047, 0.0
        %vm3282 = vcmp.gt.f32.partialorder %v3120, 0.0
        %vm3283 = vcmp.gt.f32.partialorder %v3193, 0.0
        %vm3284 = vcmp.gt.f32.partialorder %v3266, 0.0
        %v3285 = vmin.f32 %v2171, 0.0
        %v3286 = vmin.f32 %v2244, 0.0
        %v3287 = vmin.f32 %v2317, 0.0
        %v3288 = vmin.f32 %v2390, 0.0
        %v3289 = vmin.f32 %v2463, 0.0
        %v3290 = vmin.f32 %v2536, 0.0
        %v3291 = vmin.f32 %v2609, 0.0
        %v3292 = vmin.f32 %v2682, 0.0
        %v3293 = vmin.f32 %v2755, 0.0
        %v3294 = vmin.f32 %v2828, 0.0
        %v3295 = vmin.f32 %v2901, 0.0
        %v3296 = vmin.f32 %v2974, 0.0
        %v3297 = vmin.f32 %v3047, 0.0
        %v3298 = vmin.f32 %v3120, 0.0
        %v3299 = vmin.f32 %v3193, 0.0
        %v3300 = vmin.f32 %v3266, 0.0
        %v3301 = vmul.f32 %v3285, 1.442695
        %v3302 = vpow.pop %v3301
        %v3303 = vmul.f32 %v3286, 1.442695
        %v3304 = vpow.pop %v3303
        %v3305 = vmul.f32 %v3287, 1.442695
        %v3306 = vpow.pop %v3305
        %v3307 = vmul.f32 %v3288, 1.442695
        %v3308 = vpow.pop %v3307
        %v3309 = vmul.f32 %v3289, 1.442695
        %v3310 = vpow.pop %v3309
        %v3311 = vmul.f32 %v3290, 1.442695
        %v3312 = vpow.pop %v3311
        %v3313 = vmul.f32 %v3291, 1.442695
        %v3314 = vpow.pop %v3313
        %v3315 = vmul.f32 %v3292, 1.442695
        %v3316 = vpow.pop %v3315
        %v3317 = vmul.f32 %v3293, 1.442695
        %v3318 = vpow.pop %v3317
        %v3319 = vmul.f32 %v3294, 1.442695
        %v3320 = vpow.pop %v3319
        %v3321 = vmul.f32 %v3295, 1.442695
        %v3322 = vpow.pop %v3321
        %v3323 = vmul.f32 %v3296, 1.442695
        %v3324 = vpow.pop %v3323
        %v3325 = vmul.f32 %v3297, 1.442695
        %v3326 = vpow.pop %v3325
        %v3327 = vmul.f32 %v3298, 1.442695
        %v3328 = vpow.pop %v3327
        %v3329 = vmul.f32 %v3299, 1.442695
        %v3330 = vpow.pop %v3329
        %v3331 = vmul.f32 %v3300, 1.442695
        %v3332 = vpow.pop %v3331
        %v3333 = vsub.f32 %v3302, 1.0
        %v3334 = vsub.f32 %v3304, 1.0
        %v3335 = vsub.f32 %v3306, 1.0
        %v3336 = vsub.f32 %v3308, 1.0
        %v3337 = vsub.f32 %v3310, 1.0
        %v3338 = vsub.f32 %v3312, 1.0
        %v3339 = vsub.f32 %v3314, 1.0
        %v3340 = vsub.f32 %v3316, 1.0
        %v3341 = vsub.f32 %v3318, 1.0
        %v3342 = vsub.f32 %v3320, 1.0
        %v3343 = vsub.f32 %v3322, 1.0
        %v3344 = vsub.f32 %v3324, 1.0
        %v3345 = vsub.f32 %v3326, 1.0
        %v3346 = vsub.f32 %v3328, 1.0
        %v3347 = vsub.f32 %v3330, 1.0
        %v3348 = vsub.f32 %v3332, 1.0
        %v3349 = vsel %vm3269, %v2171, %v3333
        %v3350 = vsel %vm3270, %v2244, %v3334
        %v3351 = vsel %vm3271, %v2317, %v3335
        %v3352 = vsel %vm3272, %v2390, %v3336
        %v3353 = vsel %vm3273, %v2463, %v3337
        %v3354 = vsel %vm3274, %v2536, %v3338
        %v3355 = vsel %vm3275, %v2609, %v3339
        %v3356 = vsel %vm3276, %v2682, %v3340
        %v3357 = vsel %vm3277, %v2755, %v3341
        %v3358 = vsel %vm3278, %v2828, %v3342
        %v3359 = vsel %vm3279, %v2901, %v3343
        %v3360 = vsel %vm3280, %v2974, %v3344
        %v3361 = vsel %vm3281, %v3047, %v3345
        %v3362 = vsel %vm3282, %v3120, %v3346
        %v3363 = vsel %vm3283, %v3193, %v3347
        %v3364 = vsel %vm3284, %v3266, %v3348
        %vm3365 = vcmask 130048
        %3366 = vst.msk [vmem:[#allocation2] sm:$0xff] %vm3365, %v3349
        %3367 = vst.msk [vmem:[#allocation2 + $0x8] sm:$0xff] %vm3365, %v3350
        %3368 = vst.msk [vmem:[#allocation2 + $0x10] sm:$0xff] %vm3365, %v3351
        %3369 = vst.msk [vmem:[#allocation2 + $0x18] sm:$0xff] %vm3365, %v3352
        %3370 = vst.msk [vmem:[#allocation2 + $0x20] sm:$0xff] %vm3365, %v3353
        %3371 = vst.msk [vmem:[#allocation2 + $0x28] sm:$0xff] %vm3365, %v3354
        %3372 = vst.msk [vmem:[#allocation2 + $0x30] sm:$0xff] %vm3365, %v3355
        %3373 = vst.msk [vmem:[#allocation2 + $0x38] sm:$0xff] %vm3365, %v3356
        %3374 = vst.msk [vmem:[#allocation2 + $0x40] sm:$0xff] %vm3365, %v3357
        %3375 = vst.msk [vmem:[#allocation2 + $0x48] sm:$0xff] %vm3365, %v3358
        %3376 = vst.msk [vmem:[#allocation2 + $0x50] sm:$0xff] %vm3365, %v3359
        %3377 = vst.msk [vmem:[#allocation2 + $0x58] sm:$0xff] %vm3365, %v3360
        %3378 = vst.msk [vmem:[#allocation2 + $0x60] sm:$0xff] %vm3365, %v3361
        %3379 = vst.msk [vmem:[#allocation2 + $0x68] sm:$0xff] %vm3365, %v3362
        %3380 = vst.msk [vmem:[#allocation2 + $0x70] sm:$0xff] %vm3365, %v3363
        %3381 = vst.msk [vmem:[#allocation2 + $0x78] sm:$0xff] %vm3365, %v3364
        %v3382 = vsel %vm546, %v564, 1.0
        %v3383 = vsel %vm546, %v566, 1.0
        %v3384 = vsel %vm546, %v568, 1.0
        %v3385 = vsel %vm546, %v570, 1.0
        %v3386 = vsel %vm546, %v572, 1.0
        %v3387 = vsel %vm546, %v574, 1.0
        %v3388 = vsel %vm546, %v576, 1.0
        %v3389 = vsel %vm546, %v578, 1.0
        %v3390 = vsel %vm546, %v580, 1.0
        %v3391 = vsel %vm546, %v582, 1.0
        %v3392 = vsel %vm546, %v584, 1.0
        %v3393 = vsel %vm546, %v586, 1.0
        %v3394 = vsel %vm546, %v588, 1.0
        %v3395 = vsel %vm546, %v590, 1.0
        %v3396 = vsel %vm546, %v592, 1.0
        %v3397 = vsel %vm546, %v594, 1.0
        %3398 = vrot.lane.b32.xlu0 %v356, 94
        %v3399 = vpop.permute.xlu0 %3398
        %3400 = vrot.lane.b32.xlu0 %v361, 94
        %v3401 = vpop.permute.xlu0 %3400
        %3402 = vrot.lane.b32.xlu0 %v366, 94
        %v3403 = vpop.permute.xlu0 %3402
        %3404 = vrot.lane.b32.xlu0 %v371, 94
        %v3405 = vpop.permute.xlu0 %3404
        %3406 = vrot.lane.b32.xlu0 %v376, 94
        %v3407 = vpop.permute.xlu0 %3406
        %3408 = vrot.lane.b32.xlu0 %v381, 94
        %v3409 = vpop.permute.xlu0 %3408
        %3410 = vrot.lane.b32.xlu0 %v386, 94
        %v3411 = vpop.permute.xlu0 %3410
        %3412 = vrot.lane.b32.xlu0 %v391, 94
        %v3413 = vpop.permute.xlu0 %3412
        %3414 = vrot.lane.b32.xlu0 %v396, 94
        %v3415 = vpop.permute.xlu0 %3414
        %3416 = vrot.lane.b32.xlu0 %v401, 94
        %v3417 = vpop.permute.xlu0 %3416
        %3418 = vrot.lane.b32.xlu0 %v406, 94
        %v3419 = vpop.permute.xlu0 %3418
        %3420 = vrot.lane.b32.xlu0 %v411, 94
        %v3421 = vpop.permute.xlu0 %3420
        %3422 = vrot.lane.b32.xlu0 %v416, 94
        %v3423 = vpop.permute.xlu0 %3422
        %3424 = vrot.lane.b32.xlu0 %v421, 94
        %v3425 = vpop.permute.xlu0 %3424
        %3426 = vrot.lane.b32.xlu0 %v426, 94
        %v3427 = vpop.permute.xlu0 %3426
        %3428 = vrot.lane.b32.xlu0 %v431, 94
        %v3429 = vpop.permute.xlu0 %3428
        %v3446 = vsel %vm546, 1.0, %v3399
        %v3447 = vsel %vm546, 1.0, %v3401
        %v3448 = vsel %vm546, 1.0, %v3403
        %v3449 = vsel %vm546, 1.0, %v3405
        %v3450 = vsel %vm546, 1.0, %v3407
        %v3451 = vsel %vm546, 1.0, %v3409
        %v3452 = vsel %vm546, 1.0, %v3411
        %v3453 = vsel %vm546, 1.0, %v3413
        %v3454 = vsel %vm546, 1.0, %v3415
        %v3455 = vsel %vm546, 1.0, %v3417
        %v3456 = vsel %vm546, 1.0, %v3419
        %v3457 = vsel %vm546, 1.0, %v3421
        %v3458 = vsel %vm546, 1.0, %v3423
        %v3459 = vsel %vm546, 1.0, %v3425
        %v3460 = vsel %vm546, 1.0, %v3427
        %v3461 = vsel %vm546, 1.0, %v3429
        %v3463 = vsel %vm627, %v3382, 0
        %v3466 = vsel %vm627, %v3446, 0
        %3468 = vmatprep.subr.mxu0 0.0
        %3469 = vmatpush1.xpose.msra.mxu0 %v3466
        %3470 = vmatprep.subr.mxu0 0.0
        %3471 = vmatpush1.xpose.msra.mxu0 0.0
        %3472 = vmatprep.subr.mxu0 0.0
        %3473 = vmatpush1.xpose.msra.mxu0 0.0
        %3474 = vmatprep.subr.mxu0 0.0
        %3475 = vmatpush1.xpose.msra.mxu0 0.0
        %3476 = vmatprep.subr.mxu0 0.0
        %3477 = vmatpush1.xpose.msra.mxu0 0.0
        %3478 = vmatprep.subr.mxu0 0.0
        %3479 = vmatpush1.xpose.msra.mxu0 0.0
        %3480 = vmatprep.subr.mxu0 0.0
        %3481 = vmatpush1.xpose.msra.mxu0 0.0
        %3482 = vmatprep.subr.mxu0 0.0
        %3483 = vmatpush1.xpose.msra.mxu0 0.0
        %3484 = vmatprep.subr.mxu0 0.0
        %3485 = vmatpush1.xpose.msra.mxu0 0.0
        %3486 = vmatprep.subr.mxu0 0.0
        %3487 = vmatpush1.xpose.msra.mxu0 0.0
        %3488 = vmatprep.subr.mxu0 0.0
        %3489 = vmatpush1.xpose.msra.mxu0 0.0
        %3490 = vmatprep.subr.mxu0 0.0
        %3491 = vmatpush1.xpose.msra.mxu0 0.0
        %3492 = vmatprep.subr.mxu0 0.0
        %3493 = vmatpush1.xpose.msra.mxu0 0.0
        %3494 = vmatprep.subr.mxu0 0.0
        %3495 = vmatpush1.xpose.msra.mxu0 0.0
        %3496 = vmatprep.subr.mxu0 0.0
        %3497 = vmatpush1.xpose.msra.mxu0 0.0
        %3498 = vmatprep.subr.mxu0 0.0
        %3499 = vmatpush1.xpose.msra.mxu0 0.0
        %3500 = vmatprep.subr.mxu0 0.0
        %3501 = vmatpush1.xpose.msra.mxu0 0.0
        %3502 = vmatprep.subr.mxu0 0.0
        %3503 = vmatpush1.xpose.msra.mxu0 0.0
        %3504 = vmatprep.subr.mxu0 0.0
        %3505 = vmatpush1.xpose.msra.mxu0 0.0
        %3506 = vmatprep.subr.mxu0 0.0
        %3507 = vmatpush1.xpose.msra.mxu0 0.0
        %3508 = vmatprep.subr.mxu0 0.0
        %3509 = vmatpush1.xpose.msra.mxu0 0.0
        %3510 = vmatprep.subr.mxu0 0.0
        %3511 = vmatpush1.xpose.msra.mxu0 0.0
        %3512 = vmatprep.subr.mxu0 0.0
        %3513 = vmatpush1.xpose.msra.mxu0 0.0
        %3514 = vmatprep.subr.mxu0 0.0
        %3515 = vmatpush1.xpose.msra.mxu0 0.0
        %3516 = vmatprep.subr.mxu0 0.0
        %3517 = vmatpush1.xpose.msra.mxu0 0.0
        %3518 = vmatprep.subr.mxu0 0.0
        %3519 = vmatpush1.xpose.msra.mxu0 0.0
        %3520 = vmatprep.subr.mxu0 0.0
        %3521 = vmatpush1.xpose.msra.mxu0 0.0
        %3522 = vmatprep.subr.mxu0 0.0
        %3523 = vmatpush1.xpose.msra.mxu0 0.0
        %3524 = vmatprep.subr.mxu0 0.0
        %3525 = vmatpush1.xpose.msra.mxu0 0.0
        %3526 = vmatprep.subr.mxu0 0.0
        %3527 = vmatpush1.xpose.msra.mxu0 0.0
        %3528 = vmatprep.subr.mxu0 0.0
        %3529 = vmatpush1.xpose.msra.mxu0 0.0
        %3530 = vmatprep.subr.mxu0 0.0
        %3531 = vmatpush1.xpose.msra.mxu0 0.0
        %3532 = vmatprep.mubr.f32.mxu0 0.0
        %3533 = vmatmul.mubr.f32.gmra.mrb[0].mxu0 %v3463
        %v3534 = vpop.f32.mrb[0].mxu0
        %v3535 = vadd.f32 0.0, %v3534
        %v3536 = vpop.f32.mrb[0].mxu0
        %3537 = vdwg.mxu0
        %v3539 = vsel %vm627, %v3383, 0
        %v3542 = vsel %vm627, %v3447, 0
        %3544 = vmatprep.subr.mxu0 0.0
        %3545 = vmatpush1.xpose.msra.mxu0 %v3542
        %3546 = vmatprep.subr.mxu0 0.0
        %3547 = vmatpush1.xpose.msra.mxu0 0.0
        %3548 = vmatprep.subr.mxu0 0.0
        %3549 = vmatpush1.xpose.msra.mxu0 0.0
        %3550 = vmatprep.subr.mxu0 0.0
        %3551 = vmatpush1.xpose.msra.mxu0 0.0
        %3552 = vmatprep.subr.mxu0 0.0
        %3553 = vmatpush1.xpose.msra.mxu0 0.0
        %3554 = vmatprep.subr.mxu0 0.0
        %3555 = vmatpush1.xpose.msra.mxu0 0.0
        %3556 = vmatprep.subr.mxu0 0.0
        %3557 = vmatpush1.xpose.msra.mxu0 0.0
        %3558 = vmatprep.subr.mxu0 0.0
        %3559 = vmatpush1.xpose.msra.mxu0 0.0
        %3560 = vmatprep.subr.mxu0 0.0
        %3561 = vmatpush1.xpose.msra.mxu0 0.0
        %3562 = vmatprep.subr.mxu0 0.0
        %3563 = vmatpush1.xpose.msra.mxu0 0.0
        %3564 = vmatprep.subr.mxu0 0.0
        %3565 = vmatpush1.xpose.msra.mxu0 0.0
        %3566 = vmatprep.subr.mxu0 0.0
        %3567 = vmatpush1.xpose.msra.mxu0 0.0
        %3568 = vmatprep.subr.mxu0 0.0
        %3569 = vmatpush1.xpose.msra.mxu0 0.0
        %3570 = vmatprep.subr.mxu0 0.0
        %3571 = vmatpush1.xpose.msra.mxu0 0.0
        %3572 = vmatprep.subr.mxu0 0.0
        %3573 = vmatpush1.xpose.msra.mxu0 0.0
        %3574 = vmatprep.subr.mxu0 0.0
        %3575 = vmatpush1.xpose.msra.mxu0 0.0
        %3576 = vmatprep.subr.mxu0 0.0
        %3577 = vmatpush1.xpose.msra.mxu0 0.0
        %3578 = vmatprep.subr.mxu0 0.0
        %3579 = vmatpush1.xpose.msra.mxu0 0.0
        %3580 = vmatprep.subr.mxu0 0.0
        %3581 = vmatpush1.xpose.msra.mxu0 0.0
        %3582 = vmatprep.subr.mxu0 0.0
        %3583 = vmatpush1.xpose.msra.mxu0 0.0
        %3584 = vmatprep.subr.mxu0 0.0
        %3585 = vmatpush1.xpose.msra.mxu0 0.0
        %3586 = vmatprep.subr.mxu0 0.0
        %3587 = vmatpush1.xpose.msra.mxu0 0.0
        %3588 = vmatprep.subr.mxu0 0.0
        %3589 = vmatpush1.xpose.msra.mxu0 0.0
        %3590 = vmatprep.subr.mxu0 0.0
        %3591 = vmatpush1.xpose.msra.mxu0 0.0
        %3592 = vmatprep.subr.mxu0 0.0
        %3593 = vmatpush1.xpose.msra.mxu0 0.0
        %3594 = vmatprep.subr.mxu0 0.0
        %3595 = vmatpush1.xpose.msra.mxu0 0.0
        %3596 = vmatprep.subr.mxu0 0.0
        %3597 = vmatpush1.xpose.msra.mxu0 0.0
        %3598 = vmatprep.subr.mxu0 0.0
        %3599 = vmatpush1.xpose.msra.mxu0 0.0
        %3600 = vmatprep.subr.mxu0 0.0
        %3601 = vmatpush1.xpose.msra.mxu0 0.0
        %3602 = vmatprep.subr.mxu0 0.0
        %3603 = vmatpush1.xpose.msra.mxu0 0.0
        %3604 = vmatprep.subr.mxu0 0.0
        %3605 = vmatpush1.xpose.msra.mxu0 0.0
        %3606 = vmatprep.subr.mxu0 0.0
        %3607 = vmatpush1.xpose.msra.mxu0 0.0
        %3608 = vmatprep.mubr.f32.mxu0 0.0
        %3609 = vmatmul.mubr.f32.gmra.mrb[0].mxu0 %v3539
        %v3610 = vpop.f32.mrb[0].mxu0
        %v3611 = vadd.f32 0.0, %v3610
        %v3612 = vpop.f32.mrb[0].mxu0
        %3613 = vdwg.mxu0
        %v3615 = vsel %vm627, %v3384, 0
        %v3618 = vsel %vm627, %v3448, 0
        %3620 = vmatprep.subr.mxu0 0.0
        %3621 = vmatpush1.xpose.msra.mxu0 %v3618
        %3622 = vmatprep.subr.mxu0 0.0
        %3623 = vmatpush1.xpose.msra.mxu0 0.0
        %3624 = vmatprep.subr.mxu0 0.0
        %3625 = vmatpush1.xpose.msra.mxu0 0.0
        %3626 = vmatprep.subr.mxu0 0.0
        %3627 = vmatpush1.xpose.msra.mxu0 0.0
        %3628 = vmatprep.subr.mxu0 0.0
        %3629 = vmatpush1.xpose.msra.mxu0 0.0
        %3630 = vmatprep.subr.mxu0 0.0
        %3631 = vmatpush1.xpose.msra.mxu0 0.0
        %3632 = vmatprep.subr.mxu0 0.0
        %3633 = vmatpush1.xpose.msra.mxu0 0.0
        %3634 = vmatprep.subr.mxu0 0.0
        %3635 = vmatpush1.xpose.msra.mxu0 0.0
        %3636 = vmatprep.subr.mxu0 0.0
        %3637 = vmatpush1.xpose.msra.mxu0 0.0
        %3638 = vmatprep.subr.mxu0 0.0
        %3639 = vmatpush1.xpose.msra.mxu0 0.0
        %3640 = vmatprep.subr.mxu0 0.0
        %3641 = vmatpush1.xpose.msra.mxu0 0.0
        %3642 = vmatprep.subr.mxu0 0.0
        %3643 = vmatpush1.xpose.msra.mxu0 0.0
        %3644 = vmatprep.subr.mxu0 0.0
        %3645 = vmatpush1.xpose.msra.mxu0 0.0
        %3646 = vmatprep.subr.mxu0 0.0
        %3647 = vmatpush1.xpose.msra.mxu0 0.0
        %3648 = vmatprep.subr.mxu0 0.0
        %3649 = vmatpush1.xpose.msra.mxu0 0.0
        %3650 = vmatprep.subr.mxu0 0.0
        %3651 = vmatpush1.xpose.msra.mxu0 0.0
        %3652 = vmatprep.subr.mxu0 0.0
        %3653 = vmatpush1.xpose.msra.mxu0 0.0
        %3654 = vmatprep.subr.mxu0 0.0
        %3655 = vmatpush1.xpose.msra.mxu0 0.0
        %3656 = vmatprep.subr.mxu0 0.0
        %3657 = vmatpush1.xpose.msra.mxu0 0.0
        %3658 = vmatprep.subr.mxu0 0.0
        %3659 = vmatpush1.xpose.msra.mxu0 0.0
        %3660 = vmatprep.subr.mxu0 0.0
        %3661 = vmatpush1.xpose.msra.mxu0 0.0
        %3662 = vmatprep.subr.mxu0 0.0
        %3663 = vmatpush1.xpose.msra.mxu0 0.0
        %3664 = vmatprep.subr.mxu0 0.0
        %3665 = vmatpush1.xpose.msra.mxu0 0.0
        %3666 = vmatprep.subr.mxu0 0.0
        %3667 = vmatpush1.xpose.msra.mxu0 0.0
        %3668 = vmatprep.subr.mxu0 0.0
        %3669 = vmatpush1.xpose.msra.mxu0 0.0
        %3670 = vmatprep.subr.mxu0 0.0
        %3671 = vmatpush1.xpose.msra.mxu0 0.0
        %3672 = vmatprep.subr.mxu0 0.0
        %3673 = vmatpush1.xpose.msra.mxu0 0.0
        %3674 = vmatprep.subr.mxu0 0.0
        %3675 = vmatpush1.xpose.msra.mxu0 0.0
        %3676 = vmatprep.subr.mxu0 0.0
        %3677 = vmatpush1.xpose.msra.mxu0 0.0
        %3678 = vmatprep.subr.mxu0 0.0
        %3679 = vmatpush1.xpose.msra.mxu0 0.0
        %3680 = vmatprep.subr.mxu0 0.0
        %3681 = vmatpush1.xpose.msra.mxu0 0.0
        %3682 = vmatprep.subr.mxu0 0.0
        %3683 = vmatpush1.xpose.msra.mxu0 0.0
        %3684 = vmatprep.mubr.f32.mxu0 0.0
        %3685 = vmatmul.mubr.f32.gmra.mrb[0].mxu0 %v3615
        %v3686 = vpop.f32.mrb[0].mxu0
        %v3687 = vadd.f32 0.0, %v3686
        %v3688 = vpop.f32.mrb[0].mxu0
        %3689 = vdwg.mxu0
        %v3691 = vsel %vm627, %v3385, 0
        %v3694 = vsel %vm627, %v3449, 0
        %3696 = vmatprep.subr.mxu0 0.0
        %3697 = vmatpush1.xpose.msra.mxu0 %v3694
        %3698 = vmatprep.subr.mxu0 0.0
        %3699 = vmatpush1.xpose.msra.mxu0 0.0
        %3700 = vmatprep.subr.mxu0 0.0
        %3701 = vmatpush1.xpose.msra.mxu0 0.0
        %3702 = vmatprep.subr.mxu0 0.0
        %3703 = vmatpush1.xpose.msra.mxu0 0.0
        %3704 = vmatprep.subr.mxu0 0.0
        %3705 = vmatpush1.xpose.msra.mxu0 0.0
        %3706 = vmatprep.subr.mxu0 0.0
        %3707 = vmatpush1.xpose.msra.mxu0 0.0
        %3708 = vmatprep.subr.mxu0 0.0
        %3709 = vmatpush1.xpose.msra.mxu0 0.0
        %3710 = vmatprep.subr.mxu0 0.0
        %3711 = vmatpush1.xpose.msra.mxu0 0.0
        %3712 = vmatprep.subr.mxu0 0.0
        %3713 = vmatpush1.xpose.msra.mxu0 0.0
        %3714 = vmatprep.subr.mxu0 0.0
        %3715 = vmatpush1.xpose.msra.mxu0 0.0
        %3716 = vmatprep.subr.mxu0 0.0
        %3717 = vmatpush1.xpose.msra.mxu0 0.0
        %3718 = vmatprep.subr.mxu0 0.0
        %3719 = vmatpush1.xpose.msra.mxu0 0.0
        %3720 = vmatprep.subr.mxu0 0.0
        %3721 = vmatpush1.xpose.msra.mxu0 0.0
        %3722 = vmatprep.subr.mxu0 0.0
        %3723 = vmatpush1.xpose.msra.mxu0 0.0
        %3724 = vmatprep.subr.mxu0 0.0
        %3725 = vmatpush1.xpose.msra.mxu0 0.0
        %3726 = vmatprep.subr.mxu0 0.0
        %3727 = vmatpush1.xpose.msra.mxu0 0.0
        %3728 = vmatprep.subr.mxu0 0.0
        %3729 = vmatpush1.xpose.msra.mxu0 0.0
        %3730 = vmatprep.subr.mxu0 0.0
        %3731 = vmatpush1.xpose.msra.mxu0 0.0
        %3732 = vmatprep.subr.mxu0 0.0
        %3733 = vmatpush1.xpose.msra.mxu0 0.0
        %3734 = vmatprep.subr.mxu0 0.0
        %3735 = vmatpush1.xpose.msra.mxu0 0.0
        %3736 = vmatprep.subr.mxu0 0.0
        %3737 = vmatpush1.xpose.msra.mxu0 0.0
        %3738 = vmatprep.subr.mxu0 0.0
        %3739 = vmatpush1.xpose.msra.mxu0 0.0
        %3740 = vmatprep.subr.mxu0 0.0
        %3741 = vmatpush1.xpose.msra.mxu0 0.0
        %3742 = vmatprep.subr.mxu0 0.0
        %3743 = vmatpush1.xpose.msra.mxu0 0.0
        %3744 = vmatprep.subr.mxu0 0.0
        %3745 = vmatpush1.xpose.msra.mxu0 0.0
        %3746 = vmatprep.subr.mxu0 0.0
        %3747 = vmatpush1.xpose.msra.mxu0 0.0
        %3748 = vmatprep.subr.mxu0 0.0
        %3749 = vmatpush1.xpose.msra.mxu0 0.0
        %3750 = vmatprep.subr.mxu0 0.0
        %3751 = vmatpush1.xpose.msra.mxu0 0.0
        %3752 = vmatprep.subr.mxu0 0.0
        %3753 = vmatpush1.xpose.msra.mxu0 0.0
        %3754 = vmatprep.subr.mxu0 0.0
        %3755 = vmatpush1.xpose.msra.mxu0 0.0
        %3756 = vmatprep.subr.mxu0 0.0
        %3757 = vmatpush1.xpose.msra.mxu0 0.0
        %3758 = vmatprep.subr.mxu0 0.0
        %3759 = vmatpush1.xpose.msra.mxu0 0.0
        %3760 = vmatprep.mubr.f32.mxu0 0.0
        %3761 = vmatmul.mubr.f32.gmra.mrb[0].mxu0 %v3691
        %v3762 = vpop.f32.mrb[0].mxu0
        %v3763 = vadd.f32 0.0, %v3762
        %v3764 = vpop.f32.mrb[0].mxu0
        %3765 = vdwg.mxu0
        %v3767 = vsel %vm627, %v3386, 0
        %v3770 = vsel %vm627, %v3450, 0
        %3772 = vmatprep.subr.mxu0 0.0
        %3773 = vmatpush1.xpose.msra.mxu0 %v3770
        %3774 = vmatprep.subr.mxu0 0.0
        %3775 = vmatpush1.xpose.msra.mxu0 0.0
        %3776 = vmatprep.subr.mxu0 0.0
        %3777 = vmatpush1.xpose.msra.mxu0 0.0
        %3778 = vmatprep.subr.mxu0 0.0
        %3779 = vmatpush1.xpose.msra.mxu0 0.0
        %3780 = vmatprep.subr.mxu0 0.0
        %3781 = vmatpush1.xpose.msra.mxu0 0.0
        %3782 = vmatprep.subr.mxu0 0.0
        %3783 = vmatpush1.xpose.msra.mxu0 0.0
        %3784 = vmatprep.subr.mxu0 0.0
        %3785 = vmatpush1.xpose.msra.mxu0 0.0
        %3786 = vmatprep.subr.mxu0 0.0
        %3787 = vmatpush1.xpose.msra.mxu0 0.0
        %3788 = vmatprep.subr.mxu0 0.0
        %3789 = vmatpush1.xpose.msra.mxu0 0.0
        %3790 = vmatprep.subr.mxu0 0.0
        %3791 = vmatpush1.xpose.msra.mxu0 0.0
        %3792 = vmatprep.subr.mxu0 0.0
        %3793 = vmatpush1.xpose.msra.mxu0 0.0
        %3794 = vmatprep.subr.mxu0 0.0
        %3795 = vmatpush1.xpose.msra.mxu0 0.0
        %3796 = vmatprep.subr.mxu0 0.0
        %3797 = vmatpush1.xpose.msra.mxu0 0.0
        %3798 = vmatprep.subr.mxu0 0.0
        %3799 = vmatpush1.xpose.msra.mxu0 0.0
        %3800 = vmatprep.subr.mxu0 0.0
        %3801 = vmatpush1.xpose.msra.mxu0 0.0
        %3802 = vmatprep.subr.mxu0 0.0
        %3803 = vmatpush1.xpose.msra.mxu0 0.0
        %3804 = vmatprep.subr.mxu0 0.0
        %3805 = vmatpush1.xpose.msra.mxu0 0.0
        %3806 = vmatprep.subr.mxu0 0.0
        %3807 = vmatpush1.xpose.msra.mxu0 0.0
        %3808 = vmatprep.subr.mxu0 0.0
        %3809 = vmatpush1.xpose.msra.mxu0 0.0
        %3810 = vmatprep.subr.mxu0 0.0
        %3811 = vmatpush1.xpose.msra.mxu0 0.0
        %3812 = vmatprep.subr.mxu0 0.0
        %3813 = vmatpush1.xpose.msra.mxu0 0.0
        %3814 = vmatprep.subr.mxu0 0.0
        %3815 = vmatpush1.xpose.msra.mxu0 0.0
        %3816 = vmatprep.subr.mxu0 0.0
        %3817 = vmatpush1.xpose.msra.mxu0 0.0
        %3818 = vmatprep.subr.mxu0 0.0
        %3819 = vmatpush1.xpose.msra.mxu0 0.0
        %3820 = vmatprep.subr.mxu0 0.0
        %3821 = vmatpush1.xpose.msra.mxu0 0.0
        %3822 = vmatprep.subr.mxu0 0.0
        %3823 = vmatpush1.xpose.msra.mxu0 0.0
        %3824 = vmatprep.subr.mxu0 0.0
        %3825 = vmatpush1.xpose.msra.mxu0 0.0
        %3826 = vmatprep.subr.mxu0 0.0
        %3827 = vmatpush1.xpose.msra.mxu0 0.0
        %3828 = vmatprep.subr.mxu0 0.0
        %3829 = vmatpush1.xpose.msra.mxu0 0.0
        %3830 = vmatprep.subr.mxu0 0.0
        %3831 = vmatpush1.xpose.msra.mxu0 0.0
        %3832 = vmatprep.subr.mxu0 0.0
        %3833 = vmatpush1.xpose.msra.mxu0 0.0
        %3834 = vmatprep.subr.mxu0 0.0
        %3835 = vmatpush1.xpose.msra.mxu0 0.0
        %3836 = vmatprep.mubr.f32.mxu0 0.0
        %3837 = vmatmul.mubr.f32.gmra.mrb[0].mxu0 %v3767
        %v3838 = vpop.f32.mrb[0].mxu0
        %v3839 = vadd.f32 0.0, %v3838
        %v3840 = vpop.f32.mrb[0].mxu0
        %3841 = vdwg.mxu0
        %v3843 = vsel %vm627, %v3387, 0
        %v3846 = vsel %vm627, %v3451, 0
        %3848 = vmatprep.subr.mxu0 0.0
        %3849 = vmatpush1.xpose.msra.mxu0 %v3846
        %3850 = vmatprep.subr.mxu0 0.0
        %3851 = vmatpush1.xpose.msra.mxu0 0.0
        %3852 = vmatprep.subr.mxu0 0.0
        %3853 = vmatpush1.xpose.msra.mxu0 0.0
        %3854 = vmatprep.subr.mxu0 0.0
        %3855 = vmatpush1.xpose.msra.mxu0 0.0
        %3856 = vmatprep.subr.mxu0 0.0
        %3857 = vmatpush1.xpose.msra.mxu0 0.0
        %3858 = vmatprep.subr.mxu0 0.0
        %3859 = vmatpush1.xpose.msra.mxu0 0.0
        %3860 = vmatprep.subr.mxu0 0.0
        %3861 = vmatpush1.xpose.msra.mxu0 0.0
        %3862 = vmatprep.subr.mxu0 0.0
        %3863 = vmatpush1.xpose.msra.mxu0 0.0
        %3864 = vmatprep.subr.mxu0 0.0
        %3865 = vmatpush1.xpose.msra.mxu0 0.0
        %3866 = vmatprep.subr.mxu0 0.0
        %3867 = vmatpush1.xpose.msra.mxu0 0.0
        %3868 = vmatprep.subr.mxu0 0.0
        %3869 = vmatpush1.xpose.msra.mxu0 0.0
        %3870 = vmatprep.subr.mxu0 0.0
        %3871 = vmatpush1.xpose.msra.mxu0 0.0
        %3872 = vmatprep.subr.mxu0 0.0
        %3873 = vmatpush1.xpose.msra.mxu0 0.0
        %3874 = vmatprep.subr.mxu0 0.0
        %3875 = vmatpush1.xpose.msra.mxu0 0.0
        %3876 = vmatprep.subr.mxu0 0.0
        %3877 = vmatpush1.xpose.msra.mxu0 0.0
        %3878 = vmatprep.subr.mxu0 0.0
        %3879 = vmatpush1.xpose.msra.mxu0 0.0
        %3880 = vmatprep.subr.mxu0 0.0
        %3881 = vmatpush1.xpose.msra.mxu0 0.0
        %3882 = vmatprep.subr.mxu0 0.0
        %3883 = vmatpush1.xpose.msra.mxu0 0.0
        %3884 = vmatprep.subr.mxu0 0.0
        %3885 = vmatpush1.xpose.msra.mxu0 0.0
        %3886 = vmatprep.subr.mxu0 0.0
        %3887 = vmatpush1.xpose.msra.mxu0 0.0
        %3888 = vmatprep.subr.mxu0 0.0
        %3889 = vmatpush1.xpose.msra.mxu0 0.0
        %3890 = vmatprep.subr.mxu0 0.0
        %3891 = vmatpush1.xpose.msra.mxu0 0.0
        %3892 = vmatprep.subr.mxu0 0.0
        %3893 = vmatpush1.xpose.msra.mxu0 0.0
        %3894 = vmatprep.subr.mxu0 0.0
        %3895 = vmatpush1.xpose.msra.mxu0 0.0
        %3896 = vmatprep.subr.mxu0 0.0
        %3897 = vmatpush1.xpose.msra.mxu0 0.0
        %3898 = vmatprep.subr.mxu0 0.0
        %3899 = vmatpush1.xpose.msra.mxu0 0.0
        %3900 = vmatprep.subr.mxu0 0.0
        %3901 = vmatpush1.xpose.msra.mxu0 0.0
        %3902 = vmatprep.subr.mxu0 0.0
        %3903 = vmatpush1.xpose.msra.mxu0 0.0
        %3904 = vmatprep.subr.mxu0 0.0
        %3905 = vmatpush1.xpose.msra.mxu0 0.0
        %3906 = vmatprep.subr.mxu0 0.0
        %3907 = vmatpush1.xpose.msra.mxu0 0.0
        %3908 = vmatprep.subr.mxu0 0.0
        %3909 = vmatpush1.xpose.msra.mxu0 0.0
        %3910 = vmatprep.subr.mxu0 0.0
        %3911 = vmatpush1.xpose.msra.mxu0 0.0
        %3912 = vmatprep.mubr.f32.mxu0 0.0
        %3913 = vmatmul.mubr.f32.gmra.mrb[0].mxu0 %v3843
        %v3914 = vpop.f32.mrb[0].mxu0
        %v3915 = vadd.f32 0.0, %v3914
        %v3916 = vpop.f32.mrb[0].mxu0
        %3917 = vdwg.mxu0
        %v3919 = vsel %vm627, %v3388, 0
        %v3922 = vsel %vm627, %v3452, 0
        %3924 = vmatprep.subr.mxu0 0.0
        %3925 = vmatpush1.xpose.msra.mxu0 %v3922
        %3926 = vmatprep.subr.mxu0 0.0
        %3927 = vmatpush1.xpose.msra.mxu0 0.0
        %3928 = vmatprep.subr.mxu0 0.0
        %3929 = vmatpush1.xpose.msra.mxu0 0.0
        %3930 = vmatprep.subr.mxu0 0.0
        %3931 = vmatpush1.xpose.msra.mxu0 0.0
        %3932 = vmatprep.subr.mxu0 0.0
        %3933 = vmatpush1.xpose.msra.mxu0 0.0
        %3934 = vmatprep.subr.mxu0 0.0
        %3935 = vmatpush1.xpose.msra.mxu0 0.0
        %3936 = vmatprep.subr.mxu0 0.0
        %3937 = vmatpush1.xpose.msra.mxu0 0.0
        %3938 = vmatprep.subr.mxu0 0.0
        %3939 = vmatpush1.xpose.msra.mxu0 0.0
        %3940 = vmatprep.subr.mxu0 0.0
        %3941 = vmatpush1.xpose.msra.mxu0 0.0
        %3942 = vmatprep.subr.mxu0 0.0
        %3943 = vmatpush1.xpose.msra.mxu0 0.0
        %3944 = vmatprep.subr.mxu0 0.0
        %3945 = vmatpush1.xpose.msra.mxu0 0.0
        %3946 = vmatprep.subr.mxu0 0.0
        %3947 = vmatpush1.xpose.msra.mxu0 0.0
        %3948 = vmatprep.subr.mxu0 0.0
        %3949 = vmatpush1.xpose.msra.mxu0 0.0
        %3950 = vmatprep.subr.mxu0 0.0
        %3951 = vmatpush1.xpose.msra.mxu0 0.0
        %3952 = vmatprep.subr.mxu0 0.0
        %3953 = vmatpush1.xpose.msra.mxu0 0.0
        %3954 = vmatprep.subr.mxu0 0.0
        %3955 = vmatpush1.xpose.msra.mxu0 0.0
        %3956 = vmatprep.subr.mxu0 0.0
        %3957 = vmatpush1.xpose.msra.mxu0 0.0
        %3958 = vmatprep.subr.mxu0 0.0
        %3959 = vmatpush1.xpose.msra.mxu0 0.0
        %3960 = vmatprep.subr.mxu0 0.0
        %3961 = vmatpush1.xpose.msra.mxu0 0.0
        %3962 = vmatprep.subr.mxu0 0.0
        %3963 = vmatpush1.xpose.msra.mxu0 0.0
        %3964 = vmatprep.subr.mxu0 0.0
        %3965 = vmatpush1.xpose.msra.mxu0 0.0
        %3966 = vmatprep.subr.mxu0 0.0
        %3967 = vmatpush1.xpose.msra.mxu0 0.0
        %3968 = vmatprep.subr.mxu0 0.0
        %3969 = vmatpush1.xpose.msra.mxu0 0.0
        %3970 = vmatprep.subr.mxu0 0.0
        %3971 = vmatpush1.xpose.msra.mxu0 0.0
        %3972 = vmatprep.subr.mxu0 0.0
        %3973 = vmatpush1.xpose.msra.mxu0 0.0
        %3974 = vmatprep.subr.mxu0 0.0
        %3975 = vmatpush1.xpose.msra.mxu0 0.0
        %3976 = vmatprep.subr.mxu0 0.0
        %3977 = vmatpush1.xpose.msra.mxu0 0.0
        %3978 = vmatprep.subr.mxu0 0.0
        %3979 = vmatpush1.xpose.msra.mxu0 0.0
        %3980 = vmatprep.subr.mxu0 0.0
        %3981 = vmatpush1.xpose.msra.mxu0 0.0
        %3982 = vmatprep.subr.mxu0 0.0
        %3983 = vmatpush1.xpose.msra.mxu0 0.0
        %3984 = vmatprep.subr.mxu0 0.0
        %3985 = vmatpush1.xpose.msra.mxu0 0.0
        %3986 = vmatprep.subr.mxu0 0.0
        %3987 = vmatpush1.xpose.msra.mxu0 0.0
        %3988 = vmatprep.mubr.f32.mxu0 0.0
        %3989 = vmatmul.mubr.f32.gmra.mrb[0].mxu0 %v3919
        %v3990 = vpop.f32.mrb[0].mxu0
        %v3991 = vadd.f32 0.0, %v3990
        %v3992 = vpop.f32.mrb[0].mxu0
        %3993 = vdwg.mxu0
        %v3995 = vsel %vm627, %v3389, 0
        %v3998 = vsel %vm627, %v3453, 0
        %4000 = vmatprep.subr.mxu0 0.0
        %4001 = vmatpush1.xpose.msra.mxu0 %v3998
        %4002 = vmatprep.subr.mxu0 0.0
        %4003 = vmatpush1.xpose.msra.mxu0 0.0
        %4004 = vmatprep.subr.mxu0 0.0
        %4005 = vmatpush1.xpose.msra.mxu0 0.0
        %4006 = vmatprep.subr.mxu0 0.0
        %4007 = vmatpush1.xpose.msra.mxu0 0.0
        %4008 = vmatprep.subr.mxu0 0.0
        %4009 = vmatpush1.xpose.msra.mxu0 0.0
        %4010 = vmatprep.subr.mxu0 0.0
        %4011 = vmatpush1.xpose.msra.mxu0 0.0
        %4012 = vmatprep.subr.mxu0 0.0
        %4013 = vmatpush1.xpose.msra.mxu0 0.0
        %4014 = vmatprep.subr.mxu0 0.0
        %4015 = vmatpush1.xpose.msra.mxu0 0.0
        %4016 = vmatprep.subr.mxu0 0.0
        %4017 = vmatpush1.xpose.msra.mxu0 0.0
        %4018 = vmatprep.subr.mxu0 0.0
        %4019 = vmatpush1.xpose.msra.mxu0 0.0
        %4020 = vmatprep.subr.mxu0 0.0
        %4021 = vmatpush1.xpose.msra.mxu0 0.0
        %4022 = vmatprep.subr.mxu0 0.0
        %4023 = vmatpush1.xpose.msra.mxu0 0.0
        %4024 = vmatprep.subr.mxu0 0.0
        %4025 = vmatpush1.xpose.msra.mxu0 0.0
        %4026 = vmatprep.subr.mxu0 0.0
        %4027 = vmatpush1.xpose.msra.mxu0 0.0
        %4028 = vmatprep.subr.mxu0 0.0
        %4029 = vmatpush1.xpose.msra.mxu0 0.0
        %4030 = vmatprep.subr.mxu0 0.0
        %4031 = vmatpush1.xpose.msra.mxu0 0.0
        %4032 = vmatprep.subr.mxu0 0.0
        %4033 = vmatpush1.xpose.msra.mxu0 0.0
        %4034 = vmatprep.subr.mxu0 0.0
        %4035 = vmatpush1.xpose.msra.mxu0 0.0
        %4036 = vmatprep.subr.mxu0 0.0
        %4037 = vmatpush1.xpose.msra.mxu0 0.0
        %4038 = vmatprep.subr.mxu0 0.0
        %4039 = vmatpush1.xpose.msra.mxu0 0.0
        %4040 = vmatprep.subr.mxu0 0.0
        %4041 = vmatpush1.xpose.msra.mxu0 0.0
        %4042 = vmatprep.subr.mxu0 0.0
        %4043 = vmatpush1.xpose.msra.mxu0 0.0
        %4044 = vmatprep.subr.mxu0 0.0
        %4045 = vmatpush1.xpose.msra.mxu0 0.0
        %4046 = vmatprep.subr.mxu0 0.0
        %4047 = vmatpush1.xpose.msra.mxu0 0.0
        %4048 = vmatprep.subr.mxu0 0.0
        %4049 = vmatpush1.xpose.msra.mxu0 0.0
        %4050 = vmatprep.subr.mxu0 0.0
        %4051 = vmatpush1.xpose.msra.mxu0 0.0
        %4052 = vmatprep.subr.mxu0 0.0
        %4053 = vmatpush1.xpose.msra.mxu0 0.0
        %4054 = vmatprep.subr.mxu0 0.0
        %4055 = vmatpush1.xpose.msra.mxu0 0.0
        %4056 = vmatprep.subr.mxu0 0.0
        %4057 = vmatpush1.xpose.msra.mxu0 0.0
        %4058 = vmatprep.subr.mxu0 0.0
        %4059 = vmatpush1.xpose.msra.mxu0 0.0
        %4060 = vmatprep.subr.mxu0 0.0
        %4061 = vmatpush1.xpose.msra.mxu0 0.0
        %4062 = vmatprep.subr.mxu0 0.0
        %4063 = vmatpush1.xpose.msra.mxu0 0.0
        %4064 = vmatprep.mubr.f32.mxu0 0.0
        %4065 = vmatmul.mubr.f32.gmra.mrb[0].mxu0 %v3995
        %v4066 = vpop.f32.mrb[0].mxu0
        %v4067 = vadd.f32 0.0, %v4066
        %v4068 = vpop.f32.mrb[0].mxu0
        %4069 = vdwg.mxu0
        %v4071 = vsel %vm627, %v3390, 0
        %v4074 = vsel %vm627, %v3454, 0
        %4076 = vmatprep.subr.mxu0 0.0
        %4077 = vmatpush1.xpose.msra.mxu0 %v4074
        %4078 = vmatprep.subr.mxu0 0.0
        %4079 = vmatpush1.xpose.msra.mxu0 0.0
        %4080 = vmatprep.subr.mxu0 0.0
        %4081 = vmatpush1.xpose.msra.mxu0 0.0
        %4082 = vmatprep.subr.mxu0 0.0
        %4083 = vmatpush1.xpose.msra.mxu0 0.0
        %4084 = vmatprep.subr.mxu0 0.0
        %4085 = vmatpush1.xpose.msra.mxu0 0.0
        %4086 = vmatprep.subr.mxu0 0.0
        %4087 = vmatpush1.xpose.msra.mxu0 0.0
        %4088 = vmatprep.subr.mxu0 0.0
        %4089 = vmatpush1.xpose.msra.mxu0 0.0
        %4090 = vmatprep.subr.mxu0 0.0
        %4091 = vmatpush1.xpose.msra.mxu0 0.0
        %4092 = vmatprep.subr.mxu0 0.0
        %4093 = vmatpush1.xpose.msra.mxu0 0.0
        %4094 = vmatprep.subr.mxu0 0.0
        %4095 = vmatpush1.xpose.msra.mxu0 0.0
        %4096 = vmatprep.subr.mxu0 0.0
        %4097 = vmatpush1.xpose.msra.mxu0 0.0
        %4098 = vmatprep.subr.mxu0 0.0
        %4099 = vmatpush1.xpose.msra.mxu0 0.0
        %4100 = vmatprep.subr.mxu0 0.0
        %4101 = vmatpush1.xpose.msra.mxu0 0.0
        %4102 = vmatprep.subr.mxu0 0.0
        %4103 = vmatpush1.xpose.msra.mxu0 0.0
        %4104 = vmatprep.subr.mxu0 0.0
        %4105 = vmatpush1.xpose.msra.mxu0 0.0
        %4106 = vmatprep.subr.mxu0 0.0
        %4107 = vmatpush1.xpose.msra.mxu0 0.0
        %4108 = vmatprep.subr.mxu0 0.0
        %4109 = vmatpush1.xpose.msra.mxu0 0.0
        %4110 = vmatprep.subr.mxu0 0.0
        %4111 = vmatpush1.xpose.msra.mxu0 0.0
        %4112 = vmatprep.subr.mxu0 0.0
        %4113 = vmatpush1.xpose.msra.mxu0 0.0
        %4114 = vmatprep.subr.mxu0 0.0
        %4115 = vmatpush1.xpose.msra.mxu0 0.0
        %4116 = vmatprep.subr.mxu0 0.0
        %4117 = vmatpush1.xpose.msra.mxu0 0.0
        %4118 = vmatprep.subr.mxu0 0.0
        %4119 = vmatpush1.xpose.msra.mxu0 0.0
        %4120 = vmatprep.subr.mxu0 0.0
        %4121 = vmatpush1.xpose.msra.mxu0 0.0
        %4122 = vmatprep.subr.mxu0 0.0
        %4123 = vmatpush1.xpose.msra.mxu0 0.0
        %4124 = vmatprep.subr.mxu0 0.0
        %4125 = vmatpush1.xpose.msra.mxu0 0.0
        %4126 = vmatprep.subr.mxu0 0.0
        %4127 = vmatpush1.xpose.msra.mxu0 0.0
        %4128 = vmatprep.subr.mxu0 0.0
        %4129 = vmatpush1.xpose.msra.mxu0 0.0
        %4130 = vmatprep.subr.mxu0 0.0
        %4131 = vmatpush1.xpose.msra.mxu0 0.0
        %4132 = vmatprep.subr.mxu0 0.0
        %4133 = vmatpush1.xpose.msra.mxu0 0.0
        %4134 = vmatprep.subr.mxu0 0.0
        %4135 = vmatpush1.xpose.msra.mxu0 0.0
        %4136 = vmatprep.subr.mxu0 0.0
        %4137 = vmatpush1.xpose.msra.mxu0 0.0
        %4138 = vmatprep.subr.mxu0 0.0
        %4139 = vmatpush1.xpose.msra.mxu0 0.0
        %4140 = vmatprep.mubr.f32.mxu0 0.0
        %4141 = vmatmul.mubr.f32.gmra.mrb[0].mxu0 %v4071
        %v4142 = vpop.f32.mrb[0].mxu0
        %v4143 = vadd.f32 0.0, %v4142
        %v4144 = vpop.f32.mrb[0].mxu0
        %4145 = vdwg.mxu0
        %v4147 = vsel %vm627, %v3391, 0
        %v4150 = vsel %vm627, %v3455, 0
        %4152 = vmatprep.subr.mxu0 0.0
        %4153 = vmatpush1.xpose.msra.mxu0 %v4150
        %4154 = vmatprep.subr.mxu0 0.0
        %4155 = vmatpush1.xpose.msra.mxu0 0.0
        %4156 = vmatprep.subr.mxu0 0.0
        %4157 = vmatpush1.xpose.msra.mxu0 0.0
        %4158 = vmatprep.subr.mxu0 0.0
        %4159 = vmatpush1.xpose.msra.mxu0 0.0
        %4160 = vmatprep.subr.mxu0 0.0
        %4161 = vmatpush1.xpose.msra.mxu0 0.0
        %4162 = vmatprep.subr.mxu0 0.0
        %4163 = vmatpush1.xpose.msra.mxu0 0.0
        %4164 = vmatprep.subr.mxu0 0.0
        %4165 = vmatpush1.xpose.msra.mxu0 0.0
        %4166 = vmatprep.subr.mxu0 0.0
        %4167 = vmatpush1.xpose.msra.mxu0 0.0
        %4168 = vmatprep.subr.mxu0 0.0
        %4169 = vmatpush1.xpose.msra.mxu0 0.0
        %4170 = vmatprep.subr.mxu0 0.0
        %4171 = vmatpush1.xpose.msra.mxu0 0.0
        %4172 = vmatprep.subr.mxu0 0.0
        %4173 = vmatpush1.xpose.msra.mxu0 0.0
        %4174 = vmatprep.subr.mxu0 0.0
        %4175 = vmatpush1.xpose.msra.mxu0 0.0
        %4176 = vmatprep.subr.mxu0 0.0
        %4177 = vmatpush1.xpose.msra.mxu0 0.0
        %4178 = vmatprep.subr.mxu0 0.0
        %4179 = vmatpush1.xpose.msra.mxu0 0.0
        %4180 = vmatprep.subr.mxu0 0.0
        %4181 = vmatpush1.xpose.msra.mxu0 0.0
        %4182 = vmatprep.subr.mxu0 0.0
        %4183 = vmatpush1.xpose.msra.mxu0 0.0
        %4184 = vmatprep.subr.mxu0 0.0
        %4185 = vmatpush1.xpose.msra.mxu0 0.0
        %4186 = vmatprep.subr.mxu0 0.0
        %4187 = vmatpush1.xpose.msra.mxu0 0.0
        %4188 = vmatprep.subr.mxu0 0.0
        %4189 = vmatpush1.xpose.msra.mxu0 0.0
        %4190 = vmatprep.subr.mxu0 0.0
        %4191 = vmatpush1.xpose.msra.mxu0 0.0
        %4192 = vmatprep.subr.mxu0 0.0
        %4193 = vmatpush1.xpose.msra.mxu0 0.0
        %4194 = vmatprep.subr.mxu0 0.0
        %4195 = vmatpush1.xpose.msra.mxu0 0.0
        %4196 = vmatprep.subr.mxu0 0.0
        %4197 = vmatpush1.xpose.msra.mxu0 0.0
        %4198 = vmatprep.subr.mxu0 0.0
        %4199 = vmatpush1.xpose.msra.mxu0 0.0
        %4200 = vmatprep.subr.mxu0 0.0
        %4201 = vmatpush1.xpose.msra.mxu0 0.0
        %4202 = vmatprep.subr.mxu0 0.0
        %4203 = vmatpush1.xpose.msra.mxu0 0.0
        %4204 = vmatprep.subr.mxu0 0.0
        %4205 = vmatpush1.xpose.msra.mxu0 0.0
        %4206 = vmatprep.subr.mxu0 0.0
        %4207 = vmatpush1.xpose.msra.mxu0 0.0
        %4208 = vmatprep.subr.mxu0 0.0
        %4209 = vmatpush1.xpose.msra.mxu0 0.0
        %4210 = vmatprep.subr.mxu0 0.0
        %4211 = vmatpush1.xpose.msra.mxu0 0.0
        %4212 = vmatprep.subr.mxu0 0.0
        %4213 = vmatpush1.xpose.msra.mxu0 0.0
        %4214 = vmatprep.subr.mxu0 0.0
        %4215 = vmatpush1.xpose.msra.mxu0 0.0
        %4216 = vmatprep.mubr.f32.mxu0 0.0
        %4217 = vmatmul.mubr.f32.gmra.mrb[0].mxu0 %v4147
        %v4218 = vpop.f32.mrb[0].mxu0
        %v4219 = vadd.f32 0.0, %v4218
        %v4220 = vpop.f32.mrb[0].mxu0
        %4221 = vdwg.mxu0
        %v4223 = vsel %vm627, %v3392, 0
        %v4226 = vsel %vm627, %v3456, 0
        %4228 = vmatprep.subr.mxu0 0.0
        %4229 = vmatpush1.xpose.msra.mxu0 %v4226
        %4230 = vmatprep.subr.mxu0 0.0
        %4231 = vmatpush1.xpose.msra.mxu0 0.0
        %4232 = vmatprep.subr.mxu0 0.0
        %4233 = vmatpush1.xpose.msra.mxu0 0.0
        %4234 = vmatprep.subr.mxu0 0.0
        %4235 = vmatpush1.xpose.msra.mxu0 0.0
        %4236 = vmatprep.subr.mxu0 0.0
        %4237 = vmatpush1.xpose.msra.mxu0 0.0
        %4238 = vmatprep.subr.mxu0 0.0
        %4239 = vmatpush1.xpose.msra.mxu0 0.0
        %4240 = vmatprep.subr.mxu0 0.0
        %4241 = vmatpush1.xpose.msra.mxu0 0.0
        %4242 = vmatprep.subr.mxu0 0.0
        %4243 = vmatpush1.xpose.msra.mxu0 0.0
        %4244 = vmatprep.subr.mxu0 0.0
        %4245 = vmatpush1.xpose.msra.mxu0 0.0
        %4246 = vmatprep.subr.mxu0 0.0
        %4247 = vmatpush1.xpose.msra.mxu0 0.0
        %4248 = vmatprep.subr.mxu0 0.0
        %4249 = vmatpush1.xpose.msra.mxu0 0.0
        %4250 = vmatprep.subr.mxu0 0.0
        %4251 = vmatpush1.xpose.msra.mxu0 0.0
        %4252 = vmatprep.subr.mxu0 0.0
        %4253 = vmatpush1.xpose.msra.mxu0 0.0
        %4254 = vmatprep.subr.mxu0 0.0
        %4255 = vmatpush1.xpose.msra.mxu0 0.0
        %4256 = vmatprep.subr.mxu0 0.0
        %4257 = vmatpush1.xpose.msra.mxu0 0.0
        %4258 = vmatprep.subr.mxu0 0.0
        %4259 = vmatpush1.xpose.msra.mxu0 0.0
        %4260 = vmatprep.subr.mxu0 0.0
        %4261 = vmatpush1.xpose.msra.mxu0 0.0
        %4262 = vmatprep.subr.mxu0 0.0
        %4263 = vmatpush1.xpose.msra.mxu0 0.0
        %4264 = vmatprep.subr.mxu0 0.0
        %4265 = vmatpush1.xpose.msra.mxu0 0.0
        %4266 = vmatprep.subr.mxu0 0.0
        %4267 = vmatpush1.xpose.msra.mxu0 0.0
        %4268 = vmatprep.subr.mxu0 0.0
        %4269 = vmatpush1.xpose.msra.mxu0 0.0
        %4270 = vmatprep.subr.mxu0 0.0
        %4271 = vmatpush1.xpose.msra.mxu0 0.0
        %4272 = vmatprep.subr.mxu0 0.0
        %4273 = vmatpush1.xpose.msra.mxu0 0.0
        %4274 = vmatprep.subr.mxu0 0.0
        %4275 = vmatpush1.xpose.msra.mxu0 0.0
        %4276 = vmatprep.subr.mxu0 0.0
        %4277 = vmatpush1.xpose.msra.mxu0 0.0
        %4278 = vmatprep.subr.mxu0 0.0
        %4279 = vmatpush1.xpose.msra.mxu0 0.0
        %4280 = vmatprep.subr.mxu0 0.0
        %4281 = vmatpush1.xpose.msra.mxu0 0.0
        %4282 = vmatprep.subr.mxu0 0.0
        %4283 = vmatpush1.xpose.msra.mxu0 0.0
        %4284 = vmatprep.subr.mxu0 0.0
        %4285 = vmatpush1.xpose.msra.mxu0 0.0
        %4286 = vmatprep.subr.mxu0 0.0
        %4287 = vmatpush1.xpose.msra.mxu0 0.0
        %4288 = vmatprep.subr.mxu0 0.0
        %4289 = vmatpush1.xpose.msra.mxu0 0.0
        %4290 = vmatprep.subr.mxu0 0.0
        %4291 = vmatpush1.xpose.msra.mxu0 0.0
        %4292 = vmatprep.mubr.f32.mxu0 0.0
        %4293 = vmatmul.mubr.f32.gmra.mrb[0].mxu0 %v4223
        %v4294 = vpop.f32.mrb[0].mxu0
        %v4295 = vadd.f32 0.0, %v4294
        %v4296 = vpop.f32.mrb[0].mxu0
        %4297 = vdwg.mxu0
        %v4299 = vsel %vm627, %v3393, 0
        %v4302 = vsel %vm627, %v3457, 0
        %4304 = vmatprep.subr.mxu0 0.0
        %4305 = vmatpush1.xpose.msra.mxu0 %v4302
        %4306 = vmatprep.subr.mxu0 0.0
        %4307 = vmatpush1.xpose.msra.mxu0 0.0
        %4308 = vmatprep.subr.mxu0 0.0
        %4309 = vmatpush1.xpose.msra.mxu0 0.0
        %4310 = vmatprep.subr.mxu0 0.0
        %4311 = vmatpush1.xpose.msra.mxu0 0.0
        %4312 = vmatprep.subr.mxu0 0.0
        %4313 = vmatpush1.xpose.msra.mxu0 0.0
        %4314 = vmatprep.subr.mxu0 0.0
        %4315 = vmatpush1.xpose.msra.mxu0 0.0
        %4316 = vmatprep.subr.mxu0 0.0
        %4317 = vmatpush1.xpose.msra.mxu0 0.0
        %4318 = vmatprep.subr.mxu0 0.0
        %4319 = vmatpush1.xpose.msra.mxu0 0.0
        %4320 = vmatprep.subr.mxu0 0.0
        %4321 = vmatpush1.xpose.msra.mxu0 0.0
        %4322 = vmatprep.subr.mxu0 0.0
        %4323 = vmatpush1.xpose.msra.mxu0 0.0
        %4324 = vmatprep.subr.mxu0 0.0
        %4325 = vmatpush1.xpose.msra.mxu0 0.0
        %4326 = vmatprep.subr.mxu0 0.0
        %4327 = vmatpush1.xpose.msra.mxu0 0.0
        %4328 = vmatprep.subr.mxu0 0.0
        %4329 = vmatpush1.xpose.msra.mxu0 0.0
        %4330 = vmatprep.subr.mxu0 0.0
        %4331 = vmatpush1.xpose.msra.mxu0 0.0
        %4332 = vmatprep.subr.mxu0 0.0
        %4333 = vmatpush1.xpose.msra.mxu0 0.0
        %4334 = vmatprep.subr.mxu0 0.0
        %4335 = vmatpush1.xpose.msra.mxu0 0.0
        %4336 = vmatprep.subr.mxu0 0.0
        %4337 = vmatpush1.xpose.msra.mxu0 0.0
        %4338 = vmatprep.subr.mxu0 0.0
        %4339 = vmatpush1.xpose.msra.mxu0 0.0
        %4340 = vmatprep.subr.mxu0 0.0
        %4341 = vmatpush1.xpose.msra.mxu0 0.0
        %4342 = vmatprep.subr.mxu0 0.0
        %4343 = vmatpush1.xpose.msra.mxu0 0.0
        %4344 = vmatprep.subr.mxu0 0.0
        %4345 = vmatpush1.xpose.msra.mxu0 0.0
        %4346 = vmatprep.subr.mxu0 0.0
        %4347 = vmatpush1.xpose.msra.mxu0 0.0
        %4348 = vmatprep.subr.mxu0 0.0
        %4349 = vmatpush1.xpose.msra.mxu0 0.0
        %4350 = vmatprep.subr.mxu0 0.0
        %4351 = vmatpush1.xpose.msra.mxu0 0.0
        %4352 = vmatprep.subr.mxu0 0.0
        %4353 = vmatpush1.xpose.msra.mxu0 0.0
        %4354 = vmatprep.subr.mxu0 0.0
        %4355 = vmatpush1.xpose.msra.mxu0 0.0
        %4356 = vmatprep.subr.mxu0 0.0
        %4357 = vmatpush1.xpose.msra.mxu0 0.0
        %4358 = vmatprep.subr.mxu0 0.0
        %4359 = vmatpush1.xpose.msra.mxu0 0.0
        %4360 = vmatprep.subr.mxu0 0.0
        %4361 = vmatpush1.xpose.msra.mxu0 0.0
        %4362 = vmatprep.subr.mxu0 0.0
        %4363 = vmatpush1.xpose.msra.mxu0 0.0
        %4364 = vmatprep.subr.mxu0 0.0
        %4365 = vmatpush1.xpose.msra.mxu0 0.0
        %4366 = vmatprep.subr.mxu0 0.0
        %4367 = vmatpush1.xpose.msra.mxu0 0.0
        %4368 = vmatprep.mubr.f32.mxu0 0.0
        %4369 = vmatmul.mubr.f32.gmra.mrb[0].mxu0 %v4299
        %v4370 = vpop.f32.mrb[0].mxu0
        %v4371 = vadd.f32 0.0, %v4370
        %v4372 = vpop.f32.mrb[0].mxu0
        %4373 = vdwg.mxu0
        %v4375 = vsel %vm627, %v3394, 0
        %v4378 = vsel %vm627, %v3458, 0
        %4380 = vmatprep.subr.mxu0 0.0
        %4381 = vmatpush1.xpose.msra.mxu0 %v4378
        %4382 = vmatprep.subr.mxu0 0.0
        %4383 = vmatpush1.xpose.msra.mxu0 0.0
        %4384 = vmatprep.subr.mxu0 0.0
        %4385 = vmatpush1.xpose.msra.mxu0 0.0
        %4386 = vmatprep.subr.mxu0 0.0
        %4387 = vmatpush1.xpose.msra.mxu0 0.0
        %4388 = vmatprep.subr.mxu0 0.0
        %4389 = vmatpush1.xpose.msra.mxu0 0.0
        %4390 = vmatprep.subr.mxu0 0.0
        %4391 = vmatpush1.xpose.msra.mxu0 0.0
        %4392 = vmatprep.subr.mxu0 0.0
        %4393 = vmatpush1.xpose.msra.mxu0 0.0
        %4394 = vmatprep.subr.mxu0 0.0
        %4395 = vmatpush1.xpose.msra.mxu0 0.0
        %4396 = vmatprep.subr.mxu0 0.0
        %4397 = vmatpush1.xpose.msra.mxu0 0.0
        %4398 = vmatprep.subr.mxu0 0.0
        %4399 = vmatpush1.xpose.msra.mxu0 0.0
        %4400 = vmatprep.subr.mxu0 0.0
        %4401 = vmatpush1.xpose.msra.mxu0 0.0
        %4402 = vmatprep.subr.mxu0 0.0
        %4403 = vmatpush1.xpose.msra.mxu0 0.0
        %4404 = vmatprep.subr.mxu0 0.0
        %4405 = vmatpush1.xpose.msra.mxu0 0.0
        %4406 = vmatprep.subr.mxu0 0.0
        %4407 = vmatpush1.xpose.msra.mxu0 0.0
        %4408 = vmatprep.subr.mxu0 0.0
        %4409 = vmatpush1.xpose.msra.mxu0 0.0
        %4410 = vmatprep.subr.mxu0 0.0
        %4411 = vmatpush1.xpose.msra.mxu0 0.0
        %4412 = vmatprep.subr.mxu0 0.0
        %4413 = vmatpush1.xpose.msra.mxu0 0.0
        %4414 = vmatprep.subr.mxu0 0.0
        %4415 = vmatpush1.xpose.msra.mxu0 0.0
        %4416 = vmatprep.subr.mxu0 0.0
        %4417 = vmatpush1.xpose.msra.mxu0 0.0
        %4418 = vmatprep.subr.mxu0 0.0
        %4419 = vmatpush1.xpose.msra.mxu0 0.0
        %4420 = vmatprep.subr.mxu0 0.0
        %4421 = vmatpush1.xpose.msra.mxu0 0.0
        %4422 = vmatprep.subr.mxu0 0.0
        %4423 = vmatpush1.xpose.msra.mxu0 0.0
        %4424 = vmatprep.subr.mxu0 0.0
        %4425 = vmatpush1.xpose.msra.mxu0 0.0
        %4426 = vmatprep.subr.mxu0 0.0
        %4427 = vmatpush1.xpose.msra.mxu0 0.0
        %4428 = vmatprep.subr.mxu0 0.0
        %4429 = vmatpush1.xpose.msra.mxu0 0.0
        %4430 = vmatprep.subr.mxu0 0.0
        %4431 = vmatpush1.xpose.msra.mxu0 0.0
        %4432 = vmatprep.subr.mxu0 0.0
        %4433 = vmatpush1.xpose.msra.mxu0 0.0
        %4434 = vmatprep.subr.mxu0 0.0
        %4435 = vmatpush1.xpose.msra.mxu0 0.0
        %4436 = vmatprep.subr.mxu0 0.0
        %4437 = vmatpush1.xpose.msra.mxu0 0.0
        %4438 = vmatprep.subr.mxu0 0.0
        %4439 = vmatpush1.xpose.msra.mxu0 0.0
        %4440 = vmatprep.subr.mxu0 0.0
        %4441 = vmatpush1.xpose.msra.mxu0 0.0
        %4442 = vmatprep.subr.mxu0 0.0
        %4443 = vmatpush1.xpose.msra.mxu0 0.0
        %4444 = vmatprep.mubr.f32.mxu0 0.0
        %4445 = vmatmul.mubr.f32.gmra.mrb[0].mxu0 %v4375
        %v4446 = vpop.f32.mrb[0].mxu0
        %v4447 = vadd.f32 0.0, %v4446
        %v4448 = vpop.f32.mrb[0].mxu0
        %4449 = vdwg.mxu0
        %v4451 = vsel %vm627, %v3395, 0
        %v4454 = vsel %vm627, %v3459, 0
        %4456 = vmatprep.subr.mxu0 0.0
        %4457 = vmatpush1.xpose.msra.mxu0 %v4454
        %4458 = vmatprep.subr.mxu0 0.0
        %4459 = vmatpush1.xpose.msra.mxu0 0.0
        %4460 = vmatprep.subr.mxu0 0.0
        %4461 = vmatpush1.xpose.msra.mxu0 0.0
        %4462 = vmatprep.subr.mxu0 0.0
        %4463 = vmatpush1.xpose.msra.mxu0 0.0
        %4464 = vmatprep.subr.mxu0 0.0
        %4465 = vmatpush1.xpose.msra.mxu0 0.0
        %4466 = vmatprep.subr.mxu0 0.0
        %4467 = vmatpush1.xpose.msra.mxu0 0.0
        %4468 = vmatprep.subr.mxu0 0.0
        %4469 = vmatpush1.xpose.msra.mxu0 0.0
        %4470 = vmatprep.subr.mxu0 0.0
        %4471 = vmatpush1.xpose.msra.mxu0 0.0
        %4472 = vmatprep.subr.mxu0 0.0
        %4473 = vmatpush1.xpose.msra.mxu0 0.0
        %4474 = vmatprep.subr.mxu0 0.0
        %4475 = vmatpush1.xpose.msra.mxu0 0.0
        %4476 = vmatprep.subr.mxu0 0.0
        %4477 = vmatpush1.xpose.msra.mxu0 0.0
        %4478 = vmatprep.subr.mxu0 0.0
        %4479 = vmatpush1.xpose.msra.mxu0 0.0
        %4480 = vmatprep.subr.mxu0 0.0
        %4481 = vmatpush1.xpose.msra.mxu0 0.0
        %4482 = vmatprep.subr.mxu0 0.0
        %4483 = vmatpush1.xpose.msra.mxu0 0.0
        %4484 = vmatprep.subr.mxu0 0.0
        %4485 = vmatpush1.xpose.msra.mxu0 0.0
        %4486 = vmatprep.subr.mxu0 0.0
        %4487 = vmatpush1.xpose.msra.mxu0 0.0
        %4488 = vmatprep.subr.mxu0 0.0
        %4489 = vmatpush1.xpose.msra.mxu0 0.0
        %4490 = vmatprep.subr.mxu0 0.0
        %4491 = vmatpush1.xpose.msra.mxu0 0.0
        %4492 = vmatprep.subr.mxu0 0.0
        %4493 = vmatpush1.xpose.msra.mxu0 0.0
        %4494 = vmatprep.subr.mxu0 0.0
        %4495 = vmatpush1.xpose.msra.mxu0 0.0
        %4496 = vmatprep.subr.mxu0 0.0
        %4497 = vmatpush1.xpose.msra.mxu0 0.0
        %4498 = vmatprep.subr.mxu0 0.0
        %4499 = vmatpush1.xpose.msra.mxu0 0.0
        %4500 = vmatprep.subr.mxu0 0.0
        %4501 = vmatpush1.xpose.msra.mxu0 0.0
        %4502 = vmatprep.subr.mxu0 0.0
        %4503 = vmatpush1.xpose.msra.mxu0 0.0
        %4504 = vmatprep.subr.mxu0 0.0
        %4505 = vmatpush1.xpose.msra.mxu0 0.0
        %4506 = vmatprep.subr.mxu0 0.0
        %4507 = vmatpush1.xpose.msra.mxu0 0.0
        %4508 = vmatprep.subr.mxu0 0.0
        %4509 = vmatpush1.xpose.msra.mxu0 0.0
        %4510 = vmatprep.subr.mxu0 0.0
        %4511 = vmatpush1.xpose.msra.mxu0 0.0
        %4512 = vmatprep.subr.mxu0 0.0
        %4513 = vmatpush1.xpose.msra.mxu0 0.0
        %4514 = vmatprep.subr.mxu0 0.0
        %4515 = vmatpush1.xpose.msra.mxu0 0.0
        %4516 = vmatprep.subr.mxu0 0.0
        %4517 = vmatpush1.xpose.msra.mxu0 0.0
        %4518 = vmatprep.subr.mxu0 0.0
        %4519 = vmatpush1.xpose.msra.mxu0 0.0
        %4520 = vmatprep.mubr.f32.mxu0 0.0
        %4521 = vmatmul.mubr.f32.gmra.mrb[0].mxu0 %v4451
        %v4522 = vpop.f32.mrb[0].mxu0
        %v4523 = vadd.f32 0.0, %v4522
        %v4524 = vpop.f32.mrb[0].mxu0
        %4525 = vdwg.mxu0
        %v4527 = vsel %vm627, %v3396, 0
        %v4530 = vsel %vm627, %v3460, 0
        %4532 = vmatprep.subr.mxu0 0.0
        %4533 = vmatpush1.xpose.msra.mxu0 %v4530
        %4534 = vmatprep.subr.mxu0 0.0
        %4535 = vmatpush1.xpose.msra.mxu0 0.0
        %4536 = vmatprep.subr.mxu0 0.0
        %4537 = vmatpush1.xpose.msra.mxu0 0.0
        %4538 = vmatprep.subr.mxu0 0.0
        %4539 = vmatpush1.xpose.msra.mxu0 0.0
        %4540 = vmatprep.subr.mxu0 0.0
        %4541 = vmatpush1.xpose.msra.mxu0 0.0
        %4542 = vmatprep.subr.mxu0 0.0
        %4543 = vmatpush1.xpose.msra.mxu0 0.0
        %4544 = vmatprep.subr.mxu0 0.0
        %4545 = vmatpush1.xpose.msra.mxu0 0.0
        %4546 = vmatprep.subr.mxu0 0.0
        %4547 = vmatpush1.xpose.msra.mxu0 0.0
        %4548 = vmatprep.subr.mxu0 0.0
        %4549 = vmatpush1.xpose.msra.mxu0 0.0
        %4550 = vmatprep.subr.mxu0 0.0
        %4551 = vmatpush1.xpose.msra.mxu0 0.0
        %4552 = vmatprep.subr.mxu0 0.0
        %4553 = vmatpush1.xpose.msra.mxu0 0.0
        %4554 = vmatprep.subr.mxu0 0.0
        %4555 = vmatpush1.xpose.msra.mxu0 0.0
        %4556 = vmatprep.subr.mxu0 0.0
        %4557 = vmatpush1.xpose.msra.mxu0 0.0
        %4558 = vmatprep.subr.mxu0 0.0
        %4559 = vmatpush1.xpose.msra.mxu0 0.0
        %4560 = vmatprep.subr.mxu0 0.0
        %4561 = vmatpush1.xpose.msra.mxu0 0.0
        %4562 = vmatprep.subr.mxu0 0.0
        %4563 = vmatpush1.xpose.msra.mxu0 0.0
        %4564 = vmatprep.subr.mxu0 0.0
        %4565 = vmatpush1.xpose.msra.mxu0 0.0
        %4566 = vmatprep.subr.mxu0 0.0
        %4567 = vmatpush1.xpose.msra.mxu0 0.0
        %4568 = vmatprep.subr.mxu0 0.0
        %4569 = vmatpush1.xpose.msra.mxu0 0.0
        %4570 = vmatprep.subr.mxu0 0.0
        %4571 = vmatpush1.xpose.msra.mxu0 0.0
        %4572 = vmatprep.subr.mxu0 0.0
        %4573 = vmatpush1.xpose.msra.mxu0 0.0
        %4574 = vmatprep.subr.mxu0 0.0
        %4575 = vmatpush1.xpose.msra.mxu0 0.0
        %4576 = vmatprep.subr.mxu0 0.0
        %4577 = vmatpush1.xpose.msra.mxu0 0.0
        %4578 = vmatprep.subr.mxu0 0.0
        %4579 = vmatpush1.xpose.msra.mxu0 0.0
        %4580 = vmatprep.subr.mxu0 0.0
        %4581 = vmatpush1.xpose.msra.mxu0 0.0
        %4582 = vmatprep.subr.mxu0 0.0
        %4583 = vmatpush1.xpose.msra.mxu0 0.0
        %4584 = vmatprep.subr.mxu0 0.0
        %4585 = vmatpush1.xpose.msra.mxu0 0.0
        %4586 = vmatprep.subr.mxu0 0.0
        %4587 = vmatpush1.xpose.msra.mxu0 0.0
        %4588 = vmatprep.subr.mxu0 0.0
        %4589 = vmatpush1.xpose.msra.mxu0 0.0
        %4590 = vmatprep.subr.mxu0 0.0
        %4591 = vmatpush1.xpose.msra.mxu0 0.0
        %4592 = vmatprep.subr.mxu0 0.0
        %4593 = vmatpush1.xpose.msra.mxu0 0.0
        %4594 = vmatprep.subr.mxu0 0.0
        %4595 = vmatpush1.xpose.msra.mxu0 0.0
        %4596 = vmatprep.mubr.f32.mxu0 0.0
        %4597 = vmatmul.mubr.f32.gmra.mrb[0].mxu0 %v4527
        %v4598 = vpop.f32.mrb[0].mxu0
        %v4599 = vadd.f32 0.0, %v4598
        %v4600 = vpop.f32.mrb[0].mxu0
        %4601 = vdwg.mxu0
        %v4603 = vsel %vm627, %v3397, 0
        %v4606 = vsel %vm627, %v3461, 0
        %4608 = vmatprep.subr.mxu0 0.0
        %4609 = vmatpush1.xpose.msra.mxu0 %v4606
        %4610 = vmatprep.subr.mxu0 0.0
        %4611 = vmatpush1.xpose.msra.mxu0 0.0
        %4612 = vmatprep.subr.mxu0 0.0
        %4613 = vmatpush1.xpose.msra.mxu0 0.0
        %4614 = vmatprep.subr.mxu0 0.0
        %4615 = vmatpush1.xpose.msra.mxu0 0.0
        %4616 = vmatprep.subr.mxu0 0.0
        %4617 = vmatpush1.xpose.msra.mxu0 0.0
        %4618 = vmatprep.subr.mxu0 0.0
        %4619 = vmatpush1.xpose.msra.mxu0 0.0
        %4620 = vmatprep.subr.mxu0 0.0
        %4621 = vmatpush1.xpose.msra.mxu0 0.0
        %4622 = vmatprep.subr.mxu0 0.0
        %4623 = vmatpush1.xpose.msra.mxu0 0.0
        %4624 = vmatprep.subr.mxu0 0.0
        %4625 = vmatpush1.xpose.msra.mxu0 0.0
        %4626 = vmatprep.subr.mxu0 0.0
        %4627 = vmatpush1.xpose.msra.mxu0 0.0
        %4628 = vmatprep.subr.mxu0 0.0
        %4629 = vmatpush1.xpose.msra.mxu0 0.0
        %4630 = vmatprep.subr.mxu0 0.0
        %4631 = vmatpush1.xpose.msra.mxu0 0.0
        %4632 = vmatprep.subr.mxu0 0.0
        %4633 = vmatpush1.xpose.msra.mxu0 0.0
        %4634 = vmatprep.subr.mxu0 0.0
        %4635 = vmatpush1.xpose.msra.mxu0 0.0
        %4636 = vmatprep.subr.mxu0 0.0
        %4637 = vmatpush1.xpose.msra.mxu0 0.0
        %4638 = vmatprep.subr.mxu0 0.0
        %4639 = vmatpush1.xpose.msra.mxu0 0.0
        %4640 = vmatprep.subr.mxu0 0.0
        %4641 = vmatpush1.xpose.msra.mxu0 0.0
        %4642 = vmatprep.subr.mxu0 0.0
        %4643 = vmatpush1.xpose.msra.mxu0 0.0
        %4644 = vmatprep.subr.mxu0 0.0
        %4645 = vmatpush1.xpose.msra.mxu0 0.0
        %4646 = vmatprep.subr.mxu0 0.0
        %4647 = vmatpush1.xpose.msra.mxu0 0.0
        %4648 = vmatprep.subr.mxu0 0.0
        %4649 = vmatpush1.xpose.msra.mxu0 0.0
        %4650 = vmatprep.subr.mxu0 0.0
        %4651 = vmatpush1.xpose.msra.mxu0 0.0
        %4652 = vmatprep.subr.mxu0 0.0
        %4653 = vmatpush1.xpose.msra.mxu0 0.0
        %4654 = vmatprep.subr.mxu0 0.0
        %4655 = vmatpush1.xpose.msra.mxu0 0.0
        %4656 = vmatprep.subr.mxu0 0.0
        %4657 = vmatpush1.xpose.msra.mxu0 0.0
        %4658 = vmatprep.subr.mxu0 0.0
        %4659 = vmatpush1.xpose.msra.mxu0 0.0
        %4660 = vmatprep.subr.mxu0 0.0
        %4661 = vmatpush1.xpose.msra.mxu0 0.0
        %4662 = vmatprep.subr.mxu0 0.0
        %4663 = vmatpush1.xpose.msra.mxu0 0.0
        %4664 = vmatprep.subr.mxu0 0.0
        %4665 = vmatpush1.xpose.msra.mxu0 0.0
        %4666 = vmatprep.subr.mxu0 0.0
        %4667 = vmatpush1.xpose.msra.mxu0 0.0
        %4668 = vmatprep.subr.mxu0 0.0
        %4669 = vmatpush1.xpose.msra.mxu0 0.0
        %4670 = vmatprep.subr.mxu0 0.0
        %4671 = vmatpush1.xpose.msra.mxu0 0.0
        %4672 = vmatprep.mubr.f32.mxu0 0.0
        %4673 = vmatmul.mubr.f32.gmra.mrb[0].mxu0 %v4603
        %v4674 = vpop.f32.mrb[0].mxu0
        %v4675 = vadd.f32 0.0, %v4674
        %v4676 = vpop.f32.mrb[0].mxu0
        %4677 = vdwg.mxu0
        %vm4678 = vcmp.gt.f32.partialorder %v3535, 0.0
        %vm4679 = vcmp.gt.f32.partialorder %v3611, 0.0
        %vm4680 = vcmp.gt.f32.partialorder %v3687, 0.0
        %vm4681 = vcmp.gt.f32.partialorder %v3763, 0.0
        %vm4682 = vcmp.gt.f32.partialorder %v3839, 0.0
        %vm4683 = vcmp.gt.f32.partialorder %v3915, 0.0
        %vm4684 = vcmp.gt.f32.partialorder %v3991, 0.0
        %vm4685 = vcmp.gt.f32.partialorder %v4067, 0.0
        %vm4686 = vcmp.gt.f32.partialorder %v4143, 0.0
        %vm4687 = vcmp.gt.f32.partialorder %v4219, 0.0
        %vm4688 = vcmp.gt.f32.partialorder %v4295, 0.0
        %vm4689 = vcmp.gt.f32.partialorder %v4371, 0.0
        %vm4690 = vcmp.gt.f32.partialorder %v4447, 0.0
        %vm4691 = vcmp.gt.f32.partialorder %v4523, 0.0
        %vm4692 = vcmp.gt.f32.partialorder %v4599, 0.0
        %vm4693 = vcmp.gt.f32.partialorder %v4675, 0.0
        %v4694 = vmul.f32 %v3535, 0.2
        %v4695 = vmul.f32 %v3611, 0.2
        %v4696 = vmul.f32 %v3687, 0.2
        %v4697 = vmul.f32 %v3763, 0.2
        %v4698 = vmul.f32 %v3839, 0.2
        %v4699 = vmul.f32 %v3915, 0.2
        %v4700 = vmul.f32 %v3991, 0.2
        %v4701 = vmul.f32 %v4067, 0.2
        %v4702 = vmul.f32 %v4143, 0.2
        %v4703 = vmul.f32 %v4219, 0.2
        %v4704 = vmul.f32 %v4295, 0.2
        %v4705 = vmul.f32 %v4371, 0.2
        %v4706 = vmul.f32 %v4447, 0.2
        %v4707 = vmul.f32 %v4523, 0.2
        %v4708 = vmul.f32 %v4599, 0.2
        %v4709 = vmul.f32 %v4675, 0.2
        %v4710 = vsel %vm4678, %v3535, %v4694
        %v4711 = vsel %vm4679, %v3611, %v4695
        %v4712 = vsel %vm4680, %v3687, %v4696
        %v4713 = vsel %vm4681, %v3763, %v4697
        %v4714 = vsel %vm4682, %v3839, %v4698
        %v4715 = vsel %vm4683, %v3915, %v4699
        %v4716 = vsel %vm4684, %v3991, %v4700
        %v4717 = vsel %vm4685, %v4067, %v4701
        %v4718 = vsel %vm4686, %v4143, %v4702
        %v4719 = vsel %vm4687, %v4219, %v4703
        %v4720 = vsel %vm4688, %v4295, %v4704
        %v4721 = vsel %vm4689, %v4371, %v4705
        %v4722 = vsel %vm4690, %v4447, %v4706
        %v4723 = vsel %vm4691, %v4523, %v4707
        %v4724 = vsel %vm4692, %v4599, %v4708
        %v4725 = vsel %vm4693, %v4675, %v4709
        %v4726 = vsel %vm1892, %v4710, -9e+15
        %v4727 = vsel %vm1893, %v4711, -9e+15
        %v4728 = vsel %vm1894, %v4712, -9e+15
        %v4729 = vsel %vm1895, %v4713, -9e+15
        %v4730 = vsel %vm1896, %v4714, -9e+15
        %v4731 = vsel %vm1897, %v4715, -9e+15
        %v4732 = vsel %vm1898, %v4716, -9e+15
        %v4733 = vsel %vm1899, %v4717, -9e+15
        %v4734 = vsel %vm1900, %v4718, -9e+15
        %v4735 = vsel %vm1901, %v4719, -9e+15
        %v4736 = vsel %vm1902, %v4720, -9e+15
        %v4737 = vsel %vm1903, %v4721, -9e+15
        %v4738 = vsel %vm1904, %v4722, -9e+15
        %v4739 = vsel %vm1905, %v4723, -9e+15
        %v4740 = vsel %vm1906, %v4724, -9e+15
        %v4741 = vsel %vm1907, %v4725, -9e+15
        %v4742 = vsel %vm1924, %v4726, -inf
        %4743 = vmax.xlane.f32.xlu0 %v4742
        %v4744 = vpop.xlane.xlu0 %4743
        %v4745 = vsel %vm1924, %v4727, -inf
        %4746 = vmax.xlane.f32.xlu0 %v4745
        %v4747 = vpop.xlane.xlu0 %4746
        %v4748 = vsel %vm1924, %v4728, -inf
        %4749 = vmax.xlane.f32.xlu0 %v4748
        %v4750 = vpop.xlane.xlu0 %4749
        %v4751 = vsel %vm1924, %v4729, -inf
        %4752 = vmax.xlane.f32.xlu0 %v4751
        %v4753 = vpop.xlane.xlu0 %4752
        %v4754 = vsel %vm1924, %v4730, -inf
        %4755 = vmax.xlane.f32.xlu0 %v4754
        %v4756 = vpop.xlane.xlu0 %4755
        %v4757 = vsel %vm1924, %v4731, -inf
        %4758 = vmax.xlane.f32.xlu0 %v4757
        %v4759 = vpop.xlane.xlu0 %4758
        %v4760 = vsel %vm1924, %v4732, -inf
        %4761 = vmax.xlane.f32.xlu0 %v4760
        %v4762 = vpop.xlane.xlu0 %4761
        %v4763 = vsel %vm1924, %v4733, -inf
        %4764 = vmax.xlane.f32.xlu0 %v4763
        %v4765 = vpop.xlane.xlu0 %4764
        %v4766 = vsel %vm1924, %v4734, -inf
        %4767 = vmax.xlane.f32.xlu0 %v4766
        %v4768 = vpop.xlane.xlu0 %4767
        %v4769 = vsel %vm1924, %v4735, -inf
        %4770 = vmax.xlane.f32.xlu0 %v4769
        %v4771 = vpop.xlane.xlu0 %4770
        %v4772 = vsel %vm1924, %v4736, -inf
        %4773 = vmax.xlane.f32.xlu0 %v4772
        %v4774 = vpop.xlane.xlu0 %4773
        %v4775 = vsel %vm1924, %v4737, -inf
        %4776 = vmax.xlane.f32.xlu0 %v4775
        %v4777 = vpop.xlane.xlu0 %4776
        %v4778 = vsel %vm1924, %v4738, -inf
        %4779 = vmax.xlane.f32.xlu0 %v4778
        %v4780 = vpop.xlane.xlu0 %4779
        %v4781 = vsel %vm1924, %v4739, -inf
        %4782 = vmax.xlane.f32.xlu0 %v4781
        %v4783 = vpop.xlane.xlu0 %4782
        %v4784 = vsel %vm1924, %v4740, -inf
        %4785 = vmax.xlane.f32.xlu0 %v4784
        %v4786 = vpop.xlane.xlu0 %4785
        %v4787 = vsel %vm1924, %v4741, -inf
        %4788 = vmax.xlane.f32.xlu0 %v4787
        %v4789 = vpop.xlane.xlu0 %4788
        %v4790 = vsub.f32 %v4726, %v4744
        %v4791 = vsub.f32 %v4727, %v4747
        %v4792 = vsub.f32 %v4728, %v4750
        %v4793 = vsub.f32 %v4729, %v4753
        %v4794 = vsub.f32 %v4730, %v4756
        %v4795 = vsub.f32 %v4731, %v4759
        %v4796 = vsub.f32 %v4732, %v4762
        %v4797 = vsub.f32 %v4733, %v4765
        %v4798 = vsub.f32 %v4734, %v4768
        %v4799 = vsub.f32 %v4735, %v4771
        %v4800 = vsub.f32 %v4736, %v4774
        %v4801 = vsub.f32 %v4737, %v4777
        %v4802 = vsub.f32 %v4738, %v4780
        %v4803 = vsub.f32 %v4739, %v4783
        %v4804 = vsub.f32 %v4740, %v4786
        %v4805 = vsub.f32 %v4741, %v4789
        %v4806 = vmul.f32 %v4790, 1.442695
        %v4807 = vpow.pop %v4806
        %v4808 = vmul.f32 %v4791, 1.442695
        %v4809 = vpow.pop %v4808
        %v4810 = vmul.f32 %v4792, 1.442695
        %v4811 = vpow.pop %v4810
        %v4812 = vmul.f32 %v4793, 1.442695
        %v4813 = vpow.pop %v4812
        %v4814 = vmul.f32 %v4794, 1.442695
        %v4815 = vpow.pop %v4814
        %v4816 = vmul.f32 %v4795, 1.442695
        %v4817 = vpow.pop %v4816
        %v4818 = vmul.f32 %v4796, 1.442695
        %v4819 = vpow.pop %v4818
        %v4820 = vmul.f32 %v4797, 1.442695
        %v4821 = vpow.pop %v4820
        %v4822 = vmul.f32 %v4798, 1.442695
        %v4823 = vpow.pop %v4822
        %v4824 = vmul.f32 %v4799, 1.442695
        %v4825 = vpow.pop %v4824
        %v4826 = vmul.f32 %v4800, 1.442695
        %v4827 = vpow.pop %v4826
        %v4828 = vmul.f32 %v4801, 1.442695
        %v4829 = vpow.pop %v4828
        %v4830 = vmul.f32 %v4802, 1.442695
        %v4831 = vpow.pop %v4830
        %v4832 = vmul.f32 %v4803, 1.442695
        %v4833 = vpow.pop %v4832
        %v4834 = vmul.f32 %v4804, 1.442695
        %v4835 = vpow.pop %v4834
        %v4836 = vmul.f32 %v4805, 1.442695
        %v4837 = vpow.pop %v4836
        %v4838 = vsel %vm1924, %v4807, 0.0
        %4839 = vadd.xlane.f32.xlu0 %v4838
        %v4840 = vpop.xlane.xlu0 %4839
        %v4841 = vsel %vm1924, %v4809, 0.0
        %4842 = vadd.xlane.f32.xlu0 %v4841
        %v4843 = vpop.xlane.xlu0 %4842
        %v4844 = vsel %vm1924, %v4811, 0.0
        %4845 = vadd.xlane.f32.xlu0 %v4844
        %v4846 = vpop.xlane.xlu0 %4845
        %v4847 = vsel %vm1924, %v4813, 0.0
        %4848 = vadd.xlane.f32.xlu0 %v4847
        %v4849 = vpop.xlane.xlu0 %4848
        %v4850 = vsel %vm1924, %v4815, 0.0
        %4851 = vadd.xlane.f32.xlu0 %v4850
        %v4852 = vpop.xlane.xlu0 %4851
        %v4853 = vsel %vm1924, %v4817, 0.0
        %4854 = vadd.xlane.f32.xlu0 %v4853
        %v4855 = vpop.xlane.xlu0 %4854
        %v4856 = vsel %vm1924, %v4819, 0.0
        %4857 = vadd.xlane.f32.xlu0 %v4856
        %v4858 = vpop.xlane.xlu0 %4857
        %v4859 = vsel %vm1924, %v4821, 0.0
        %4860 = vadd.xlane.f32.xlu0 %v4859
        %v4861 = vpop.xlane.xlu0 %4860
        %v4862 = vsel %vm1924, %v4823, 0.0
        %4863 = vadd.xlane.f32.xlu0 %v4862
        %v4864 = vpop.xlane.xlu0 %4863
        %v4865 = vsel %vm1924, %v4825, 0.0
        %4866 = vadd.xlane.f32.xlu0 %v4865
        %v4867 = vpop.xlane.xlu0 %4866
        %v4868 = vsel %vm1924, %v4827, 0.0
        %4869 = vadd.xlane.f32.xlu0 %v4868
        %v4870 = vpop.xlane.xlu0 %4869
        %v4871 = vsel %vm1924, %v4829, 0.0
        %4872 = vadd.xlane.f32.xlu0 %v4871
        %v4873 = vpop.xlane.xlu0 %4872
        %v4874 = vsel %vm1924, %v4831, 0.0
        %4875 = vadd.xlane.f32.xlu0 %v4874
        %v4876 = vpop.xlane.xlu0 %4875
        %v4877 = vsel %vm1924, %v4833, 0.0
        %4878 = vadd.xlane.f32.xlu0 %v4877
        %v4879 = vpop.xlane.xlu0 %4878
        %v4880 = vsel %vm1924, %v4835, 0.0
        %4881 = vadd.xlane.f32.xlu0 %v4880
        %v4882 = vpop.xlane.xlu0 %4881
        %v4883 = vsel %vm1924, %v4837, 0.0
        %4884 = vadd.xlane.f32.xlu0 %v4883
        %v4885 = vpop.xlane.xlu0 %4884
        %v4886 = vrcp.pop %v4840
        %v4887 = vrcp.pop %v4843
        %v4888 = vrcp.pop %v4846
        %v4889 = vrcp.pop %v4849
        %v4890 = vrcp.pop %v4852
        %v4891 = vrcp.pop %v4855
        %v4892 = vrcp.pop %v4858
        %v4893 = vrcp.pop %v4861
        %v4894 = vrcp.pop %v4864
        %v4895 = vrcp.pop %v4867
        %v4896 = vrcp.pop %v4870
        %v4897 = vrcp.pop %v4873
        %v4898 = vrcp.pop %v4876
        %v4899 = vrcp.pop %v4879
        %v4900 = vrcp.pop %v4882
        %v4901 = vrcp.pop %v4885
        %v4902 = vmul.f32 %v4807, %v4886
        %v4903 = vmul.f32 %v4809, %v4887
        %v4904 = vmul.f32 %v4811, %v4888
        %v4905 = vmul.f32 %v4813, %v4889
        %v4906 = vmul.f32 %v4815, %v4890
        %v4907 = vmul.f32 %v4817, %v4891
        %v4908 = vmul.f32 %v4819, %v4892
        %v4909 = vmul.f32 %v4821, %v4893
        %v4910 = vmul.f32 %v4823, %v4894
        %v4911 = vmul.f32 %v4825, %v4895
        %v4912 = vmul.f32 %v4827, %v4896
        %v4913 = vmul.f32 %v4829, %v4897
        %v4914 = vmul.f32 %v4831, %v4898
        %v4915 = vmul.f32 %v4833, %v4899
        %v4916 = vmul.f32 %v4835, %v4900
        %v4917 = vmul.f32 %v4837, %v4901
        %4918 = vrot.lane.b32.xlu0 %v356, 112
        %v4919 = vpop.permute.xlu0 %4918
        %v4922 = vsel %vm1924, %v4902, 0
        %4924 = vmatprep.subr.mxu0 0.0
        %4925 = vmatpush1.msra.mxu0 %v4919
        %4926 = vmatprep.subr.mxu0 0.0
        %4927 = vmatpush1.msra.mxu0 0.0
        %4928 = vmatprep.subr.mxu0 0.0
        %4929 = vmatpush1.msra.mxu0 0.0
        %4930 = vmatprep.subr.mxu0 0.0
        %4931 = vmatpush1.msra.mxu0 0.0
        %4932 = vmatprep.subr.mxu0 0.0
        %4933 = vmatpush1.msra.mxu0 0.0
        %4934 = vmatprep.subr.mxu0 0.0
        %4935 = vmatpush1.msra.mxu0 0.0
        %4936 = vmatprep.subr.mxu0 0.0
        %4937 = vmatpush1.msra.mxu0 0.0
        %4938 = vmatprep.subr.mxu0 0.0
        %4939 = vmatpush1.msra.mxu0 0.0
        %4940 = vmatprep.subr.mxu0 0.0
        %4941 = vmatpush1.msra.mxu0 0.0
        %4942 = vmatprep.subr.mxu0 0.0
        %4943 = vmatpush1.msra.mxu0 0.0
        %4944 = vmatprep.subr.mxu0 0.0
        %4945 = vmatpush1.msra.mxu0 0.0
        %4946 = vmatprep.subr.mxu0 0.0
        %4947 = vmatpush1.msra.mxu0 0.0
        %4948 = vmatprep.subr.mxu0 0.0
        %4949 = vmatpush1.msra.mxu0 0.0
        %4950 = vmatprep.subr.mxu0 0.0
        %4951 = vmatpush1.msra.mxu0 0.0
        %4952 = vmatprep.subr.mxu0 0.0
        %4953 = vmatpush1.msra.mxu0 0.0
        %4954 = vmatprep.subr.mxu0 0.0
        %4955 = vmatpush1.msra.mxu0 0.0
        %4956 = vmatprep.subr.mxu0 0.0
        %4957 = vmatpush1.msra.mxu0 0.0
        %4958 = vmatprep.subr.mxu0 0.0
        %4959 = vmatpush1.msra.mxu0 0.0
        %4960 = vmatprep.subr.mxu0 0.0
        %4961 = vmatpush1.msra.mxu0 0.0
        %4962 = vmatprep.subr.mxu0 0.0
        %4963 = vmatpush1.msra.mxu0 0.0
        %4964 = vmatprep.subr.mxu0 0.0
        %4965 = vmatpush1.msra.mxu0 0.0
        %4966 = vmatprep.subr.mxu0 0.0
        %4967 = vmatpush1.msra.mxu0 0.0
        %4968 = vmatprep.subr.mxu0 0.0
        %4969 = vmatpush1.msra.mxu0 0.0
        %4970 = vmatprep.subr.mxu0 0.0
        %4971 = vmatpush1.msra.mxu0 0.0
        %4972 = vmatprep.subr.mxu0 0.0
        %4973 = vmatpush1.msra.mxu0 0.0
        %4974 = vmatprep.subr.mxu0 0.0
        %4975 = vmatpush1.msra.mxu0 0.0
        %4976 = vmatprep.subr.mxu0 0.0
        %4977 = vmatpush1.msra.mxu0 0.0
        %4978 = vmatprep.subr.mxu0 0.0
        %4979 = vmatpush1.msra.mxu0 0.0
        %4980 = vmatprep.subr.mxu0 0.0
        %4981 = vmatpush1.msra.mxu0 0.0
        %4982 = vmatprep.subr.mxu0 0.0
        %4983 = vmatpush1.msra.mxu0 0.0
        %4984 = vmatprep.subr.mxu0 0.0
        %4985 = vmatpush1.msra.mxu0 0.0
        %4986 = vmatprep.subr.mxu0 0.0
        %4987 = vmatpush1.msra.mxu0 0.0
        %4988 = vmatprep.mubr.f32.mxu0 0.0
        %4989 = vmatmul.mubr.f32.gmra.mrb[0].mxu0 %v4922
        %v4990 = vpop.f32.mrb[0].mxu0
        %v4991 = vadd.f32 0.0, %v4990
        %v4992 = vpop.f32.mrb[0].mxu0
        %4993 = vdwg.mxu0
        %4994 = vrot.lane.b32.xlu0 %v361, 112
        %v4995 = vpop.permute.xlu0 %4994
        %v4998 = vsel %vm1924, %v4903, 0
        %5000 = vmatprep.subr.mxu0 0.0
        %5001 = vmatpush1.msra.mxu0 %v4995
        %5002 = vmatprep.subr.mxu0 0.0
        %5003 = vmatpush1.msra.mxu0 0.0
        %5004 = vmatprep.subr.mxu0 0.0
        %5005 = vmatpush1.msra.mxu0 0.0
        %5006 = vmatprep.subr.mxu0 0.0
        %5007 = vmatpush1.msra.mxu0 0.0
        %5008 = vmatprep.subr.mxu0 0.0
        %5009 = vmatpush1.msra.mxu0 0.0
        %5010 = vmatprep.subr.mxu0 0.0
        %5011 = vmatpush1.msra.mxu0 0.0
        %5012 = vmatprep.subr.mxu0 0.0
        %5013 = vmatpush1.msra.mxu0 0.0
        %5014 = vmatprep.subr.mxu0 0.0
        %5015 = vmatpush1.msra.mxu0 0.0
        %5016 = vmatprep.subr.mxu0 0.0
        %5017 = vmatpush1.msra.mxu0 0.0
        %5018 = vmatprep.subr.mxu0 0.0
        %5019 = vmatpush1.msra.mxu0 0.0
        %5020 = vmatprep.subr.mxu0 0.0
        %5021 = vmatpush1.msra.mxu0 0.0
        %5022 = vmatprep.subr.mxu0 0.0
        %5023 = vmatpush1.msra.mxu0 0.0
        %5024 = vmatprep.subr.mxu0 0.0
        %5025 = vmatpush1.msra.mxu0 0.0
        %5026 = vmatprep.subr.mxu0 0.0
        %5027 = vmatpush1.msra.mxu0 0.0
        %5028 = vmatprep.subr.mxu0 0.0
        %5029 = vmatpush1.msra.mxu0 0.0
        %5030 = vmatprep.subr.mxu0 0.0
        %5031 = vmatpush1.msra.mxu0 0.0
        %5032 = vmatprep.subr.mxu0 0.0
        %5033 = vmatpush1.msra.mxu0 0.0
        %5034 = vmatprep.subr.mxu0 0.0
        %5035 = vmatpush1.msra.mxu0 0.0
        %5036 = vmatprep.subr.mxu0 0.0
        %5037 = vmatpush1.msra.mxu0 0.0
        %5038 = vmatprep.subr.mxu0 0.0
        %5039 = vmatpush1.msra.mxu0 0.0
        %5040 = vmatprep.subr.mxu0 0.0
        %5041 = vmatpush1.msra.mxu0 0.0
        %5042 = vmatprep.subr.mxu0 0.0
        %5043 = vmatpush1.msra.mxu0 0.0
        %5044 = vmatprep.subr.mxu0 0.0
        %5045 = vmatpush1.msra.mxu0 0.0
        %5046 = vmatprep.subr.mxu0 0.0
        %5047 = vmatpush1.msra.mxu0 0.0
        %5048 = vmatprep.subr.mxu0 0.0
        %5049 = vmatpush1.msra.mxu0 0.0
        %5050 = vmatprep.subr.mxu0 0.0
        %5051 = vmatpush1.msra.mxu0 0.0
        %5052 = vmatprep.subr.mxu0 0.0
        %5053 = vmatpush1.msra.mxu0 0.0
        %5054 = vmatprep.subr.mxu0 0.0
        %5055 = vmatpush1.msra.mxu0 0.0
        %5056 = vmatprep.subr.mxu0 0.0
        %5057 = vmatpush1.msra.mxu0 0.0
        %5058 = vmatprep.subr.mxu0 0.0
        %5059 = vmatpush1.msra.mxu0 0.0
        %5060 = vmatprep.subr.mxu0 0.0
        %5061 = vmatpush1.msra.mxu0 0.0
        %5062 = vmatprep.subr.mxu0 0.0
        %5063 = vmatpush1.msra.mxu0 0.0
        %5064 = vmatprep.mubr.f32.mxu0 0.0
        %5065 = vmatmul.mubr.f32.gmra.mrb[0].mxu0 %v4998
        %v5066 = vpop.f32.mrb[0].mxu0
        %v5067 = vadd.f32 0.0, %v5066
        %v5068 = vpop.f32.mrb[0].mxu0
        %5069 = vdwg.mxu0
        %5070 = vrot.lane.b32.xlu0 %v366, 112
        %v5071 = vpop.permute.xlu0 %5070
        %v5074 = vsel %vm1924, %v4904, 0
        %5076 = vmatprep.subr.mxu0 0.0
        %5077 = vmatpush1.msra.mxu0 %v5071
        %5078 = vmatprep.subr.mxu0 0.0
        %5079 = vmatpush1.msra.mxu0 0.0
        %5080 = vmatprep.subr.mxu0 0.0
        %5081 = vmatpush1.msra.mxu0 0.0
        %5082 = vmatprep.subr.mxu0 0.0
        %5083 = vmatpush1.msra.mxu0 0.0
        %5084 = vmatprep.subr.mxu0 0.0
        %5085 = vmatpush1.msra.mxu0 0.0
        %5086 = vmatprep.subr.mxu0 0.0
        %5087 = vmatpush1.msra.mxu0 0.0
        %5088 = vmatprep.subr.mxu0 0.0
        %5089 = vmatpush1.msra.mxu0 0.0
        %5090 = vmatprep.subr.mxu0 0.0
        %5091 = vmatpush1.msra.mxu0 0.0
        %5092 = vmatprep.subr.mxu0 0.0
        %5093 = vmatpush1.msra.mxu0 0.0
        %5094 = vmatprep.subr.mxu0 0.0
        %5095 = vmatpush1.msra.mxu0 0.0
        %5096 = vmatprep.subr.mxu0 0.0
        %5097 = vmatpush1.msra.mxu0 0.0
        %5098 = vmatprep.subr.mxu0 0.0
        %5099 = vmatpush1.msra.mxu0 0.0
        %5100 = vmatprep.subr.mxu0 0.0
        %5101 = vmatpush1.msra.mxu0 0.0
        %5102 = vmatprep.subr.mxu0 0.0
        %5103 = vmatpush1.msra.mxu0 0.0
        %5104 = vmatprep.subr.mxu0 0.0
        %5105 = vmatpush1.msra.mxu0 0.0
        %5106 = vmatprep.subr.mxu0 0.0
        %5107 = vmatpush1.msra.mxu0 0.0
        %5108 = vmatprep.subr.mxu0 0.0
        %5109 = vmatpush1.msra.mxu0 0.0
        %5110 = vmatprep.subr.mxu0 0.0
        %5111 = vmatpush1.msra.mxu0 0.0
        %5112 = vmatprep.subr.mxu0 0.0
        %5113 = vmatpush1.msra.mxu0 0.0
        %5114 = vmatprep.subr.mxu0 0.0
        %5115 = vmatpush1.msra.mxu0 0.0
        %5116 = vmatprep.subr.mxu0 0.0
        %5117 = vmatpush1.msra.mxu0 0.0
        %5118 = vmatprep.subr.mxu0 0.0
        %5119 = vmatpush1.msra.mxu0 0.0
        %5120 = vmatprep.subr.mxu0 0.0
        %5121 = vmatpush1.msra.mxu0 0.0
        %5122 = vmatprep.subr.mxu0 0.0
        %5123 = vmatpush1.msra.mxu0 0.0
        %5124 = vmatprep.subr.mxu0 0.0
        %5125 = vmatpush1.msra.mxu0 0.0
        %5126 = vmatprep.subr.mxu0 0.0
        %5127 = vmatpush1.msra.mxu0 0.0
        %5128 = vmatprep.subr.mxu0 0.0
        %5129 = vmatpush1.msra.mxu0 0.0
        %5130 = vmatprep.subr.mxu0 0.0
        %5131 = vmatpush1.msra.mxu0 0.0
        %5132 = vmatprep.subr.mxu0 0.0
        %5133 = vmatpush1.msra.mxu0 0.0
        %5134 = vmatprep.subr.mxu0 0.0
        %5135 = vmatpush1.msra.mxu0 0.0
        %5136 = vmatprep.subr.mxu0 0.0
        %5137 = vmatpush1.msra.mxu0 0.0
        %5138 = vmatprep.subr.mxu0 0.0
        %5139 = vmatpush1.msra.mxu0 0.0
        %5140 = vmatprep.mubr.f32.mxu0 0.0
        %5141 = vmatmul.mubr.f32.gmra.mrb[0].mxu0 %v5074
        %v5142 = vpop.f32.mrb[0].mxu0
        %v5143 = vadd.f32 0.0, %v5142
        %v5144 = vpop.f32.mrb[0].mxu0
        %5145 = vdwg.mxu0
        %5146 = vrot.lane.b32.xlu0 %v371, 112
        %v5147 = vpop.permute.xlu0 %5146
        %v5150 = vsel %vm1924, %v4905, 0
        %5152 = vmatprep.subr.mxu0 0.0
        %5153 = vmatpush1.msra.mxu0 %v5147
        %5154 = vmatprep.subr.mxu0 0.0
        %5155 = vmatpush1.msra.mxu0 0.0
        %5156 = vmatprep.subr.mxu0 0.0
        %5157 = vmatpush1.msra.mxu0 0.0
        %5158 = vmatprep.subr.mxu0 0.0
        %5159 = vmatpush1.msra.mxu0 0.0
        %5160 = vmatprep.subr.mxu0 0.0
        %5161 = vmatpush1.msra.mxu0 0.0
        %5162 = vmatprep.subr.mxu0 0.0
        %5163 = vmatpush1.msra.mxu0 0.0
        %5164 = vmatprep.subr.mxu0 0.0
        %5165 = vmatpush1.msra.mxu0 0.0
        %5166 = vmatprep.subr.mxu0 0.0
        %5167 = vmatpush1.msra.mxu0 0.0
        %5168 = vmatprep.subr.mxu0 0.0
        %5169 = vmatpush1.msra.mxu0 0.0
        %5170 = vmatprep.subr.mxu0 0.0
        %5171 = vmatpush1.msra.mxu0 0.0
        %5172 = vmatprep.subr.mxu0 0.0
        %5173 = vmatpush1.msra.mxu0 0.0
        %5174 = vmatprep.subr.mxu0 0.0
        %5175 = vmatpush1.msra.mxu0 0.0
        %5176 = vmatprep.subr.mxu0 0.0
        %5177 = vmatpush1.msra.mxu0 0.0
        %5178 = vmatprep.subr.mxu0 0.0
        %5179 = vmatpush1.msra.mxu0 0.0
        %5180 = vmatprep.subr.mxu0 0.0
        %5181 = vmatpush1.msra.mxu0 0.0
        %5182 = vmatprep.subr.mxu0 0.0
        %5183 = vmatpush1.msra.mxu0 0.0
        %5184 = vmatprep.subr.mxu0 0.0
        %5185 = vmatpush1.msra.mxu0 0.0
        %5186 = vmatprep.subr.mxu0 0.0
        %5187 = vmatpush1.msra.mxu0 0.0
        %5188 = vmatprep.subr.mxu0 0.0
        %5189 = vmatpush1.msra.mxu0 0.0
        %5190 = vmatprep.subr.mxu0 0.0
        %5191 = vmatpush1.msra.mxu0 0.0
        %5192 = vmatprep.subr.mxu0 0.0
        %5193 = vmatpush1.msra.mxu0 0.0
        %5194 = vmatprep.subr.mxu0 0.0
        %5195 = vmatpush1.msra.mxu0 0.0
        %5196 = vmatprep.subr.mxu0 0.0
        %5197 = vmatpush1.msra.mxu0 0.0
        %5198 = vmatprep.subr.mxu0 0.0
        %5199 = vmatpush1.msra.mxu0 0.0
        %5200 = vmatprep.subr.mxu0 0.0
        %5201 = vmatpush1.msra.mxu0 0.0
        %5202 = vmatprep.subr.mxu0 0.0
        %5203 = vmatpush1.msra.mxu0 0.0
        %5204 = vmatprep.subr.mxu0 0.0
        %5205 = vmatpush1.msra.mxu0 0.0
        %5206 = vmatprep.subr.mxu0 0.0
        %5207 = vmatpush1.msra.mxu0 0.0
        %5208 = vmatprep.subr.mxu0 0.0
        %5209 = vmatpush1.msra.mxu0 0.0
        %5210 = vmatprep.subr.mxu0 0.0
        %5211 = vmatpush1.msra.mxu0 0.0
        %5212 = vmatprep.subr.mxu0 0.0
        %5213 = vmatpush1.msra.mxu0 0.0
        %5214 = vmatprep.subr.mxu0 0.0
        %5215 = vmatpush1.msra.mxu0 0.0
        %5216 = vmatprep.mubr.f32.mxu0 0.0
        %5217 = vmatmul.mubr.f32.gmra.mrb[0].mxu0 %v5150
        %v5218 = vpop.f32.mrb[0].mxu0
        %v5219 = vadd.f32 0.0, %v5218
        %v5220 = vpop.f32.mrb[0].mxu0
        %5221 = vdwg.mxu0
        %5222 = vrot.lane.b32.xlu0 %v376, 112
        %v5223 = vpop.permute.xlu0 %5222
        %v5226 = vsel %vm1924, %v4906, 0
        %5228 = vmatprep.subr.mxu0 0.0
        %5229 = vmatpush1.msra.mxu0 %v5223
        %5230 = vmatprep.subr.mxu0 0.0
        %5231 = vmatpush1.msra.mxu0 0.0
        %5232 = vmatprep.subr.mxu0 0.0
        %5233 = vmatpush1.msra.mxu0 0.0
        %5234 = vmatprep.subr.mxu0 0.0
        %5235 = vmatpush1.msra.mxu0 0.0
        %5236 = vmatprep.subr.mxu0 0.0
        %5237 = vmatpush1.msra.mxu0 0.0
        %5238 = vmatprep.subr.mxu0 0.0
        %5239 = vmatpush1.msra.mxu0 0.0
        %5240 = vmatprep.subr.mxu0 0.0
        %5241 = vmatpush1.msra.mxu0 0.0
        %5242 = vmatprep.subr.mxu0 0.0
        %5243 = vmatpush1.msra.mxu0 0.0
        %5244 = vmatprep.subr.mxu0 0.0
        %5245 = vmatpush1.msra.mxu0 0.0
        %5246 = vmatprep.subr.mxu0 0.0
        %5247 = vmatpush1.msra.mxu0 0.0
        %5248 = vmatprep.subr.mxu0 0.0
        %5249 = vmatpush1.msra.mxu0 0.0
        %5250 = vmatprep.subr.mxu0 0.0
        %5251 = vmatpush1.msra.mxu0 0.0
        %5252 = vmatprep.subr.mxu0 0.0
        %5253 = vmatpush1.msra.mxu0 0.0
        %5254 = vmatprep.subr.mxu0 0.0
        %5255 = vmatpush1.msra.mxu0 0.0
        %5256 = vmatprep.subr.mxu0 0.0
        %5257 = vmatpush1.msra.mxu0 0.0
        %5258 = vmatprep.subr.mxu0 0.0
        %5259 = vmatpush1.msra.mxu0 0.0
        %5260 = vmatprep.subr.mxu0 0.0
        %5261 = vmatpush1.msra.mxu0 0.0
        %5262 = vmatprep.subr.mxu0 0.0
        %5263 = vmatpush1.msra.mxu0 0.0
        %5264 = vmatprep.subr.mxu0 0.0
        %5265 = vmatpush1.msra.mxu0 0.0
        %5266 = vmatprep.subr.mxu0 0.0
        %5267 = vmatpush1.msra.mxu0 0.0
        %5268 = vmatprep.subr.mxu0 0.0
        %5269 = vmatpush1.msra.mxu0 0.0
        %5270 = vmatprep.subr.mxu0 0.0
        %5271 = vmatpush1.msra.mxu0 0.0
        %5272 = vmatprep.subr.mxu0 0.0
        %5273 = vmatpush1.msra.mxu0 0.0
        %5274 = vmatprep.subr.mxu0 0.0
        %5275 = vmatpush1.msra.mxu0 0.0
        %5276 = vmatprep.subr.mxu0 0.0
        %5277 = vmatpush1.msra.mxu0 0.0
        %5278 = vmatprep.subr.mxu0 0.0
        %5279 = vmatpush1.msra.mxu0 0.0
        %5280 = vmatprep.subr.mxu0 0.0
        %5281 = vmatpush1.msra.mxu0 0.0
        %5282 = vmatprep.subr.mxu0 0.0
        %5283 = vmatpush1.msra.mxu0 0.0
        %5284 = vmatprep.subr.mxu0 0.0
        %5285 = vmatpush1.msra.mxu0 0.0
        %5286 = vmatprep.subr.mxu0 0.0
        %5287 = vmatpush1.msra.mxu0 0.0
        %5288 = vmatprep.subr.mxu0 0.0
        %5289 = vmatpush1.msra.mxu0 0.0
        %5290 = vmatprep.subr.mxu0 0.0
        %5291 = vmatpush1.msra.mxu0 0.0
        %5292 = vmatprep.mubr.f32.mxu0 0.0
        %5293 = vmatmul.mubr.f32.gmra.mrb[0].mxu0 %v5226
        %v5294 = vpop.f32.mrb[0].mxu0
        %v5295 = vadd.f32 0.0, %v5294
        %v5296 = vpop.f32.mrb[0].mxu0
        %5297 = vdwg.mxu0
        %5298 = vrot.lane.b32.xlu0 %v381, 112
        %v5299 = vpop.permute.xlu0 %5298
        %v5302 = vsel %vm1924, %v4907, 0
        %5304 = vmatprep.subr.mxu0 0.0
        %5305 = vmatpush1.msra.mxu0 %v5299
        %5306 = vmatprep.subr.mxu0 0.0
        %5307 = vmatpush1.msra.mxu0 0.0
        %5308 = vmatprep.subr.mxu0 0.0
        %5309 = vmatpush1.msra.mxu0 0.0
        %5310 = vmatprep.subr.mxu0 0.0
        %5311 = vmatpush1.msra.mxu0 0.0
        %5312 = vmatprep.subr.mxu0 0.0
        %5313 = vmatpush1.msra.mxu0 0.0
        %5314 = vmatprep.subr.mxu0 0.0
        %5315 = vmatpush1.msra.mxu0 0.0
        %5316 = vmatprep.subr.mxu0 0.0
        %5317 = vmatpush1.msra.mxu0 0.0
        %5318 = vmatprep.subr.mxu0 0.0
        %5319 = vmatpush1.msra.mxu0 0.0
        %5320 = vmatprep.subr.mxu0 0.0
        %5321 = vmatpush1.msra.mxu0 0.0
        %5322 = vmatprep.subr.mxu0 0.0
        %5323 = vmatpush1.msra.mxu0 0.0
        %5324 = vmatprep.subr.mxu0 0.0
        %5325 = vmatpush1.msra.mxu0 0.0
        %5326 = vmatprep.subr.mxu0 0.0
        %5327 = vmatpush1.msra.mxu0 0.0
        %5328 = vmatprep.subr.mxu0 0.0
        %5329 = vmatpush1.msra.mxu0 0.0
        %5330 = vmatprep.subr.mxu0 0.0
        %5331 = vmatpush1.msra.mxu0 0.0
        %5332 = vmatprep.subr.mxu0 0.0
        %5333 = vmatpush1.msra.mxu0 0.0
        %5334 = vmatprep.subr.mxu0 0.0
        %5335 = vmatpush1.msra.mxu0 0.0
        %5336 = vmatprep.subr.mxu0 0.0
        %5337 = vmatpush1.msra.mxu0 0.0
        %5338 = vmatprep.subr.mxu0 0.0
        %5339 = vmatpush1.msra.mxu0 0.0
        %5340 = vmatprep.subr.mxu0 0.0
        %5341 = vmatpush1.msra.mxu0 0.0
        %5342 = vmatprep.subr.mxu0 0.0
        %5343 = vmatpush1.msra.mxu0 0.0
        %5344 = vmatprep.subr.mxu0 0.0
        %5345 = vmatpush1.msra.mxu0 0.0
        %5346 = vmatprep.subr.mxu0 0.0
        %5347 = vmatpush1.msra.mxu0 0.0
        %5348 = vmatprep.subr.mxu0 0.0
        %5349 = vmatpush1.msra.mxu0 0.0
        %5350 = vmatprep.subr.mxu0 0.0
        %5351 = vmatpush1.msra.mxu0 0.0
        %5352 = vmatprep.subr.mxu0 0.0
        %5353 = vmatpush1.msra.mxu0 0.0
        %5354 = vmatprep.subr.mxu0 0.0
        %5355 = vmatpush1.msra.mxu0 0.0
        %5356 = vmatprep.subr.mxu0 0.0
        %5357 = vmatpush1.msra.mxu0 0.0
        %5358 = vmatprep.subr.mxu0 0.0
        %5359 = vmatpush1.msra.mxu0 0.0
        %5360 = vmatprep.subr.mxu0 0.0
        %5361 = vmatpush1.msra.mxu0 0.0
        %5362 = vmatprep.subr.mxu0 0.0
        %5363 = vmatpush1.msra.mxu0 0.0
        %5364 = vmatprep.subr.mxu0 0.0
        %5365 = vmatpush1.msra.mxu0 0.0
        %5366 = vmatprep.subr.mxu0 0.0
        %5367 = vmatpush1.msra.mxu0 0.0
        %5368 = vmatprep.mubr.f32.mxu0 0.0
        %5369 = vmatmul.mubr.f32.gmra.mrb[0].mxu0 %v5302
        %v5370 = vpop.f32.mrb[0].mxu0
        %v5371 = vadd.f32 0.0, %v5370
        %v5372 = vpop.f32.mrb[0].mxu0
        %5373 = vdwg.mxu0
        %5374 = vrot.lane.b32.xlu0 %v386, 112
        %v5375 = vpop.permute.xlu0 %5374
        %v5378 = vsel %vm1924, %v4908, 0
        %5380 = vmatprep.subr.mxu0 0.0
        %5381 = vmatpush1.msra.mxu0 %v5375
        %5382 = vmatprep.subr.mxu0 0.0
        %5383 = vmatpush1.msra.mxu0 0.0
        %5384 = vmatprep.subr.mxu0 0.0
        %5385 = vmatpush1.msra.mxu0 0.0
        %5386 = vmatprep.subr.mxu0 0.0
        %5387 = vmatpush1.msra.mxu0 0.0
        %5388 = vmatprep.subr.mxu0 0.0
        %5389 = vmatpush1.msra.mxu0 0.0
        %5390 = vmatprep.subr.mxu0 0.0
        %5391 = vmatpush1.msra.mxu0 0.0
        %5392 = vmatprep.subr.mxu0 0.0
        %5393 = vmatpush1.msra.mxu0 0.0
        %5394 = vmatprep.subr.mxu0 0.0
        %5395 = vmatpush1.msra.mxu0 0.0
        %5396 = vmatprep.subr.mxu0 0.0
        %5397 = vmatpush1.msra.mxu0 0.0
        %5398 = vmatprep.subr.mxu0 0.0
        %5399 = vmatpush1.msra.mxu0 0.0
        %5400 = vmatprep.subr.mxu0 0.0
        %5401 = vmatpush1.msra.mxu0 0.0
        %5402 = vmatprep.subr.mxu0 0.0
        %5403 = vmatpush1.msra.mxu0 0.0
        %5404 = vmatprep.subr.mxu0 0.0
        %5405 = vmatpush1.msra.mxu0 0.0
        %5406 = vmatprep.subr.mxu0 0.0
        %5407 = vmatpush1.msra.mxu0 0.0
        %5408 = vmatprep.subr.mxu0 0.0
        %5409 = vmatpush1.msra.mxu0 0.0
        %5410 = vmatprep.subr.mxu0 0.0
        %5411 = vmatpush1.msra.mxu0 0.0
        %5412 = vmatprep.subr.mxu0 0.0
        %5413 = vmatpush1.msra.mxu0 0.0
        %5414 = vmatprep.subr.mxu0 0.0
        %5415 = vmatpush1.msra.mxu0 0.0
        %5416 = vmatprep.subr.mxu0 0.0
        %5417 = vmatpush1.msra.mxu0 0.0
        %5418 = vmatprep.subr.mxu0 0.0
        %5419 = vmatpush1.msra.mxu0 0.0
        %5420 = vmatprep.subr.mxu0 0.0
        %5421 = vmatpush1.msra.mxu0 0.0
        %5422 = vmatprep.subr.mxu0 0.0
        %5423 = vmatpush1.msra.mxu0 0.0
        %5424 = vmatprep.subr.mxu0 0.0
        %5425 = vmatpush1.msra.mxu0 0.0
        %5426 = vmatprep.subr.mxu0 0.0
        %5427 = vmatpush1.msra.mxu0 0.0
        %5428 = vmatprep.subr.mxu0 0.0
        %5429 = vmatpush1.msra.mxu0 0.0
        %5430 = vmatprep.subr.mxu0 0.0
        %5431 = vmatpush1.msra.mxu0 0.0
        %5432 = vmatprep.subr.mxu0 0.0
        %5433 = vmatpush1.msra.mxu0 0.0
        %5434 = vmatprep.subr.mxu0 0.0
        %5435 = vmatpush1.msra.mxu0 0.0
        %5436 = vmatprep.subr.mxu0 0.0
        %5437 = vmatpush1.msra.mxu0 0.0
        %5438 = vmatprep.subr.mxu0 0.0
        %5439 = vmatpush1.msra.mxu0 0.0
        %5440 = vmatprep.subr.mxu0 0.0
        %5441 = vmatpush1.msra.mxu0 0.0
        %5442 = vmatprep.subr.mxu0 0.0
        %5443 = vmatpush1.msra.mxu0 0.0
        %5444 = vmatprep.mubr.f32.mxu0 0.0
        %5445 = vmatmul.mubr.f32.gmra.mrb[0].mxu0 %v5378
        %v5446 = vpop.f32.mrb[0].mxu0
        %v5447 = vadd.f32 0.0, %v5446
        %v5448 = vpop.f32.mrb[0].mxu0
        %5449 = vdwg.mxu0
        %5450 = vrot.lane.b32.xlu0 %v391, 112
        %v5451 = vpop.permute.xlu0 %5450
        %v5454 = vsel %vm1924, %v4909, 0
        %5456 = vmatprep.subr.mxu0 0.0
        %5457 = vmatpush1.msra.mxu0 %v5451
        %5458 = vmatprep.subr.mxu0 0.0
        %5459 = vmatpush1.msra.mxu0 0.0
        %5460 = vmatprep.subr.mxu0 0.0
        %5461 = vmatpush1.msra.mxu0 0.0
        %5462 = vmatprep.subr.mxu0 0.0
        %5463 = vmatpush1.msra.mxu0 0.0
        %5464 = vmatprep.subr.mxu0 0.0
        %5465 = vmatpush1.msra.mxu0 0.0
        %5466 = vmatprep.subr.mxu0 0.0
        %5467 = vmatpush1.msra.mxu0 0.0
        %5468 = vmatprep.subr.mxu0 0.0
        %5469 = vmatpush1.msra.mxu0 0.0
        %5470 = vmatprep.subr.mxu0 0.0
        %5471 = vmatpush1.msra.mxu0 0.0
        %5472 = vmatprep.subr.mxu0 0.0
        %5473 = vmatpush1.msra.mxu0 0.0
        %5474 = vmatprep.subr.mxu0 0.0
        %5475 = vmatpush1.msra.mxu0 0.0
        %5476 = vmatprep.subr.mxu0 0.0
        %5477 = vmatpush1.msra.mxu0 0.0
        %5478 = vmatprep.subr.mxu0 0.0
        %5479 = vmatpush1.msra.mxu0 0.0
        %5480 = vmatprep.subr.mxu0 0.0
        %5481 = vmatpush1.msra.mxu0 0.0
        %5482 = vmatprep.subr.mxu0 0.0
        %5483 = vmatpush1.msra.mxu0 0.0
        %5484 = vmatprep.subr.mxu0 0.0
        %5485 = vmatpush1.msra.mxu0 0.0
        %5486 = vmatprep.subr.mxu0 0.0
        %5487 = vmatpush1.msra.mxu0 0.0
        %5488 = vmatprep.subr.mxu0 0.0
        %5489 = vmatpush1.msra.mxu0 0.0
        %5490 = vmatprep.subr.mxu0 0.0
        %5491 = vmatpush1.msra.mxu0 0.0
        %5492 = vmatprep.subr.mxu0 0.0
        %5493 = vmatpush1.msra.mxu0 0.0
        %5494 = vmatprep.subr.mxu0 0.0
        %5495 = vmatpush1.msra.mxu0 0.0
        %5496 = vmatprep.subr.mxu0 0.0
        %5497 = vmatpush1.msra.mxu0 0.0
        %5498 = vmatprep.subr.mxu0 0.0
        %5499 = vmatpush1.msra.mxu0 0.0
        %5500 = vmatprep.subr.mxu0 0.0
        %5501 = vmatpush1.msra.mxu0 0.0
        %5502 = vmatprep.subr.mxu0 0.0
        %5503 = vmatpush1.msra.mxu0 0.0
        %5504 = vmatprep.subr.mxu0 0.0
        %5505 = vmatpush1.msra.mxu0 0.0
        %5506 = vmatprep.subr.mxu0 0.0
        %5507 = vmatpush1.msra.mxu0 0.0
        %5508 = vmatprep.subr.mxu0 0.0
        %5509 = vmatpush1.msra.mxu0 0.0
        %5510 = vmatprep.subr.mxu0 0.0
        %5511 = vmatpush1.msra.mxu0 0.0
        %5512 = vmatprep.subr.mxu0 0.0
        %5513 = vmatpush1.msra.mxu0 0.0
        %5514 = vmatprep.subr.mxu0 0.0
        %5515 = vmatpush1.msra.mxu0 0.0
        %5516 = vmatprep.subr.mxu0 0.0
        %5517 = vmatpush1.msra.mxu0 0.0
        %5518 = vmatprep.subr.mxu0 0.0
        %5519 = vmatpush1.msra.mxu0 0.0
        %5520 = vmatprep.mubr.f32.mxu0 0.0
        %5521 = vmatmul.mubr.f32.gmra.mrb[0].mxu0 %v5454
        %v5522 = vpop.f32.mrb[0].mxu0
        %v5523 = vadd.f32 0.0, %v5522
        %v5524 = vpop.f32.mrb[0].mxu0
        %5525 = vdwg.mxu0
        %5526 = vrot.lane.b32.xlu0 %v396, 112
        %v5527 = vpop.permute.xlu0 %5526
        %v5530 = vsel %vm1924, %v4910, 0
        %5532 = vmatprep.subr.mxu0 0.0
        %5533 = vmatpush1.msra.mxu0 %v5527
        %5534 = vmatprep.subr.mxu0 0.0
        %5535 = vmatpush1.msra.mxu0 0.0
        %5536 = vmatprep.subr.mxu0 0.0
        %5537 = vmatpush1.msra.mxu0 0.0
        %5538 = vmatprep.subr.mxu0 0.0
        %5539 = vmatpush1.msra.mxu0 0.0
        %5540 = vmatprep.subr.mxu0 0.0
        %5541 = vmatpush1.msra.mxu0 0.0
        %5542 = vmatprep.subr.mxu0 0.0
        %5543 = vmatpush1.msra.mxu0 0.0
        %5544 = vmatprep.subr.mxu0 0.0
        %5545 = vmatpush1.msra.mxu0 0.0
        %5546 = vmatprep.subr.mxu0 0.0
        %5547 = vmatpush1.msra.mxu0 0.0
        %5548 = vmatprep.subr.mxu0 0.0
        %5549 = vmatpush1.msra.mxu0 0.0
        %5550 = vmatprep.subr.mxu0 0.0
        %5551 = vmatpush1.msra.mxu0 0.0
        %5552 = vmatprep.subr.mxu0 0.0
        %5553 = vmatpush1.msra.mxu0 0.0
        %5554 = vmatprep.subr.mxu0 0.0
        %5555 = vmatpush1.msra.mxu0 0.0
        %5556 = vmatprep.subr.mxu0 0.0
        %5557 = vmatpush1.msra.mxu0 0.0
        %5558 = vmatprep.subr.mxu0 0.0
        %5559 = vmatpush1.msra.mxu0 0.0
        %5560 = vmatprep.subr.mxu0 0.0
        %5561 = vmatpush1.msra.mxu0 0.0
        %5562 = vmatprep.subr.mxu0 0.0
        %5563 = vmatpush1.msra.mxu0 0.0
        %5564 = vmatprep.subr.mxu0 0.0
        %5565 = vmatpush1.msra.mxu0 0.0
        %5566 = vmatprep.subr.mxu0 0.0
        %5567 = vmatpush1.msra.mxu0 0.0
        %5568 = vmatprep.subr.mxu0 0.0
        %5569 = vmatpush1.msra.mxu0 0.0
        %5570 = vmatprep.subr.mxu0 0.0
        %5571 = vmatpush1.msra.mxu0 0.0
        %5572 = vmatprep.subr.mxu0 0.0
        %5573 = vmatpush1.msra.mxu0 0.0
        %5574 = vmatprep.subr.mxu0 0.0
        %5575 = vmatpush1.msra.mxu0 0.0
        %5576 = vmatprep.subr.mxu0 0.0
        %5577 = vmatpush1.msra.mxu0 0.0
        %5578 = vmatprep.subr.mxu0 0.0
        %5579 = vmatpush1.msra.mxu0 0.0
        %5580 = vmatprep.subr.mxu0 0.0
        %5581 = vmatpush1.msra.mxu0 0.0
        %5582 = vmatprep.subr.mxu0 0.0
        %5583 = vmatpush1.msra.mxu0 0.0
        %5584 = vmatprep.subr.mxu0 0.0
        %5585 = vmatpush1.msra.mxu0 0.0
        %5586 = vmatprep.subr.mxu0 0.0
        %5587 = vmatpush1.msra.mxu0 0.0
        %5588 = vmatprep.subr.mxu0 0.0
        %5589 = vmatpush1.msra.mxu0 0.0
        %5590 = vmatprep.subr.mxu0 0.0
        %5591 = vmatpush1.msra.mxu0 0.0
        %5592 = vmatprep.subr.mxu0 0.0
        %5593 = vmatpush1.msra.mxu0 0.0
        %5594 = vmatprep.subr.mxu0 0.0
        %5595 = vmatpush1.msra.mxu0 0.0
        %5596 = vmatprep.mubr.f32.mxu0 0.0
        %5597 = vmatmul.mubr.f32.gmra.mrb[0].mxu0 %v5530
        %v5598 = vpop.f32.mrb[0].mxu0
        %v5599 = vadd.f32 0.0, %v5598
        %v5600 = vpop.f32.mrb[0].mxu0
        %5601 = vdwg.mxu0
        %5602 = vrot.lane.b32.xlu0 %v401, 112
        %v5603 = vpop.permute.xlu0 %5602
        %v5606 = vsel %vm1924, %v4911, 0
        %5608 = vmatprep.subr.mxu0 0.0
        %5609 = vmatpush1.msra.mxu0 %v5603
        %5610 = vmatprep.subr.mxu0 0.0
        %5611 = vmatpush1.msra.mxu0 0.0
        %5612 = vmatprep.subr.mxu0 0.0
        %5613 = vmatpush1.msra.mxu0 0.0
        %5614 = vmatprep.subr.mxu0 0.0
        %5615 = vmatpush1.msra.mxu0 0.0
        %5616 = vmatprep.subr.mxu0 0.0
        %5617 = vmatpush1.msra.mxu0 0.0
        %5618 = vmatprep.subr.mxu0 0.0
        %5619 = vmatpush1.msra.mxu0 0.0
        %5620 = vmatprep.subr.mxu0 0.0
        %5621 = vmatpush1.msra.mxu0 0.0
        %5622 = vmatprep.subr.mxu0 0.0
        %5623 = vmatpush1.msra.mxu0 0.0
        %5624 = vmatprep.subr.mxu0 0.0
        %5625 = vmatpush1.msra.mxu0 0.0
        %5626 = vmatprep.subr.mxu0 0.0
        %5627 = vmatpush1.msra.mxu0 0.0
        %5628 = vmatprep.subr.mxu0 0.0
        %5629 = vmatpush1.msra.mxu0 0.0
        %5630 = vmatprep.subr.mxu0 0.0
        %5631 = vmatpush1.msra.mxu0 0.0
        %5632 = vmatprep.subr.mxu0 0.0
        %5633 = vmatpush1.msra.mxu0 0.0
        %5634 = vmatprep.subr.mxu0 0.0
        %5635 = vmatpush1.msra.mxu0 0.0
        %5636 = vmatprep.subr.mxu0 0.0
        %5637 = vmatpush1.msra.mxu0 0.0
        %5638 = vmatprep.subr.mxu0 0.0
        %5639 = vmatpush1.msra.mxu0 0.0
        %5640 = vmatprep.subr.mxu0 0.0
        %5641 = vmatpush1.msra.mxu0 0.0
        %5642 = vmatprep.subr.mxu0 0.0
        %5643 = vmatpush1.msra.mxu0 0.0
        %5644 = vmatprep.subr.mxu0 0.0
        %5645 = vmatpush1.msra.mxu0 0.0
        %5646 = vmatprep.subr.mxu0 0.0
        %5647 = vmatpush1.msra.mxu0 0.0
        %5648 = vmatprep.subr.mxu0 0.0
        %5649 = vmatpush1.msra.mxu0 0.0
        %5650 = vmatprep.subr.mxu0 0.0
        %5651 = vmatpush1.msra.mxu0 0.0
        %5652 = vmatprep.subr.mxu0 0.0
        %5653 = vmatpush1.msra.mxu0 0.0
        %5654 = vmatprep.subr.mxu0 0.0
        %5655 = vmatpush1.msra.mxu0 0.0
        %5656 = vmatprep.subr.mxu0 0.0
        %5657 = vmatpush1.msra.mxu0 0.0
        %5658 = vmatprep.subr.mxu0 0.0
        %5659 = vmatpush1.msra.mxu0 0.0
        %5660 = vmatprep.subr.mxu0 0.0
        %5661 = vmatpush1.msra.mxu0 0.0
        %5662 = vmatprep.subr.mxu0 0.0
        %5663 = vmatpush1.msra.mxu0 0.0
        %5664 = vmatprep.subr.mxu0 0.0
        %5665 = vmatpush1.msra.mxu0 0.0
        %5666 = vmatprep.subr.mxu0 0.0
        %5667 = vmatpush1.msra.mxu0 0.0
        %5668 = vmatprep.subr.mxu0 0.0
        %5669 = vmatpush1.msra.mxu0 0.0
        %5670 = vmatprep.subr.mxu0 0.0
        %5671 = vmatpush1.msra.mxu0 0.0
        %5672 = vmatprep.mubr.f32.mxu0 0.0
        %5673 = vmatmul.mubr.f32.gmra.mrb[0].mxu0 %v5606
        %v5674 = vpop.f32.mrb[0].mxu0
        %v5675 = vadd.f32 0.0, %v5674
        %v5676 = vpop.f32.mrb[0].mxu0
        %5677 = vdwg.mxu0
        %5678 = vrot.lane.b32.xlu0 %v406, 112
        %v5679 = vpop.permute.xlu0 %5678
        %v5682 = vsel %vm1924, %v4912, 0
        %5684 = vmatprep.subr.mxu0 0.0
        %5685 = vmatpush1.msra.mxu0 %v5679
        %5686 = vmatprep.subr.mxu0 0.0
        %5687 = vmatpush1.msra.mxu0 0.0
        %5688 = vmatprep.subr.mxu0 0.0
        %5689 = vmatpush1.msra.mxu0 0.0
        %5690 = vmatprep.subr.mxu0 0.0
        %5691 = vmatpush1.msra.mxu0 0.0
        %5692 = vmatprep.subr.mxu0 0.0
        %5693 = vmatpush1.msra.mxu0 0.0
        %5694 = vmatprep.subr.mxu0 0.0
        %5695 = vmatpush1.msra.mxu0 0.0
        %5696 = vmatprep.subr.mxu0 0.0
        %5697 = vmatpush1.msra.mxu0 0.0
        %5698 = vmatprep.subr.mxu0 0.0
        %5699 = vmatpush1.msra.mxu0 0.0
        %5700 = vmatprep.subr.mxu0 0.0
        %5701 = vmatpush1.msra.mxu0 0.0
        %5702 = vmatprep.subr.mxu0 0.0
        %5703 = vmatpush1.msra.mxu0 0.0
        %5704 = vmatprep.subr.mxu0 0.0
        %5705 = vmatpush1.msra.mxu0 0.0
        %5706 = vmatprep.subr.mxu0 0.0
        %5707 = vmatpush1.msra.mxu0 0.0
        %5708 = vmatprep.subr.mxu0 0.0
        %5709 = vmatpush1.msra.mxu0 0.0
        %5710 = vmatprep.subr.mxu0 0.0
        %5711 = vmatpush1.msra.mxu0 0.0
        %5712 = vmatprep.subr.mxu0 0.0
        %5713 = vmatpush1.msra.mxu0 0.0
        %5714 = vmatprep.subr.mxu0 0.0
        %5715 = vmatpush1.msra.mxu0 0.0
        %5716 = vmatprep.subr.mxu0 0.0
        %5717 = vmatpush1.msra.mxu0 0.0
        %5718 = vmatprep.subr.mxu0 0.0
        %5719 = vmatpush1.msra.mxu0 0.0
        %5720 = vmatprep.subr.mxu0 0.0
        %5721 = vmatpush1.msra.mxu0 0.0
        %5722 = vmatprep.subr.mxu0 0.0
        %5723 = vmatpush1.msra.mxu0 0.0
        %5724 = vmatprep.subr.mxu0 0.0
        %5725 = vmatpush1.msra.mxu0 0.0
        %5726 = vmatprep.subr.mxu0 0.0
        %5727 = vmatpush1.msra.mxu0 0.0
        %5728 = vmatprep.subr.mxu0 0.0
        %5729 = vmatpush1.msra.mxu0 0.0
        %5730 = vmatprep.subr.mxu0 0.0
        %5731 = vmatpush1.msra.mxu0 0.0
        %5732 = vmatprep.subr.mxu0 0.0
        %5733 = vmatpush1.msra.mxu0 0.0
        %5734 = vmatprep.subr.mxu0 0.0
        %5735 = vmatpush1.msra.mxu0 0.0
        %5736 = vmatprep.subr.mxu0 0.0
        %5737 = vmatpush1.msra.mxu0 0.0
        %5738 = vmatprep.subr.mxu0 0.0
        %5739 = vmatpush1.msra.mxu0 0.0
        %5740 = vmatprep.subr.mxu0 0.0
        %5741 = vmatpush1.msra.mxu0 0.0
        %5742 = vmatprep.subr.mxu0 0.0
        %5743 = vmatpush1.msra.mxu0 0.0
        %5744 = vmatprep.subr.mxu0 0.0
        %5745 = vmatpush1.msra.mxu0 0.0
        %5746 = vmatprep.subr.mxu0 0.0
        %5747 = vmatpush1.msra.mxu0 0.0
        %5748 = vmatprep.mubr.f32.mxu0 0.0
        %5749 = vmatmul.mubr.f32.gmra.mrb[0].mxu0 %v5682
        %v5750 = vpop.f32.mrb[0].mxu0
        %v5751 = vadd.f32 0.0, %v5750
        %v5752 = vpop.f32.mrb[0].mxu0
        %5753 = vdwg.mxu0
        %5754 = vrot.lane.b32.xlu0 %v411, 112
        %v5755 = vpop.permute.xlu0 %5754
        %v5758 = vsel %vm1924, %v4913, 0
        %5760 = vmatprep.subr.mxu0 0.0
        %5761 = vmatpush1.msra.mxu0 %v5755
        %5762 = vmatprep.subr.mxu0 0.0
        %5763 = vmatpush1.msra.mxu0 0.0
        %5764 = vmatprep.subr.mxu0 0.0
        %5765 = vmatpush1.msra.mxu0 0.0
        %5766 = vmatprep.subr.mxu0 0.0
        %5767 = vmatpush1.msra.mxu0 0.0
        %5768 = vmatprep.subr.mxu0 0.0
        %5769 = vmatpush1.msra.mxu0 0.0
        %5770 = vmatprep.subr.mxu0 0.0
        %5771 = vmatpush1.msra.mxu0 0.0
        %5772 = vmatprep.subr.mxu0 0.0
        %5773 = vmatpush1.msra.mxu0 0.0
        %5774 = vmatprep.subr.mxu0 0.0
        %5775 = vmatpush1.msra.mxu0 0.0
        %5776 = vmatprep.subr.mxu0 0.0
        %5777 = vmatpush1.msra.mxu0 0.0
        %5778 = vmatprep.subr.mxu0 0.0
        %5779 = vmatpush1.msra.mxu0 0.0
        %5780 = vmatprep.subr.mxu0 0.0
        %5781 = vmatpush1.msra.mxu0 0.0
        %5782 = vmatprep.subr.mxu0 0.0
        %5783 = vmatpush1.msra.mxu0 0.0
        %5784 = vmatprep.subr.mxu0 0.0
        %5785 = vmatpush1.msra.mxu0 0.0
        %5786 = vmatprep.subr.mxu0 0.0
        %5787 = vmatpush1.msra.mxu0 0.0
        %5788 = vmatprep.subr.mxu0 0.0
        %5789 = vmatpush1.msra.mxu0 0.0
        %5790 = vmatprep.subr.mxu0 0.0
        %5791 = vmatpush1.msra.mxu0 0.0
        %5792 = vmatprep.subr.mxu0 0.0
        %5793 = vmatpush1.msra.mxu0 0.0
        %5794 = vmatprep.subr.mxu0 0.0
        %5795 = vmatpush1.msra.mxu0 0.0
        %5796 = vmatprep.subr.mxu0 0.0
        %5797 = vmatpush1.msra.mxu0 0.0
        %5798 = vmatprep.subr.mxu0 0.0
        %5799 = vmatpush1.msra.mxu0 0.0
        %5800 = vmatprep.subr.mxu0 0.0
        %5801 = vmatpush1.msra.mxu0 0.0
        %5802 = vmatprep.subr.mxu0 0.0
        %5803 = vmatpush1.msra.mxu0 0.0
        %5804 = vmatprep.subr.mxu0 0.0
        %5805 = vmatpush1.msra.mxu0 0.0
        %5806 = vmatprep.subr.mxu0 0.0
        %5807 = vmatpush1.msra.mxu0 0.0
        %5808 = vmatprep.subr.mxu0 0.0
        %5809 = vmatpush1.msra.mxu0 0.0
        %5810 = vmatprep.subr.mxu0 0.0
        %5811 = vmatpush1.msra.mxu0 0.0
        %5812 = vmatprep.subr.mxu0 0.0
        %5813 = vmatpush1.msra.mxu0 0.0
        %5814 = vmatprep.subr.mxu0 0.0
        %5815 = vmatpush1.msra.mxu0 0.0
        %5816 = vmatprep.subr.mxu0 0.0
        %5817 = vmatpush1.msra.mxu0 0.0
        %5818 = vmatprep.subr.mxu0 0.0
        %5819 = vmatpush1.msra.mxu0 0.0
        %5820 = vmatprep.subr.mxu0 0.0
        %5821 = vmatpush1.msra.mxu0 0.0
        %5822 = vmatprep.subr.mxu0 0.0
        %5823 = vmatpush1.msra.mxu0 0.0
        %5824 = vmatprep.mubr.f32.mxu0 0.0
        %5825 = vmatmul.mubr.f32.gmra.mrb[0].mxu0 %v5758
        %v5826 = vpop.f32.mrb[0].mxu0
        %v5827 = vadd.f32 0.0, %v5826
        %v5828 = vpop.f32.mrb[0].mxu0
        %5829 = vdwg.mxu0
        %5830 = vrot.lane.b32.xlu0 %v416, 112
        %v5831 = vpop.permute.xlu0 %5830
        %v5834 = vsel %vm1924, %v4914, 0
        %5836 = vmatprep.subr.mxu0 0.0
        %5837 = vmatpush1.msra.mxu0 %v5831
        %5838 = vmatprep.subr.mxu0 0.0
        %5839 = vmatpush1.msra.mxu0 0.0
        %5840 = vmatprep.subr.mxu0 0.0
        %5841 = vmatpush1.msra.mxu0 0.0
        %5842 = vmatprep.subr.mxu0 0.0
        %5843 = vmatpush1.msra.mxu0 0.0
        %5844 = vmatprep.subr.mxu0 0.0
        %5845 = vmatpush1.msra.mxu0 0.0
        %5846 = vmatprep.subr.mxu0 0.0
        %5847 = vmatpush1.msra.mxu0 0.0
        %5848 = vmatprep.subr.mxu0 0.0
        %5849 = vmatpush1.msra.mxu0 0.0
        %5850 = vmatprep.subr.mxu0 0.0
        %5851 = vmatpush1.msra.mxu0 0.0
        %5852 = vmatprep.subr.mxu0 0.0
        %5853 = vmatpush1.msra.mxu0 0.0
        %5854 = vmatprep.subr.mxu0 0.0
        %5855 = vmatpush1.msra.mxu0 0.0
        %5856 = vmatprep.subr.mxu0 0.0
        %5857 = vmatpush1.msra.mxu0 0.0
        %5858 = vmatprep.subr.mxu0 0.0
        %5859 = vmatpush1.msra.mxu0 0.0
        %5860 = vmatprep.subr.mxu0 0.0
        %5861 = vmatpush1.msra.mxu0 0.0
        %5862 = vmatprep.subr.mxu0 0.0
        %5863 = vmatpush1.msra.mxu0 0.0
        %5864 = vmatprep.subr.mxu0 0.0
        %5865 = vmatpush1.msra.mxu0 0.0
        %5866 = vmatprep.subr.mxu0 0.0
        %5867 = vmatpush1.msra.mxu0 0.0
        %5868 = vmatprep.subr.mxu0 0.0
        %5869 = vmatpush1.msra.mxu0 0.0
        %5870 = vmatprep.subr.mxu0 0.0
        %5871 = vmatpush1.msra.mxu0 0.0
        %5872 = vmatprep.subr.mxu0 0.0
        %5873 = vmatpush1.msra.mxu0 0.0
        %5874 = vmatprep.subr.mxu0 0.0
        %5875 = vmatpush1.msra.mxu0 0.0
        %5876 = vmatprep.subr.mxu0 0.0
        %5877 = vmatpush1.msra.mxu0 0.0
        %5878 = vmatprep.subr.mxu0 0.0
        %5879 = vmatpush1.msra.mxu0 0.0
        %5880 = vmatprep.subr.mxu0 0.0
        %5881 = vmatpush1.msra.mxu0 0.0
        %5882 = vmatprep.subr.mxu0 0.0
        %5883 = vmatpush1.msra.mxu0 0.0
        %5884 = vmatprep.subr.mxu0 0.0
        %5885 = vmatpush1.msra.mxu0 0.0
        %5886 = vmatprep.subr.mxu0 0.0
        %5887 = vmatpush1.msra.mxu0 0.0
        %5888 = vmatprep.subr.mxu0 0.0
        %5889 = vmatpush1.msra.mxu0 0.0
        %5890 = vmatprep.subr.mxu0 0.0
        %5891 = vmatpush1.msra.mxu0 0.0
        %5892 = vmatprep.subr.mxu0 0.0
        %5893 = vmatpush1.msra.mxu0 0.0
        %5894 = vmatprep.subr.mxu0 0.0
        %5895 = vmatpush1.msra.mxu0 0.0
        %5896 = vmatprep.subr.mxu0 0.0
        %5897 = vmatpush1.msra.mxu0 0.0
        %5898 = vmatprep.subr.mxu0 0.0
        %5899 = vmatpush1.msra.mxu0 0.0
        %5900 = vmatprep.mubr.f32.mxu0 0.0
        %5901 = vmatmul.mubr.f32.gmra.mrb[0].mxu0 %v5834
        %v5902 = vpop.f32.mrb[0].mxu0
        %v5903 = vadd.f32 0.0, %v5902
        %v5904 = vpop.f32.mrb[0].mxu0
        %5905 = vdwg.mxu0
        %5906 = vrot.lane.b32.xlu0 %v421, 112
        %v5907 = vpop.permute.xlu0 %5906
        %v5910 = vsel %vm1924, %v4915, 0
        %5912 = vmatprep.subr.mxu0 0.0
        %5913 = vmatpush1.msra.mxu0 %v5907
        %5914 = vmatprep.subr.mxu0 0.0
        %5915 = vmatpush1.msra.mxu0 0.0
        %5916 = vmatprep.subr.mxu0 0.0
        %5917 = vmatpush1.msra.mxu0 0.0
        %5918 = vmatprep.subr.mxu0 0.0
        %5919 = vmatpush1.msra.mxu0 0.0
        %5920 = vmatprep.subr.mxu0 0.0
        %5921 = vmatpush1.msra.mxu0 0.0
        %5922 = vmatprep.subr.mxu0 0.0
        %5923 = vmatpush1.msra.mxu0 0.0
        %5924 = vmatprep.subr.mxu0 0.0
        %5925 = vmatpush1.msra.mxu0 0.0
        %5926 = vmatprep.subr.mxu0 0.0
        %5927 = vmatpush1.msra.mxu0 0.0
        %5928 = vmatprep.subr.mxu0 0.0
        %5929 = vmatpush1.msra.mxu0 0.0
        %5930 = vmatprep.subr.mxu0 0.0
        %5931 = vmatpush1.msra.mxu0 0.0
        %5932 = vmatprep.subr.mxu0 0.0
        %5933 = vmatpush1.msra.mxu0 0.0
        %5934 = vmatprep.subr.mxu0 0.0
        %5935 = vmatpush1.msra.mxu0 0.0
        %5936 = vmatprep.subr.mxu0 0.0
        %5937 = vmatpush1.msra.mxu0 0.0
        %5938 = vmatprep.subr.mxu0 0.0
        %5939 = vmatpush1.msra.mxu0 0.0
        %5940 = vmatprep.subr.mxu0 0.0
        %5941 = vmatpush1.msra.mxu0 0.0
        %5942 = vmatprep.subr.mxu0 0.0
        %5943 = vmatpush1.msra.mxu0 0.0
        %5944 = vmatprep.subr.mxu0 0.0
        %5945 = vmatpush1.msra.mxu0 0.0
        %5946 = vmatprep.subr.mxu0 0.0
        %5947 = vmatpush1.msra.mxu0 0.0
        %5948 = vmatprep.subr.mxu0 0.0
        %5949 = vmatpush1.msra.mxu0 0.0
        %5950 = vmatprep.subr.mxu0 0.0
        %5951 = vmatpush1.msra.mxu0 0.0
        %5952 = vmatprep.subr.mxu0 0.0
        %5953 = vmatpush1.msra.mxu0 0.0
        %5954 = vmatprep.subr.mxu0 0.0
        %5955 = vmatpush1.msra.mxu0 0.0
        %5956 = vmatprep.subr.mxu0 0.0
        %5957 = vmatpush1.msra.mxu0 0.0
        %5958 = vmatprep.subr.mxu0 0.0
        %5959 = vmatpush1.msra.mxu0 0.0
        %5960 = vmatprep.subr.mxu0 0.0
        %5961 = vmatpush1.msra.mxu0 0.0
        %5962 = vmatprep.subr.mxu0 0.0
        %5963 = vmatpush1.msra.mxu0 0.0
        %5964 = vmatprep.subr.mxu0 0.0
        %5965 = vmatpush1.msra.mxu0 0.0
        %5966 = vmatprep.subr.mxu0 0.0
        %5967 = vmatpush1.msra.mxu0 0.0
        %5968 = vmatprep.subr.mxu0 0.0
        %5969 = vmatpush1.msra.mxu0 0.0
        %5970 = vmatprep.subr.mxu0 0.0
        %5971 = vmatpush1.msra.mxu0 0.0
        %5972 = vmatprep.subr.mxu0 0.0
        %5973 = vmatpush1.msra.mxu0 0.0
        %5974 = vmatprep.subr.mxu0 0.0
        %5975 = vmatpush1.msra.mxu0 0.0
        %5976 = vmatprep.mubr.f32.mxu0 0.0
        %5977 = vmatmul.mubr.f32.gmra.mrb[0].mxu0 %v5910
        %v5978 = vpop.f32.mrb[0].mxu0
        %v5979 = vadd.f32 0.0, %v5978
        %v5980 = vpop.f32.mrb[0].mxu0
        %5981 = vdwg.mxu0
        %5982 = vrot.lane.b32.xlu0 %v426, 112
        %v5983 = vpop.permute.xlu0 %5982
        %v5986 = vsel %vm1924, %v4916, 0
        %5988 = vmatprep.subr.mxu0 0.0
        %5989 = vmatpush1.msra.mxu0 %v5983
        %5990 = vmatprep.subr.mxu0 0.0
        %5991 = vmatpush1.msra.mxu0 0.0
        %5992 = vmatprep.subr.mxu0 0.0
        %5993 = vmatpush1.msra.mxu0 0.0
        %5994 = vmatprep.subr.mxu0 0.0
        %5995 = vmatpush1.msra.mxu0 0.0
        %5996 = vmatprep.subr.mxu0 0.0
        %5997 = vmatpush1.msra.mxu0 0.0
        %5998 = vmatprep.subr.mxu0 0.0
        %5999 = vmatpush1.msra.mxu0 0.0
        %6000 = vmatprep.subr.mxu0 0.0
        %6001 = vmatpush1.msra.mxu0 0.0
        %6002 = vmatprep.subr.mxu0 0.0
        %6003 = vmatpush1.msra.mxu0 0.0
        %6004 = vmatprep.subr.mxu0 0.0
        %6005 = vmatpush1.msra.mxu0 0.0
        %6006 = vmatprep.subr.mxu0 0.0
        %6007 = vmatpush1.msra.mxu0 0.0
        %6008 = vmatprep.subr.mxu0 0.0
        %6009 = vmatpush1.msra.mxu0 0.0
        %6010 = vmatprep.subr.mxu0 0.0
        %6011 = vmatpush1.msra.mxu0 0.0
        %6012 = vmatprep.subr.mxu0 0.0
        %6013 = vmatpush1.msra.mxu0 0.0
        %6014 = vmatprep.subr.mxu0 0.0
        %6015 = vmatpush1.msra.mxu0 0.0
        %6016 = vmatprep.subr.mxu0 0.0
        %6017 = vmatpush1.msra.mxu0 0.0
        %6018 = vmatprep.subr.mxu0 0.0
        %6019 = vmatpush1.msra.mxu0 0.0
        %6020 = vmatprep.subr.mxu0 0.0
        %6021 = vmatpush1.msra.mxu0 0.0
        %6022 = vmatprep.subr.mxu0 0.0
        %6023 = vmatpush1.msra.mxu0 0.0
        %6024 = vmatprep.subr.mxu0 0.0
        %6025 = vmatpush1.msra.mxu0 0.0
        %6026 = vmatprep.subr.mxu0 0.0
        %6027 = vmatpush1.msra.mxu0 0.0
        %6028 = vmatprep.subr.mxu0 0.0
        %6029 = vmatpush1.msra.mxu0 0.0
        %6030 = vmatprep.subr.mxu0 0.0
        %6031 = vmatpush1.msra.mxu0 0.0
        %6032 = vmatprep.subr.mxu0 0.0
        %6033 = vmatpush1.msra.mxu0 0.0
        %6034 = vmatprep.subr.mxu0 0.0
        %6035 = vmatpush1.msra.mxu0 0.0
        %6036 = vmatprep.subr.mxu0 0.0
        %6037 = vmatpush1.msra.mxu0 0.0
        %6038 = vmatprep.subr.mxu0 0.0
        %6039 = vmatpush1.msra.mxu0 0.0
        %6040 = vmatprep.subr.mxu0 0.0
        %6041 = vmatpush1.msra.mxu0 0.0
        %6042 = vmatprep.subr.mxu0 0.0
        %6043 = vmatpush1.msra.mxu0 0.0
        %6044 = vmatprep.subr.mxu0 0.0
        %6045 = vmatpush1.msra.mxu0 0.0
        %6046 = vmatprep.subr.mxu0 0.0
        %6047 = vmatpush1.msra.mxu0 0.0
        %6048 = vmatprep.subr.mxu0 0.0
        %6049 = vmatpush1.msra.mxu0 0.0
        %6050 = vmatprep.subr.mxu0 0.0
        %6051 = vmatpush1.msra.mxu0 0.0
        %6052 = vmatprep.mubr.f32.mxu0 0.0
        %6053 = vmatmul.mubr.f32.gmra.mrb[0].mxu0 %v5986
        %v6054 = vpop.f32.mrb[0].mxu0
        %v6055 = vadd.f32 0.0, %v6054
        %v6056 = vpop.f32.mrb[0].mxu0
        %6057 = vdwg.mxu0
        %6058 = vrot.lane.b32.xlu0 %v431, 112
        %v6059 = vpop.permute.xlu0 %6058
        %v6062 = vsel %vm1924, %v4917, 0
        %6064 = vmatprep.subr.mxu0 0.0
        %6065 = vmatpush1.msra.mxu0 %v6059
        %6066 = vmatprep.subr.mxu0 0.0
        %6067 = vmatpush1.msra.mxu0 0.0
        %6068 = vmatprep.subr.mxu0 0.0
        %6069 = vmatpush1.msra.mxu0 0.0
        %6070 = vmatprep.subr.mxu0 0.0
        %6071 = vmatpush1.msra.mxu0 0.0
        %6072 = vmatprep.subr.mxu0 0.0
        %6073 = vmatpush1.msra.mxu0 0.0
        %6074 = vmatprep.subr.mxu0 0.0
        %6075 = vmatpush1.msra.mxu0 0.0
        %6076 = vmatprep.subr.mxu0 0.0
        %6077 = vmatpush1.msra.mxu0 0.0
        %6078 = vmatprep.subr.mxu0 0.0
        %6079 = vmatpush1.msra.mxu0 0.0
        %6080 = vmatprep.subr.mxu0 0.0
        %6081 = vmatpush1.msra.mxu0 0.0
        %6082 = vmatprep.subr.mxu0 0.0
        %6083 = vmatpush1.msra.mxu0 0.0
        %6084 = vmatprep.subr.mxu0 0.0
        %6085 = vmatpush1.msra.mxu0 0.0
        %6086 = vmatprep.subr.mxu0 0.0
        %6087 = vmatpush1.msra.mxu0 0.0
        %6088 = vmatprep.subr.mxu0 0.0
        %6089 = vmatpush1.msra.mxu0 0.0
        %6090 = vmatprep.subr.mxu0 0.0
        %6091 = vmatpush1.msra.mxu0 0.0
        %6092 = vmatprep.subr.mxu0 0.0
        %6093 = vmatpush1.msra.mxu0 0.0
        %6094 = vmatprep.subr.mxu0 0.0
        %6095 = vmatpush1.msra.mxu0 0.0
        %6096 = vmatprep.subr.mxu0 0.0
        %6097 = vmatpush1.msra.mxu0 0.0
        %6098 = vmatprep.subr.mxu0 0.0
        %6099 = vmatpush1.msra.mxu0 0.0
        %6100 = vmatprep.subr.mxu0 0.0
        %6101 = vmatpush1.msra.mxu0 0.0
        %6102 = vmatprep.subr.mxu0 0.0
        %6103 = vmatpush1.msra.mxu0 0.0
        %6104 = vmatprep.subr.mxu0 0.0
        %6105 = vmatpush1.msra.mxu0 0.0
        %6106 = vmatprep.subr.mxu0 0.0
        %6107 = vmatpush1.msra.mxu0 0.0
        %6108 = vmatprep.subr.mxu0 0.0
        %6109 = vmatpush1.msra.mxu0 0.0
        %6110 = vmatprep.subr.mxu0 0.0
        %6111 = vmatpush1.msra.mxu0 0.0
        %6112 = vmatprep.subr.mxu0 0.0
        %6113 = vmatpush1.msra.mxu0 0.0
        %6114 = vmatprep.subr.mxu0 0.0
        %6115 = vmatpush1.msra.mxu0 0.0
        %6116 = vmatprep.subr.mxu0 0.0
        %6117 = vmatpush1.msra.mxu0 0.0
        %6118 = vmatprep.subr.mxu0 0.0
        %6119 = vmatpush1.msra.mxu0 0.0
        %6120 = vmatprep.subr.mxu0 0.0
        %6121 = vmatpush1.msra.mxu0 0.0
        %6122 = vmatprep.subr.mxu0 0.0
        %6123 = vmatpush1.msra.mxu0 0.0
        %6124 = vmatprep.subr.mxu0 0.0
        %6125 = vmatpush1.msra.mxu0 0.0
        %6126 = vmatprep.subr.mxu0 0.0
        %6127 = vmatpush1.msra.mxu0 0.0
        %6128 = vmatprep.mubr.f32.mxu0 0.0
        %6129 = vmatmul.mubr.f32.gmra.mrb[0].mxu0 %v6062
        %v6130 = vpop.f32.mrb[0].mxu0
        %v6131 = vadd.f32 0.0, %v6130
        %v6132 = vpop.f32.mrb[0].mxu0
        %6133 = vdwg.mxu0
        %vm6134 = vcmp.gt.f32.partialorder %v4991, 0.0
        %vm6135 = vcmp.gt.f32.partialorder %v5067, 0.0
        %vm6136 = vcmp.gt.f32.partialorder %v5143, 0.0
        %vm6137 = vcmp.gt.f32.partialorder %v5219, 0.0
        %vm6138 = vcmp.gt.f32.partialorder %v5295, 0.0
        %vm6139 = vcmp.gt.f32.partialorder %v5371, 0.0
        %vm6140 = vcmp.gt.f32.partialorder %v5447, 0.0
        %vm6141 = vcmp.gt.f32.partialorder %v5523, 0.0
        %vm6142 = vcmp.gt.f32.partialorder %v5599, 0.0
        %vm6143 = vcmp.gt.f32.partialorder %v5675, 0.0
        %vm6144 = vcmp.gt.f32.partialorder %v5751, 0.0
        %vm6145 = vcmp.gt.f32.partialorder %v5827, 0.0
        %vm6146 = vcmp.gt.f32.partialorder %v5903, 0.0
        %vm6147 = vcmp.gt.f32.partialorder %v5979, 0.0
        %vm6148 = vcmp.gt.f32.partialorder %v6055, 0.0
        %vm6149 = vcmp.gt.f32.partialorder %v6131, 0.0
        %v6150 = vmin.f32 %v4991, 0.0
        %v6151 = vmin.f32 %v5067, 0.0
        %v6152 = vmin.f32 %v5143, 0.0
        %v6153 = vmin.f32 %v5219, 0.0
        %v6154 = vmin.f32 %v5295, 0.0
        %v6155 = vmin.f32 %v5371, 0.0
        %v6156 = vmin.f32 %v5447, 0.0
        %v6157 = vmin.f32 %v5523, 0.0
        %v6158 = vmin.f32 %v5599, 0.0
        %v6159 = vmin.f32 %v5675, 0.0
        %v6160 = vmin.f32 %v5751, 0.0
        %v6161 = vmin.f32 %v5827, 0.0
        %v6162 = vmin.f32 %v5903, 0.0
        %v6163 = vmin.f32 %v5979, 0.0
        %v6164 = vmin.f32 %v6055, 0.0
        %v6165 = vmin.f32 %v6131, 0.0
        %v6166 = vmul.f32 %v6150, 1.442695
        %v6167 = vpow.pop %v6166
        %v6168 = vmul.f32 %v6151, 1.442695
        %v6169 = vpow.pop %v6168
        %v6170 = vmul.f32 %v6152, 1.442695
        %v6171 = vpow.pop %v6170
        %v6172 = vmul.f32 %v6153, 1.442695
        %v6173 = vpow.pop %v6172
        %v6174 = vmul.f32 %v6154, 1.442695
        %v6175 = vpow.pop %v6174
        %v6176 = vmul.f32 %v6155, 1.442695
        %v6177 = vpow.pop %v6176
        %v6178 = vmul.f32 %v6156, 1.442695
        %v6179 = vpow.pop %v6178
        %v6180 = vmul.f32 %v6157, 1.442695
        %v6181 = vpow.pop %v6180
        %v6182 = vmul.f32 %v6158, 1.442695
        %v6183 = vpow.pop %v6182
        %v6184 = vmul.f32 %v6159, 1.442695
        %v6185 = vpow.pop %v6184
        %v6186 = vmul.f32 %v6160, 1.442695
        %v6187 = vpow.pop %v6186
        %v6188 = vmul.f32 %v6161, 1.442695
        %v6189 = vpow.pop %v6188
        %v6190 = vmul.f32 %v6162, 1.442695
        %v6191 = vpow.pop %v6190
        %v6192 = vmul.f32 %v6163, 1.442695
        %v6193 = vpow.pop %v6192
        %v6194 = vmul.f32 %v6164, 1.442695
        %v6195 = vpow.pop %v6194
        %v6196 = vmul.f32 %v6165, 1.442695
        %v6197 = vpow.pop %v6196
        %v6198 = vsub.f32 %v6167, 1.0
        %v6199 = vsub.f32 %v6169, 1.0
        %v6200 = vsub.f32 %v6171, 1.0
        %v6201 = vsub.f32 %v6173, 1.0
        %v6202 = vsub.f32 %v6175, 1.0
        %v6203 = vsub.f32 %v6177, 1.0
        %v6204 = vsub.f32 %v6179, 1.0
        %v6205 = vsub.f32 %v6181, 1.0
        %v6206 = vsub.f32 %v6183, 1.0
        %v6207 = vsub.f32 %v6185, 1.0
        %v6208 = vsub.f32 %v6187, 1.0
        %v6209 = vsub.f32 %v6189, 1.0
        %v6210 = vsub.f32 %v6191, 1.0
        %v6211 = vsub.f32 %v6193, 1.0
        %v6212 = vsub.f32 %v6195, 1.0
        %v6213 = vsub.f32 %v6197, 1.0
        %v6214 = vsel %vm6134, %v4991, %v6198
        %v6215 = vsel %vm6135, %v5067, %v6199
        %v6216 = vsel %vm6136, %v5143, %v6200
        %v6217 = vsel %vm6137, %v5219, %v6201
        %v6218 = vsel %vm6138, %v5295, %v6202
        %v6219 = vsel %vm6139, %v5371, %v6203
        %v6220 = vsel %vm6140, %v5447, %v6204
        %v6221 = vsel %vm6141, %v5523, %v6205
        %v6222 = vsel %vm6142, %v5599, %v6206
        %v6223 = vsel %vm6143, %v5675, %v6207
        %v6224 = vsel %vm6144, %v5751, %v6208
        %v6225 = vsel %vm6145, %v5827, %v6209
        %v6226 = vsel %vm6146, %v5903, %v6210
        %v6227 = vsel %vm6147, %v5979, %v6211
        %v6228 = vsel %vm6148, %v6055, %v6212
        %v6229 = vsel %vm6149, %v6131, %v6213
        %6246 = vrot.lane.b32.xlu0 %v6214, 16
        %v6247 = vpop.permute.xlu0 %6246
        %6248 = vrot.lane.b32.xlu0 %v6215, 16
        %v6249 = vpop.permute.xlu0 %6248
        %6250 = vrot.lane.b32.xlu0 %v6216, 16
        %v6251 = vpop.permute.xlu0 %6250
        %6252 = vrot.lane.b32.xlu0 %v6217, 16
        %v6253 = vpop.permute.xlu0 %6252
        %6254 = vrot.lane.b32.xlu0 %v6218, 16
        %v6255 = vpop.permute.xlu0 %6254
        %6256 = vrot.lane.b32.xlu0 %v6219, 16
        %v6257 = vpop.permute.xlu0 %6256
        %6258 = vrot.lane.b32.xlu0 %v6220, 16
        %v6259 = vpop.permute.xlu0 %6258
        %6260 = vrot.lane.b32.xlu0 %v6221, 16
        %v6261 = vpop.permute.xlu0 %6260
        %6262 = vrot.lane.b32.xlu0 %v6222, 16
        %v6263 = vpop.permute.xlu0 %6262
        %6264 = vrot.lane.b32.xlu0 %v6223, 16
        %v6265 = vpop.permute.xlu0 %6264
        %6266 = vrot.lane.b32.xlu0 %v6224, 16
        %v6267 = vpop.permute.xlu0 %6266
        %6268 = vrot.lane.b32.xlu0 %v6225, 16
        %v6269 = vpop.permute.xlu0 %6268
        %6270 = vrot.lane.b32.xlu0 %v6226, 16
        %v6271 = vpop.permute.xlu0 %6270
        %6272 = vrot.lane.b32.xlu0 %v6227, 16
        %v6273 = vpop.permute.xlu0 %6272
        %6274 = vrot.lane.b32.xlu0 %v6228, 16
        %v6275 = vpop.permute.xlu0 %6274
        %6276 = vrot.lane.b32.xlu0 %v6229, 16
        %v6277 = vpop.permute.xlu0 %6276
        %vm6294 = vcmask 261248
        %6295 = vst.msk [vmem:[#allocation2] sm:$0xff] %vm6294, %v6247
        %6296 = vst.msk [vmem:[#allocation2 + $0x8] sm:$0xff] %vm6294, %v6249
        %6297 = vst.msk [vmem:[#allocation2 + $0x10] sm:$0xff] %vm6294, %v6251
        %6298 = vst.msk [vmem:[#allocation2 + $0x18] sm:$0xff] %vm6294, %v6253
        %6299 = vst.msk [vmem:[#allocation2 + $0x20] sm:$0xff] %vm6294, %v6255
        %6300 = vst.msk [vmem:[#allocation2 + $0x28] sm:$0xff] %vm6294, %v6257
        %6301 = vst.msk [vmem:[#allocation2 + $0x30] sm:$0xff] %vm6294, %v6259
        %6302 = vst.msk [vmem:[#allocation2 + $0x38] sm:$0xff] %vm6294, %v6261
        %6303 = vst.msk [vmem:[#allocation2 + $0x40] sm:$0xff] %vm6294, %v6263
        %6304 = vst.msk [vmem:[#allocation2 + $0x48] sm:$0xff] %vm6294, %v6265
        %6305 = vst.msk [vmem:[#allocation2 + $0x50] sm:$0xff] %vm6294, %v6267
        %6306 = vst.msk [vmem:[#allocation2 + $0x58] sm:$0xff] %vm6294, %v6269
        %6307 = vst.msk [vmem:[#allocation2 + $0x60] sm:$0xff] %vm6294, %v6271
        %6308 = vst.msk [vmem:[#allocation2 + $0x68] sm:$0xff] %vm6294, %v6273
        %6309 = vst.msk [vmem:[#allocation2 + $0x70] sm:$0xff] %vm6294, %v6275
        %6310 = vst.msk [vmem:[#allocation2 + $0x78] sm:$0xff] %vm6294, %v6277
        %v6311 = vld [vmem:[#allocation2] sm:$0xff]
        %v6312 = vld [vmem:[#allocation2 + $0x8] sm:$0xff]
        %v6313 = vld [vmem:[#allocation2 + $0x10] sm:$0xff]
        %v6314 = vld [vmem:[#allocation2 + $0x18] sm:$0xff]
        %v6315 = vld [vmem:[#allocation2 + $0x20] sm:$0xff]
        %v6316 = vld [vmem:[#allocation2 + $0x28] sm:$0xff]
        %v6317 = vld [vmem:[#allocation2 + $0x30] sm:$0xff]
        %v6318 = vld [vmem:[#allocation2 + $0x38] sm:$0xff]
        %v6319 = vld [vmem:[#allocation2 + $0x40] sm:$0xff]
        %v6320 = vld [vmem:[#allocation2 + $0x48] sm:$0xff]
        %v6321 = vld [vmem:[#allocation2 + $0x50] sm:$0xff]
        %v6322 = vld [vmem:[#allocation2 + $0x58] sm:$0xff]
        %v6323 = vld [vmem:[#allocation2 + $0x60] sm:$0xff]
        %v6324 = vld [vmem:[#allocation2 + $0x68] sm:$0xff]
        %v6325 = vld [vmem:[#allocation2 + $0x70] sm:$0xff]
        %v6326 = vld [vmem:[#allocation2 + $0x78] sm:$0xff]
        %v6327 = vld [vmem:[%s3] sm:$0xff]
        %v6328 = vld [vmem:[%s3 + $0x8] sm:$0xff]
        %v6329 = vld [vmem:[%s3 + $0x10] sm:$0xff]
        %v6330 = vld [vmem:[%s3 + $0x18] sm:$0xff]
        %v6332 = vsel %vm240, %v6311, 0
        %v6335 = vsel %vm240, %v6312, 0
        %v6338 = vsel %vm240, %v6313, 0
        %v6341 = vsel %vm240, %v6314, 0
        %v6344 = vsel %vm240, %v6315, 0
        %v6347 = vsel %vm240, %v6316, 0
        %v6350 = vsel %vm240, %v6317, 0
        %v6353 = vsel %vm240, %v6318, 0
        %v6356 = vsel %vm240, %v6319, 0
        %v6359 = vsel %vm240, %v6320, 0
        %v6362 = vsel %vm240, %v6321, 0
        %v6365 = vsel %vm240, %v6322, 0
        %v6368 = vsel %vm240, %v6323, 0
        %v6371 = vsel %vm240, %v6324, 0
        %v6374 = vsel %vm240, %v6325, 0
        %v6377 = vsel %vm240, %v6326, 0
        %6379 = vmatprep.subr.mxu0 0.0
        %6380 = vmatpush1.msra.mxu0 %v6327
        %6381 = vmatprep.subr.mxu0 0.0
        %6382 = vmatpush1.msra.mxu0 %v6328
        %6383 = vmatprep.subr.mxu0 0.0
        %6384 = vmatpush1.msra.mxu0 %v6329
        %6385 = vmatprep.subr.mxu0 0.0
        %6386 = vmatpush1.msra.mxu0 %v6330
        %6387 = vmatprep.subr.mxu0 0.0
        %6388 = vmatpush1.msra.mxu0 0.0
        %6389 = vmatprep.subr.mxu0 0.0
        %6390 = vmatpush1.msra.mxu0 0.0
        %6391 = vmatprep.subr.mxu0 0.0
        %6392 = vmatpush1.msra.mxu0 0.0
        %6393 = vmatprep.subr.mxu0 0.0
        %6394 = vmatpush1.msra.mxu0 0.0
        %6395 = vmatprep.subr.mxu0 0.0
        %6396 = vmatpush1.msra.mxu0 0.0
        %6397 = vmatprep.subr.mxu0 0.0
        %6398 = vmatpush1.msra.mxu0 0.0
        %6399 = vmatprep.subr.mxu0 0.0
        %6400 = vmatpush1.msra.mxu0 0.0
        %6401 = vmatprep.subr.mxu0 0.0
        %6402 = vmatpush1.msra.mxu0 0.0
        %6403 = vmatprep.subr.mxu0 0.0
        %6404 = vmatpush1.msra.mxu0 0.0
        %6405 = vmatprep.subr.mxu0 0.0
        %6406 = vmatpush1.msra.mxu0 0.0
        %6407 = vmatprep.subr.mxu0 0.0
        %6408 = vmatpush1.msra.mxu0 0.0
        %6409 = vmatprep.subr.mxu0 0.0
        %6410 = vmatpush1.msra.mxu0 0.0
        %6411 = vmatprep.subr.mxu0 0.0
        %6412 = vmatpush1.msra.mxu0 0.0
        %6413 = vmatprep.subr.mxu0 0.0
        %6414 = vmatpush1.msra.mxu0 0.0
        %6415 = vmatprep.subr.mxu0 0.0
        %6416 = vmatpush1.msra.mxu0 0.0
        %6417 = vmatprep.subr.mxu0 0.0
        %6418 = vmatpush1.msra.mxu0 0.0
        %6419 = vmatprep.subr.mxu0 0.0
        %6420 = vmatpush1.msra.mxu0 0.0
        %6421 = vmatprep.subr.mxu0 0.0
        %6422 = vmatpush1.msra.mxu0 0.0
        %6423 = vmatprep.subr.mxu0 0.0
        %6424 = vmatpush1.msra.mxu0 0.0
        %6425 = vmatprep.subr.mxu0 0.0
        %6426 = vmatpush1.msra.mxu0 0.0
        %6427 = vmatprep.subr.mxu0 0.0
        %6428 = vmatpush1.msra.mxu0 0.0
        %6429 = vmatprep.subr.mxu0 0.0
        %6430 = vmatpush1.msra.mxu0 0.0
        %6431 = vmatprep.subr.mxu0 0.0
        %6432 = vmatpush1.msra.mxu0 0.0
        %6433 = vmatprep.subr.mxu0 0.0
        %6434 = vmatpush1.msra.mxu0 0.0
        %6435 = vmatprep.subr.mxu0 0.0
        %6436 = vmatpush1.msra.mxu0 0.0
        %6437 = vmatprep.subr.mxu0 0.0
        %6438 = vmatpush1.msra.mxu0 0.0
        %6439 = vmatprep.subr.mxu0 0.0
        %6440 = vmatpush1.msra.mxu0 0.0
        %6441 = vmatprep.subr.mxu0 0.0
        %6442 = vmatpush1.msra.mxu0 0.0
        %6443 = vmatprep.mubr.f32.mxu0 0.0
        %6444 = vmatmul.mubr.f32.gmra.mrb[0].mxu0 %v6332
        %v6445 = vpop.f32.mrb[0].mxu0
        %v6446 = vadd.f32 0.0, %v6445
        %v6447 = vpop.f32.mrb[0].mxu0
        %6448 = vmatprep.mubr.f32.mxu0 0.0
        %6449 = vmatmul.mubr.f32.gmra.mrb[0].mxu0 %v6335
        %v6450 = vpop.f32.mrb[0].mxu0
        %v6451 = vadd.f32 0.0, %v6450
        %v6452 = vpop.f32.mrb[0].mxu0
        %6453 = vmatprep.mubr.f32.mxu0 0.0
        %6454 = vmatmul.mubr.f32.gmra.mrb[0].mxu0 %v6338
        %v6455 = vpop.f32.mrb[0].mxu0
        %v6456 = vadd.f32 0.0, %v6455
        %v6457 = vpop.f32.mrb[0].mxu0
        %6458 = vmatprep.mubr.f32.mxu0 0.0
        %6459 = vmatmul.mubr.f32.gmra.mrb[0].mxu0 %v6341
        %v6460 = vpop.f32.mrb[0].mxu0
        %v6461 = vadd.f32 0.0, %v6460
        %v6462 = vpop.f32.mrb[0].mxu0
        %6463 = vmatprep.mubr.f32.mxu0 0.0
        %6464 = vmatmul.mubr.f32.gmra.mrb[0].mxu0 %v6344
        %v6465 = vpop.f32.mrb[0].mxu0
        %v6466 = vadd.f32 0.0, %v6465
        %v6467 = vpop.f32.mrb[0].mxu0
        %6468 = vmatprep.mubr.f32.mxu0 0.0
        %6469 = vmatmul.mubr.f32.gmra.mrb[0].mxu0 %v6347
        %v6470 = vpop.f32.mrb[0].mxu0
        %v6471 = vadd.f32 0.0, %v6470
        %v6472 = vpop.f32.mrb[0].mxu0
        %6473 = vmatprep.mubr.f32.mxu0 0.0
        %6474 = vmatmul.mubr.f32.gmra.mrb[0].mxu0 %v6350
        %v6475 = vpop.f32.mrb[0].mxu0
        %v6476 = vadd.f32 0.0, %v6475
        %v6477 = vpop.f32.mrb[0].mxu0
        %6478 = vmatprep.mubr.f32.mxu0 0.0
        %6479 = vmatmul.mubr.f32.gmra.mrb[0].mxu0 %v6353
        %v6480 = vpop.f32.mrb[0].mxu0
        %v6481 = vadd.f32 0.0, %v6480
        %v6482 = vpop.f32.mrb[0].mxu0
        %6483 = vmatprep.mubr.f32.mxu0 0.0
        %6484 = vmatmul.mubr.f32.gmra.mrb[0].mxu0 %v6356
        %v6485 = vpop.f32.mrb[0].mxu0
        %v6486 = vadd.f32 0.0, %v6485
        %v6487 = vpop.f32.mrb[0].mxu0
        %6488 = vmatprep.mubr.f32.mxu0 0.0
        %6489 = vmatmul.mubr.f32.gmra.mrb[0].mxu0 %v6359
        %v6490 = vpop.f32.mrb[0].mxu0
        %v6491 = vadd.f32 0.0, %v6490
        %v6492 = vpop.f32.mrb[0].mxu0
        %6493 = vmatprep.mubr.f32.mxu0 0.0
        %6494 = vmatmul.mubr.f32.gmra.mrb[0].mxu0 %v6362
        %v6495 = vpop.f32.mrb[0].mxu0
        %v6496 = vadd.f32 0.0, %v6495
        %v6497 = vpop.f32.mrb[0].mxu0
        %6498 = vmatprep.mubr.f32.mxu0 0.0
        %6499 = vmatmul.mubr.f32.gmra.mrb[0].mxu0 %v6365
        %v6500 = vpop.f32.mrb[0].mxu0
        %v6501 = vadd.f32 0.0, %v6500
        %v6502 = vpop.f32.mrb[0].mxu0
        %6503 = vmatprep.mubr.f32.mxu0 0.0
        %6504 = vmatmul.mubr.f32.gmra.mrb[0].mxu0 %v6368
        %v6505 = vpop.f32.mrb[0].mxu0
        %v6506 = vadd.f32 0.0, %v6505
        %v6507 = vpop.f32.mrb[0].mxu0
        %6508 = vmatprep.mubr.f32.mxu0 0.0
        %6509 = vmatmul.mubr.f32.gmra.mrb[0].mxu0 %v6371
        %v6510 = vpop.f32.mrb[0].mxu0
        %v6511 = vadd.f32 0.0, %v6510
        %v6512 = vpop.f32.mrb[0].mxu0
        %6513 = vmatprep.mubr.f32.mxu0 0.0
        %6514 = vmatmul.mubr.f32.gmra.mrb[0].mxu0 %v6374
        %v6515 = vpop.f32.mrb[0].mxu0
        %v6516 = vadd.f32 0.0, %v6515
        %v6517 = vpop.f32.mrb[0].mxu0
        %6518 = vmatprep.mubr.f32.mxu0 0.0
        %6519 = vmatmul.mubr.f32.gmra.mrb[0].mxu0 %v6377
        %v6520 = vpop.f32.mrb[0].mxu0
        %v6521 = vadd.f32 0.0, %v6520
        %v6522 = vpop.f32.mrb[0].mxu0
        %6523 = vdwg.mxu0
        %6540 = vrot.lane.b32.xlu0 %v6446, 120
        %v6541 = vpop.permute.xlu0 %6540
        %6542 = vrot.lane.b32.xlu0 %v6451, 120
        %v6543 = vpop.permute.xlu0 %6542
        %6544 = vrot.lane.b32.xlu0 %v6456, 120
        %v6545 = vpop.permute.xlu0 %6544
        %6546 = vrot.lane.b32.xlu0 %v6461, 120
        %v6547 = vpop.permute.xlu0 %6546
        %6548 = vrot.lane.b32.xlu0 %v6466, 120
        %v6549 = vpop.permute.xlu0 %6548
        %6550 = vrot.lane.b32.xlu0 %v6471, 120
        %v6551 = vpop.permute.xlu0 %6550
        %6552 = vrot.lane.b32.xlu0 %v6476, 120
        %v6553 = vpop.permute.xlu0 %6552
        %6554 = vrot.lane.b32.xlu0 %v6481, 120
        %v6555 = vpop.permute.xlu0 %6554
        %6556 = vrot.lane.b32.xlu0 %v6486, 120
        %v6557 = vpop.permute.xlu0 %6556
        %6558 = vrot.lane.b32.xlu0 %v6491, 120
        %v6559 = vpop.permute.xlu0 %6558
        %6560 = vrot.lane.b32.xlu0 %v6496, 120
        %v6561 = vpop.permute.xlu0 %6560
        %6562 = vrot.lane.b32.xlu0 %v6501, 120
        %v6563 = vpop.permute.xlu0 %6562
        %6564 = vrot.lane.b32.xlu0 %v6506, 120
        %v6565 = vpop.permute.xlu0 %6564
        %6566 = vrot.lane.b32.xlu0 %v6511, 120
        %v6567 = vpop.permute.xlu0 %6566
        %6568 = vrot.lane.b32.xlu0 %v6516, 120
        %v6569 = vpop.permute.xlu0 %6568
        %6570 = vrot.lane.b32.xlu0 %v6521, 120
        %v6571 = vpop.permute.xlu0 %6570
        %v6588 = vsel %vm546, %v6541, 1.0
        %v6589 = vsel %vm546, %v6543, 1.0
        %v6590 = vsel %vm546, %v6545, 1.0
        %v6591 = vsel %vm546, %v6547, 1.0
        %v6592 = vsel %vm546, %v6549, 1.0
        %v6593 = vsel %vm546, %v6551, 1.0
        %v6594 = vsel %vm546, %v6553, 1.0
        %v6595 = vsel %vm546, %v6555, 1.0
        %v6596 = vsel %vm546, %v6557, 1.0
        %v6597 = vsel %vm546, %v6559, 1.0
        %v6598 = vsel %vm546, %v6561, 1.0
        %v6599 = vsel %vm546, %v6563, 1.0
        %v6600 = vsel %vm546, %v6565, 1.0
        %v6601 = vsel %vm546, %v6567, 1.0
        %v6602 = vsel %vm546, %v6569, 1.0
        %v6603 = vsel %vm546, %v6571, 1.0
        %v6604 = vsel %vm546, 1.0, %v6541
        %v6605 = vsel %vm546, 1.0, %v6543
        %v6606 = vsel %vm546, 1.0, %v6545
        %v6607 = vsel %vm546, 1.0, %v6547
        %v6608 = vsel %vm546, 1.0, %v6549
        %v6609 = vsel %vm546, 1.0, %v6551
        %v6610 = vsel %vm546, 1.0, %v6553
        %v6611 = vsel %vm546, 1.0, %v6555
        %v6612 = vsel %vm546, 1.0, %v6557
        %v6613 = vsel %vm546, 1.0, %v6559
        %v6614 = vsel %vm546, 1.0, %v6561
        %v6615 = vsel %vm546, 1.0, %v6563
        %v6616 = vsel %vm546, 1.0, %v6565
        %v6617 = vsel %vm546, 1.0, %v6567
        %v6618 = vsel %vm546, 1.0, %v6569
        %v6619 = vsel %vm546, 1.0, %v6571
        %v6621 = vsel %vm627, %v6588, 0
        %v6624 = vsel %vm627, %v6604, 0
        %6626 = vmatprep.subr.mxu0 0.0
        %6627 = vmatpush1.xpose.msra.mxu0 %v6624
        %6628 = vmatprep.subr.mxu0 0.0
        %6629 = vmatpush1.xpose.msra.mxu0 0.0
        %6630 = vmatprep.subr.mxu0 0.0
        %6631 = vmatpush1.xpose.msra.mxu0 0.0
        %6632 = vmatprep.subr.mxu0 0.0
        %6633 = vmatpush1.xpose.msra.mxu0 0.0
        %6634 = vmatprep.subr.mxu0 0.0
        %6635 = vmatpush1.xpose.msra.mxu0 0.0
        %6636 = vmatprep.subr.mxu0 0.0
        %6637 = vmatpush1.xpose.msra.mxu0 0.0
        %6638 = vmatprep.subr.mxu0 0.0
        %6639 = vmatpush1.xpose.msra.mxu0 0.0
        %6640 = vmatprep.subr.mxu0 0.0
        %6641 = vmatpush1.xpose.msra.mxu0 0.0
        %6642 = vmatprep.subr.mxu0 0.0
        %6643 = vmatpush1.xpose.msra.mxu0 0.0
        %6644 = vmatprep.subr.mxu0 0.0
        %6645 = vmatpush1.xpose.msra.mxu0 0.0
        %6646 = vmatprep.subr.mxu0 0.0
        %6647 = vmatpush1.xpose.msra.mxu0 0.0
        %6648 = vmatprep.subr.mxu0 0.0
        %6649 = vmatpush1.xpose.msra.mxu0 0.0
        %6650 = vmatprep.subr.mxu0 0.0
        %6651 = vmatpush1.xpose.msra.mxu0 0.0
        %6652 = vmatprep.subr.mxu0 0.0
        %6653 = vmatpush1.xpose.msra.mxu0 0.0
        %6654 = vmatprep.subr.mxu0 0.0
        %6655 = vmatpush1.xpose.msra.mxu0 0.0
        %6656 = vmatprep.subr.mxu0 0.0
        %6657 = vmatpush1.xpose.msra.mxu0 0.0
        %6658 = vmatprep.subr.mxu0 0.0
        %6659 = vmatpush1.xpose.msra.mxu0 0.0
        %6660 = vmatprep.subr.mxu0 0.0
        %6661 = vmatpush1.xpose.msra.mxu0 0.0
        %6662 = vmatprep.subr.mxu0 0.0
        %6663 = vmatpush1.xpose.msra.mxu0 0.0
        %6664 = vmatprep.subr.mxu0 0.0
        %6665 = vmatpush1.xpose.msra.mxu0 0.0
        %6666 = vmatprep.subr.mxu0 0.0
        %6667 = vmatpush1.xpose.msra.mxu0 0.0
        %6668 = vmatprep.subr.mxu0 0.0
        %6669 = vmatpush1.xpose.msra.mxu0 0.0
        %6670 = vmatprep.subr.mxu0 0.0
        %6671 = vmatpush1.xpose.msra.mxu0 0.0
        %6672 = vmatprep.subr.mxu0 0.0
        %6673 = vmatpush1.xpose.msra.mxu0 0.0
        %6674 = vmatprep.subr.mxu0 0.0
        %6675 = vmatpush1.xpose.msra.mxu0 0.0
        %6676 = vmatprep.subr.mxu0 0.0
        %6677 = vmatpush1.xpose.msra.mxu0 0.0
        %6678 = vmatprep.subr.mxu0 0.0
        %6679 = vmatpush1.xpose.msra.mxu0 0.0
        %6680 = vmatprep.subr.mxu0 0.0
        %6681 = vmatpush1.xpose.msra.mxu0 0.0
        %6682 = vmatprep.subr.mxu0 0.0
        %6683 = vmatpush1.xpose.msra.mxu0 0.0
        %6684 = vmatprep.subr.mxu0 0.0
        %6685 = vmatpush1.xpose.msra.mxu0 0.0
        %6686 = vmatprep.subr.mxu0 0.0
        %6687 = vmatpush1.xpose.msra.mxu0 0.0
        %6688 = vmatprep.subr.mxu0 0.0
        %6689 = vmatpush1.xpose.msra.mxu0 0.0
        %6690 = vmatprep.mubr.f32.mxu0 0.0
        %6691 = vmatmul.mubr.f32.gmra.mrb[0].mxu0 %v6621
        %v6692 = vpop.f32.mrb[0].mxu0
        %v6693 = vadd.f32 0.0, %v6692
        %v6694 = vpop.f32.mrb[0].mxu0
        %6695 = vdwg.mxu0
        %v6697 = vsel %vm627, %v6589, 0
        %v6700 = vsel %vm627, %v6605, 0
        %6702 = vmatprep.subr.mxu0 0.0
        %6703 = vmatpush1.xpose.msra.mxu0 %v6700
        %6704 = vmatprep.subr.mxu0 0.0
        %6705 = vmatpush1.xpose.msra.mxu0 0.0
        %6706 = vmatprep.subr.mxu0 0.0
        %6707 = vmatpush1.xpose.msra.mxu0 0.0
        %6708 = vmatprep.subr.mxu0 0.0
        %6709 = vmatpush1.xpose.msra.mxu0 0.0
        %6710 = vmatprep.subr.mxu0 0.0
        %6711 = vmatpush1.xpose.msra.mxu0 0.0
        %6712 = vmatprep.subr.mxu0 0.0
        %6713 = vmatpush1.xpose.msra.mxu0 0.0
        %6714 = vmatprep.subr.mxu0 0.0
        %6715 = vmatpush1.xpose.msra.mxu0 0.0
        %6716 = vmatprep.subr.mxu0 0.0
        %6717 = vmatpush1.xpose.msra.mxu0 0.0
        %6718 = vmatprep.subr.mxu0 0.0
        %6719 = vmatpush1.xpose.msra.mxu0 0.0
        %6720 = vmatprep.subr.mxu0 0.0
        %6721 = vmatpush1.xpose.msra.mxu0 0.0
        %6722 = vmatprep.subr.mxu0 0.0
        %6723 = vmatpush1.xpose.msra.mxu0 0.0
        %6724 = vmatprep.subr.mxu0 0.0
        %6725 = vmatpush1.xpose.msra.mxu0 0.0
        %6726 = vmatprep.subr.mxu0 0.0
        %6727 = vmatpush1.xpose.msra.mxu0 0.0
        %6728 = vmatprep.subr.mxu0 0.0
        %6729 = vmatpush1.xpose.msra.mxu0 0.0
        %6730 = vmatprep.subr.mxu0 0.0
        %6731 = vmatpush1.xpose.msra.mxu0 0.0
        %6732 = vmatprep.subr.mxu0 0.0
        %6733 = vmatpush1.xpose.msra.mxu0 0.0
        %6734 = vmatprep.subr.mxu0 0.0
        %6735 = vmatpush1.xpose.msra.mxu0 0.0
        %6736 = vmatprep.subr.mxu0 0.0
        %6737 = vmatpush1.xpose.msra.mxu0 0.0
        %6738 = vmatprep.subr.mxu0 0.0
        %6739 = vmatpush1.xpose.msra.mxu0 0.0
        %6740 = vmatprep.subr.mxu0 0.0
        %6741 = vmatpush1.xpose.msra.mxu0 0.0
        %6742 = vmatprep.subr.mxu0 0.0
        %6743 = vmatpush1.xpose.msra.mxu0 0.0
        %6744 = vmatprep.subr.mxu0 0.0
        %6745 = vmatpush1.xpose.msra.mxu0 0.0
        %6746 = vmatprep.subr.mxu0 0.0
        %6747 = vmatpush1.xpose.msra.mxu0 0.0
        %6748 = vmatprep.subr.mxu0 0.0
        %6749 = vmatpush1.xpose.msra.mxu0 0.0
        %6750 = vmatprep.subr.mxu0 0.0
        %6751 = vmatpush1.xpose.msra.mxu0 0.0
        %6752 = vmatprep.subr.mxu0 0.0
        %6753 = vmatpush1.xpose.msra.mxu0 0.0
        %6754 = vmatprep.subr.mxu0 0.0
        %6755 = vmatpush1.xpose.msra.mxu0 0.0
        %6756 = vmatprep.subr.mxu0 0.0
        %6757 = vmatpush1.xpose.msra.mxu0 0.0
        %6758 = vmatprep.subr.mxu0 0.0
        %6759 = vmatpush1.xpose.msra.mxu0 0.0
        %6760 = vmatprep.subr.mxu0 0.0
        %6761 = vmatpush1.xpose.msra.mxu0 0.0
        %6762 = vmatprep.subr.mxu0 0.0
        %6763 = vmatpush1.xpose.msra.mxu0 0.0
        %6764 = vmatprep.subr.mxu0 0.0
        %6765 = vmatpush1.xpose.msra.mxu0 0.0
        %6766 = vmatprep.mubr.f32.mxu0 0.0
        %6767 = vmatmul.mubr.f32.gmra.mrb[0].mxu0 %v6697
        %v6768 = vpop.f32.mrb[0].mxu0
        %v6769 = vadd.f32 0.0, %v6768
        %v6770 = vpop.f32.mrb[0].mxu0
        %6771 = vdwg.mxu0
        %v6773 = vsel %vm627, %v6590, 0
        %v6776 = vsel %vm627, %v6606, 0
        %6778 = vmatprep.subr.mxu0 0.0
        %6779 = vmatpush1.xpose.msra.mxu0 %v6776
        %6780 = vmatprep.subr.mxu0 0.0
        %6781 = vmatpush1.xpose.msra.mxu0 0.0
        %6782 = vmatprep.subr.mxu0 0.0
        %6783 = vmatpush1.xpose.msra.mxu0 0.0
        %6784 = vmatprep.subr.mxu0 0.0
        %6785 = vmatpush1.xpose.msra.mxu0 0.0
        %6786 = vmatprep.subr.mxu0 0.0
        %6787 = vmatpush1.xpose.msra.mxu0 0.0
        %6788 = vmatprep.subr.mxu0 0.0
        %6789 = vmatpush1.xpose.msra.mxu0 0.0
        %6790 = vmatprep.subr.mxu0 0.0
        %6791 = vmatpush1.xpose.msra.mxu0 0.0
        %6792 = vmatprep.subr.mxu0 0.0
        %6793 = vmatpush1.xpose.msra.mxu0 0.0
        %6794 = vmatprep.subr.mxu0 0.0
        %6795 = vmatpush1.xpose.msra.mxu0 0.0
        %6796 = vmatprep.subr.mxu0 0.0
        %6797 = vmatpush1.xpose.msra.mxu0 0.0
        %6798 = vmatprep.subr.mxu0 0.0
        %6799 = vmatpush1.xpose.msra.mxu0 0.0
        %6800 = vmatprep.subr.mxu0 0.0
        %6801 = vmatpush1.xpose.msra.mxu0 0.0
        %6802 = vmatprep.subr.mxu0 0.0
        %6803 = vmatpush1.xpose.msra.mxu0 0.0
        %6804 = vmatprep.subr.mxu0 0.0
        %6805 = vmatpush1.xpose.msra.mxu0 0.0
        %6806 = vmatprep.subr.mxu0 0.0
        %6807 = vmatpush1.xpose.msra.mxu0 0.0
        %6808 = vmatprep.subr.mxu0 0.0
        %6809 = vmatpush1.xpose.msra.mxu0 0.0
        %6810 = vmatprep.subr.mxu0 0.0
        %6811 = vmatpush1.xpose.msra.mxu0 0.0
        %6812 = vmatprep.subr.mxu0 0.0
        %6813 = vmatpush1.xpose.msra.mxu0 0.0
        %6814 = vmatprep.subr.mxu0 0.0
        %6815 = vmatpush1.xpose.msra.mxu0 0.0
        %6816 = vmatprep.subr.mxu0 0.0
        %6817 = vmatpush1.xpose.msra.mxu0 0.0
        %6818 = vmatprep.subr.mxu0 0.0
        %6819 = vmatpush1.xpose.msra.mxu0 0.0
        %6820 = vmatprep.subr.mxu0 0.0
        %6821 = vmatpush1.xpose.msra.mxu0 0.0
        %6822 = vmatprep.subr.mxu0 0.0
        %6823 = vmatpush1.xpose.msra.mxu0 0.0
        %6824 = vmatprep.subr.mxu0 0.0
        %6825 = vmatpush1.xpose.msra.mxu0 0.0
        %6826 = vmatprep.subr.mxu0 0.0
        %6827 = vmatpush1.xpose.msra.mxu0 0.0
        %6828 = vmatprep.subr.mxu0 0.0
        %6829 = vmatpush1.xpose.msra.mxu0 0.0
        %6830 = vmatprep.subr.mxu0 0.0
        %6831 = vmatpush1.xpose.msra.mxu0 0.0
        %6832 = vmatprep.subr.mxu0 0.0
        %6833 = vmatpush1.xpose.msra.mxu0 0.0
        %6834 = vmatprep.subr.mxu0 0.0
        %6835 = vmatpush1.xpose.msra.mxu0 0.0
        %6836 = vmatprep.subr.mxu0 0.0
        %6837 = vmatpush1.xpose.msra.mxu0 0.0
        %6838 = vmatprep.subr.mxu0 0.0
        %6839 = vmatpush1.xpose.msra.mxu0 0.0
        %6840 = vmatprep.subr.mxu0 0.0
        %6841 = vmatpush1.xpose.msra.mxu0 0.0
        %6842 = vmatprep.mubr.f32.mxu0 0.0
        %6843 = vmatmul.mubr.f32.gmra.mrb[0].mxu0 %v6773
        %v6844 = vpop.f32.mrb[0].mxu0
        %v6845 = vadd.f32 0.0, %v6844
        %v6846 = vpop.f32.mrb[0].mxu0
        %6847 = vdwg.mxu0
        %v6849 = vsel %vm627, %v6591, 0
        %v6852 = vsel %vm627, %v6607, 0
        %6854 = vmatprep.subr.mxu0 0.0
        %6855 = vmatpush1.xpose.msra.mxu0 %v6852
        %6856 = vmatprep.subr.mxu0 0.0
        %6857 = vmatpush1.xpose.msra.mxu0 0.0
        %6858 = vmatprep.subr.mxu0 0.0
        %6859 = vmatpush1.xpose.msra.mxu0 0.0
        %6860 = vmatprep.subr.mxu0 0.0
        %6861 = vmatpush1.xpose.msra.mxu0 0.0
        %6862 = vmatprep.subr.mxu0 0.0
        %6863 = vmatpush1.xpose.msra.mxu0 0.0
        %6864 = vmatprep.subr.mxu0 0.0
        %6865 = vmatpush1.xpose.msra.mxu0 0.0
        %6866 = vmatprep.subr.mxu0 0.0
        %6867 = vmatpush1.xpose.msra.mxu0 0.0
        %6868 = vmatprep.subr.mxu0 0.0
        %6869 = vmatpush1.xpose.msra.mxu0 0.0
        %6870 = vmatprep.subr.mxu0 0.0
        %6871 = vmatpush1.xpose.msra.mxu0 0.0
        %6872 = vmatprep.subr.mxu0 0.0
        %6873 = vmatpush1.xpose.msra.mxu0 0.0
        %6874 = vmatprep.subr.mxu0 0.0
        %6875 = vmatpush1.xpose.msra.mxu0 0.0
        %6876 = vmatprep.subr.mxu0 0.0
        %6877 = vmatpush1.xpose.msra.mxu0 0.0
        %6878 = vmatprep.subr.mxu0 0.0
        %6879 = vmatpush1.xpose.msra.mxu0 0.0
        %6880 = vmatprep.subr.mxu0 0.0
        %6881 = vmatpush1.xpose.msra.mxu0 0.0
        %6882 = vmatprep.subr.mxu0 0.0
        %6883 = vmatpush1.xpose.msra.mxu0 0.0
        %6884 = vmatprep.subr.mxu0 0.0
        %6885 = vmatpush1.xpose.msra.mxu0 0.0
        %6886 = vmatprep.subr.mxu0 0.0
        %6887 = vmatpush1.xpose.msra.mxu0 0.0
        %6888 = vmatprep.subr.mxu0 0.0
        %6889 = vmatpush1.xpose.msra.mxu0 0.0
        %6890 = vmatprep.subr.mxu0 0.0
        %6891 = vmatpush1.xpose.msra.mxu0 0.0
        %6892 = vmatprep.subr.mxu0 0.0
        %6893 = vmatpush1.xpose.msra.mxu0 0.0
        %6894 = vmatprep.subr.mxu0 0.0
        %6895 = vmatpush1.xpose.msra.mxu0 0.0
        %6896 = vmatprep.subr.mxu0 0.0
        %6897 = vmatpush1.xpose.msra.mxu0 0.0
        %6898 = vmatprep.subr.mxu0 0.0
        %6899 = vmatpush1.xpose.msra.mxu0 0.0
        %6900 = vmatprep.subr.mxu0 0.0
        %6901 = vmatpush1.xpose.msra.mxu0 0.0
        %6902 = vmatprep.subr.mxu0 0.0
        %6903 = vmatpush1.xpose.msra.mxu0 0.0
        %6904 = vmatprep.subr.mxu0 0.0
        %6905 = vmatpush1.xpose.msra.mxu0 0.0
        %6906 = vmatprep.subr.mxu0 0.0
        %6907 = vmatpush1.xpose.msra.mxu0 0.0
        %6908 = vmatprep.subr.mxu0 0.0
        %6909 = vmatpush1.xpose.msra.mxu0 0.0
        %6910 = vmatprep.subr.mxu0 0.0
        %6911 = vmatpush1.xpose.msra.mxu0 0.0
        %6912 = vmatprep.subr.mxu0 0.0
        %6913 = vmatpush1.xpose.msra.mxu0 0.0
        %6914 = vmatprep.subr.mxu0 0.0
        %6915 = vmatpush1.xpose.msra.mxu0 0.0
        %6916 = vmatprep.subr.mxu0 0.0
        %6917 = vmatpush1.xpose.msra.mxu0 0.0
        %6918 = vmatprep.mubr.f32.mxu0 0.0
        %6919 = vmatmul.mubr.f32.gmra.mrb[0].mxu0 %v6849
        %v6920 = vpop.f32.mrb[0].mxu0
        %v6921 = vadd.f32 0.0, %v6920
        %v6922 = vpop.f32.mrb[0].mxu0
        %6923 = vdwg.mxu0
        %v6925 = vsel %vm627, %v6592, 0
        %v6928 = vsel %vm627, %v6608, 0
        %6930 = vmatprep.subr.mxu0 0.0
        %6931 = vmatpush1.xpose.msra.mxu0 %v6928
        %6932 = vmatprep.subr.mxu0 0.0
        %6933 = vmatpush1.xpose.msra.mxu0 0.0
        %6934 = vmatprep.subr.mxu0 0.0
        %6935 = vmatpush1.xpose.msra.mxu0 0.0
        %6936 = vmatprep.subr.mxu0 0.0
        %6937 = vmatpush1.xpose.msra.mxu0 0.0
        %6938 = vmatprep.subr.mxu0 0.0
        %6939 = vmatpush1.xpose.msra.mxu0 0.0
        %6940 = vmatprep.subr.mxu0 0.0
        %6941 = vmatpush1.xpose.msra.mxu0 0.0
        %6942 = vmatprep.subr.mxu0 0.0
        %6943 = vmatpush1.xpose.msra.mxu0 0.0
        %6944 = vmatprep.subr.mxu0 0.0
        %6945 = vmatpush1.xpose.msra.mxu0 0.0
        %6946 = vmatprep.subr.mxu0 0.0
        %6947 = vmatpush1.xpose.msra.mxu0 0.0
        %6948 = vmatprep.subr.mxu0 0.0
        %6949 = vmatpush1.xpose.msra.mxu0 0.0
        %6950 = vmatprep.subr.mxu0 0.0
        %6951 = vmatpush1.xpose.msra.mxu0 0.0
        %6952 = vmatprep.subr.mxu0 0.0
        %6953 = vmatpush1.xpose.msra.mxu0 0.0
        %6954 = vmatprep.subr.mxu0 0.0
        %6955 = vmatpush1.xpose.msra.mxu0 0.0
        %6956 = vmatprep.subr.mxu0 0.0
        %6957 = vmatpush1.xpose.msra.mxu0 0.0
        %6958 = vmatprep.subr.mxu0 0.0
        %6959 = vmatpush1.xpose.msra.mxu0 0.0
        %6960 = vmatprep.subr.mxu0 0.0
        %6961 = vmatpush1.xpose.msra.mxu0 0.0
        %6962 = vmatprep.subr.mxu0 0.0
        %6963 = vmatpush1.xpose.msra.mxu0 0.0
        %6964 = vmatprep.subr.mxu0 0.0
        %6965 = vmatpush1.xpose.msra.mxu0 0.0
        %6966 = vmatprep.subr.mxu0 0.0
        %6967 = vmatpush1.xpose.msra.mxu0 0.0
        %6968 = vmatprep.subr.mxu0 0.0
        %6969 = vmatpush1.xpose.msra.mxu0 0.0
        %6970 = vmatprep.subr.mxu0 0.0
        %6971 = vmatpush1.xpose.msra.mxu0 0.0
        %6972 = vmatprep.subr.mxu0 0.0
        %6973 = vmatpush1.xpose.msra.mxu0 0.0
        %6974 = vmatprep.subr.mxu0 0.0
        %6975 = vmatpush1.xpose.msra.mxu0 0.0
        %6976 = vmatprep.subr.mxu0 0.0
        %6977 = vmatpush1.xpose.msra.mxu0 0.0
        %6978 = vmatprep.subr.mxu0 0.0
        %6979 = vmatpush1.xpose.msra.mxu0 0.0
        %6980 = vmatprep.subr.mxu0 0.0
        %6981 = vmatpush1.xpose.msra.mxu0 0.0
        %6982 = vmatprep.subr.mxu0 0.0
        %6983 = vmatpush1.xpose.msra.mxu0 0.0
        %6984 = vmatprep.subr.mxu0 0.0
        %6985 = vmatpush1.xpose.msra.mxu0 0.0
        %6986 = vmatprep.subr.mxu0 0.0
        %6987 = vmatpush1.xpose.msra.mxu0 0.0
        %6988 = vmatprep.subr.mxu0 0.0
        %6989 = vmatpush1.xpose.msra.mxu0 0.0
        %6990 = vmatprep.subr.mxu0 0.0
        %6991 = vmatpush1.xpose.msra.mxu0 0.0
        %6992 = vmatprep.subr.mxu0 0.0
        %6993 = vmatpush1.xpose.msra.mxu0 0.0
        %6994 = vmatprep.mubr.f32.mxu0 0.0
        %6995 = vmatmul.mubr.f32.gmra.mrb[0].mxu0 %v6925
        %v6996 = vpop.f32.mrb[0].mxu0
        %v6997 = vadd.f32 0.0, %v6996
        %v6998 = vpop.f32.mrb[0].mxu0
        %6999 = vdwg.mxu0
        %v7001 = vsel %vm627, %v6593, 0
        %v7004 = vsel %vm627, %v6609, 0
        %7006 = vmatprep.subr.mxu0 0.0
        %7007 = vmatpush1.xpose.msra.mxu0 %v7004
        %7008 = vmatprep.subr.mxu0 0.0
        %7009 = vmatpush1.xpose.msra.mxu0 0.0
        %7010 = vmatprep.subr.mxu0 0.0
        %7011 = vmatpush1.xpose.msra.mxu0 0.0
        %7012 = vmatprep.subr.mxu0 0.0
        %7013 = vmatpush1.xpose.msra.mxu0 0.0
        %7014 = vmatprep.subr.mxu0 0.0
        %7015 = vmatpush1.xpose.msra.mxu0 0.0
        %7016 = vmatprep.subr.mxu0 0.0
        %7017 = vmatpush1.xpose.msra.mxu0 0.0
        %7018 = vmatprep.subr.mxu0 0.0
        %7019 = vmatpush1.xpose.msra.mxu0 0.0
        %7020 = vmatprep.subr.mxu0 0.0
        %7021 = vmatpush1.xpose.msra.mxu0 0.0
        %7022 = vmatprep.subr.mxu0 0.0
        %7023 = vmatpush1.xpose.msra.mxu0 0.0
        %7024 = vmatprep.subr.mxu0 0.0
        %7025 = vmatpush1.xpose.msra.mxu0 0.0
        %7026 = vmatprep.subr.mxu0 0.0
        %7027 = vmatpush1.xpose.msra.mxu0 0.0
        %7028 = vmatprep.subr.mxu0 0.0
        %7029 = vmatpush1.xpose.msra.mxu0 0.0
        %7030 = vmatprep.subr.mxu0 0.0
        %7031 = vmatpush1.xpose.msra.mxu0 0.0
        %7032 = vmatprep.subr.mxu0 0.0
        %7033 = vmatpush1.xpose.msra.mxu0 0.0
        %7034 = vmatprep.subr.mxu0 0.0
        %7035 = vmatpush1.xpose.msra.mxu0 0.0
        %7036 = vmatprep.subr.mxu0 0.0
        %7037 = vmatpush1.xpose.msra.mxu0 0.0
        %7038 = vmatprep.subr.mxu0 0.0
        %7039 = vmatpush1.xpose.msra.mxu0 0.0
        %7040 = vmatprep.subr.mxu0 0.0
        %7041 = vmatpush1.xpose.msra.mxu0 0.0
        %7042 = vmatprep.subr.mxu0 0.0
        %7043 = vmatpush1.xpose.msra.mxu0 0.0
        %7044 = vmatprep.subr.mxu0 0.0
        %7045 = vmatpush1.xpose.msra.mxu0 0.0
        %7046 = vmatprep.subr.mxu0 0.0
        %7047 = vmatpush1.xpose.msra.mxu0 0.0
        %7048 = vmatprep.subr.mxu0 0.0
        %7049 = vmatpush1.xpose.msra.mxu0 0.0
        %7050 = vmatprep.subr.mxu0 0.0
        %7051 = vmatpush1.xpose.msra.mxu0 0.0
        %7052 = vmatprep.subr.mxu0 0.0
        %7053 = vmatpush1.xpose.msra.mxu0 0.0
        %7054 = vmatprep.subr.mxu0 0.0
        %7055 = vmatpush1.xpose.msra.mxu0 0.0
        %7056 = vmatprep.subr.mxu0 0.0
        %7057 = vmatpush1.xpose.msra.mxu0 0.0
        %7058 = vmatprep.subr.mxu0 0.0
        %7059 = vmatpush1.xpose.msra.mxu0 0.0
        %7060 = vmatprep.subr.mxu0 0.0
        %7061 = vmatpush1.xpose.msra.mxu0 0.0
        %7062 = vmatprep.subr.mxu0 0.0
        %7063 = vmatpush1.xpose.msra.mxu0 0.0
        %7064 = vmatprep.subr.mxu0 0.0
        %7065 = vmatpush1.xpose.msra.mxu0 0.0
        %7066 = vmatprep.subr.mxu0 0.0
        %7067 = vmatpush1.xpose.msra.mxu0 0.0
        %7068 = vmatprep.subr.mxu0 0.0
        %7069 = vmatpush1.xpose.msra.mxu0 0.0
        %7070 = vmatprep.mubr.f32.mxu0 0.0
        %7071 = vmatmul.mubr.f32.gmra.mrb[0].mxu0 %v7001
        %v7072 = vpop.f32.mrb[0].mxu0
        %v7073 = vadd.f32 0.0, %v7072
        %v7074 = vpop.f32.mrb[0].mxu0
        %7075 = vdwg.mxu0
        %v7077 = vsel %vm627, %v6594, 0
        %v7080 = vsel %vm627, %v6610, 0
        %7082 = vmatprep.subr.mxu0 0.0
        %7083 = vmatpush1.xpose.msra.mxu0 %v7080
        %7084 = vmatprep.subr.mxu0 0.0
        %7085 = vmatpush1.xpose.msra.mxu0 0.0
        %7086 = vmatprep.subr.mxu0 0.0
        %7087 = vmatpush1.xpose.msra.mxu0 0.0
        %7088 = vmatprep.subr.mxu0 0.0
        %7089 = vmatpush1.xpose.msra.mxu0 0.0
        %7090 = vmatprep.subr.mxu0 0.0
        %7091 = vmatpush1.xpose.msra.mxu0 0.0
        %7092 = vmatprep.subr.mxu0 0.0
        %7093 = vmatpush1.xpose.msra.mxu0 0.0
        %7094 = vmatprep.subr.mxu0 0.0
        %7095 = vmatpush1.xpose.msra.mxu0 0.0
        %7096 = vmatprep.subr.mxu0 0.0
        %7097 = vmatpush1.xpose.msra.mxu0 0.0
        %7098 = vmatprep.subr.mxu0 0.0
        %7099 = vmatpush1.xpose.msra.mxu0 0.0
        %7100 = vmatprep.subr.mxu0 0.0
        %7101 = vmatpush1.xpose.msra.mxu0 0.0
        %7102 = vmatprep.subr.mxu0 0.0
        %7103 = vmatpush1.xpose.msra.mxu0 0.0
        %7104 = vmatprep.subr.mxu0 0.0
        %7105 = vmatpush1.xpose.msra.mxu0 0.0
        %7106 = vmatprep.subr.mxu0 0.0
        %7107 = vmatpush1.xpose.msra.mxu0 0.0
        %7108 = vmatprep.subr.mxu0 0.0
        %7109 = vmatpush1.xpose.msra.mxu0 0.0
        %7110 = vmatprep.subr.mxu0 0.0
        %7111 = vmatpush1.xpose.msra.mxu0 0.0
        %7112 = vmatprep.subr.mxu0 0.0
        %7113 = vmatpush1.xpose.msra.mxu0 0.0
        %7114 = vmatprep.subr.mxu0 0.0
        %7115 = vmatpush1.xpose.msra.mxu0 0.0
        %7116 = vmatprep.subr.mxu0 0.0
        %7117 = vmatpush1.xpose.msra.mxu0 0.0
        %7118 = vmatprep.subr.mxu0 0.0
        %7119 = vmatpush1.xpose.msra.mxu0 0.0
        %7120 = vmatprep.subr.mxu0 0.0
        %7121 = vmatpush1.xpose.msra.mxu0 0.0
        %7122 = vmatprep.subr.mxu0 0.0
        %7123 = vmatpush1.xpose.msra.mxu0 0.0
        %7124 = vmatprep.subr.mxu0 0.0
        %7125 = vmatpush1.xpose.msra.mxu0 0.0
        %7126 = vmatprep.subr.mxu0 0.0
        %7127 = vmatpush1.xpose.msra.mxu0 0.0
        %7128 = vmatprep.subr.mxu0 0.0
        %7129 = vmatpush1.xpose.msra.mxu0 0.0
        %7130 = vmatprep.subr.mxu0 0.0
        %7131 = vmatpush1.xpose.msra.mxu0 0.0
        %7132 = vmatprep.subr.mxu0 0.0
        %7133 = vmatpush1.xpose.msra.mxu0 0.0
        %7134 = vmatprep.subr.mxu0 0.0
        %7135 = vmatpush1.xpose.msra.mxu0 0.0
        %7136 = vmatprep.subr.mxu0 0.0
        %7137 = vmatpush1.xpose.msra.mxu0 0.0
        %7138 = vmatprep.subr.mxu0 0.0
        %7139 = vmatpush1.xpose.msra.mxu0 0.0
        %7140 = vmatprep.subr.mxu0 0.0
        %7141 = vmatpush1.xpose.msra.mxu0 0.0
        %7142 = vmatprep.subr.mxu0 0.0
        %7143 = vmatpush1.xpose.msra.mxu0 0.0
        %7144 = vmatprep.subr.mxu0 0.0
        %7145 = vmatpush1.xpose.msra.mxu0 0.0
        %7146 = vmatprep.mubr.f32.mxu0 0.0
        %7147 = vmatmul.mubr.f32.gmra.mrb[0].mxu0 %v7077
        %v7148 = vpop.f32.mrb[0].mxu0
        %v7149 = vadd.f32 0.0, %v7148
        %v7150 = vpop.f32.mrb[0].mxu0
        %7151 = vdwg.mxu0
        %v7153 = vsel %vm627, %v6595, 0
        %v7156 = vsel %vm627, %v6611, 0
        %7158 = vmatprep.subr.mxu0 0.0
        %7159 = vmatpush1.xpose.msra.mxu0 %v7156
        %7160 = vmatprep.subr.mxu0 0.0
        %7161 = vmatpush1.xpose.msra.mxu0 0.0
        %7162 = vmatprep.subr.mxu0 0.0
        %7163 = vmatpush1.xpose.msra.mxu0 0.0
        %7164 = vmatprep.subr.mxu0 0.0
        %7165 = vmatpush1.xpose.msra.mxu0 0.0
        %7166 = vmatprep.subr.mxu0 0.0
        %7167 = vmatpush1.xpose.msra.mxu0 0.0
        %7168 = vmatprep.subr.mxu0 0.0
        %7169 = vmatpush1.xpose.msra.mxu0 0.0
        %7170 = vmatprep.subr.mxu0 0.0
        %7171 = vmatpush1.xpose.msra.mxu0 0.0
        %7172 = vmatprep.subr.mxu0 0.0
        %7173 = vmatpush1.xpose.msra.mxu0 0.0
        %7174 = vmatprep.subr.mxu0 0.0
        %7175 = vmatpush1.xpose.msra.mxu0 0.0
        %7176 = vmatprep.subr.mxu0 0.0
        %7177 = vmatpush1.xpose.msra.mxu0 0.0
        %7178 = vmatprep.subr.mxu0 0.0
        %7179 = vmatpush1.xpose.msra.mxu0 0.0
        %7180 = vmatprep.subr.mxu0 0.0
        %7181 = vmatpush1.xpose.msra.mxu0 0.0
        %7182 = vmatprep.subr.mxu0 0.0
        %7183 = vmatpush1.xpose.msra.mxu0 0.0
        %7184 = vmatprep.subr.mxu0 0.0
        %7185 = vmatpush1.xpose.msra.mxu0 0.0
        %7186 = vmatprep.subr.mxu0 0.0
        %7187 = vmatpush1.xpose.msra.mxu0 0.0
        %7188 = vmatprep.subr.mxu0 0.0
        %7189 = vmatpush1.xpose.msra.mxu0 0.0
        %7190 = vmatprep.subr.mxu0 0.0
        %7191 = vmatpush1.xpose.msra.mxu0 0.0
        %7192 = vmatprep.subr.mxu0 0.0
        %7193 = vmatpush1.xpose.msra.mxu0 0.0
        %7194 = vmatprep.subr.mxu0 0.0
        %7195 = vmatpush1.xpose.msra.mxu0 0.0
        %7196 = vmatprep.subr.mxu0 0.0
        %7197 = vmatpush1.xpose.msra.mxu0 0.0
        %7198 = vmatprep.subr.mxu0 0.0
        %7199 = vmatpush1.xpose.msra.mxu0 0.0
        %7200 = vmatprep.subr.mxu0 0.0
        %7201 = vmatpush1.xpose.msra.mxu0 0.0
        %7202 = vmatprep.subr.mxu0 0.0
        %7203 = vmatpush1.xpose.msra.mxu0 0.0
        %7204 = vmatprep.subr.mxu0 0.0
        %7205 = vmatpush1.xpose.msra.mxu0 0.0
        %7206 = vmatprep.subr.mxu0 0.0
        %7207 = vmatpush1.xpose.msra.mxu0 0.0
        %7208 = vmatprep.subr.mxu0 0.0
        %7209 = vmatpush1.xpose.msra.mxu0 0.0
        %7210 = vmatprep.subr.mxu0 0.0
        %7211 = vmatpush1.xpose.msra.mxu0 0.0
        %7212 = vmatprep.subr.mxu0 0.0
        %7213 = vmatpush1.xpose.msra.mxu0 0.0
        %7214 = vmatprep.subr.mxu0 0.0
        %7215 = vmatpush1.xpose.msra.mxu0 0.0
        %7216 = vmatprep.subr.mxu0 0.0
        %7217 = vmatpush1.xpose.msra.mxu0 0.0
        %7218 = vmatprep.subr.mxu0 0.0
        %7219 = vmatpush1.xpose.msra.mxu0 0.0
        %7220 = vmatprep.subr.mxu0 0.0
        %7221 = vmatpush1.xpose.msra.mxu0 0.0
        %7222 = vmatprep.mubr.f32.mxu0 0.0
        %7223 = vmatmul.mubr.f32.gmra.mrb[0].mxu0 %v7153
        %v7224 = vpop.f32.mrb[0].mxu0
        %v7225 = vadd.f32 0.0, %v7224
        %v7226 = vpop.f32.mrb[0].mxu0
        %7227 = vdwg.mxu0
        %v7229 = vsel %vm627, %v6596, 0
        %v7232 = vsel %vm627, %v6612, 0
        %7234 = vmatprep.subr.mxu0 0.0
        %7235 = vmatpush1.xpose.msra.mxu0 %v7232
        %7236 = vmatprep.subr.mxu0 0.0
        %7237 = vmatpush1.xpose.msra.mxu0 0.0
        %7238 = vmatprep.subr.mxu0 0.0
        %7239 = vmatpush1.xpose.msra.mxu0 0.0
        %7240 = vmatprep.subr.mxu0 0.0
        %7241 = vmatpush1.xpose.msra.mxu0 0.0
        %7242 = vmatprep.subr.mxu0 0.0
        %7243 = vmatpush1.xpose.msra.mxu0 0.0
        %7244 = vmatprep.subr.mxu0 0.0
        %7245 = vmatpush1.xpose.msra.mxu0 0.0
        %7246 = vmatprep.subr.mxu0 0.0
        %7247 = vmatpush1.xpose.msra.mxu0 0.0
        %7248 = vmatprep.subr.mxu0 0.0
        %7249 = vmatpush1.xpose.msra.mxu0 0.0
        %7250 = vmatprep.subr.mxu0 0.0
        %7251 = vmatpush1.xpose.msra.mxu0 0.0
        %7252 = vmatprep.subr.mxu0 0.0
        %7253 = vmatpush1.xpose.msra.mxu0 0.0
        %7254 = vmatprep.subr.mxu0 0.0
        %7255 = vmatpush1.xpose.msra.mxu0 0.0
        %7256 = vmatprep.subr.mxu0 0.0
        %7257 = vmatpush1.xpose.msra.mxu0 0.0
        %7258 = vmatprep.subr.mxu0 0.0
        %7259 = vmatpush1.xpose.msra.mxu0 0.0
        %7260 = vmatprep.subr.mxu0 0.0
        %7261 = vmatpush1.xpose.msra.mxu0 0.0
        %7262 = vmatprep.subr.mxu0 0.0
        %7263 = vmatpush1.xpose.msra.mxu0 0.0
        %7264 = vmatprep.subr.mxu0 0.0
        %7265 = vmatpush1.xpose.msra.mxu0 0.0
        %7266 = vmatprep.subr.mxu0 0.0
        %7267 = vmatpush1.xpose.msra.mxu0 0.0
        %7268 = vmatprep.subr.mxu0 0.0
        %7269 = vmatpush1.xpose.msra.mxu0 0.0
        %7270 = vmatprep.subr.mxu0 0.0
        %7271 = vmatpush1.xpose.msra.mxu0 0.0
        %7272 = vmatprep.subr.mxu0 0.0
        %7273 = vmatpush1.xpose.msra.mxu0 0.0
        %7274 = vmatprep.subr.mxu0 0.0
        %7275 = vmatpush1.xpose.msra.mxu0 0.0
        %7276 = vmatprep.subr.mxu0 0.0
        %7277 = vmatpush1.xpose.msra.mxu0 0.0
        %7278 = vmatprep.subr.mxu0 0.0
        %7279 = vmatpush1.xpose.msra.mxu0 0.0
        %7280 = vmatprep.subr.mxu0 0.0
        %7281 = vmatpush1.xpose.msra.mxu0 0.0
        %7282 = vmatprep.subr.mxu0 0.0
        %7283 = vmatpush1.xpose.msra.mxu0 0.0
        %7284 = vmatprep.subr.mxu0 0.0
        %7285 = vmatpush1.xpose.msra.mxu0 0.0
        %7286 = vmatprep.subr.mxu0 0.0
        %7287 = vmatpush1.xpose.msra.mxu0 0.0
        %7288 = vmatprep.subr.mxu0 0.0
        %7289 = vmatpush1.xpose.msra.mxu0 0.0
        %7290 = vmatprep.subr.mxu0 0.0
        %7291 = vmatpush1.xpose.msra.mxu0 0.0
        %7292 = vmatprep.subr.mxu0 0.0
        %7293 = vmatpush1.xpose.msra.mxu0 0.0
        %7294 = vmatprep.subr.mxu0 0.0
        %7295 = vmatpush1.xpose.msra.mxu0 0.0
        %7296 = vmatprep.subr.mxu0 0.0
        %7297 = vmatpush1.xpose.msra.mxu0 0.0
        %7298 = vmatprep.mubr.f32.mxu0 0.0
        %7299 = vmatmul.mubr.f32.gmra.mrb[0].mxu0 %v7229
        %v7300 = vpop.f32.mrb[0].mxu0
        %v7301 = vadd.f32 0.0, %v7300
        %v7302 = vpop.f32.mrb[0].mxu0
        %7303 = vdwg.mxu0
        %v7305 = vsel %vm627, %v6597, 0
        %v7308 = vsel %vm627, %v6613, 0
        %7310 = vmatprep.subr.mxu0 0.0
        %7311 = vmatpush1.xpose.msra.mxu0 %v7308
        %7312 = vmatprep.subr.mxu0 0.0
        %7313 = vmatpush1.xpose.msra.mxu0 0.0
        %7314 = vmatprep.subr.mxu0 0.0
        %7315 = vmatpush1.xpose.msra.mxu0 0.0
        %7316 = vmatprep.subr.mxu0 0.0
        %7317 = vmatpush1.xpose.msra.mxu0 0.0
        %7318 = vmatprep.subr.mxu0 0.0
        %7319 = vmatpush1.xpose.msra.mxu0 0.0
        %7320 = vmatprep.subr.mxu0 0.0
        %7321 = vmatpush1.xpose.msra.mxu0 0.0
        %7322 = vmatprep.subr.mxu0 0.0
        %7323 = vmatpush1.xpose.msra.mxu0 0.0
        %7324 = vmatprep.subr.mxu0 0.0
        %7325 = vmatpush1.xpose.msra.mxu0 0.0
        %7326 = vmatprep.subr.mxu0 0.0
        %7327 = vmatpush1.xpose.msra.mxu0 0.0
        %7328 = vmatprep.subr.mxu0 0.0
        %7329 = vmatpush1.xpose.msra.mxu0 0.0
        %7330 = vmatprep.subr.mxu0 0.0
        %7331 = vmatpush1.xpose.msra.mxu0 0.0
        %7332 = vmatprep.subr.mxu0 0.0
        %7333 = vmatpush1.xpose.msra.mxu0 0.0
        %7334 = vmatprep.subr.mxu0 0.0
        %7335 = vmatpush1.xpose.msra.mxu0 0.0
        %7336 = vmatprep.subr.mxu0 0.0
        %7337 = vmatpush1.xpose.msra.mxu0 0.0
        %7338 = vmatprep.subr.mxu0 0.0
        %7339 = vmatpush1.xpose.msra.mxu0 0.0
        %7340 = vmatprep.subr.mxu0 0.0
        %7341 = vmatpush1.xpose.msra.mxu0 0.0
        %7342 = vmatprep.subr.mxu0 0.0
        %7343 = vmatpush1.xpose.msra.mxu0 0.0
        %7344 = vmatprep.subr.mxu0 0.0
        %7345 = vmatpush1.xpose.msra.mxu0 0.0
        %7346 = vmatprep.subr.mxu0 0.0
        %7347 = vmatpush1.xpose.msra.mxu0 0.0
        %7348 = vmatprep.subr.mxu0 0.0
        %7349 = vmatpush1.xpose.msra.mxu0 0.0
        %7350 = vmatprep.subr.mxu0 0.0
        %7351 = vmatpush1.xpose.msra.mxu0 0.0
        %7352 = vmatprep.subr.mxu0 0.0
        %7353 = vmatpush1.xpose.msra.mxu0 0.0
        %7354 = vmatprep.subr.mxu0 0.0
        %7355 = vmatpush1.xpose.msra.mxu0 0.0
        %7356 = vmatprep.subr.mxu0 0.0
        %7357 = vmatpush1.xpose.msra.mxu0 0.0
        %7358 = vmatprep.subr.mxu0 0.0
        %7359 = vmatpush1.xpose.msra.mxu0 0.0
        %7360 = vmatprep.subr.mxu0 0.0
        %7361 = vmatpush1.xpose.msra.mxu0 0.0
        %7362 = vmatprep.subr.mxu0 0.0
        %7363 = vmatpush1.xpose.msra.mxu0 0.0
        %7364 = vmatprep.subr.mxu0 0.0
        %7365 = vmatpush1.xpose.msra.mxu0 0.0
        %7366 = vmatprep.subr.mxu0 0.0
        %7367 = vmatpush1.xpose.msra.mxu0 0.0
        %7368 = vmatprep.subr.mxu0 0.0
        %7369 = vmatpush1.xpose.msra.mxu0 0.0
        %7370 = vmatprep.subr.mxu0 0.0
        %7371 = vmatpush1.xpose.msra.mxu0 0.0
        %7372 = vmatprep.subr.mxu0 0.0
        %7373 = vmatpush1.xpose.msra.mxu0 0.0
        %7374 = vmatprep.mubr.f32.mxu0 0.0
        %7375 = vmatmul.mubr.f32.gmra.mrb[0].mxu0 %v7305
        %v7376 = vpop.f32.mrb[0].mxu0
        %v7377 = vadd.f32 0.0, %v7376
        %v7378 = vpop.f32.mrb[0].mxu0
        %7379 = vdwg.mxu0
        %v7381 = vsel %vm627, %v6598, 0
        %v7384 = vsel %vm627, %v6614, 0
        %7386 = vmatprep.subr.mxu0 0.0
        %7387 = vmatpush1.xpose.msra.mxu0 %v7384
        %7388 = vmatprep.subr.mxu0 0.0
        %7389 = vmatpush1.xpose.msra.mxu0 0.0
        %7390 = vmatprep.subr.mxu0 0.0
        %7391 = vmatpush1.xpose.msra.mxu0 0.0
        %7392 = vmatprep.subr.mxu0 0.0
        %7393 = vmatpush1.xpose.msra.mxu0 0.0
        %7394 = vmatprep.subr.mxu0 0.0
        %7395 = vmatpush1.xpose.msra.mxu0 0.0
        %7396 = vmatprep.subr.mxu0 0.0
        %7397 = vmatpush1.xpose.msra.mxu0 0.0
        %7398 = vmatprep.subr.mxu0 0.0
        %7399 = vmatpush1.xpose.msra.mxu0 0.0
        %7400 = vmatprep.subr.mxu0 0.0
        %7401 = vmatpush1.xpose.msra.mxu0 0.0
        %7402 = vmatprep.subr.mxu0 0.0
        %7403 = vmatpush1.xpose.msra.mxu0 0.0
        %7404 = vmatprep.subr.mxu0 0.0
        %7405 = vmatpush1.xpose.msra.mxu0 0.0
        %7406 = vmatprep.subr.mxu0 0.0
        %7407 = vmatpush1.xpose.msra.mxu0 0.0
        %7408 = vmatprep.subr.mxu0 0.0
        %7409 = vmatpush1.xpose.msra.mxu0 0.0
        %7410 = vmatprep.subr.mxu0 0.0
        %7411 = vmatpush1.xpose.msra.mxu0 0.0
        %7412 = vmatprep.subr.mxu0 0.0
        %7413 = vmatpush1.xpose.msra.mxu0 0.0
        %7414 = vmatprep.subr.mxu0 0.0
        %7415 = vmatpush1.xpose.msra.mxu0 0.0
        %7416 = vmatprep.subr.mxu0 0.0
        %7417 = vmatpush1.xpose.msra.mxu0 0.0
        %7418 = vmatprep.subr.mxu0 0.0
        %7419 = vmatpush1.xpose.msra.mxu0 0.0
        %7420 = vmatprep.subr.mxu0 0.0
        %7421 = vmatpush1.xpose.msra.mxu0 0.0
        %7422 = vmatprep.subr.mxu0 0.0
        %7423 = vmatpush1.xpose.msra.mxu0 0.0
        %7424 = vmatprep.subr.mxu0 0.0
        %7425 = vmatpush1.xpose.msra.mxu0 0.0
        %7426 = vmatprep.subr.mxu0 0.0
        %7427 = vmatpush1.xpose.msra.mxu0 0.0
        %7428 = vmatprep.subr.mxu0 0.0
        %7429 = vmatpush1.xpose.msra.mxu0 0.0
        %7430 = vmatprep.subr.mxu0 0.0
        %7431 = vmatpush1.xpose.msra.mxu0 0.0
        %7432 = vmatprep.subr.mxu0 0.0
        %7433 = vmatpush1.xpose.msra.mxu0 0.0
        %7434 = vmatprep.subr.mxu0 0.0
        %7435 = vmatpush1.xpose.msra.mxu0 0.0
        %7436 = vmatprep.subr.mxu0 0.0
        %7437 = vmatpush1.xpose.msra.mxu0 0.0
        %7438 = vmatprep.subr.mxu0 0.0
        %7439 = vmatpush1.xpose.msra.mxu0 0.0
        %7440 = vmatprep.subr.mxu0 0.0
        %7441 = vmatpush1.xpose.msra.mxu0 0.0
        %7442 = vmatprep.subr.mxu0 0.0
        %7443 = vmatpush1.xpose.msra.mxu0 0.0
        %7444 = vmatprep.subr.mxu0 0.0
        %7445 = vmatpush1.xpose.msra.mxu0 0.0
        %7446 = vmatprep.subr.mxu0 0.0
        %7447 = vmatpush1.xpose.msra.mxu0 0.0
        %7448 = vmatprep.subr.mxu0 0.0
        %7449 = vmatpush1.xpose.msra.mxu0 0.0
        %7450 = vmatprep.mubr.f32.mxu0 0.0
        %7451 = vmatmul.mubr.f32.gmra.mrb[0].mxu0 %v7381
        %v7452 = vpop.f32.mrb[0].mxu0
        %v7453 = vadd.f32 0.0, %v7452
        %v7454 = vpop.f32.mrb[0].mxu0
        %7455 = vdwg.mxu0
        %v7457 = vsel %vm627, %v6599, 0
        %v7460 = vsel %vm627, %v6615, 0
        %7462 = vmatprep.subr.mxu0 0.0
        %7463 = vmatpush1.xpose.msra.mxu0 %v7460
        %7464 = vmatprep.subr.mxu0 0.0
        %7465 = vmatpush1.xpose.msra.mxu0 0.0
        %7466 = vmatprep.subr.mxu0 0.0
        %7467 = vmatpush1.xpose.msra.mxu0 0.0
        %7468 = vmatprep.subr.mxu0 0.0
        %7469 = vmatpush1.xpose.msra.mxu0 0.0
        %7470 = vmatprep.subr.mxu0 0.0
        %7471 = vmatpush1.xpose.msra.mxu0 0.0
        %7472 = vmatprep.subr.mxu0 0.0
        %7473 = vmatpush1.xpose.msra.mxu0 0.0
        %7474 = vmatprep.subr.mxu0 0.0
        %7475 = vmatpush1.xpose.msra.mxu0 0.0
        %7476 = vmatprep.subr.mxu0 0.0
        %7477 = vmatpush1.xpose.msra.mxu0 0.0
        %7478 = vmatprep.subr.mxu0 0.0
        %7479 = vmatpush1.xpose.msra.mxu0 0.0
        %7480 = vmatprep.subr.mxu0 0.0
        %7481 = vmatpush1.xpose.msra.mxu0 0.0
        %7482 = vmatprep.subr.mxu0 0.0
        %7483 = vmatpush1.xpose.msra.mxu0 0.0
        %7484 = vmatprep.subr.mxu0 0.0
        %7485 = vmatpush1.xpose.msra.mxu0 0.0
        %7486 = vmatprep.subr.mxu0 0.0
        %7487 = vmatpush1.xpose.msra.mxu0 0.0
        %7488 = vmatprep.subr.mxu0 0.0
        %7489 = vmatpush1.xpose.msra.mxu0 0.0
        %7490 = vmatprep.subr.mxu0 0.0
        %7491 = vmatpush1.xpose.msra.mxu0 0.0
        %7492 = vmatprep.subr.mxu0 0.0
        %7493 = vmatpush1.xpose.msra.mxu0 0.0
        %7494 = vmatprep.subr.mxu0 0.0
        %7495 = vmatpush1.xpose.msra.mxu0 0.0
        %7496 = vmatprep.subr.mxu0 0.0
        %7497 = vmatpush1.xpose.msra.mxu0 0.0
        %7498 = vmatprep.subr.mxu0 0.0
        %7499 = vmatpush1.xpose.msra.mxu0 0.0
        %7500 = vmatprep.subr.mxu0 0.0
        %7501 = vmatpush1.xpose.msra.mxu0 0.0
        %7502 = vmatprep.subr.mxu0 0.0
        %7503 = vmatpush1.xpose.msra.mxu0 0.0
        %7504 = vmatprep.subr.mxu0 0.0
        %7505 = vmatpush1.xpose.msra.mxu0 0.0
        %7506 = vmatprep.subr.mxu0 0.0
        %7507 = vmatpush1.xpose.msra.mxu0 0.0
        %7508 = vmatprep.subr.mxu0 0.0
        %7509 = vmatpush1.xpose.msra.mxu0 0.0
        %7510 = vmatprep.subr.mxu0 0.0
        %7511 = vmatpush1.xpose.msra.mxu0 0.0
        %7512 = vmatprep.subr.mxu0 0.0
        %7513 = vmatpush1.xpose.msra.mxu0 0.0
        %7514 = vmatprep.subr.mxu0 0.0
        %7515 = vmatpush1.xpose.msra.mxu0 0.0
        %7516 = vmatprep.subr.mxu0 0.0
        %7517 = vmatpush1.xpose.msra.mxu0 0.0
        %7518 = vmatprep.subr.mxu0 0.0
        %7519 = vmatpush1.xpose.msra.mxu0 0.0
        %7520 = vmatprep.subr.mxu0 0.0
        %7521 = vmatpush1.xpose.msra.mxu0 0.0
        %7522 = vmatprep.subr.mxu0 0.0
        %7523 = vmatpush1.xpose.msra.mxu0 0.0
        %7524 = vmatprep.subr.mxu0 0.0
        %7525 = vmatpush1.xpose.msra.mxu0 0.0
        %7526 = vmatprep.mubr.f32.mxu0 0.0
        %7527 = vmatmul.mubr.f32.gmra.mrb[0].mxu0 %v7457
        %v7528 = vpop.f32.mrb[0].mxu0
        %v7529 = vadd.f32 0.0, %v7528
        %v7530 = vpop.f32.mrb[0].mxu0
        %7531 = vdwg.mxu0
        %v7533 = vsel %vm627, %v6600, 0
        %v7536 = vsel %vm627, %v6616, 0
        %7538 = vmatprep.subr.mxu0 0.0
        %7539 = vmatpush1.xpose.msra.mxu0 %v7536
        %7540 = vmatprep.subr.mxu0 0.0
        %7541 = vmatpush1.xpose.msra.mxu0 0.0
        %7542 = vmatprep.subr.mxu0 0.0
        %7543 = vmatpush1.xpose.msra.mxu0 0.0
        %7544 = vmatprep.subr.mxu0 0.0
        %7545 = vmatpush1.xpose.msra.mxu0 0.0
        %7546 = vmatprep.subr.mxu0 0.0
        %7547 = vmatpush1.xpose.msra.mxu0 0.0
        %7548 = vmatprep.subr.mxu0 0.0
        %7549 = vmatpush1.xpose.msra.mxu0 0.0
        %7550 = vmatprep.subr.mxu0 0.0
        %7551 = vmatpush1.xpose.msra.mxu0 0.0
        %7552 = vmatprep.subr.mxu0 0.0
        %7553 = vmatpush1.xpose.msra.mxu0 0.0
        %7554 = vmatprep.subr.mxu0 0.0
        %7555 = vmatpush1.xpose.msra.mxu0 0.0
        %7556 = vmatprep.subr.mxu0 0.0
        %7557 = vmatpush1.xpose.msra.mxu0 0.0
        %7558 = vmatprep.subr.mxu0 0.0
        %7559 = vmatpush1.xpose.msra.mxu0 0.0
        %7560 = vmatprep.subr.mxu0 0.0
        %7561 = vmatpush1.xpose.msra.mxu0 0.0
        %7562 = vmatprep.subr.mxu0 0.0
        %7563 = vmatpush1.xpose.msra.mxu0 0.0
        %7564 = vmatprep.subr.mxu0 0.0
        %7565 = vmatpush1.xpose.msra.mxu0 0.0
        %7566 = vmatprep.subr.mxu0 0.0
        %7567 = vmatpush1.xpose.msra.mxu0 0.0
        %7568 = vmatprep.subr.mxu0 0.0
        %7569 = vmatpush1.xpose.msra.mxu0 0.0
        %7570 = vmatprep.subr.mxu0 0.0
        %7571 = vmatpush1.xpose.msra.mxu0 0.0
        %7572 = vmatprep.subr.mxu0 0.0
        %7573 = vmatpush1.xpose.msra.mxu0 0.0
        %7574 = vmatprep.subr.mxu0 0.0
        %7575 = vmatpush1.xpose.msra.mxu0 0.0
        %7576 = vmatprep.subr.mxu0 0.0
        %7577 = vmatpush1.xpose.msra.mxu0 0.0
        %7578 = vmatprep.subr.mxu0 0.0
        %7579 = vmatpush1.xpose.msra.mxu0 0.0
        %7580 = vmatprep.subr.mxu0 0.0
        %7581 = vmatpush1.xpose.msra.mxu0 0.0
        %7582 = vmatprep.subr.mxu0 0.0
        %7583 = vmatpush1.xpose.msra.mxu0 0.0
        %7584 = vmatprep.subr.mxu0 0.0
        %7585 = vmatpush1.xpose.msra.mxu0 0.0
        %7586 = vmatprep.subr.mxu0 0.0
        %7587 = vmatpush1.xpose.msra.mxu0 0.0
        %7588 = vmatprep.subr.mxu0 0.0
        %7589 = vmatpush1.xpose.msra.mxu0 0.0
        %7590 = vmatprep.subr.mxu0 0.0
        %7591 = vmatpush1.xpose.msra.mxu0 0.0
        %7592 = vmatprep.subr.mxu0 0.0
        %7593 = vmatpush1.xpose.msra.mxu0 0.0
        %7594 = vmatprep.subr.mxu0 0.0
        %7595 = vmatpush1.xpose.msra.mxu0 0.0
        %7596 = vmatprep.subr.mxu0 0.0
        %7597 = vmatpush1.xpose.msra.mxu0 0.0
        %7598 = vmatprep.subr.mxu0 0.0
        %7599 = vmatpush1.xpose.msra.mxu0 0.0
        %7600 = vmatprep.subr.mxu0 0.0
        %7601 = vmatpush1.xpose.msra.mxu0 0.0
        %7602 = vmatprep.mubr.f32.mxu0 0.0
        %7603 = vmatmul.mubr.f32.gmra.mrb[0].mxu0 %v7533
        %v7604 = vpop.f32.mrb[0].mxu0
        %v7605 = vadd.f32 0.0, %v7604
        %v7606 = vpop.f32.mrb[0].mxu0
        %7607 = vdwg.mxu0
        %v7609 = vsel %vm627, %v6601, 0
        %v7612 = vsel %vm627, %v6617, 0
        %7614 = vmatprep.subr.mxu0 0.0
        %7615 = vmatpush1.xpose.msra.mxu0 %v7612
        %7616 = vmatprep.subr.mxu0 0.0
        %7617 = vmatpush1.xpose.msra.mxu0 0.0
        %7618 = vmatprep.subr.mxu0 0.0
        %7619 = vmatpush1.xpose.msra.mxu0 0.0
        %7620 = vmatprep.subr.mxu0 0.0
        %7621 = vmatpush1.xpose.msra.mxu0 0.0
        %7622 = vmatprep.subr.mxu0 0.0
        %7623 = vmatpush1.xpose.msra.mxu0 0.0
        %7624 = vmatprep.subr.mxu0 0.0
        %7625 = vmatpush1.xpose.msra.mxu0 0.0
        %7626 = vmatprep.subr.mxu0 0.0
        %7627 = vmatpush1.xpose.msra.mxu0 0.0
        %7628 = vmatprep.subr.mxu0 0.0
        %7629 = vmatpush1.xpose.msra.mxu0 0.0
        %7630 = vmatprep.subr.mxu0 0.0
        %7631 = vmatpush1.xpose.msra.mxu0 0.0
        %7632 = vmatprep.subr.mxu0 0.0
        %7633 = vmatpush1.xpose.msra.mxu0 0.0
        %7634 = vmatprep.subr.mxu0 0.0
        %7635 = vmatpush1.xpose.msra.mxu0 0.0
        %7636 = vmatprep.subr.mxu0 0.0
        %7637 = vmatpush1.xpose.msra.mxu0 0.0
        %7638 = vmatprep.subr.mxu0 0.0
        %7639 = vmatpush1.xpose.msra.mxu0 0.0
        %7640 = vmatprep.subr.mxu0 0.0
        %7641 = vmatpush1.xpose.msra.mxu0 0.0
        %7642 = vmatprep.subr.mxu0 0.0
        %7643 = vmatpush1.xpose.msra.mxu0 0.0
        %7644 = vmatprep.subr.mxu0 0.0
        %7645 = vmatpush1.xpose.msra.mxu0 0.0
        %7646 = vmatprep.subr.mxu0 0.0
        %7647 = vmatpush1.xpose.msra.mxu0 0.0
        %7648 = vmatprep.subr.mxu0 0.0
        %7649 = vmatpush1.xpose.msra.mxu0 0.0
        %7650 = vmatprep.subr.mxu0 0.0
        %7651 = vmatpush1.xpose.msra.mxu0 0.0
        %7652 = vmatprep.subr.mxu0 0.0
        %7653 = vmatpush1.xpose.msra.mxu0 0.0
        %7654 = vmatprep.subr.mxu0 0.0
        %7655 = vmatpush1.xpose.msra.mxu0 0.0
        %7656 = vmatprep.subr.mxu0 0.0
        %7657 = vmatpush1.xpose.msra.mxu0 0.0
        %7658 = vmatprep.subr.mxu0 0.0
        %7659 = vmatpush1.xpose.msra.mxu0 0.0
        %7660 = vmatprep.subr.mxu0 0.0
        %7661 = vmatpush1.xpose.msra.mxu0 0.0
        %7662 = vmatprep.subr.mxu0 0.0
        %7663 = vmatpush1.xpose.msra.mxu0 0.0
        %7664 = vmatprep.subr.mxu0 0.0
        %7665 = vmatpush1.xpose.msra.mxu0 0.0
        %7666 = vmatprep.subr.mxu0 0.0
        %7667 = vmatpush1.xpose.msra.mxu0 0.0
        %7668 = vmatprep.subr.mxu0 0.0
        %7669 = vmatpush1.xpose.msra.mxu0 0.0
        %7670 = vmatprep.subr.mxu0 0.0
        %7671 = vmatpush1.xpose.msra.mxu0 0.0
        %7672 = vmatprep.subr.mxu0 0.0
        %7673 = vmatpush1.xpose.msra.mxu0 0.0
        %7674 = vmatprep.subr.mxu0 0.0
        %7675 = vmatpush1.xpose.msra.mxu0 0.0
        %7676 = vmatprep.subr.mxu0 0.0
        %7677 = vmatpush1.xpose.msra.mxu0 0.0
        %7678 = vmatprep.mubr.f32.mxu0 0.0
        %7679 = vmatmul.mubr.f32.gmra.mrb[0].mxu0 %v7609
        %v7680 = vpop.f32.mrb[0].mxu0
        %v7681 = vadd.f32 0.0, %v7680
        %v7682 = vpop.f32.mrb[0].mxu0
        %7683 = vdwg.mxu0
        %v7685 = vsel %vm627, %v6602, 0
        %v7688 = vsel %vm627, %v6618, 0
        %7690 = vmatprep.subr.mxu0 0.0
        %7691 = vmatpush1.xpose.msra.mxu0 %v7688
        %7692 = vmatprep.subr.mxu0 0.0
        %7693 = vmatpush1.xpose.msra.mxu0 0.0
        %7694 = vmatprep.subr.mxu0 0.0
        %7695 = vmatpush1.xpose.msra.mxu0 0.0
        %7696 = vmatprep.subr.mxu0 0.0
        %7697 = vmatpush1.xpose.msra.mxu0 0.0
        %7698 = vmatprep.subr.mxu0 0.0
        %7699 = vmatpush1.xpose.msra.mxu0 0.0
        %7700 = vmatprep.subr.mxu0 0.0
        %7701 = vmatpush1.xpose.msra.mxu0 0.0
        %7702 = vmatprep.subr.mxu0 0.0
        %7703 = vmatpush1.xpose.msra.mxu0 0.0
        %7704 = vmatprep.subr.mxu0 0.0
        %7705 = vmatpush1.xpose.msra.mxu0 0.0
        %7706 = vmatprep.subr.mxu0 0.0
        %7707 = vmatpush1.xpose.msra.mxu0 0.0
        %7708 = vmatprep.subr.mxu0 0.0
        %7709 = vmatpush1.xpose.msra.mxu0 0.0
        %7710 = vmatprep.subr.mxu0 0.0
        %7711 = vmatpush1.xpose.msra.mxu0 0.0
        %7712 = vmatprep.subr.mxu0 0.0
        %7713 = vmatpush1.xpose.msra.mxu0 0.0
        %7714 = vmatprep.subr.mxu0 0.0
        %7715 = vmatpush1.xpose.msra.mxu0 0.0
        %7716 = vmatprep.subr.mxu0 0.0
        %7717 = vmatpush1.xpose.msra.mxu0 0.0
        %7718 = vmatprep.subr.mxu0 0.0
        %7719 = vmatpush1.xpose.msra.mxu0 0.0
        %7720 = vmatprep.subr.mxu0 0.0
        %7721 = vmatpush1.xpose.msra.mxu0 0.0
        %7722 = vmatprep.subr.mxu0 0.0
        %7723 = vmatpush1.xpose.msra.mxu0 0.0
        %7724 = vmatprep.subr.mxu0 0.0
        %7725 = vmatpush1.xpose.msra.mxu0 0.0
        %7726 = vmatprep.subr.mxu0 0.0
        %7727 = vmatpush1.xpose.msra.mxu0 0.0
        %7728 = vmatprep.subr.mxu0 0.0
        %7729 = vmatpush1.xpose.msra.mxu0 0.0
        %7730 = vmatprep.subr.mxu0 0.0
        %7731 = vmatpush1.xpose.msra.mxu0 0.0
        %7732 = vmatprep.subr.mxu0 0.0
        %7733 = vmatpush1.xpose.msra.mxu0 0.0
        %7734 = vmatprep.subr.mxu0 0.0
        %7735 = vmatpush1.xpose.msra.mxu0 0.0
        %7736 = vmatprep.subr.mxu0 0.0
        %7737 = vmatpush1.xpose.msra.mxu0 0.0
        %7738 = vmatprep.subr.mxu0 0.0
        %7739 = vmatpush1.xpose.msra.mxu0 0.0
        %7740 = vmatprep.subr.mxu0 0.0
        %7741 = vmatpush1.xpose.msra.mxu0 0.0
        %7742 = vmatprep.subr.mxu0 0.0
        %7743 = vmatpush1.xpose.msra.mxu0 0.0
        %7744 = vmatprep.subr.mxu0 0.0
        %7745 = vmatpush1.xpose.msra.mxu0 0.0
        %7746 = vmatprep.subr.mxu0 0.0
        %7747 = vmatpush1.xpose.msra.mxu0 0.0
        %7748 = vmatprep.subr.mxu0 0.0
        %7749 = vmatpush1.xpose.msra.mxu0 0.0
        %7750 = vmatprep.subr.mxu0 0.0
        %7751 = vmatpush1.xpose.msra.mxu0 0.0
        %7752 = vmatprep.subr.mxu0 0.0
        %7753 = vmatpush1.xpose.msra.mxu0 0.0
        %7754 = vmatprep.mubr.f32.mxu0 0.0
        %7755 = vmatmul.mubr.f32.gmra.mrb[0].mxu0 %v7685
        %v7756 = vpop.f32.mrb[0].mxu0
        %v7757 = vadd.f32 0.0, %v7756
        %v7758 = vpop.f32.mrb[0].mxu0
        %7759 = vdwg.mxu0
        %v7761 = vsel %vm627, %v6603, 0
        %v7764 = vsel %vm627, %v6619, 0
        %7766 = vmatprep.subr.mxu0 0.0
        %7767 = vmatpush1.xpose.msra.mxu0 %v7764
        %7768 = vmatprep.subr.mxu0 0.0
        %7769 = vmatpush1.xpose.msra.mxu0 0.0
        %7770 = vmatprep.subr.mxu0 0.0
        %7771 = vmatpush1.xpose.msra.mxu0 0.0
        %7772 = vmatprep.subr.mxu0 0.0
        %7773 = vmatpush1.xpose.msra.mxu0 0.0
        %7774 = vmatprep.subr.mxu0 0.0
        %7775 = vmatpush1.xpose.msra.mxu0 0.0
        %7776 = vmatprep.subr.mxu0 0.0
        %7777 = vmatpush1.xpose.msra.mxu0 0.0
        %7778 = vmatprep.subr.mxu0 0.0
        %7779 = vmatpush1.xpose.msra.mxu0 0.0
        %7780 = vmatprep.subr.mxu0 0.0
        %7781 = vmatpush1.xpose.msra.mxu0 0.0
        %7782 = vmatprep.subr.mxu0 0.0
        %7783 = vmatpush1.xpose.msra.mxu0 0.0
        %7784 = vmatprep.subr.mxu0 0.0
        %7785 = vmatpush1.xpose.msra.mxu0 0.0
        %7786 = vmatprep.subr.mxu0 0.0
        %7787 = vmatpush1.xpose.msra.mxu0 0.0
        %7788 = vmatprep.subr.mxu0 0.0
        %7789 = vmatpush1.xpose.msra.mxu0 0.0
        %7790 = vmatprep.subr.mxu0 0.0
        %7791 = vmatpush1.xpose.msra.mxu0 0.0
        %7792 = vmatprep.subr.mxu0 0.0
        %7793 = vmatpush1.xpose.msra.mxu0 0.0
        %7794 = vmatprep.subr.mxu0 0.0
        %7795 = vmatpush1.xpose.msra.mxu0 0.0
        %7796 = vmatprep.subr.mxu0 0.0
        %7797 = vmatpush1.xpose.msra.mxu0 0.0
        %7798 = vmatprep.subr.mxu0 0.0
        %7799 = vmatpush1.xpose.msra.mxu0 0.0
        %7800 = vmatprep.subr.mxu0 0.0
        %7801 = vmatpush1.xpose.msra.mxu0 0.0
        %7802 = vmatprep.subr.mxu0 0.0
        %7803 = vmatpush1.xpose.msra.mxu0 0.0
        %7804 = vmatprep.subr.mxu0 0.0
        %7805 = vmatpush1.xpose.msra.mxu0 0.0
        %7806 = vmatprep.subr.mxu0 0.0
        %7807 = vmatpush1.xpose.msra.mxu0 0.0
        %7808 = vmatprep.subr.mxu0 0.0
        %7809 = vmatpush1.xpose.msra.mxu0 0.0
        %7810 = vmatprep.subr.mxu0 0.0
        %7811 = vmatpush1.xpose.msra.mxu0 0.0
        %7812 = vmatprep.subr.mxu0 0.0
        %7813 = vmatpush1.xpose.msra.mxu0 0.0
        %7814 = vmatprep.subr.mxu0 0.0
        %7815 = vmatpush1.xpose.msra.mxu0 0.0
        %7816 = vmatprep.subr.mxu0 0.0
        %7817 = vmatpush1.xpose.msra.mxu0 0.0
        %7818 = vmatprep.subr.mxu0 0.0
        %7819 = vmatpush1.xpose.msra.mxu0 0.0
        %7820 = vmatprep.subr.mxu0 0.0
        %7821 = vmatpush1.xpose.msra.mxu0 0.0
        %7822 = vmatprep.subr.mxu0 0.0
        %7823 = vmatpush1.xpose.msra.mxu0 0.0
        %7824 = vmatprep.subr.mxu0 0.0
        %7825 = vmatpush1.xpose.msra.mxu0 0.0
        %7826 = vmatprep.subr.mxu0 0.0
        %7827 = vmatpush1.xpose.msra.mxu0 0.0
        %7828 = vmatprep.subr.mxu0 0.0
        %7829 = vmatpush1.xpose.msra.mxu0 0.0
        %7830 = vmatprep.mubr.f32.mxu0 0.0
        %7831 = vmatmul.mubr.f32.gmra.mrb[0].mxu0 %v7761
        %v7832 = vpop.f32.mrb[0].mxu0
        %v7833 = vadd.f32 0.0, %v7832
        %v7834 = vpop.f32.mrb[0].mxu0
        %7835 = vdwg.mxu0
        %vm7836 = vcmp.gt.f32.partialorder %v6693, 0.0
        %vm7837 = vcmp.gt.f32.partialorder %v6769, 0.0
        %vm7838 = vcmp.gt.f32.partialorder %v6845, 0.0
        %vm7839 = vcmp.gt.f32.partialorder %v6921, 0.0
        %vm7840 = vcmp.gt.f32.partialorder %v6997, 0.0
        %vm7841 = vcmp.gt.f32.partialorder %v7073, 0.0
        %vm7842 = vcmp.gt.f32.partialorder %v7149, 0.0
        %vm7843 = vcmp.gt.f32.partialorder %v7225, 0.0
        %vm7844 = vcmp.gt.f32.partialorder %v7301, 0.0
        %vm7845 = vcmp.gt.f32.partialorder %v7377, 0.0
        %vm7846 = vcmp.gt.f32.partialorder %v7453, 0.0
        %vm7847 = vcmp.gt.f32.partialorder %v7529, 0.0
        %vm7848 = vcmp.gt.f32.partialorder %v7605, 0.0
        %vm7849 = vcmp.gt.f32.partialorder %v7681, 0.0
        %vm7850 = vcmp.gt.f32.partialorder %v7757, 0.0
        %vm7851 = vcmp.gt.f32.partialorder %v7833, 0.0
        %v7852 = vmul.f32 %v6693, 0.2
        %v7853 = vmul.f32 %v6769, 0.2
        %v7854 = vmul.f32 %v6845, 0.2
        %v7855 = vmul.f32 %v6921, 0.2
        %v7856 = vmul.f32 %v6997, 0.2
        %v7857 = vmul.f32 %v7073, 0.2
        %v7858 = vmul.f32 %v7149, 0.2
        %v7859 = vmul.f32 %v7225, 0.2
        %v7860 = vmul.f32 %v7301, 0.2
        %v7861 = vmul.f32 %v7377, 0.2
        %v7862 = vmul.f32 %v7453, 0.2
        %v7863 = vmul.f32 %v7529, 0.2
        %v7864 = vmul.f32 %v7605, 0.2
        %v7865 = vmul.f32 %v7681, 0.2
        %v7866 = vmul.f32 %v7757, 0.2
        %v7867 = vmul.f32 %v7833, 0.2
        %v7868 = vsel %vm7836, %v6693, %v7852
        %v7869 = vsel %vm7837, %v6769, %v7853
        %v7870 = vsel %vm7838, %v6845, %v7854
        %v7871 = vsel %vm7839, %v6921, %v7855
        %v7872 = vsel %vm7840, %v6997, %v7856
        %v7873 = vsel %vm7841, %v7073, %v7857
        %v7874 = vsel %vm7842, %v7149, %v7858
        %v7875 = vsel %vm7843, %v7225, %v7859
        %v7876 = vsel %vm7844, %v7301, %v7860
        %v7877 = vsel %vm7845, %v7377, %v7861
        %v7878 = vsel %vm7846, %v7453, %v7862
        %v7879 = vsel %vm7847, %v7529, %v7863
        %v7880 = vsel %vm7848, %v7605, %v7864
        %v7881 = vsel %vm7849, %v7681, %v7865
        %v7882 = vsel %vm7850, %v7757, %v7866
        %v7883 = vsel %vm7851, %v7833, %v7867
        %v7884 = vsel %vm1892, %v7868, -9e+15
        %v7885 = vsel %vm1893, %v7869, -9e+15
        %v7886 = vsel %vm1894, %v7870, -9e+15
        %v7887 = vsel %vm1895, %v7871, -9e+15
        %v7888 = vsel %vm1896, %v7872, -9e+15
        %v7889 = vsel %vm1897, %v7873, -9e+15
        %v7890 = vsel %vm1898, %v7874, -9e+15
        %v7891 = vsel %vm1899, %v7875, -9e+15
        %v7892 = vsel %vm1900, %v7876, -9e+15
        %v7893 = vsel %vm1901, %v7877, -9e+15
        %v7894 = vsel %vm1902, %v7878, -9e+15
        %v7895 = vsel %vm1903, %v7879, -9e+15
        %v7896 = vsel %vm1904, %v7880, -9e+15
        %v7897 = vsel %vm1905, %v7881, -9e+15
        %v7898 = vsel %vm1906, %v7882, -9e+15
        %v7899 = vsel %vm1907, %v7883, -9e+15
        %v7900 = vsel %vm1924, %v7884, -inf
        %7901 = vmax.xlane.f32.xlu0 %v7900
        %v7902 = vpop.xlane.xlu0 %7901
        %v7903 = vsel %vm1924, %v7885, -inf
        %7904 = vmax.xlane.f32.xlu0 %v7903
        %v7905 = vpop.xlane.xlu0 %7904
        %v7906 = vsel %vm1924, %v7886, -inf
        %7907 = vmax.xlane.f32.xlu0 %v7906
        %v7908 = vpop.xlane.xlu0 %7907
        %v7909 = vsel %vm1924, %v7887, -inf
        %7910 = vmax.xlane.f32.xlu0 %v7909
        %v7911 = vpop.xlane.xlu0 %7910
        %v7912 = vsel %vm1924, %v7888, -inf
        %7913 = vmax.xlane.f32.xlu0 %v7912
        %v7914 = vpop.xlane.xlu0 %7913
        %v7915 = vsel %vm1924, %v7889, -inf
        %7916 = vmax.xlane.f32.xlu0 %v7915
        %v7917 = vpop.xlane.xlu0 %7916
        %v7918 = vsel %vm1924, %v7890, -inf
        %7919 = vmax.xlane.f32.xlu0 %v7918
        %v7920 = vpop.xlane.xlu0 %7919
        %v7921 = vsel %vm1924, %v7891, -inf
        %7922 = vmax.xlane.f32.xlu0 %v7921
        %v7923 = vpop.xlane.xlu0 %7922
        %v7924 = vsel %vm1924, %v7892, -inf
        %7925 = vmax.xlane.f32.xlu0 %v7924
        %v7926 = vpop.xlane.xlu0 %7925
        %v7927 = vsel %vm1924, %v7893, -inf
        %7928 = vmax.xlane.f32.xlu0 %v7927
        %v7929 = vpop.xlane.xlu0 %7928
        %v7930 = vsel %vm1924, %v7894, -inf
        %7931 = vmax.xlane.f32.xlu0 %v7930
        %v7932 = vpop.xlane.xlu0 %7931
        %v7933 = vsel %vm1924, %v7895, -inf
        %7934 = vmax.xlane.f32.xlu0 %v7933
        %v7935 = vpop.xlane.xlu0 %7934
        %v7936 = vsel %vm1924, %v7896, -inf
        %7937 = vmax.xlane.f32.xlu0 %v7936
        %v7938 = vpop.xlane.xlu0 %7937
        %v7939 = vsel %vm1924, %v7897, -inf
        %7940 = vmax.xlane.f32.xlu0 %v7939
        %v7941 = vpop.xlane.xlu0 %7940
        %v7942 = vsel %vm1924, %v7898, -inf
        %7943 = vmax.xlane.f32.xlu0 %v7942
        %v7944 = vpop.xlane.xlu0 %7943
        %v7945 = vsel %vm1924, %v7899, -inf
        %7946 = vmax.xlane.f32.xlu0 %v7945
        %v7947 = vpop.xlane.xlu0 %7946
        %v7948 = vsub.f32 %v7884, %v7902
        %v7949 = vsub.f32 %v7885, %v7905
        %v7950 = vsub.f32 %v7886, %v7908
        %v7951 = vsub.f32 %v7887, %v7911
        %v7952 = vsub.f32 %v7888, %v7914
        %v7953 = vsub.f32 %v7889, %v7917
        %v7954 = vsub.f32 %v7890, %v7920
        %v7955 = vsub.f32 %v7891, %v7923
        %v7956 = vsub.f32 %v7892, %v7926
        %v7957 = vsub.f32 %v7893, %v7929
        %v7958 = vsub.f32 %v7894, %v7932
        %v7959 = vsub.f32 %v7895, %v7935
        %v7960 = vsub.f32 %v7896, %v7938
        %v7961 = vsub.f32 %v7897, %v7941
        %v7962 = vsub.f32 %v7898, %v7944
        %v7963 = vsub.f32 %v7899, %v7947
        %v7964 = vmul.f32 %v7948, 1.442695
        %v7965 = vpow.pop %v7964
        %v7966 = vmul.f32 %v7949, 1.442695
        %v7967 = vpow.pop %v7966
        %v7968 = vmul.f32 %v7950, 1.442695
        %v7969 = vpow.pop %v7968
        %v7970 = vmul.f32 %v7951, 1.442695
        %v7971 = vpow.pop %v7970
        %v7972 = vmul.f32 %v7952, 1.442695
        %v7973 = vpow.pop %v7972
        %v7974 = vmul.f32 %v7953, 1.442695
        %v7975 = vpow.pop %v7974
        %v7976 = vmul.f32 %v7954, 1.442695
        %v7977 = vpow.pop %v7976
        %v7978 = vmul.f32 %v7955, 1.442695
        %v7979 = vpow.pop %v7978
        %v7980 = vmul.f32 %v7956, 1.442695
        %v7981 = vpow.pop %v7980
        %v7982 = vmul.f32 %v7957, 1.442695
        %v7983 = vpow.pop %v7982
        %v7984 = vmul.f32 %v7958, 1.442695
        %v7985 = vpow.pop %v7984
        %v7986 = vmul.f32 %v7959, 1.442695
        %v7987 = vpow.pop %v7986
        %v7988 = vmul.f32 %v7960, 1.442695
        %v7989 = vpow.pop %v7988
        %v7990 = vmul.f32 %v7961, 1.442695
        %v7991 = vpow.pop %v7990
        %v7992 = vmul.f32 %v7962, 1.442695
        %v7993 = vpow.pop %v7992
        %v7994 = vmul.f32 %v7963, 1.442695
        %v7995 = vpow.pop %v7994
        %v7996 = vsel %vm1924, %v7965, 0.0
        %7997 = vadd.xlane.f32.xlu0 %v7996
        %v7998 = vpop.xlane.xlu0 %7997
        %v7999 = vsel %vm1924, %v7967, 0.0
        %8000 = vadd.xlane.f32.xlu0 %v7999
        %v8001 = vpop.xlane.xlu0 %8000
        %v8002 = vsel %vm1924, %v7969, 0.0
        %8003 = vadd.xlane.f32.xlu0 %v8002
        %v8004 = vpop.xlane.xlu0 %8003
        %v8005 = vsel %vm1924, %v7971, 0.0
        %8006 = vadd.xlane.f32.xlu0 %v8005
        %v8007 = vpop.xlane.xlu0 %8006
        %v8008 = vsel %vm1924, %v7973, 0.0
        %8009 = vadd.xlane.f32.xlu0 %v8008
        %v8010 = vpop.xlane.xlu0 %8009
        %v8011 = vsel %vm1924, %v7975, 0.0
        %8012 = vadd.xlane.f32.xlu0 %v8011
        %v8013 = vpop.xlane.xlu0 %8012
        %v8014 = vsel %vm1924, %v7977, 0.0
        %8015 = vadd.xlane.f32.xlu0 %v8014
        %v8016 = vpop.xlane.xlu0 %8015
        %v8017 = vsel %vm1924, %v7979, 0.0
        %8018 = vadd.xlane.f32.xlu0 %v8017
        %v8019 = vpop.xlane.xlu0 %8018
        %v8020 = vsel %vm1924, %v7981, 0.0
        %8021 = vadd.xlane.f32.xlu0 %v8020
        %v8022 = vpop.xlane.xlu0 %8021
        %v8023 = vsel %vm1924, %v7983, 0.0
        %8024 = vadd.xlane.f32.xlu0 %v8023
        %v8025 = vpop.xlane.xlu0 %8024
        %v8026 = vsel %vm1924, %v7985, 0.0
        %8027 = vadd.xlane.f32.xlu0 %v8026
        %v8028 = vpop.xlane.xlu0 %8027
        %v8029 = vsel %vm1924, %v7987, 0.0
        %8030 = vadd.xlane.f32.xlu0 %v8029
        %v8031 = vpop.xlane.xlu0 %8030
        %v8032 = vsel %vm1924, %v7989, 0.0
        %8033 = vadd.xlane.f32.xlu0 %v8032
        %v8034 = vpop.xlane.xlu0 %8033
        %v8035 = vsel %vm1924, %v7991, 0.0
        %8036 = vadd.xlane.f32.xlu0 %v8035
        %v8037 = vpop.xlane.xlu0 %8036
        %v8038 = vsel %vm1924, %v7993, 0.0
        %8039 = vadd.xlane.f32.xlu0 %v8038
        %v8040 = vpop.xlane.xlu0 %8039
        %v8041 = vsel %vm1924, %v7995, 0.0
        %8042 = vadd.xlane.f32.xlu0 %v8041
        %v8043 = vpop.xlane.xlu0 %8042
        %v8044 = vrcp.pop %v7998
        %v8045 = vmul.f32 %v7965, %v8044
        %v8046 = vrcp.pop %v8001
        %v8047 = vmul.f32 %v7967, %v8046
        %v8048 = vrcp.pop %v8004
        %v8049 = vmul.f32 %v7969, %v8048
        %v8050 = vrcp.pop %v8007
        %v8051 = vmul.f32 %v7971, %v8050
        %v8052 = vrcp.pop %v8010
        %v8053 = vmul.f32 %v7973, %v8052
        %v8054 = vrcp.pop %v8013
        %v8055 = vmul.f32 %v7975, %v8054
        %v8056 = vrcp.pop %v8016
        %v8057 = vmul.f32 %v7977, %v8056
        %v8058 = vrcp.pop %v8019
        %v8059 = vmul.f32 %v7979, %v8058
        %v8060 = vrcp.pop %v8022
        %v8061 = vmul.f32 %v7981, %v8060
        %v8062 = vrcp.pop %v8025
        %v8063 = vmul.f32 %v7983, %v8062
        %v8064 = vrcp.pop %v8028
        %v8065 = vmul.f32 %v7985, %v8064
        %v8066 = vrcp.pop %v8031
        %v8067 = vmul.f32 %v7987, %v8066
        %v8068 = vrcp.pop %v8034
        %v8069 = vmul.f32 %v7989, %v8068
        %v8070 = vrcp.pop %v8037
        %v8071 = vmul.f32 %v7991, %v8070
        %v8072 = vrcp.pop %v8040
        %v8073 = vmul.f32 %v7993, %v8072
        %v8074 = vrcp.pop %v8043
        %v8075 = vmul.f32 %v7995, %v8074
        %v8077 = vsel %vm1924, %v8045, 0
        %8079 = vmatprep.subr.mxu0 0.0
        %8080 = vmatpush1.msra.mxu0 %v6446
        %8081 = vmatprep.subr.mxu0 0.0
        %8082 = vmatpush1.msra.mxu0 0.0
        %8083 = vmatprep.subr.mxu0 0.0
        %8084 = vmatpush1.msra.mxu0 0.0
        %8085 = vmatprep.subr.mxu0 0.0
        %8086 = vmatpush1.msra.mxu0 0.0
        %8087 = vmatprep.subr.mxu0 0.0
        %8088 = vmatpush1.msra.mxu0 0.0
        %8089 = vmatprep.subr.mxu0 0.0
        %8090 = vmatpush1.msra.mxu0 0.0
        %8091 = vmatprep.subr.mxu0 0.0
        %8092 = vmatpush1.msra.mxu0 0.0
        %8093 = vmatprep.subr.mxu0 0.0
        %8094 = vmatpush1.msra.mxu0 0.0
        %8095 = vmatprep.subr.mxu0 0.0
        %8096 = vmatpush1.msra.mxu0 0.0
        %8097 = vmatprep.subr.mxu0 0.0
        %8098 = vmatpush1.msra.mxu0 0.0
        %8099 = vmatprep.subr.mxu0 0.0
        %8100 = vmatpush1.msra.mxu0 0.0
        %8101 = vmatprep.subr.mxu0 0.0
        %8102 = vmatpush1.msra.mxu0 0.0
        %8103 = vmatprep.subr.mxu0 0.0
        %8104 = vmatpush1.msra.mxu0 0.0
        %8105 = vmatprep.subr.mxu0 0.0
        %8106 = vmatpush1.msra.mxu0 0.0
        %8107 = vmatprep.subr.mxu0 0.0
        %8108 = vmatpush1.msra.mxu0 0.0
        %8109 = vmatprep.subr.mxu0 0.0
        %8110 = vmatpush1.msra.mxu0 0.0
        %8111 = vmatprep.subr.mxu0 0.0
        %8112 = vmatpush1.msra.mxu0 0.0
        %8113 = vmatprep.subr.mxu0 0.0
        %8114 = vmatpush1.msra.mxu0 0.0
        %8115 = vmatprep.subr.mxu0 0.0
        %8116 = vmatpush1.msra.mxu0 0.0
        %8117 = vmatprep.subr.mxu0 0.0
        %8118 = vmatpush1.msra.mxu0 0.0
        %8119 = vmatprep.subr.mxu0 0.0
        %8120 = vmatpush1.msra.mxu0 0.0
        %8121 = vmatprep.subr.mxu0 0.0
        %8122 = vmatpush1.msra.mxu0 0.0
        %8123 = vmatprep.subr.mxu0 0.0
        %8124 = vmatpush1.msra.mxu0 0.0
        %8125 = vmatprep.subr.mxu0 0.0
        %8126 = vmatpush1.msra.mxu0 0.0
        %8127 = vmatprep.subr.mxu0 0.0
        %8128 = vmatpush1.msra.mxu0 0.0
        %8129 = vmatprep.subr.mxu0 0.0
        %8130 = vmatpush1.msra.mxu0 0.0
        %8131 = vmatprep.subr.mxu0 0.0
        %8132 = vmatpush1.msra.mxu0 0.0
        %8133 = vmatprep.subr.mxu0 0.0
        %8134 = vmatpush1.msra.mxu0 0.0
        %8135 = vmatprep.subr.mxu0 0.0
        %8136 = vmatpush1.msra.mxu0 0.0
        %8137 = vmatprep.subr.mxu0 0.0
        %8138 = vmatpush1.msra.mxu0 0.0
        %8139 = vmatprep.subr.mxu0 0.0
        %8140 = vmatpush1.msra.mxu0 0.0
        %8141 = vmatprep.subr.mxu0 0.0
        %8142 = vmatpush1.msra.mxu0 0.0
        %8143 = vmatprep.mubr.f32.mxu0 0.0
        %8144 = vmatmul.mubr.f32.gmra.mrb[0].mxu0 %v8077
        %v8145 = vpop.f32.mrb[0].mxu0
        %v8146 = vadd.f32 0.0, %v8145
        %v8147 = vpop.f32.mrb[0].mxu0
        %8148 = vdwg.mxu0
        %v8150 = vsel %vm1924, %v8047, 0
        %8152 = vmatprep.subr.mxu0 0.0
        %8153 = vmatpush1.msra.mxu0 %v6451
        %8154 = vmatprep.subr.mxu0 0.0
        %8155 = vmatpush1.msra.mxu0 0.0
        %8156 = vmatprep.subr.mxu0 0.0
        %8157 = vmatpush1.msra.mxu0 0.0
        %8158 = vmatprep.subr.mxu0 0.0
        %8159 = vmatpush1.msra.mxu0 0.0
        %8160 = vmatprep.subr.mxu0 0.0
        %8161 = vmatpush1.msra.mxu0 0.0
        %8162 = vmatprep.subr.mxu0 0.0
        %8163 = vmatpush1.msra.mxu0 0.0
        %8164 = vmatprep.subr.mxu0 0.0
        %8165 = vmatpush1.msra.mxu0 0.0
        %8166 = vmatprep.subr.mxu0 0.0
        %8167 = vmatpush1.msra.mxu0 0.0
        %8168 = vmatprep.subr.mxu0 0.0
        %8169 = vmatpush1.msra.mxu0 0.0
        %8170 = vmatprep.subr.mxu0 0.0
        %8171 = vmatpush1.msra.mxu0 0.0
        %8172 = vmatprep.subr.mxu0 0.0
        %8173 = vmatpush1.msra.mxu0 0.0
        %8174 = vmatprep.subr.mxu0 0.0
        %8175 = vmatpush1.msra.mxu0 0.0
        %8176 = vmatprep.subr.mxu0 0.0
        %8177 = vmatpush1.msra.mxu0 0.0
        %8178 = vmatprep.subr.mxu0 0.0
        %8179 = vmatpush1.msra.mxu0 0.0
        %8180 = vmatprep.subr.mxu0 0.0
        %8181 = vmatpush1.msra.mxu0 0.0
        %8182 = vmatprep.subr.mxu0 0.0
        %8183 = vmatpush1.msra.mxu0 0.0
        %8184 = vmatprep.subr.mxu0 0.0
        %8185 = vmatpush1.msra.mxu0 0.0
        %8186 = vmatprep.subr.mxu0 0.0
        %8187 = vmatpush1.msra.mxu0 0.0
        %8188 = vmatprep.subr.mxu0 0.0
        %8189 = vmatpush1.msra.mxu0 0.0
        %8190 = vmatprep.subr.mxu0 0.0
        %8191 = vmatpush1.msra.mxu0 0.0
        %8192 = vmatprep.subr.mxu0 0.0
        %8193 = vmatpush1.msra.mxu0 0.0
        %8194 = vmatprep.subr.mxu0 0.0
        %8195 = vmatpush1.msra.mxu0 0.0
        %8196 = vmatprep.subr.mxu0 0.0
        %8197 = vmatpush1.msra.mxu0 0.0
        %8198 = vmatprep.subr.mxu0 0.0
        %8199 = vmatpush1.msra.mxu0 0.0
        %8200 = vmatprep.subr.mxu0 0.0
        %8201 = vmatpush1.msra.mxu0 0.0
        %8202 = vmatprep.subr.mxu0 0.0
        %8203 = vmatpush1.msra.mxu0 0.0
        %8204 = vmatprep.subr.mxu0 0.0
        %8205 = vmatpush1.msra.mxu0 0.0
        %8206 = vmatprep.subr.mxu0 0.0
        %8207 = vmatpush1.msra.mxu0 0.0
        %8208 = vmatprep.subr.mxu0 0.0
        %8209 = vmatpush1.msra.mxu0 0.0
        %8210 = vmatprep.subr.mxu0 0.0
        %8211 = vmatpush1.msra.mxu0 0.0
        %8212 = vmatprep.subr.mxu0 0.0
        %8213 = vmatpush1.msra.mxu0 0.0
        %8214 = vmatprep.subr.mxu0 0.0
        %8215 = vmatpush1.msra.mxu0 0.0
        %8216 = vmatprep.mubr.f32.mxu0 0.0
        %8217 = vmatmul.mubr.f32.gmra.mrb[0].mxu0 %v8150
        %v8218 = vpop.f32.mrb[0].mxu0
        %v8219 = vadd.f32 0.0, %v8218
        %v8220 = vpop.f32.mrb[0].mxu0
        %8221 = vdwg.mxu0
        %v8223 = vsel %vm1924, %v8049, 0
        %8225 = vmatprep.subr.mxu0 0.0
        %8226 = vmatpush1.msra.mxu0 %v6456
        %8227 = vmatprep.subr.mxu0 0.0
        %8228 = vmatpush1.msra.mxu0 0.0
        %8229 = vmatprep.subr.mxu0 0.0
        %8230 = vmatpush1.msra.mxu0 0.0
        %8231 = vmatprep.subr.mxu0 0.0
        %8232 = vmatpush1.msra.mxu0 0.0
        %8233 = vmatprep.subr.mxu0 0.0
        %8234 = vmatpush1.msra.mxu0 0.0
        %8235 = vmatprep.subr.mxu0 0.0
        %8236 = vmatpush1.msra.mxu0 0.0
        %8237 = vmatprep.subr.mxu0 0.0
        %8238 = vmatpush1.msra.mxu0 0.0
        %8239 = vmatprep.subr.mxu0 0.0
        %8240 = vmatpush1.msra.mxu0 0.0
        %8241 = vmatprep.subr.mxu0 0.0
        %8242 = vmatpush1.msra.mxu0 0.0
        %8243 = vmatprep.subr.mxu0 0.0
        %8244 = vmatpush1.msra.mxu0 0.0
        %8245 = vmatprep.subr.mxu0 0.0
        %8246 = vmatpush1.msra.mxu0 0.0
        %8247 = vmatprep.subr.mxu0 0.0
        %8248 = vmatpush1.msra.mxu0 0.0
        %8249 = vmatprep.subr.mxu0 0.0
        %8250 = vmatpush1.msra.mxu0 0.0
        %8251 = vmatprep.subr.mxu0 0.0
        %8252 = vmatpush1.msra.mxu0 0.0
        %8253 = vmatprep.subr.mxu0 0.0
        %8254 = vmatpush1.msra.mxu0 0.0
        %8255 = vmatprep.subr.mxu0 0.0
        %8256 = vmatpush1.msra.mxu0 0.0
        %8257 = vmatprep.subr.mxu0 0.0
        %8258 = vmatpush1.msra.mxu0 0.0
        %8259 = vmatprep.subr.mxu0 0.0
        %8260 = vmatpush1.msra.mxu0 0.0
        %8261 = vmatprep.subr.mxu0 0.0
        %8262 = vmatpush1.msra.mxu0 0.0
        %8263 = vmatprep.subr.mxu0 0.0
        %8264 = vmatpush1.msra.mxu0 0.0
        %8265 = vmatprep.subr.mxu0 0.0
        %8266 = vmatpush1.msra.mxu0 0.0
        %8267 = vmatprep.subr.mxu0 0.0
        %8268 = vmatpush1.msra.mxu0 0.0
        %8269 = vmatprep.subr.mxu0 0.0
        %8270 = vmatpush1.msra.mxu0 0.0
        %8271 = vmatprep.subr.mxu0 0.0
        %8272 = vmatpush1.msra.mxu0 0.0
        %8273 = vmatprep.subr.mxu0 0.0
        %8274 = vmatpush1.msra.mxu0 0.0
        %8275 = vmatprep.subr.mxu0 0.0
        %8276 = vmatpush1.msra.mxu0 0.0
        %8277 = vmatprep.subr.mxu0 0.0
        %8278 = vmatpush1.msra.mxu0 0.0
        %8279 = vmatprep.subr.mxu0 0.0
        %8280 = vmatpush1.msra.mxu0 0.0
        %8281 = vmatprep.subr.mxu0 0.0
        %8282 = vmatpush1.msra.mxu0 0.0
        %8283 = vmatprep.subr.mxu0 0.0
        %8284 = vmatpush1.msra.mxu0 0.0
        %8285 = vmatprep.subr.mxu0 0.0
        %8286 = vmatpush1.msra.mxu0 0.0
        %8287 = vmatprep.subr.mxu0 0.0
        %8288 = vmatpush1.msra.mxu0 0.0
        %8289 = vmatprep.mubr.f32.mxu0 0.0
        %8290 = vmatmul.mubr.f32.gmra.mrb[0].mxu0 %v8223
        %v8291 = vpop.f32.mrb[0].mxu0
        %v8292 = vadd.f32 0.0, %v8291
        %v8293 = vpop.f32.mrb[0].mxu0
        %8294 = vdwg.mxu0
        %v8296 = vsel %vm1924, %v8051, 0
        %8298 = vmatprep.subr.mxu0 0.0
        %8299 = vmatpush1.msra.mxu0 %v6461
        %8300 = vmatprep.subr.mxu0 0.0
        %8301 = vmatpush1.msra.mxu0 0.0
        %8302 = vmatprep.subr.mxu0 0.0
        %8303 = vmatpush1.msra.mxu0 0.0
        %8304 = vmatprep.subr.mxu0 0.0
        %8305 = vmatpush1.msra.mxu0 0.0
        %8306 = vmatprep.subr.mxu0 0.0
        %8307 = vmatpush1.msra.mxu0 0.0
        %8308 = vmatprep.subr.mxu0 0.0
        %8309 = vmatpush1.msra.mxu0 0.0
        %8310 = vmatprep.subr.mxu0 0.0
        %8311 = vmatpush1.msra.mxu0 0.0
        %8312 = vmatprep.subr.mxu0 0.0
        %8313 = vmatpush1.msra.mxu0 0.0
        %8314 = vmatprep.subr.mxu0 0.0
        %8315 = vmatpush1.msra.mxu0 0.0
        %8316 = vmatprep.subr.mxu0 0.0
        %8317 = vmatpush1.msra.mxu0 0.0
        %8318 = vmatprep.subr.mxu0 0.0
        %8319 = vmatpush1.msra.mxu0 0.0
        %8320 = vmatprep.subr.mxu0 0.0
        %8321 = vmatpush1.msra.mxu0 0.0
        %8322 = vmatprep.subr.mxu0 0.0
        %8323 = vmatpush1.msra.mxu0 0.0
        %8324 = vmatprep.subr.mxu0 0.0
        %8325 = vmatpush1.msra.mxu0 0.0
        %8326 = vmatprep.subr.mxu0 0.0
        %8327 = vmatpush1.msra.mxu0 0.0
        %8328 = vmatprep.subr.mxu0 0.0
        %8329 = vmatpush1.msra.mxu0 0.0
        %8330 = vmatprep.subr.mxu0 0.0
        %8331 = vmatpush1.msra.mxu0 0.0
        %8332 = vmatprep.subr.mxu0 0.0
        %8333 = vmatpush1.msra.mxu0 0.0
        %8334 = vmatprep.subr.mxu0 0.0
        %8335 = vmatpush1.msra.mxu0 0.0
        %8336 = vmatprep.subr.mxu0 0.0
        %8337 = vmatpush1.msra.mxu0 0.0
        %8338 = vmatprep.subr.mxu0 0.0
        %8339 = vmatpush1.msra.mxu0 0.0
        %8340 = vmatprep.subr.mxu0 0.0
        %8341 = vmatpush1.msra.mxu0 0.0
        %8342 = vmatprep.subr.mxu0 0.0
        %8343 = vmatpush1.msra.mxu0 0.0
        %8344 = vmatprep.subr.mxu0 0.0
        %8345 = vmatpush1.msra.mxu0 0.0
        %8346 = vmatprep.subr.mxu0 0.0
        %8347 = vmatpush1.msra.mxu0 0.0
        %8348 = vmatprep.subr.mxu0 0.0
        %8349 = vmatpush1.msra.mxu0 0.0
        %8350 = vmatprep.subr.mxu0 0.0
        %8351 = vmatpush1.msra.mxu0 0.0
        %8352 = vmatprep.subr.mxu0 0.0
        %8353 = vmatpush1.msra.mxu0 0.0
        %8354 = vmatprep.subr.mxu0 0.0
        %8355 = vmatpush1.msra.mxu0 0.0
        %8356 = vmatprep.subr.mxu0 0.0
        %8357 = vmatpush1.msra.mxu0 0.0
        %8358 = vmatprep.subr.mxu0 0.0
        %8359 = vmatpush1.msra.mxu0 0.0
        %8360 = vmatprep.subr.mxu0 0.0
        %8361 = vmatpush1.msra.mxu0 0.0
        %8362 = vmatprep.mubr.f32.mxu0 0.0
        %8363 = vmatmul.mubr.f32.gmra.mrb[0].mxu0 %v8296
        %v8364 = vpop.f32.mrb[0].mxu0
        %v8365 = vadd.f32 0.0, %v8364
        %v8366 = vpop.f32.mrb[0].mxu0
        %8367 = vdwg.mxu0
        %v8369 = vsel %vm1924, %v8053, 0
        %8371 = vmatprep.subr.mxu0 0.0
        %8372 = vmatpush1.msra.mxu0 %v6466
        %8373 = vmatprep.subr.mxu0 0.0
        %8374 = vmatpush1.msra.mxu0 0.0
        %8375 = vmatprep.subr.mxu0 0.0
        %8376 = vmatpush1.msra.mxu0 0.0
        %8377 = vmatprep.subr.mxu0 0.0
        %8378 = vmatpush1.msra.mxu0 0.0
        %8379 = vmatprep.subr.mxu0 0.0
        %8380 = vmatpush1.msra.mxu0 0.0
        %8381 = vmatprep.subr.mxu0 0.0
        %8382 = vmatpush1.msra.mxu0 0.0
        %8383 = vmatprep.subr.mxu0 0.0
        %8384 = vmatpush1.msra.mxu0 0.0
        %8385 = vmatprep.subr.mxu0 0.0
        %8386 = vmatpush1.msra.mxu0 0.0
        %8387 = vmatprep.subr.mxu0 0.0
        %8388 = vmatpush1.msra.mxu0 0.0
        %8389 = vmatprep.subr.mxu0 0.0
        %8390 = vmatpush1.msra.mxu0 0.0
        %8391 = vmatprep.subr.mxu0 0.0
        %8392 = vmatpush1.msra.mxu0 0.0
        %8393 = vmatprep.subr.mxu0 0.0
        %8394 = vmatpush1.msra.mxu0 0.0
        %8395 = vmatprep.subr.mxu0 0.0
        %8396 = vmatpush1.msra.mxu0 0.0
        %8397 = vmatprep.subr.mxu0 0.0
        %8398 = vmatpush1.msra.mxu0 0.0
        %8399 = vmatprep.subr.mxu0 0.0
        %8400 = vmatpush1.msra.mxu0 0.0
        %8401 = vmatprep.subr.mxu0 0.0
        %8402 = vmatpush1.msra.mxu0 0.0
        %8403 = vmatprep.subr.mxu0 0.0
        %8404 = vmatpush1.msra.mxu0 0.0
        %8405 = vmatprep.subr.mxu0 0.0
        %8406 = vmatpush1.msra.mxu0 0.0
        %8407 = vmatprep.subr.mxu0 0.0
        %8408 = vmatpush1.msra.mxu0 0.0
        %8409 = vmatprep.subr.mxu0 0.0
        %8410 = vmatpush1.msra.mxu0 0.0
        %8411 = vmatprep.subr.mxu0 0.0
        %8412 = vmatpush1.msra.mxu0 0.0
        %8413 = vmatprep.subr.mxu0 0.0
        %8414 = vmatpush1.msra.mxu0 0.0
        %8415 = vmatprep.subr.mxu0 0.0
        %8416 = vmatpush1.msra.mxu0 0.0
        %8417 = vmatprep.subr.mxu0 0.0
        %8418 = vmatpush1.msra.mxu0 0.0
        %8419 = vmatprep.subr.mxu0 0.0
        %8420 = vmatpush1.msra.mxu0 0.0
        %8421 = vmatprep.subr.mxu0 0.0
        %8422 = vmatpush1.msra.mxu0 0.0
        %8423 = vmatprep.subr.mxu0 0.0
        %8424 = vmatpush1.msra.mxu0 0.0
        %8425 = vmatprep.subr.mxu0 0.0
        %8426 = vmatpush1.msra.mxu0 0.0
        %8427 = vmatprep.subr.mxu0 0.0
        %8428 = vmatpush1.msra.mxu0 0.0
        %8429 = vmatprep.subr.mxu0 0.0
        %8430 = vmatpush1.msra.mxu0 0.0
        %8431 = vmatprep.subr.mxu0 0.0
        %8432 = vmatpush1.msra.mxu0 0.0
        %8433 = vmatprep.subr.mxu0 0.0
        %8434 = vmatpush1.msra.mxu0 0.0
        %8435 = vmatprep.mubr.f32.mxu0 0.0
        %8436 = vmatmul.mubr.f32.gmra.mrb[0].mxu0 %v8369
        %v8437 = vpop.f32.mrb[0].mxu0
        %v8438 = vadd.f32 0.0, %v8437
        %v8439 = vpop.f32.mrb[0].mxu0
        %8440 = vdwg.mxu0
        %v8442 = vsel %vm1924, %v8055, 0
        %8444 = vmatprep.subr.mxu0 0.0
        %8445 = vmatpush1.msra.mxu0 %v6471
        %8446 = vmatprep.subr.mxu0 0.0
        %8447 = vmatpush1.msra.mxu0 0.0
        %8448 = vmatprep.subr.mxu0 0.0
        %8449 = vmatpush1.msra.mxu0 0.0
        %8450 = vmatprep.subr.mxu0 0.0
        %8451 = vmatpush1.msra.mxu0 0.0
        %8452 = vmatprep.subr.mxu0 0.0
        %8453 = vmatpush1.msra.mxu0 0.0
        %8454 = vmatprep.subr.mxu0 0.0
        %8455 = vmatpush1.msra.mxu0 0.0
        %8456 = vmatprep.subr.mxu0 0.0
        %8457 = vmatpush1.msra.mxu0 0.0
        %8458 = vmatprep.subr.mxu0 0.0
        %8459 = vmatpush1.msra.mxu0 0.0
        %8460 = vmatprep.subr.mxu0 0.0
        %8461 = vmatpush1.msra.mxu0 0.0
        %8462 = vmatprep.subr.mxu0 0.0
        %8463 = vmatpush1.msra.mxu0 0.0
        %8464 = vmatprep.subr.mxu0 0.0
        %8465 = vmatpush1.msra.mxu0 0.0
        %8466 = vmatprep.subr.mxu0 0.0
        %8467 = vmatpush1.msra.mxu0 0.0
        %8468 = vmatprep.subr.mxu0 0.0
        %8469 = vmatpush1.msra.mxu0 0.0
        %8470 = vmatprep.subr.mxu0 0.0
        %8471 = vmatpush1.msra.mxu0 0.0
        %8472 = vmatprep.subr.mxu0 0.0
        %8473 = vmatpush1.msra.mxu0 0.0
        %8474 = vmatprep.subr.mxu0 0.0
        %8475 = vmatpush1.msra.mxu0 0.0
        %8476 = vmatprep.subr.mxu0 0.0
        %8477 = vmatpush1.msra.mxu0 0.0
        %8478 = vmatprep.subr.mxu0 0.0
        %8479 = vmatpush1.msra.mxu0 0.0
        %8480 = vmatprep.subr.mxu0 0.0
        %8481 = vmatpush1.msra.mxu0 0.0
        %8482 = vmatprep.subr.mxu0 0.0
        %8483 = vmatpush1.msra.mxu0 0.0
        %8484 = vmatprep.subr.mxu0 0.0
        %8485 = vmatpush1.msra.mxu0 0.0
        %8486 = vmatprep.subr.mxu0 0.0
        %8487 = vmatpush1.msra.mxu0 0.0
        %8488 = vmatprep.subr.mxu0 0.0
        %8489 = vmatpush1.msra.mxu0 0.0
        %8490 = vmatprep.subr.mxu0 0.0
        %8491 = vmatpush1.msra.mxu0 0.0
        %8492 = vmatprep.subr.mxu0 0.0
        %8493 = vmatpush1.msra.mxu0 0.0
        %8494 = vmatprep.subr.mxu0 0.0
        %8495 = vmatpush1.msra.mxu0 0.0
        %8496 = vmatprep.subr.mxu0 0.0
        %8497 = vmatpush1.msra.mxu0 0.0
        %8498 = vmatprep.subr.mxu0 0.0
        %8499 = vmatpush1.msra.mxu0 0.0
        %8500 = vmatprep.subr.mxu0 0.0
        %8501 = vmatpush1.msra.mxu0 0.0
        %8502 = vmatprep.subr.mxu0 0.0
        %8503 = vmatpush1.msra.mxu0 0.0
        %8504 = vmatprep.subr.mxu0 0.0
        %8505 = vmatpush1.msra.mxu0 0.0
        %8506 = vmatprep.subr.mxu0 0.0
        %8507 = vmatpush1.msra.mxu0 0.0
        %8508 = vmatprep.mubr.f32.mxu0 0.0
        %8509 = vmatmul.mubr.f32.gmra.mrb[0].mxu0 %v8442
        %v8510 = vpop.f32.mrb[0].mxu0
        %v8511 = vadd.f32 0.0, %v8510
        %v8512 = vpop.f32.mrb[0].mxu0
        %8513 = vdwg.mxu0
        %v8515 = vsel %vm1924, %v8057, 0
        %8517 = vmatprep.subr.mxu0 0.0
        %8518 = vmatpush1.msra.mxu0 %v6476
        %8519 = vmatprep.subr.mxu0 0.0
        %8520 = vmatpush1.msra.mxu0 0.0
        %8521 = vmatprep.subr.mxu0 0.0
        %8522 = vmatpush1.msra.mxu0 0.0
        %8523 = vmatprep.subr.mxu0 0.0
        %8524 = vmatpush1.msra.mxu0 0.0
        %8525 = vmatprep.subr.mxu0 0.0
        %8526 = vmatpush1.msra.mxu0 0.0
        %8527 = vmatprep.subr.mxu0 0.0
        %8528 = vmatpush1.msra.mxu0 0.0
        %8529 = vmatprep.subr.mxu0 0.0
        %8530 = vmatpush1.msra.mxu0 0.0
        %8531 = vmatprep.subr.mxu0 0.0
        %8532 = vmatpush1.msra.mxu0 0.0
        %8533 = vmatprep.subr.mxu0 0.0
        %8534 = vmatpush1.msra.mxu0 0.0
        %8535 = vmatprep.subr.mxu0 0.0
        %8536 = vmatpush1.msra.mxu0 0.0
        %8537 = vmatprep.subr.mxu0 0.0
        %8538 = vmatpush1.msra.mxu0 0.0
        %8539 = vmatprep.subr.mxu0 0.0
        %8540 = vmatpush1.msra.mxu0 0.0
        %8541 = vmatprep.subr.mxu0 0.0
        %8542 = vmatpush1.msra.mxu0 0.0
        %8543 = vmatprep.subr.mxu0 0.0
        %8544 = vmatpush1.msra.mxu0 0.0
        %8545 = vmatprep.subr.mxu0 0.0
        %8546 = vmatpush1.msra.mxu0 0.0
        %8547 = vmatprep.subr.mxu0 0.0
        %8548 = vmatpush1.msra.mxu0 0.0
        %8549 = vmatprep.subr.mxu0 0.0
        %8550 = vmatpush1.msra.mxu0 0.0
        %8551 = vmatprep.subr.mxu0 0.0
        %8552 = vmatpush1.msra.mxu0 0.0
        %8553 = vmatprep.subr.mxu0 0.0
        %8554 = vmatpush1.msra.mxu0 0.0
        %8555 = vmatprep.subr.mxu0 0.0
        %8556 = vmatpush1.msra.mxu0 0.0
        %8557 = vmatprep.subr.mxu0 0.0
        %8558 = vmatpush1.msra.mxu0 0.0
        %8559 = vmatprep.subr.mxu0 0.0
        %8560 = vmatpush1.msra.mxu0 0.0
        %8561 = vmatprep.subr.mxu0 0.0
        %8562 = vmatpush1.msra.mxu0 0.0
        %8563 = vmatprep.subr.mxu0 0.0
        %8564 = vmatpush1.msra.mxu0 0.0
        %8565 = vmatprep.subr.mxu0 0.0
        %8566 = vmatpush1.msra.mxu0 0.0
        %8567 = vmatprep.subr.mxu0 0.0
        %8568 = vmatpush1.msra.mxu0 0.0
        %8569 = vmatprep.subr.mxu0 0.0
        %8570 = vmatpush1.msra.mxu0 0.0
        %8571 = vmatprep.subr.mxu0 0.0
        %8572 = vmatpush1.msra.mxu0 0.0
        %8573 = vmatprep.subr.mxu0 0.0
        %8574 = vmatpush1.msra.mxu0 0.0
        %8575 = vmatprep.subr.mxu0 0.0
        %8576 = vmatpush1.msra.mxu0 0.0
        %8577 = vmatprep.subr.mxu0 0.0
        %8578 = vmatpush1.msra.mxu0 0.0
        %8579 = vmatprep.subr.mxu0 0.0
        %8580 = vmatpush1.msra.mxu0 0.0
        %8581 = vmatprep.mubr.f32.mxu0 0.0
        %8582 = vmatmul.mubr.f32.gmra.mrb[0].mxu0 %v8515
        %v8583 = vpop.f32.mrb[0].mxu0
        %v8584 = vadd.f32 0.0, %v8583
        %v8585 = vpop.f32.mrb[0].mxu0
        %8586 = vdwg.mxu0
        %v8588 = vsel %vm1924, %v8059, 0
        %8590 = vmatprep.subr.mxu0 0.0
        %8591 = vmatpush1.msra.mxu0 %v6481
        %8592 = vmatprep.subr.mxu0 0.0
        %8593 = vmatpush1.msra.mxu0 0.0
        %8594 = vmatprep.subr.mxu0 0.0
        %8595 = vmatpush1.msra.mxu0 0.0
        %8596 = vmatprep.subr.mxu0 0.0
        %8597 = vmatpush1.msra.mxu0 0.0
        %8598 = vmatprep.subr.mxu0 0.0
        %8599 = vmatpush1.msra.mxu0 0.0
        %8600 = vmatprep.subr.mxu0 0.0
        %8601 = vmatpush1.msra.mxu0 0.0
        %8602 = vmatprep.subr.mxu0 0.0
        %8603 = vmatpush1.msra.mxu0 0.0
        %8604 = vmatprep.subr.mxu0 0.0
        %8605 = vmatpush1.msra.mxu0 0.0
        %8606 = vmatprep.subr.mxu0 0.0
        %8607 = vmatpush1.msra.mxu0 0.0
        %8608 = vmatprep.subr.mxu0 0.0
        %8609 = vmatpush1.msra.mxu0 0.0
        %8610 = vmatprep.subr.mxu0 0.0
        %8611 = vmatpush1.msra.mxu0 0.0
        %8612 = vmatprep.subr.mxu0 0.0
        %8613 = vmatpush1.msra.mxu0 0.0
        %8614 = vmatprep.subr.mxu0 0.0
        %8615 = vmatpush1.msra.mxu0 0.0
        %8616 = vmatprep.subr.mxu0 0.0
        %8617 = vmatpush1.msra.mxu0 0.0
        %8618 = vmatprep.subr.mxu0 0.0
        %8619 = vmatpush1.msra.mxu0 0.0
        %8620 = vmatprep.subr.mxu0 0.0
        %8621 = vmatpush1.msra.mxu0 0.0
        %8622 = vmatprep.subr.mxu0 0.0
        %8623 = vmatpush1.msra.mxu0 0.0
        %8624 = vmatprep.subr.mxu0 0.0
        %8625 = vmatpush1.msra.mxu0 0.0
        %8626 = vmatprep.subr.mxu0 0.0
        %8627 = vmatpush1.msra.mxu0 0.0
        %8628 = vmatprep.subr.mxu0 0.0
        %8629 = vmatpush1.msra.mxu0 0.0
        %8630 = vmatprep.subr.mxu0 0.0
        %8631 = vmatpush1.msra.mxu0 0.0
        %8632 = vmatprep.subr.mxu0 0.0
        %8633 = vmatpush1.msra.mxu0 0.0
        %8634 = vmatprep.subr.mxu0 0.0
        %8635 = vmatpush1.msra.mxu0 0.0
        %8636 = vmatprep.subr.mxu0 0.0
        %8637 = vmatpush1.msra.mxu0 0.0
        %8638 = vmatprep.subr.mxu0 0.0
        %8639 = vmatpush1.msra.mxu0 0.0
        %8640 = vmatprep.subr.mxu0 0.0
        %8641 = vmatpush1.msra.mxu0 0.0
        %8642 = vmatprep.subr.mxu0 0.0
        %8643 = vmatpush1.msra.mxu0 0.0
        %8644 = vmatprep.subr.mxu0 0.0
        %8645 = vmatpush1.msra.mxu0 0.0
        %8646 = vmatprep.subr.mxu0 0.0
        %8647 = vmatpush1.msra.mxu0 0.0
        %8648 = vmatprep.subr.mxu0 0.0
        %8649 = vmatpush1.msra.mxu0 0.0
        %8650 = vmatprep.subr.mxu0 0.0
        %8651 = vmatpush1.msra.mxu0 0.0
        %8652 = vmatprep.subr.mxu0 0.0
        %8653 = vmatpush1.msra.mxu0 0.0
        %8654 = vmatprep.mubr.f32.mxu0 0.0
        %8655 = vmatmul.mubr.f32.gmra.mrb[0].mxu0 %v8588
        %v8656 = vpop.f32.mrb[0].mxu0
        %v8657 = vadd.f32 0.0, %v8656
        %v8658 = vpop.f32.mrb[0].mxu0
        %8659 = vdwg.mxu0
        %v8661 = vsel %vm1924, %v8061, 0
        %8663 = vmatprep.subr.mxu0 0.0
        %8664 = vmatpush1.msra.mxu0 %v6486
        %8665 = vmatprep.subr.mxu0 0.0
        %8666 = vmatpush1.msra.mxu0 0.0
        %8667 = vmatprep.subr.mxu0 0.0
        %8668 = vmatpush1.msra.mxu0 0.0
        %8669 = vmatprep.subr.mxu0 0.0
        %8670 = vmatpush1.msra.mxu0 0.0
        %8671 = vmatprep.subr.mxu0 0.0
        %8672 = vmatpush1.msra.mxu0 0.0
        %8673 = vmatprep.subr.mxu0 0.0
        %8674 = vmatpush1.msra.mxu0 0.0
        %8675 = vmatprep.subr.mxu0 0.0
        %8676 = vmatpush1.msra.mxu0 0.0
        %8677 = vmatprep.subr.mxu0 0.0
        %8678 = vmatpush1.msra.mxu0 0.0
        %8679 = vmatprep.subr.mxu0 0.0
        %8680 = vmatpush1.msra.mxu0 0.0
        %8681 = vmatprep.subr.mxu0 0.0
        %8682 = vmatpush1.msra.mxu0 0.0
        %8683 = vmatprep.subr.mxu0 0.0
        %8684 = vmatpush1.msra.mxu0 0.0
        %8685 = vmatprep.subr.mxu0 0.0
        %8686 = vmatpush1.msra.mxu0 0.0
        %8687 = vmatprep.subr.mxu0 0.0
        %8688 = vmatpush1.msra.mxu0 0.0
        %8689 = vmatprep.subr.mxu0 0.0
        %8690 = vmatpush1.msra.mxu0 0.0
        %8691 = vmatprep.subr.mxu0 0.0
        %8692 = vmatpush1.msra.mxu0 0.0
        %8693 = vmatprep.subr.mxu0 0.0
        %8694 = vmatpush1.msra.mxu0 0.0
        %8695 = vmatprep.subr.mxu0 0.0
        %8696 = vmatpush1.msra.mxu0 0.0
        %8697 = vmatprep.subr.mxu0 0.0
        %8698 = vmatpush1.msra.mxu0 0.0
        %8699 = vmatprep.subr.mxu0 0.0
        %8700 = vmatpush1.msra.mxu0 0.0
        %8701 = vmatprep.subr.mxu0 0.0
        %8702 = vmatpush1.msra.mxu0 0.0
        %8703 = vmatprep.subr.mxu0 0.0
        %8704 = vmatpush1.msra.mxu0 0.0
        %8705 = vmatprep.subr.mxu0 0.0
        %8706 = vmatpush1.msra.mxu0 0.0
        %8707 = vmatprep.subr.mxu0 0.0
        %8708 = vmatpush1.msra.mxu0 0.0
        %8709 = vmatprep.subr.mxu0 0.0
        %8710 = vmatpush1.msra.mxu0 0.0
        %8711 = vmatprep.subr.mxu0 0.0
        %8712 = vmatpush1.msra.mxu0 0.0
        %8713 = vmatprep.subr.mxu0 0.0
        %8714 = vmatpush1.msra.mxu0 0.0
        %8715 = vmatprep.subr.mxu0 0.0
        %8716 = vmatpush1.msra.mxu0 0.0
        %8717 = vmatprep.subr.mxu0 0.0
        %8718 = vmatpush1.msra.mxu0 0.0
        %8719 = vmatprep.subr.mxu0 0.0
        %8720 = vmatpush1.msra.mxu0 0.0
        %8721 = vmatprep.subr.mxu0 0.0
        %8722 = vmatpush1.msra.mxu0 0.0
        %8723 = vmatprep.subr.mxu0 0.0
        %8724 = vmatpush1.msra.mxu0 0.0
        %8725 = vmatprep.subr.mxu0 0.0
        %8726 = vmatpush1.msra.mxu0 0.0
        %8727 = vmatprep.mubr.f32.mxu0 0.0
        %8728 = vmatmul.mubr.f32.gmra.mrb[0].mxu0 %v8661
        %v8729 = vpop.f32.mrb[0].mxu0
        %v8730 = vadd.f32 0.0, %v8729
        %v8731 = vpop.f32.mrb[0].mxu0
        %8732 = vdwg.mxu0
        %v8734 = vsel %vm1924, %v8063, 0
        %8736 = vmatprep.subr.mxu0 0.0
        %8737 = vmatpush1.msra.mxu0 %v6491
        %8738 = vmatprep.subr.mxu0 0.0
        %8739 = vmatpush1.msra.mxu0 0.0
        %8740 = vmatprep.subr.mxu0 0.0
        %8741 = vmatpush1.msra.mxu0 0.0
        %8742 = vmatprep.subr.mxu0 0.0
        %8743 = vmatpush1.msra.mxu0 0.0
        %8744 = vmatprep.subr.mxu0 0.0
        %8745 = vmatpush1.msra.mxu0 0.0
        %8746 = vmatprep.subr.mxu0 0.0
        %8747 = vmatpush1.msra.mxu0 0.0
        %8748 = vmatprep.subr.mxu0 0.0
        %8749 = vmatpush1.msra.mxu0 0.0
        %8750 = vmatprep.subr.mxu0 0.0
        %8751 = vmatpush1.msra.mxu0 0.0
        %8752 = vmatprep.subr.mxu0 0.0
        %8753 = vmatpush1.msra.mxu0 0.0
        %8754 = vmatprep.subr.mxu0 0.0
        %8755 = vmatpush1.msra.mxu0 0.0
        %8756 = vmatprep.subr.mxu0 0.0
        %8757 = vmatpush1.msra.mxu0 0.0
        %8758 = vmatprep.subr.mxu0 0.0
        %8759 = vmatpush1.msra.mxu0 0.0
        %8760 = vmatprep.subr.mxu0 0.0
        %8761 = vmatpush1.msra.mxu0 0.0
        %8762 = vmatprep.subr.mxu0 0.0
        %8763 = vmatpush1.msra.mxu0 0.0
        %8764 = vmatprep.subr.mxu0 0.0
        %8765 = vmatpush1.msra.mxu0 0.0
        %8766 = vmatprep.subr.mxu0 0.0
        %8767 = vmatpush1.msra.mxu0 0.0
        %8768 = vmatprep.subr.mxu0 0.0
        %8769 = vmatpush1.msra.mxu0 0.0
        %8770 = vmatprep.subr.mxu0 0.0
        %8771 = vmatpush1.msra.mxu0 0.0
        %8772 = vmatprep.subr.mxu0 0.0
        %8773 = vmatpush1.msra.mxu0 0.0
        %8774 = vmatprep.subr.mxu0 0.0
        %8775 = vmatpush1.msra.mxu0 0.0
        %8776 = vmatprep.subr.mxu0 0.0
        %8777 = vmatpush1.msra.mxu0 0.0
        %8778 = vmatprep.subr.mxu0 0.0
        %8779 = vmatpush1.msra.mxu0 0.0
        %8780 = vmatprep.subr.mxu0 0.0
        %8781 = vmatpush1.msra.mxu0 0.0
        %8782 = vmatprep.subr.mxu0 0.0
        %8783 = vmatpush1.msra.mxu0 0.0
        %8784 = vmatprep.subr.mxu0 0.0
        %8785 = vmatpush1.msra.mxu0 0.0
        %8786 = vmatprep.subr.mxu0 0.0
        %8787 = vmatpush1.msra.mxu0 0.0
        %8788 = vmatprep.subr.mxu0 0.0
        %8789 = vmatpush1.msra.mxu0 0.0
        %8790 = vmatprep.subr.mxu0 0.0
        %8791 = vmatpush1.msra.mxu0 0.0
        %8792 = vmatprep.subr.mxu0 0.0
        %8793 = vmatpush1.msra.mxu0 0.0
        %8794 = vmatprep.subr.mxu0 0.0
        %8795 = vmatpush1.msra.mxu0 0.0
        %8796 = vmatprep.subr.mxu0 0.0
        %8797 = vmatpush1.msra.mxu0 0.0
        %8798 = vmatprep.subr.mxu0 0.0
        %8799 = vmatpush1.msra.mxu0 0.0
        %8800 = vmatprep.mubr.f32.mxu0 0.0
        %8801 = vmatmul.mubr.f32.gmra.mrb[0].mxu0 %v8734
        %v8802 = vpop.f32.mrb[0].mxu0
        %v8803 = vadd.f32 0.0, %v8802
        %v8804 = vpop.f32.mrb[0].mxu0
        %8805 = vdwg.mxu0
        %v8807 = vsel %vm1924, %v8065, 0
        %8809 = vmatprep.subr.mxu0 0.0
        %8810 = vmatpush1.msra.mxu0 %v6496
        %8811 = vmatprep.subr.mxu0 0.0
        %8812 = vmatpush1.msra.mxu0 0.0
        %8813 = vmatprep.subr.mxu0 0.0
        %8814 = vmatpush1.msra.mxu0 0.0
        %8815 = vmatprep.subr.mxu0 0.0
        %8816 = vmatpush1.msra.mxu0 0.0
        %8817 = vmatprep.subr.mxu0 0.0
        %8818 = vmatpush1.msra.mxu0 0.0
        %8819 = vmatprep.subr.mxu0 0.0
        %8820 = vmatpush1.msra.mxu0 0.0
        %8821 = vmatprep.subr.mxu0 0.0
        %8822 = vmatpush1.msra.mxu0 0.0
        %8823 = vmatprep.subr.mxu0 0.0
        %8824 = vmatpush1.msra.mxu0 0.0
        %8825 = vmatprep.subr.mxu0 0.0
        %8826 = vmatpush1.msra.mxu0 0.0
        %8827 = vmatprep.subr.mxu0 0.0
        %8828 = vmatpush1.msra.mxu0 0.0
        %8829 = vmatprep.subr.mxu0 0.0
        %8830 = vmatpush1.msra.mxu0 0.0
        %8831 = vmatprep.subr.mxu0 0.0
        %8832 = vmatpush1.msra.mxu0 0.0
        %8833 = vmatprep.subr.mxu0 0.0
        %8834 = vmatpush1.msra.mxu0 0.0
        %8835 = vmatprep.subr.mxu0 0.0
        %8836 = vmatpush1.msra.mxu0 0.0
        %8837 = vmatprep.subr.mxu0 0.0
        %8838 = vmatpush1.msra.mxu0 0.0
        %8839 = vmatprep.subr.mxu0 0.0
        %8840 = vmatpush1.msra.mxu0 0.0
        %8841 = vmatprep.subr.mxu0 0.0
        %8842 = vmatpush1.msra.mxu0 0.0
        %8843 = vmatprep.subr.mxu0 0.0
        %8844 = vmatpush1.msra.mxu0 0.0
        %8845 = vmatprep.subr.mxu0 0.0
        %8846 = vmatpush1.msra.mxu0 0.0
        %8847 = vmatprep.subr.mxu0 0.0
        %8848 = vmatpush1.msra.mxu0 0.0
        %8849 = vmatprep.subr.mxu0 0.0
        %8850 = vmatpush1.msra.mxu0 0.0
        %8851 = vmatprep.subr.mxu0 0.0
        %8852 = vmatpush1.msra.mxu0 0.0
        %8853 = vmatprep.subr.mxu0 0.0
        %8854 = vmatpush1.msra.mxu0 0.0
        %8855 = vmatprep.subr.mxu0 0.0
        %8856 = vmatpush1.msra.mxu0 0.0
        %8857 = vmatprep.subr.mxu0 0.0
        %8858 = vmatpush1.msra.mxu0 0.0
        %8859 = vmatprep.subr.mxu0 0.0
        %8860 = vmatpush1.msra.mxu0 0.0
        %8861 = vmatprep.subr.mxu0 0.0
        %8862 = vmatpush1.msra.mxu0 0.0
        %8863 = vmatprep.subr.mxu0 0.0
        %8864 = vmatpush1.msra.mxu0 0.0
        %8865 = vmatprep.subr.mxu0 0.0
        %8866 = vmatpush1.msra.mxu0 0.0
        %8867 = vmatprep.subr.mxu0 0.0
        %8868 = vmatpush1.msra.mxu0 0.0
        %8869 = vmatprep.subr.mxu0 0.0
        %8870 = vmatpush1.msra.mxu0 0.0
        %8871 = vmatprep.subr.mxu0 0.0
        %8872 = vmatpush1.msra.mxu0 0.0
        %8873 = vmatprep.mubr.f32.mxu0 0.0
        %8874 = vmatmul.mubr.f32.gmra.mrb[0].mxu0 %v8807
        %v8875 = vpop.f32.mrb[0].mxu0
        %v8876 = vadd.f32 0.0, %v8875
        %v8877 = vpop.f32.mrb[0].mxu0
        %8878 = vdwg.mxu0
        %v8880 = vsel %vm1924, %v8067, 0
        %8882 = vmatprep.subr.mxu0 0.0
        %8883 = vmatpush1.msra.mxu0 %v6501
        %8884 = vmatprep.subr.mxu0 0.0
        %8885 = vmatpush1.msra.mxu0 0.0
        %8886 = vmatprep.subr.mxu0 0.0
        %8887 = vmatpush1.msra.mxu0 0.0
        %8888 = vmatprep.subr.mxu0 0.0
        %8889 = vmatpush1.msra.mxu0 0.0
        %8890 = vmatprep.subr.mxu0 0.0
        %8891 = vmatpush1.msra.mxu0 0.0
        %8892 = vmatprep.subr.mxu0 0.0
        %8893 = vmatpush1.msra.mxu0 0.0
        %8894 = vmatprep.subr.mxu0 0.0
        %8895 = vmatpush1.msra.mxu0 0.0
        %8896 = vmatprep.subr.mxu0 0.0
        %8897 = vmatpush1.msra.mxu0 0.0
        %8898 = vmatprep.subr.mxu0 0.0
        %8899 = vmatpush1.msra.mxu0 0.0
        %8900 = vmatprep.subr.mxu0 0.0
        %8901 = vmatpush1.msra.mxu0 0.0
        %8902 = vmatprep.subr.mxu0 0.0
        %8903 = vmatpush1.msra.mxu0 0.0
        %8904 = vmatprep.subr.mxu0 0.0
        %8905 = vmatpush1.msra.mxu0 0.0
        %8906 = vmatprep.subr.mxu0 0.0
        %8907 = vmatpush1.msra.mxu0 0.0
        %8908 = vmatprep.subr.mxu0 0.0
        %8909 = vmatpush1.msra.mxu0 0.0
        %8910 = vmatprep.subr.mxu0 0.0
        %8911 = vmatpush1.msra.mxu0 0.0
        %8912 = vmatprep.subr.mxu0 0.0
        %8913 = vmatpush1.msra.mxu0 0.0
        %8914 = vmatprep.subr.mxu0 0.0
        %8915 = vmatpush1.msra.mxu0 0.0
        %8916 = vmatprep.subr.mxu0 0.0
        %8917 = vmatpush1.msra.mxu0 0.0
        %8918 = vmatprep.subr.mxu0 0.0
        %8919 = vmatpush1.msra.mxu0 0.0
        %8920 = vmatprep.subr.mxu0 0.0
        %8921 = vmatpush1.msra.mxu0 0.0
        %8922 = vmatprep.subr.mxu0 0.0
        %8923 = vmatpush1.msra.mxu0 0.0
        %8924 = vmatprep.subr.mxu0 0.0
        %8925 = vmatpush1.msra.mxu0 0.0
        %8926 = vmatprep.subr.mxu0 0.0
        %8927 = vmatpush1.msra.mxu0 0.0
        %8928 = vmatprep.subr.mxu0 0.0
        %8929 = vmatpush1.msra.mxu0 0.0
        %8930 = vmatprep.subr.mxu0 0.0
        %8931 = vmatpush1.msra.mxu0 0.0
        %8932 = vmatprep.subr.mxu0 0.0
        %8933 = vmatpush1.msra.mxu0 0.0
        %8934 = vmatprep.subr.mxu0 0.0
        %8935 = vmatpush1.msra.mxu0 0.0
        %8936 = vmatprep.subr.mxu0 0.0
        %8937 = vmatpush1.msra.mxu0 0.0
        %8938 = vmatprep.subr.mxu0 0.0
        %8939 = vmatpush1.msra.mxu0 0.0
        %8940 = vmatprep.subr.mxu0 0.0
        %8941 = vmatpush1.msra.mxu0 0.0
        %8942 = vmatprep.subr.mxu0 0.0
        %8943 = vmatpush1.msra.mxu0 0.0
        %8944 = vmatprep.subr.mxu0 0.0
        %8945 = vmatpush1.msra.mxu0 0.0
        %8946 = vmatprep.mubr.f32.mxu0 0.0
        %8947 = vmatmul.mubr.f32.gmra.mrb[0].mxu0 %v8880
        %v8948 = vpop.f32.mrb[0].mxu0
        %v8949 = vadd.f32 0.0, %v8948
        %v8950 = vpop.f32.mrb[0].mxu0
        %8951 = vdwg.mxu0
        %v8953 = vsel %vm1924, %v8069, 0
        %8955 = vmatprep.subr.mxu0 0.0
        %8956 = vmatpush1.msra.mxu0 %v6506
        %8957 = vmatprep.subr.mxu0 0.0
        %8958 = vmatpush1.msra.mxu0 0.0
        %8959 = vmatprep.subr.mxu0 0.0
        %8960 = vmatpush1.msra.mxu0 0.0
        %8961 = vmatprep.subr.mxu0 0.0
        %8962 = vmatpush1.msra.mxu0 0.0
        %8963 = vmatprep.subr.mxu0 0.0
        %8964 = vmatpush1.msra.mxu0 0.0
        %8965 = vmatprep.subr.mxu0 0.0
        %8966 = vmatpush1.msra.mxu0 0.0
        %8967 = vmatprep.subr.mxu0 0.0
        %8968 = vmatpush1.msra.mxu0 0.0
        %8969 = vmatprep.subr.mxu0 0.0
        %8970 = vmatpush1.msra.mxu0 0.0
        %8971 = vmatprep.subr.mxu0 0.0
        %8972 = vmatpush1.msra.mxu0 0.0
        %8973 = vmatprep.subr.mxu0 0.0
        %8974 = vmatpush1.msra.mxu0 0.0
        %8975 = vmatprep.subr.mxu0 0.0
        %8976 = vmatpush1.msra.mxu0 0.0
        %8977 = vmatprep.subr.mxu0 0.0
        %8978 = vmatpush1.msra.mxu0 0.0
        %8979 = vmatprep.subr.mxu0 0.0
        %8980 = vmatpush1.msra.mxu0 0.0
        %8981 = vmatprep.subr.mxu0 0.0
        %8982 = vmatpush1.msra.mxu0 0.0
        %8983 = vmatprep.subr.mxu0 0.0
        %8984 = vmatpush1.msra.mxu0 0.0
        %8985 = vmatprep.subr.mxu0 0.0
        %8986 = vmatpush1.msra.mxu0 0.0
        %8987 = vmatprep.subr.mxu0 0.0
        %8988 = vmatpush1.msra.mxu0 0.0
        %8989 = vmatprep.subr.mxu0 0.0
        %8990 = vmatpush1.msra.mxu0 0.0
        %8991 = vmatprep.subr.mxu0 0.0
        %8992 = vmatpush1.msra.mxu0 0.0
        %8993 = vmatprep.subr.mxu0 0.0
        %8994 = vmatpush1.msra.mxu0 0.0
        %8995 = vmatprep.subr.mxu0 0.0
        %8996 = vmatpush1.msra.mxu0 0.0
        %8997 = vmatprep.subr.mxu0 0.0
        %8998 = vmatpush1.msra.mxu0 0.0
        %8999 = vmatprep.subr.mxu0 0.0
        %9000 = vmatpush1.msra.mxu0 0.0
        %9001 = vmatprep.subr.mxu0 0.0
        %9002 = vmatpush1.msra.mxu0 0.0
        %9003 = vmatprep.subr.mxu0 0.0
        %9004 = vmatpush1.msra.mxu0 0.0
        %9005 = vmatprep.subr.mxu0 0.0
        %9006 = vmatpush1.msra.mxu0 0.0
        %9007 = vmatprep.subr.mxu0 0.0
        %9008 = vmatpush1.msra.mxu0 0.0
        %9009 = vmatprep.subr.mxu0 0.0
        %9010 = vmatpush1.msra.mxu0 0.0
        %9011 = vmatprep.subr.mxu0 0.0
        %9012 = vmatpush1.msra.mxu0 0.0
        %9013 = vmatprep.subr.mxu0 0.0
        %9014 = vmatpush1.msra.mxu0 0.0
        %9015 = vmatprep.subr.mxu0 0.0
        %9016 = vmatpush1.msra.mxu0 0.0
        %9017 = vmatprep.subr.mxu0 0.0
        %9018 = vmatpush1.msra.mxu0 0.0
        %9019 = vmatprep.mubr.f32.mxu0 0.0
        %9020 = vmatmul.mubr.f32.gmra.mrb[0].mxu0 %v8953
        %v9021 = vpop.f32.mrb[0].mxu0
        %v9022 = vadd.f32 0.0, %v9021
        %v9023 = vpop.f32.mrb[0].mxu0
        %9024 = vdwg.mxu0
        %v9026 = vsel %vm1924, %v8071, 0
        %9028 = vmatprep.subr.mxu0 0.0
        %9029 = vmatpush1.msra.mxu0 %v6511
        %9030 = vmatprep.subr.mxu0 0.0
        %9031 = vmatpush1.msra.mxu0 0.0
        %9032 = vmatprep.subr.mxu0 0.0
        %9033 = vmatpush1.msra.mxu0 0.0
        %9034 = vmatprep.subr.mxu0 0.0
        %9035 = vmatpush1.msra.mxu0 0.0
        %9036 = vmatprep.subr.mxu0 0.0
        %9037 = vmatpush1.msra.mxu0 0.0
        %9038 = vmatprep.subr.mxu0 0.0
        %9039 = vmatpush1.msra.mxu0 0.0
        %9040 = vmatprep.subr.mxu0 0.0
        %9041 = vmatpush1.msra.mxu0 0.0
        %9042 = vmatprep.subr.mxu0 0.0
        %9043 = vmatpush1.msra.mxu0 0.0
        %9044 = vmatprep.subr.mxu0 0.0
        %9045 = vmatpush1.msra.mxu0 0.0
        %9046 = vmatprep.subr.mxu0 0.0
        %9047 = vmatpush1.msra.mxu0 0.0
        %9048 = vmatprep.subr.mxu0 0.0
        %9049 = vmatpush1.msra.mxu0 0.0
        %9050 = vmatprep.subr.mxu0 0.0
        %9051 = vmatpush1.msra.mxu0 0.0
        %9052 = vmatprep.subr.mxu0 0.0
        %9053 = vmatpush1.msra.mxu0 0.0
        %9054 = vmatprep.subr.mxu0 0.0
        %9055 = vmatpush1.msra.mxu0 0.0
        %9056 = vmatprep.subr.mxu0 0.0
        %9057 = vmatpush1.msra.mxu0 0.0
        %9058 = vmatprep.subr.mxu0 0.0
        %9059 = vmatpush1.msra.mxu0 0.0
        %9060 = vmatprep.subr.mxu0 0.0
        %9061 = vmatpush1.msra.mxu0 0.0
        %9062 = vmatprep.subr.mxu0 0.0
        %9063 = vmatpush1.msra.mxu0 0.0
        %9064 = vmatprep.subr.mxu0 0.0
        %9065 = vmatpush1.msra.mxu0 0.0
        %9066 = vmatprep.subr.mxu0 0.0
        %9067 = vmatpush1.msra.mxu0 0.0
        %9068 = vmatprep.subr.mxu0 0.0
        %9069 = vmatpush1.msra.mxu0 0.0
        %9070 = vmatprep.subr.mxu0 0.0
        %9071 = vmatpush1.msra.mxu0 0.0
        %9072 = vmatprep.subr.mxu0 0.0
        %9073 = vmatpush1.msra.mxu0 0.0
        %9074 = vmatprep.subr.mxu0 0.0
        %9075 = vmatpush1.msra.mxu0 0.0
        %9076 = vmatprep.subr.mxu0 0.0
        %9077 = vmatpush1.msra.mxu0 0.0
        %9078 = vmatprep.subr.mxu0 0.0
        %9079 = vmatpush1.msra.mxu0 0.0
        %9080 = vmatprep.subr.mxu0 0.0
        %9081 = vmatpush1.msra.mxu0 0.0
        %9082 = vmatprep.subr.mxu0 0.0
        %9083 = vmatpush1.msra.mxu0 0.0
        %9084 = vmatprep.subr.mxu0 0.0
        %9085 = vmatpush1.msra.mxu0 0.0
        %9086 = vmatprep.subr.mxu0 0.0
        %9087 = vmatpush1.msra.mxu0 0.0
        %9088 = vmatprep.subr.mxu0 0.0
        %9089 = vmatpush1.msra.mxu0 0.0
        %9090 = vmatprep.subr.mxu0 0.0
        %9091 = vmatpush1.msra.mxu0 0.0
        %9092 = vmatprep.mubr.f32.mxu0 0.0
        %9093 = vmatmul.mubr.f32.gmra.mrb[0].mxu0 %v9026
        %v9094 = vpop.f32.mrb[0].mxu0
        %v9095 = vadd.f32 0.0, %v9094
        %v9096 = vpop.f32.mrb[0].mxu0
        %9097 = vdwg.mxu0
        %v9099 = vsel %vm1924, %v8073, 0
        %9101 = vmatprep.subr.mxu0 0.0
        %9102 = vmatpush1.msra.mxu0 %v6516
        %9103 = vmatprep.subr.mxu0 0.0
        %9104 = vmatpush1.msra.mxu0 0.0
        %9105 = vmatprep.subr.mxu0 0.0
        %9106 = vmatpush1.msra.mxu0 0.0
        %9107 = vmatprep.subr.mxu0 0.0
        %9108 = vmatpush1.msra.mxu0 0.0
        %9109 = vmatprep.subr.mxu0 0.0
        %9110 = vmatpush1.msra.mxu0 0.0
        %9111 = vmatprep.subr.mxu0 0.0
        %9112 = vmatpush1.msra.mxu0 0.0
        %9113 = vmatprep.subr.mxu0 0.0
        %9114 = vmatpush1.msra.mxu0 0.0
        %9115 = vmatprep.subr.mxu0 0.0
        %9116 = vmatpush1.msra.mxu0 0.0
        %9117 = vmatprep.subr.mxu0 0.0
        %9118 = vmatpush1.msra.mxu0 0.0
        %9119 = vmatprep.subr.mxu0 0.0
        %9120 = vmatpush1.msra.mxu0 0.0
        %9121 = vmatprep.subr.mxu0 0.0
        %9122 = vmatpush1.msra.mxu0 0.0
        %9123 = vmatprep.subr.mxu0 0.0
        %9124 = vmatpush1.msra.mxu0 0.0
        %9125 = vmatprep.subr.mxu0 0.0
        %9126 = vmatpush1.msra.mxu0 0.0
        %9127 = vmatprep.subr.mxu0 0.0
        %9128 = vmatpush1.msra.mxu0 0.0
        %9129 = vmatprep.subr.mxu0 0.0
        %9130 = vmatpush1.msra.mxu0 0.0
        %9131 = vmatprep.subr.mxu0 0.0
        %9132 = vmatpush1.msra.mxu0 0.0
        %9133 = vmatprep.subr.mxu0 0.0
        %9134 = vmatpush1.msra.mxu0 0.0
        %9135 = vmatprep.subr.mxu0 0.0
        %9136 = vmatpush1.msra.mxu0 0.0
        %9137 = vmatprep.subr.mxu0 0.0
        %9138 = vmatpush1.msra.mxu0 0.0
        %9139 = vmatprep.subr.mxu0 0.0
        %9140 = vmatpush1.msra.mxu0 0.0
        %9141 = vmatprep.subr.mxu0 0.0
        %9142 = vmatpush1.msra.mxu0 0.0
        %9143 = vmatprep.subr.mxu0 0.0
        %9144 = vmatpush1.msra.mxu0 0.0
        %9145 = vmatprep.subr.mxu0 0.0
        %9146 = vmatpush1.msra.mxu0 0.0
        %9147 = vmatprep.subr.mxu0 0.0
        %9148 = vmatpush1.msra.mxu0 0.0
        %9149 = vmatprep.subr.mxu0 0.0
        %9150 = vmatpush1.msra.mxu0 0.0
        %9151 = vmatprep.subr.mxu0 0.0
        %9152 = vmatpush1.msra.mxu0 0.0
        %9153 = vmatprep.subr.mxu0 0.0
        %9154 = vmatpush1.msra.mxu0 0.0
        %9155 = vmatprep.subr.mxu0 0.0
        %9156 = vmatpush1.msra.mxu0 0.0
        %9157 = vmatprep.subr.mxu0 0.0
        %9158 = vmatpush1.msra.mxu0 0.0
        %9159 = vmatprep.subr.mxu0 0.0
        %9160 = vmatpush1.msra.mxu0 0.0
        %9161 = vmatprep.subr.mxu0 0.0
        %9162 = vmatpush1.msra.mxu0 0.0
        %9163 = vmatprep.subr.mxu0 0.0
        %9164 = vmatpush1.msra.mxu0 0.0
        %9165 = vmatprep.mubr.f32.mxu0 0.0
        %9166 = vmatmul.mubr.f32.gmra.mrb[0].mxu0 %v9099
        %v9167 = vpop.f32.mrb[0].mxu0
        %v9168 = vadd.f32 0.0, %v9167
        %v9169 = vpop.f32.mrb[0].mxu0
        %9170 = vdwg.mxu0
        %v9172 = vsel %vm1924, %v8075, 0
        %9174 = vmatprep.subr.mxu0 0.0
        %9175 = vmatpush1.msra.mxu0 %v6521
        %9176 = vmatprep.subr.mxu0 0.0
        %9177 = vmatpush1.msra.mxu0 0.0
        %9178 = vmatprep.subr.mxu0 0.0
        %9179 = vmatpush1.msra.mxu0 0.0
        %9180 = vmatprep.subr.mxu0 0.0
        %9181 = vmatpush1.msra.mxu0 0.0
        %9182 = vmatprep.subr.mxu0 0.0
        %9183 = vmatpush1.msra.mxu0 0.0
        %9184 = vmatprep.subr.mxu0 0.0
        %9185 = vmatpush1.msra.mxu0 0.0
        %9186 = vmatprep.subr.mxu0 0.0
        %9187 = vmatpush1.msra.mxu0 0.0
        %9188 = vmatprep.subr.mxu0 0.0
        %9189 = vmatpush1.msra.mxu0 0.0
        %9190 = vmatprep.subr.mxu0 0.0
        %9191 = vmatpush1.msra.mxu0 0.0
        %9192 = vmatprep.subr.mxu0 0.0
        %9193 = vmatpush1.msra.mxu0 0.0
        %9194 = vmatprep.subr.mxu0 0.0
        %9195 = vmatpush1.msra.mxu0 0.0
        %9196 = vmatprep.subr.mxu0 0.0
        %9197 = vmatpush1.msra.mxu0 0.0
        %9198 = vmatprep.subr.mxu0 0.0
        %9199 = vmatpush1.msra.mxu0 0.0
        %9200 = vmatprep.subr.mxu0 0.0
        %9201 = vmatpush1.msra.mxu0 0.0
        %9202 = vmatprep.subr.mxu0 0.0
        %9203 = vmatpush1.msra.mxu0 0.0
        %9204 = vmatprep.subr.mxu0 0.0
        %9205 = vmatpush1.msra.mxu0 0.0
        %9206 = vmatprep.subr.mxu0 0.0
        %9207 = vmatpush1.msra.mxu0 0.0
        %9208 = vmatprep.subr.mxu0 0.0
        %9209 = vmatpush1.msra.mxu0 0.0
        %9210 = vmatprep.subr.mxu0 0.0
        %9211 = vmatpush1.msra.mxu0 0.0
        %9212 = vmatprep.subr.mxu0 0.0
        %9213 = vmatpush1.msra.mxu0 0.0
        %9214 = vmatprep.subr.mxu0 0.0
        %9215 = vmatpush1.msra.mxu0 0.0
        %9216 = vmatprep.subr.mxu0 0.0
        %9217 = vmatpush1.msra.mxu0 0.0
        %9218 = vmatprep.subr.mxu0 0.0
        %9219 = vmatpush1.msra.mxu0 0.0
        %9220 = vmatprep.subr.mxu0 0.0
        %9221 = vmatpush1.msra.mxu0 0.0
        %9222 = vmatprep.subr.mxu0 0.0
        %9223 = vmatpush1.msra.mxu0 0.0
        %9224 = vmatprep.subr.mxu0 0.0
        %9225 = vmatpush1.msra.mxu0 0.0
        %9226 = vmatprep.subr.mxu0 0.0
        %9227 = vmatpush1.msra.mxu0 0.0
        %9228 = vmatprep.subr.mxu0 0.0
        %9229 = vmatpush1.msra.mxu0 0.0
        %9230 = vmatprep.subr.mxu0 0.0
        %9231 = vmatpush1.msra.mxu0 0.0
        %9232 = vmatprep.subr.mxu0 0.0
        %9233 = vmatpush1.msra.mxu0 0.0
        %9234 = vmatprep.subr.mxu0 0.0
        %9235 = vmatpush1.msra.mxu0 0.0
        %9236 = vmatprep.subr.mxu0 0.0
        %9237 = vmatpush1.msra.mxu0 0.0
        %9238 = vmatprep.mubr.f32.mxu0 0.0
        %9239 = vmatmul.mubr.f32.gmra.mrb[0].mxu0 %v9172
        %v9240 = vpop.f32.mrb[0].mxu0
        %v9241 = vadd.f32 0.0, %v9240
        %v9242 = vpop.f32.mrb[0].mxu0
        %9243 = vdwg.mxu0
        %vm9244 = vcmp.gt.f32.partialorder %v8146, 0.0
        %vm9245 = vcmp.gt.f32.partialorder %v8219, 0.0
        %vm9246 = vcmp.gt.f32.partialorder %v8292, 0.0
        %vm9247 = vcmp.gt.f32.partialorder %v8365, 0.0
        %vm9248 = vcmp.gt.f32.partialorder %v8438, 0.0
        %vm9249 = vcmp.gt.f32.partialorder %v8511, 0.0
        %vm9250 = vcmp.gt.f32.partialorder %v8584, 0.0
        %vm9251 = vcmp.gt.f32.partialorder %v8657, 0.0
        %vm9252 = vcmp.gt.f32.partialorder %v8730, 0.0
        %vm9253 = vcmp.gt.f32.partialorder %v8803, 0.0
        %vm9254 = vcmp.gt.f32.partialorder %v8876, 0.0
        %vm9255 = vcmp.gt.f32.partialorder %v8949, 0.0
        %vm9256 = vcmp.gt.f32.partialorder %v9022, 0.0
        %vm9257 = vcmp.gt.f32.partialorder %v9095, 0.0
        %vm9258 = vcmp.gt.f32.partialorder %v9168, 0.0
        %vm9259 = vcmp.gt.f32.partialorder %v9241, 0.0
        %v9260 = vmin.f32 %v8146, 0.0
        %v9261 = vmin.f32 %v8219, 0.0
        %v9262 = vmin.f32 %v8292, 0.0
        %v9263 = vmin.f32 %v8365, 0.0
        %v9264 = vmin.f32 %v8438, 0.0
        %v9265 = vmin.f32 %v8511, 0.0
        %v9266 = vmin.f32 %v8584, 0.0
        %v9267 = vmin.f32 %v8657, 0.0
        %v9268 = vmin.f32 %v8730, 0.0
        %v9269 = vmin.f32 %v8803, 0.0
        %v9270 = vmin.f32 %v8876, 0.0
        %v9271 = vmin.f32 %v8949, 0.0
        %v9272 = vmin.f32 %v9022, 0.0
        %v9273 = vmin.f32 %v9095, 0.0
        %v9274 = vmin.f32 %v9168, 0.0
        %v9275 = vmin.f32 %v9241, 0.0
        %v9276 = vmul.f32 %v9260, 1.442695
        %v9277 = vpow.pop %v9276
        %v9278 = vmul.f32 %v9261, 1.442695
        %v9279 = vpow.pop %v9278
        %v9280 = vmul.f32 %v9262, 1.442695
        %v9281 = vpow.pop %v9280
        %v9282 = vmul.f32 %v9263, 1.442695
        %v9283 = vpow.pop %v9282
        %v9284 = vmul.f32 %v9264, 1.442695
        %v9285 = vpow.pop %v9284
        %v9286 = vmul.f32 %v9265, 1.442695
        %v9287 = vpow.pop %v9286
        %v9288 = vmul.f32 %v9266, 1.442695
        %v9289 = vpow.pop %v9288
        %v9290 = vmul.f32 %v9267, 1.442695
        %v9291 = vpow.pop %v9290
        %v9292 = vmul.f32 %v9268, 1.442695
        %v9293 = vpow.pop %v9292
        %v9294 = vmul.f32 %v9269, 1.442695
        %v9295 = vpow.pop %v9294
        %v9296 = vmul.f32 %v9270, 1.442695
        %v9297 = vpow.pop %v9296
        %v9298 = vmul.f32 %v9271, 1.442695
        %v9299 = vpow.pop %v9298
        %v9300 = vmul.f32 %v9272, 1.442695
        %v9301 = vpow.pop %v9300
        %v9302 = vmul.f32 %v9273, 1.442695
        %v9303 = vpow.pop %v9302
        %v9304 = vmul.f32 %v9274, 1.442695
        %v9305 = vpow.pop %v9304
        %v9306 = vmul.f32 %v9275, 1.442695
        %v9307 = vpow.pop %v9306
        %v9308 = vsub.f32 %v9277, 1.0
        %v9309 = vsub.f32 %v9279, 1.0
        %v9310 = vsub.f32 %v9281, 1.0
        %v9311 = vsub.f32 %v9283, 1.0
        %v9312 = vsub.f32 %v9285, 1.0
        %v9313 = vsub.f32 %v9287, 1.0
        %v9314 = vsub.f32 %v9289, 1.0
        %v9315 = vsub.f32 %v9291, 1.0
        %v9316 = vsub.f32 %v9293, 1.0
        %v9317 = vsub.f32 %v9295, 1.0
        %v9318 = vsub.f32 %v9297, 1.0
        %v9319 = vsub.f32 %v9299, 1.0
        %v9320 = vsub.f32 %v9301, 1.0
        %v9321 = vsub.f32 %v9303, 1.0
        %v9322 = vsub.f32 %v9305, 1.0
        %v9323 = vsub.f32 %v9307, 1.0
        %v9324 = vsel %vm9244, %v8146, %v9308
        %v9325 = vsel %vm9245, %v8219, %v9309
        %v9326 = vsel %vm9246, %v8292, %v9310
        %v9327 = vsel %vm9247, %v8365, %v9311
        %v9328 = vsel %vm9248, %v8438, %v9312
        %v9329 = vsel %vm9249, %v8511, %v9313
        %v9330 = vsel %vm9250, %v8584, %v9314
        %v9331 = vsel %vm9251, %v8657, %v9315
        %v9332 = vsel %vm9252, %v8730, %v9316
        %v9333 = vsel %vm9253, %v8803, %v9317
        %v9334 = vsel %vm9254, %v8876, %v9318
        %v9335 = vsel %vm9255, %v8949, %v9319
        %v9336 = vsel %vm9256, %v9022, %v9320
        %v9337 = vsel %vm9257, %v9095, %v9321
        %v9338 = vsel %vm9258, %v9168, %v9322
        %v9339 = vsel %vm9259, %v9241, %v9323
        %9340 = vst.msk [vmem:[%s207] sm:$0xff] %vm1924, %v9324
        %9342 = vrot.lane.b32.xlu0 %v9325, 8
        %v9343 = vpop.permute.xlu0 %9342
        %vm9345 = vcmask 130112
        %9346 = vst.msk [vmem:[%s207] sm:$0xff] %vm9345, %v9343
        %9348 = vrot.lane.b32.xlu0 %v9326, 16
        %v9349 = vpop.permute.xlu0 %9348
        %vm9351 = vcmask 195712
        %9352 = vst.msk [vmem:[%s207] sm:$0xff] %vm9351, %v9349
        %9354 = vrot.lane.b32.xlu0 %v9327, 24
        %v9355 = vpop.permute.xlu0 %9354
        %vm9357 = vcmask 261312
        %9358 = vst.msk [vmem:[%s207] sm:$0xff] %vm9357, %v9355
        %9360 = vrot.lane.b32.xlu0 %v9328, 32
        %v9361 = vpop.permute.xlu0 %9360
        %vm9363 = vcmask 326912
        %9364 = vst.msk [vmem:[%s207] sm:$0xff] %vm9363, %v9361
        %9366 = vrot.lane.b32.xlu0 %v9329, 40
        %v9367 = vpop.permute.xlu0 %9366
        %vm9369 = vcmask 392512
        %9370 = vst.msk [vmem:[%s207] sm:$0xff] %vm9369, %v9367
        %9372 = vrot.lane.b32.xlu0 %v9330, 48
        %v9373 = vpop.permute.xlu0 %9372
        %vm9375 = vcmask 458112
        %9376 = vst.msk [vmem:[%s207] sm:$0xff] %vm9375, %v9373
        %9378 = vrot.lane.b32.xlu0 %v9331, 56
        %v9379 = vpop.permute.xlu0 %9378
        %vm9381 = vcmask 523712
        %9382 = vst.msk [vmem:[%s207] sm:$0xff] %vm9381, %v9379
        %9384 = vrot.lane.b32.xlu0 %v9332, 64
        %v9385 = vpop.permute.xlu0 %9384
        %vm9387 = vcmask 589312
        %9388 = vst.msk [vmem:[%s207] sm:$0xff] %vm9387, %v9385
        %9390 = vrot.lane.b32.xlu0 %v9333, 72
        %v9391 = vpop.permute.xlu0 %9390
        %vm9393 = vcmask 654912
        %9394 = vst.msk [vmem:[%s207] sm:$0xff] %vm9393, %v9391
        %9396 = vrot.lane.b32.xlu0 %v9334, 80
        %v9397 = vpop.permute.xlu0 %9396
        %vm9399 = vcmask 720512
        %9400 = vst.msk [vmem:[%s207] sm:$0xff] %vm9399, %v9397
        %9402 = vrot.lane.b32.xlu0 %v9335, 88
        %v9403 = vpop.permute.xlu0 %9402
        %vm9405 = vcmask 786112
        %9406 = vst.msk [vmem:[%s207] sm:$0xff] %vm9405, %v9403
        %9408 = vrot.lane.b32.xlu0 %v9336, 96
        %v9409 = vpop.permute.xlu0 %9408
        %vm9411 = vcmask 851712
        %9412 = vst.msk [vmem:[%s207] sm:$0xff] %vm9411, %v9409
        %9414 = vrot.lane.b32.xlu0 %v9337, 104
        %v9415 = vpop.permute.xlu0 %9414
        %vm9417 = vcmask 917312
        %9418 = vst.msk [vmem:[%s207] sm:$0xff] %vm9417, %v9415
        %9420 = vrot.lane.b32.xlu0 %v9338, 112
        %v9421 = vpop.permute.xlu0 %9420
        %vm9423 = vcmask 982912
        %9424 = vst.msk [vmem:[%s207] sm:$0xff] %vm9423, %v9421
        %9426 = vrot.lane.b32.xlu0 %v9339, 120
        %v9427 = vpop.permute.xlu0 %9426
        %vm9429 = vcmask 1048512
        %9430 = vst.msk [vmem:[%s207] sm:$0xff] %vm9429, %v9427
        %s9431 = sand.u32 %s120, 1
        %s9432 = scalar_lea.sflag [#allocation4], %s9431
        %s9433 = sand.u32 %s120, 1
        %s9434 = smul.addr %s9433, 8
        %s9435 = scalar_lea.vmem [#allocation3], %s9434
        // Predicated region
        $region37: #{tpu_custom_call.1} parent=35 // pred_check
          %p9436 = pneg %p130
        $region38: #{tpu_custom_call.1} parent=35 // pred_check_branch
          %9438 = sbr.rel (%p9436) target = $region40
        $region39: #{tpu_custom_call.1} parent=35 // pred_region
          %s9440 = ssub.s32 128, 128
          %9441 = vsyncadd %s9432, %s9440
          %s9442 = smul.addr %s18, 128
          %s9443 = scalar_lea.hbm %s4, %s9442
          %s9445 = sshll.u32 %s9435, 4
          %s9446 = int_to_ptr.vmem [resolvable:$true] %s9445
          %9448 = dma.vmem_to_hbm [thread:$0]  %s9446, 128, %s9443, %s9432
        $region40: #{tpu_custom_call.1} parent=35 // pred_fallthru
          _
      $region36: #{tpu_custom_call.1} parent=5 // pred_fallthru
        _
      %p9449 = scmp.le.s32.totalorder 2, %s13
      // Predicated region
      $region41: #{tpu_custom_call.1} parent=5 // pred_check
        %p9450 = pneg %p9449
      $region42: #{tpu_custom_call.1} parent=5 // pred_check_branch
        %9452 = sbr.rel (%p9450) target = $region44
      $region43: #{tpu_custom_call.1} parent=5 // pred_region
        %s9453 = ssub.s32 %s13, 2
        // Predicated region
        $region45: #{tpu_custom_call.1} parent=43 // pred_check
          %p9454 = pneg %p136
        $region46: #{tpu_custom_call.1} parent=43 // pred_check_branch
          %9456 = sbr.rel (%p9454) target = $region48
        $region47: #{tpu_custom_call.1} parent=43 // pred_region
          %s9457 = sand.u32 %s121, 1
          %s9458 = scalar_lea.sflag [#allocation4], %s9457
          %s9459 = sand.u32 %s121, 1
          %s9460 = smul.addr %s9459, 8
          %s9461 = scalar_lea.vmem [#allocation3], %s9460
          %9462 = dma.done %s9458, 128
        $region48: #{tpu_custom_call.1} parent=43 // pred_fallthru
          _
      $region44: #{tpu_custom_call.1} parent=5 // pred_fallthru
        _
    $region6: #{tpu_custom_call.1} parent=1 // loop_footer
      %s17 = sadd.s32 1, %s13
    $region7: #{tpu_custom_call.1} parent=1 // loop_footer_branch
      %12 = sbr.rel target = $region3
    $region8: #{tpu_custom_call.1} parent=1 // loop_exit
      _
    %9463 = vsyncpa [#allocation4], 1
    %s9464 = scalar_lea.sflag [#allocation4], 1
    %9465 = vsyncpa %s9464, 1

</llo_original>
